<compile_context>
chip_gen: v6e
topology: v6e:2x2x1
jax: 0.10.0
libtpu: 0.0.40
codegen_flags: <defaults>
</compile_context>

<pallas_src>
import functools

import jax
import jax.numpy as jnp
from jax.experimental import pallas as pl
from jax.experimental.pallas import tpu as pltpu

_LANE = 128


def _round_up(x, m):
    return ((x + m - 1) // m) * m


def _pick_tile_h(H, W, cinp, coutp, budget_bytes=8 << 20):
    """Largest even row tile TH dividing H whose double-buffered VMEM footprint
    (haloed bf16 input + f32 outputs) stays under `budget_bytes`."""
    for th in range(H, 1, -1):
        if H % th or th % 2:
            continue
        in_b = (th + 2) * (W + 2) * cinp * 2
        out_b = th * W * coutp * 4 + (th // 2) * (W // 2) * coutp * 4
        if 2 * (in_b + out_b) <= budget_bytes:
            return th
    return 2


# ----------------------------------------------------------------------------
# Kernel: 3x3 conv (reflect-padded haloed tile) + bias + ReLU [+ 2x2 max-pool]
# ----------------------------------------------------------------------------
def _conv3x3_kernel(x_ref, w_ref, b_ref, *out_refs, pool: bool):
    # x_ref : (TH+2, W+2, Cinp)  bf16  haloed input row tile
    # w_ref : (9, Cinp, Coutp)   bf16  per-tap weights (VMEM resident)
    # b_ref : (1, Coutp)         f32
    # out_refs[0] : (TH, W, Coutp)        conv + ReLU output (skip path)
    # out_refs[1] : (TH//2, W//2, Coutp)  pooled output (only when pool=True)
    o_ref = out_refs[0]
    th, wd, coutp = o_ref.shape
    cinp = x_ref.shape[-1]

    # 9-tap accumulation on the MXU, K = Cinp, f32 accumulator.
    acc = None
    for tap in range(9):
        dy, dx = divmod(tap, 3)
        xs = x_ref[dy:dy + th, dx:dx + wd, :].reshape(th * wd, cinp)
        part = jnp.dot(xs, w_ref[tap], preferred_element_type=jnp.float32)
        acc = part if acc is None else acc + part

    y = jnp.maximum(acc + b_ref[...], 0.0).reshape(th, wd, coutp)
    o_ref[...] = y.astype(o_ref.dtype)

    if pool:
        p_ref = out_refs[1]
        # 2x2 max-pool fused in the epilogue while the tile is still in VMEM.
        # Columns: pairwise max via stride-2 reads of the just-written tile.
        c_even = o_ref[:, pl.ds(0, wd // 2, 2), :]
        c_odd = o_ref[:, pl.ds(1, wd // 2, 2), :]
        c = jnp.maximum(c_even, c_odd)                     # (TH, W//2, Coutp)
        # Rows: pairwise max via a leading-dim regroup (no data movement).
        c = c.reshape(th // 2, 2, wd // 2, coutp)
        p_ref[...] = jnp.maximum(c[:, 0], c[:, 1]).astype(p_ref.dtype)


# ----------------------------------------------------------------------------
# Pallas-backed conv block
# ----------------------------------------------------------------------------
def _conv_block(x_nhwc, w9, bias, *, out_dtype, pool):
    """Reflect-padded 3x3 conv + bias + ReLU (optionally fused 2x2 max-pool).

    x_nhwc: (N, H, W, Cinp) bf16 channel-padded activation.
    w9:     (9, Cinp, Coutp) bf16.   bias: (1, Coutp) f32.
    """
    N, H, W, Cinp = x_nhwc.shape
    Coutp = w9.shape[-1]
    assert H % 2 == 0 and W % 2 == 0, "spatial dims must be even"
    assert W % 8 == 0, "W must be a multiple of 8 (sublane tiling)"

    TH = _pick_tile_h(H, W, Cinp, Coutp)
    T = H // TH

    # Reflect pad (padding_mode='reflect') + haloed row tiles (2-row overlap).
    xp = jnp.pad(x_nhwc, ((0, 0), (1, 1), (1, 1), (0, 0)), mode="reflect")
    if T == 1:
        xt = xp[:, None]
    else:
        xt = jnp.stack([xp[:, t * TH:t * TH + TH + 2] for t in range(T)], axis=1)
    # xt: (N, T, TH+2, W+2, Cinp)

    in_specs = [
        pl.BlockSpec((None, None, TH + 2, W + 2, Cinp),
                     lambda n, t: (n, t, 0, 0, 0)),
        pl.BlockSpec((9, Cinp, Coutp), lambda n, t: (0, 0, 0)),   # resident
        pl.BlockSpec((1, Coutp), lambda n, t: (0, 0)),            # resident
    ]
    if pool:
        out_shape = (jax.ShapeDtypeStruct((N, H, W, Coutp), out_dtype),
                     jax.ShapeDtypeStruct((N, H // 2, W // 2, Coutp), out_dtype))
        out_specs = (pl.BlockSpec((None, TH, W, Coutp), lambda n, t: (n, t, 0, 0)),
                     pl.BlockSpec((None, TH // 2, W // 2, Coutp),
                                  lambda n, t: (n, t, 0, 0)))
    else:
        out_shape = jax.ShapeDtypeStruct((N, H, W, Coutp), out_dtype)
        out_specs = pl.BlockSpec((None, TH, W, Coutp), lambda n, t: (n, t, 0, 0))

    out_bytes = N * H * W * Coutp * jnp.dtype(out_dtype).itemsize
    if pool:
        out_bytes += out_bytes // 4
    cost = pl.CostEstimate(
        flops=2 * N * H * W * 9 * Cinp * Coutp,
        transcendentals=0,
        bytes_accessed=int(xt.size * xt.dtype.itemsize + w9.size * 2
                           + bias.size * 4 + out_bytes))

    return pl.pallas_call(
        functools.partial(_conv3x3_kernel, pool=pool),
        out_shape=out_shape,
        grid_spec=pltpu.PrefetchScalarGridSpec(
            num_scalar_prefetch=0,
            grid=(N, T),
            in_specs=in_specs,
            out_specs=out_specs),
        compiler_params=pltpu.CompilerParams(
            dimension_semantics=("parallel", "parallel"),
            vmem_limit_bytes=48 * 1024 * 1024),
        cost_estimate=cost,
    )(xt, w9, bias)


# ----------------------------------------------------------------------------
# Parameter prep & DownSampling forward
# ----------------------------------------------------------------------------
def _prep_conv_params(w_oihw, b, cin_p, cout_p):
    cout, cin, kh, kw = w_oihw.shape
    assert (kh, kw) == (3, 3)
    # (Cout, Cin, 3, 3) -> (dy, dx, Cin, Cout) -> (9, Cin, Cout), zero-padded.
    w9 = jnp.transpose(w_oihw, (2, 3, 1, 0)).reshape(9, cin, cout)
    w9 = jnp.pad(w9, ((0, 0), (0, cin_p - cin), (0, cout_p - cout)))
    b2 = jnp.pad(b, (0, cout_p - cout)).astype(jnp.float32).reshape(1, cout_p)
    return w9.astype(jnp.bfloat16), b2


def downsampling_forward(x_nchw, params, use_maxpool=True):
    """Matches DownSampling.forward (eval mode)."""
    # TODO(synk): training-mode Dropout(p=0.5) RNG is not reproduced (eval-mode identity).
    N, Cin, H, W = x_nchw.shape
    Cout = params["w1"].shape[0]
    Cinp, Coutp = _round_up(Cin, _LANE), _round_up(Cout, _LANE)

    w1, b1 = _prep_conv_params(params["w1"], params["b1"], Cinp, Coutp)
    w2, b2 = _prep_conv_params(params["w2"], params["b2"], Coutp, Coutp)

    # NCHW -> NHWC, zero-pad channels to the lane width, bf16 MXU inputs.
    x = jnp.transpose(x_nchw, (0, 2, 3, 1))
    x = jnp.pad(x, ((0, 0), (0, 0), (0, 0), (0, Cinp - Cin))).astype(jnp.bfloat16)

    # conv1 + ReLU (intermediate stays channel-padded, bf16).
    y1 = _conv_block(x, w1, b1, out_dtype=jnp.bfloat16, pool=False)

    if not use_maxpool:
        y2 = _conv_block(y1, w2, b2, out_dtype=jnp.float32, pool=False)
        return jnp.transpose(y2[..., :Cout], (0, 3, 1, 2))

    # conv2 + ReLU with the 2x2 max-pool fused into the epilogue.
    skip_p, pool_p = _conv_block(y1, w2, b2, out_dtype=jnp.float32, pool=True)
    skip = jnp.transpose(skip_p[..., :Cout], (0, 3, 1, 2))
    pooled = jnp.transpose(pool_p[..., :Cout], (0, 3, 1, 2))
    return pooled, skip


def init_params(key, in_channels, out_channels):
    """Deterministic init mimicking PyTorch Conv2d defaults."""
    ks = jax.random.split(key, 4)
    fan1, fan2 = in_channels * 9, out_channels * 9
    b1lim, b2lim = 1.0 / jnp.sqrt(fan1), 1.0 / jnp.sqrt(fan2)
    return {
        "w1": jax.random.uniform(ks[0], (out_channels, in_channels, 3, 3),
                                 jnp.float32, -b1lim, b1lim),
        "b1": jax.random.uniform(ks[1], (out_channels,), jnp.float32, -b1lim, b1lim),
        "w2": jax.random.uniform(ks[2], (out_channels, out_channels, 3, 3),
                                 jnp.float32, -b2lim, b2lim),
        "b2": jax.random.uniform(ks[3], (out_channels,), jnp.float32, -b2lim, b2lim),
    }


# ----------------------------------------------------------------------------
# Pure-JAX reference (mirrors the kernel's bf16-input / f32-accumulate policy)
# ----------------------------------------------------------------------------
def _ref_forward(x_nchw, params):
    def conv_relu(x, w, b):
        xp = jnp.pad(x.astype(jnp.bfloat16), ((0, 0), (0, 0), (1, 1), (1, 1)),
                     mode="reflect")
        y = jax.lax.conv_general_dilated(
            xp, w.astype(jnp.bfloat16), window_strides=(1, 1), padding="VALID",
            dimension_numbers=("NCHW", "OIHW", "NCHW"),
            preferred_element_type=jnp.float32)
        return jax.nn.relu(y + b[None, :, None, None])

    y1 = conv_relu(x_nchw, params["w1"], params["b1"])
    y1 = y1.astype(jnp.bfloat16).astype(jnp.float32)   # bf16 intermediate
    y2 = conv_relu(y1, params["w2"], params["b2"])
    pooled = jax.lax.reduce_window(
        y2, -jnp.inf, jax.lax.max,
        window_dimensions=(1, 1, 2, 2), window_strides=(1, 1, 2, 2),
        padding="VALID")
    return pooled, y2


# ----------------------------------------------------------------------------
if __name__ == "__main__":
    key = jax.random.PRNGKey(0)
    kx, kp = jax.random.split(key)

    N, Cin, Cout, H, W = 2, 4, 8, 16, 16
    x = jax.random.normal(kx, (N, Cin, H, W), jnp.float32)
    params = init_params(kp, Cin, Cout)

    fwd = jax.jit(functools.partial(downsampling_forward, use_maxpool=True))
    pooled, skip = fwd(x, params)
    jax.block_until_ready((pooled, skip))

    assert pooled.shape == (N, Cout, H // 2, W // 2), pooled.shape
    assert skip.shape == (N, Cout, H, W), skip.shape
    assert pooled.dtype == jnp.float32 and skip.dtype == jnp.float32

    ref_pooled, ref_skip = _ref_forward(x, params)
    assert jnp.allclose(skip, ref_skip, atol=1e-2, rtol=1e-2), \
        float(jnp.max(jnp.abs(skip - ref_skip)))
    assert jnp.allclose(pooled, ref_pooled, atol=1e-2, rtol=1e-2), \
        float(jnp.max(jnp.abs(pooled - ref_pooled)))

    print("KERNEL_OK")
</pallas_src>

<mosaic_0001>
module attributes {stable_mosaic.version = 11 : i64} {
  func.func @_conv3x3_kernel(%arg0: i32, %arg1: i32, %arg2: memref<1x1x18x18x128xbf16, #tpu.memory_space<vmem>>, %arg3: memref<9x128x128xbf16, #tpu.memory_space<vmem>>, %arg4: memref<1x128xf32, #tpu.memory_space<vmem>>, %arg5: memref<1x16x16x128xbf16, #tpu.memory_space<vmem>>) attributes {dimension_semantics = [#tpu.dimension_semantics<parallel>, #tpu.dimension_semantics<parallel>], iteration_bounds = array<i64: 2, 1>, scalar_prefetch = 0 : i64, scratch_operands = 0 : i64, tpu.core_type = #tpu.core_type<tc>, window_params = [{transform_indices = @transform_0, window_bounds = array<i64: 1, 1, 18, 18, 128>}, {pipeline_mode = #tpu.pipeline_mode<synchronous>, transform_indices = @transform_1, window_bounds = array<i64: 9, 128, 128>}, {pipeline_mode = #tpu.pipeline_mode<synchronous>, transform_indices = @transform_2, window_bounds = array<i64: 1, 128>}, {transform_indices = @transform_3, window_bounds = array<i64: 1, 16, 16, 128>}]} {
    %c0 = arith.constant 0 : index
    %c0_0 = arith.constant 0 : index
    %c0_1 = arith.constant 0 : index
    %c0_2 = arith.constant 0 : index
    %c0_3 = arith.constant 0 : index
    %0 = vector.load %arg2[%c0, %c0_0, %c0_1, %c0_2, %c0_3] : memref<1x1x18x18x128xbf16, #tpu.memory_space<vmem>>, vector<1x1x16x16x128xbf16>
    %1 = vector.shape_cast %0 : vector<1x1x16x16x128xbf16> to vector<16x16x128xbf16>
    %2 = vector.shape_cast %1 : vector<16x16x128xbf16> to vector<256x128xbf16>
    %c0_4 = arith.constant 0 : index
    %c0_5 = arith.constant 0 : index
    %c0_6 = arith.constant 0 : index
    %3 = vector.load %arg3[%c0_4, %c0_5, %c0_6] : memref<9x128x128xbf16, #tpu.memory_space<vmem>>, vector<1x128x128xbf16>
    %4 = vector.shape_cast %3 : vector<1x128x128xbf16> to vector<128x128xbf16>
    %cst = arith.constant dense<0.000000e+00> : vector<256x128xf32>
    %5 = tpu.matmul %2, %4, %cst {dimension_numbers = #tpu.dot_dimension_numbers<[1], [0], [0], [1], [0, 0, 1, 1], [], []>} : vector<256x128xbf16>, vector<128x128xbf16>, vector<256x128xf32> -> vector<256x128xf32>
    %c0_7 = arith.constant 0 : index
    %c0_8 = arith.constant 0 : index
    %c0_9 = arith.constant 0 : index
    %c1 = arith.constant 1 : index
    %c0_10 = arith.constant 0 : index
    %6 = vector.load %arg2[%c0_7, %c0_8, %c0_9, %c1, %c0_10] : memref<1x1x18x18x128xbf16, #tpu.memory_space<vmem>>, vector<1x1x16x16x128xbf16>
    %7 = vector.shape_cast %6 : vector<1x1x16x16x128xbf16> to vector<16x16x128xbf16>
    %8 = vector.shape_cast %7 : vector<16x16x128xbf16> to vector<256x128xbf16>
    %c1_11 = arith.constant 1 : index
    %c0_12 = arith.constant 0 : index
    %c0_13 = arith.constant 0 : index
    %9 = vector.load %arg3[%c1_11, %c0_12, %c0_13] : memref<9x128x128xbf16, #tpu.memory_space<vmem>>, vector<1x128x128xbf16>
    %10 = vector.shape_cast %9 : vector<1x128x128xbf16> to vector<128x128xbf16>
    %cst_14 = arith.constant dense<0.000000e+00> : vector<256x128xf32>
    %11 = tpu.matmul %8, %10, %cst_14 {dimension_numbers = #tpu.dot_dimension_numbers<[1], [0], [0], [1], [0, 0, 1, 1], [], []>} : vector<256x128xbf16>, vector<128x128xbf16>, vector<256x128xf32> -> vector<256x128xf32>
    %12 = arith.addf %5, %11 : vector<256x128xf32>
    %c0_15 = arith.constant 0 : index
    %c0_16 = arith.constant 0 : index
    %c0_17 = arith.constant 0 : index
    %c2 = arith.constant 2 : index
    %c0_18 = arith.constant 0 : index
    %13 = vector.load %arg2[%c0_15, %c0_16, %c0_17, %c2, %c0_18] : memref<1x1x18x18x128xbf16, #tpu.memory_space<vmem>>, vector<1x1x16x16x128xbf16>
    %14 = vector.shape_cast %13 : vector<1x1x16x16x128xbf16> to vector<16x16x128xbf16>
    %15 = vector.shape_cast %14 : vector<16x16x128xbf16> to vector<256x128xbf16>
    %c2_19 = arith.constant 2 : index
    %c0_20 = arith.constant 0 : index
    %c0_21 = arith.constant 0 : index
    %16 = vector.load %arg3[%c2_19, %c0_20, %c0_21] : memref<9x128x128xbf16, #tpu.memory_space<vmem>>, vector<1x128x128xbf16>
    %17 = vector.shape_cast %16 : vector<1x128x128xbf16> to vector<128x128xbf16>
    %cst_22 = arith.constant dense<0.000000e+00> : vector<256x128xf32>
    %18 = tpu.matmul %15, %17, %cst_22 {dimension_numbers = #tpu.dot_dimension_numbers<[1], [0], [0], [1], [0, 0, 1, 1], [], []>} : vector<256x128xbf16>, vector<128x128xbf16>, vector<256x128xf32> -> vector<256x128xf32>
    %19 = arith.addf %12, %18 : vector<256x128xf32>
    %c0_23 = arith.constant 0 : index
    %c0_24 = arith.constant 0 : index
    %c1_25 = arith.constant 1 : index
    %c0_26 = arith.constant 0 : index
    %c0_27 = arith.constant 0 : index
    %20 = vector.load %arg2[%c0_23, %c0_24, %c1_25, %c0_26, %c0_27] : memref<1x1x18x18x128xbf16, #tpu.memory_space<vmem>>, vector<1x1x16x16x128xbf16>
    %21 = vector.shape_cast %20 : vector<1x1x16x16x128xbf16> to vector<16x16x128xbf16>
    %22 = vector.shape_cast %21 : vector<16x16x128xbf16> to vector<256x128xbf16>
    %c3 = arith.constant 3 : index
    %c0_28 = arith.constant 0 : index
    %c0_29 = arith.constant 0 : index
    %23 = vector.load %arg3[%c3, %c0_28, %c0_29] : memref<9x128x128xbf16, #tpu.memory_space<vmem>>, vector<1x128x128xbf16>
    %24 = vector.shape_cast %23 : vector<1x128x128xbf16> to vector<128x128xbf16>
    %cst_30 = arith.constant dense<0.000000e+00> : vector<256x128xf32>
    %25 = tpu.matmul %22, %24, %cst_30 {dimension_numbers = #tpu.dot_dimension_numbers<[1], [0], [0], [1], [0, 0, 1, 1], [], []>} : vector<256x128xbf16>, vector<128x128xbf16>, vector<256x128xf32> -> vector<256x128xf32>
    %26 = arith.addf %19, %25 : vector<256x128xf32>
    %c0_31 = arith.constant 0 : index
    %c0_32 = arith.constant 0 : index
    %c1_33 = arith.constant 1 : index
    %c1_34 = arith.constant 1 : index
    %c0_35 = arith.constant 0 : index
    %27 = vector.load %arg2[%c0_31, %c0_32, %c1_33, %c1_34, %c0_35] : memref<1x1x18x18x128xbf16, #tpu.memory_space<vmem>>, vector<1x1x16x16x128xbf16>
    %28 = vector.shape_cast %27 : vector<1x1x16x16x128xbf16> to vector<16x16x128xbf16>
    %29 = vector.shape_cast %28 : vector<16x16x128xbf16> to vector<256x128xbf16>
    %c4 = arith.constant 4 : index
    %c0_36 = arith.constant 0 : index
    %c0_37 = arith.constant 0 : index
    %30 = vector.load %arg3[%c4, %c0_36, %c0_37] : memref<9x128x128xbf16, #tpu.memory_space<vmem>>, vector<1x128x128xbf16>
    %31 = vector.shape_cast %30 : vector<1x128x128xbf16> to vector<128x128xbf16>
    %cst_38 = arith.constant dense<0.000000e+00> : vector<256x128xf32>
    %32 = tpu.matmul %29, %31, %cst_38 {dimension_numbers = #tpu.dot_dimension_numbers<[1], [0], [0], [1], [0, 0, 1, 1], [], []>} : vector<256x128xbf16>, vector<128x128xbf16>, vector<256x128xf32> -> vector<256x128xf32>
    %33 = arith.addf %26, %32 : vector<256x128xf32>
    %c0_39 = arith.constant 0 : index
    %c0_40 = arith.constant 0 : index
    %c1_41 = arith.constant 1 : index
    %c2_42 = arith.constant 2 : index
    %c0_43 = arith.constant 0 : index
    %34 = vector.load %arg2[%c0_39, %c0_40, %c1_41, %c2_42, %c0_43] : memref<1x1x18x18x128xbf16, #tpu.memory_space<vmem>>, vector<1x1x16x16x128xbf16>
    %35 = vector.shape_cast %34 : vector<1x1x16x16x128xbf16> to vector<16x16x128xbf16>
    %36 = vector.shape_cast %35 : vector<16x16x128xbf16> to vector<256x128xbf16>
    %c5 = arith.constant 5 : index
    %c0_44 = arith.constant 0 : index
    %c0_45 = arith.constant 0 : index
    %37 = vector.load %arg3[%c5, %c0_44, %c0_45] : memref<9x128x128xbf16, #tpu.memory_space<vmem>>, vector<1x128x128xbf16>
    %38 = vector.shape_cast %37 : vector<1x128x128xbf16> to vector<128x128xbf16>
    %cst_46 = arith.constant dense<0.000000e+00> : vector<256x128xf32>
    %39 = tpu.matmul %36, %38, %cst_46 {dimension_numbers = #tpu.dot_dimension_numbers<[1], [0], [0], [1], [0, 0, 1, 1], [], []>} : vector<256x128xbf16>, vector<128x128xbf16>, vector<256x128xf32> -> vector<256x128xf32>
    %40 = arith.addf %33, %39 : vector<256x128xf32>
    %c0_47 = arith.constant 0 : index
    %c0_48 = arith.constant 0 : index
    %c2_49 = arith.constant 2 : index
    %c0_50 = arith.constant 0 : index
    %c0_51 = arith.constant 0 : index
    %41 = vector.load %arg2[%c0_47, %c0_48, %c2_49, %c0_50, %c0_51] : memref<1x1x18x18x128xbf16, #tpu.memory_space<vmem>>, vector<1x1x16x16x128xbf16>
    %42 = vector.shape_cast %41 : vector<1x1x16x16x128xbf16> to vector<16x16x128xbf16>
    %43 = vector.shape_cast %42 : vector<16x16x128xbf16> to vector<256x128xbf16>
    %c6 = arith.constant 6 : index
    %c0_52 = arith.constant 0 : index
    %c0_53 = arith.constant 0 : index
    %44 = vector.load %arg3[%c6, %c0_52, %c0_53] : memref<9x128x128xbf16, #tpu.memory_space<vmem>>, vector<1x128x128xbf16>
    %45 = vector.shape_cast %44 : vector<1x128x128xbf16> to vector<128x128xbf16>
    %cst_54 = arith.constant dense<0.000000e+00> : vector<256x128xf32>
    %46 = tpu.matmul %43, %45, %cst_54 {dimension_numbers = #tpu.dot_dimension_numbers<[1], [0], [0], [1], [0, 0, 1, 1], [], []>} : vector<256x128xbf16>, vector<128x128xbf16>, vector<256x128xf32> -> vector<256x128xf32>
    %47 = arith.addf %40, %46 : vector<256x128xf32>
    %c0_55 = arith.constant 0 : index
    %c0_56 = arith.constant 0 : index
    %c2_57 = arith.constant 2 : index
    %c1_58 = arith.constant 1 : index
    %c0_59 = arith.constant 0 : index
    %48 = vector.load %arg2[%c0_55, %c0_56, %c2_57, %c1_58, %c0_59] : memref<1x1x18x18x128xbf16, #tpu.memory_space<vmem>>, vector<1x1x16x16x128xbf16>
    %49 = vector.shape_cast %48 : vector<1x1x16x16x128xbf16> to vector<16x16x128xbf16>
    %50 = vector.shape_cast %49 : vector<16x16x128xbf16> to vector<256x128xbf16>
    %c7 = arith.constant 7 : index
    %c0_60 = arith.constant 0 : index
    %c0_61 = arith.constant 0 : index
    %51 = vector.load %arg3[%c7, %c0_60, %c0_61] : memref<9x128x128xbf16, #tpu.memory_space<vmem>>, vector<1x128x128xbf16>
    %52 = vector.shape_cast %51 : vector<1x128x128xbf16> to vector<128x128xbf16>
    %cst_62 = arith.constant dense<0.000000e+00> : vector<256x128xf32>
    %53 = tpu.matmul %50, %52, %cst_62 {dimension_numbers = #tpu.dot_dimension_numbers<[1], [0], [0], [1], [0, 0, 1, 1], [], []>} : vector<256x128xbf16>, vector<128x128xbf16>, vector<256x128xf32> -> vector<256x128xf32>
    %54 = arith.addf %47, %53 : vector<256x128xf32>
    %c0_63 = arith.constant 0 : index
    %c0_64 = arith.constant 0 : index
    %c2_65 = arith.constant 2 : index
    %c2_66 = arith.constant 2 : index
    %c0_67 = arith.constant 0 : index
    %55 = vector.load %arg2[%c0_63, %c0_64, %c2_65, %c2_66, %c0_67] : memref<1x1x18x18x128xbf16, #tpu.memory_space<vmem>>, vector<1x1x16x16x128xbf16>
    %56 = vector.shape_cast %55 : vector<1x1x16x16x128xbf16> to vector<16x16x128xbf16>
    %57 = vector.shape_cast %56 : vector<16x16x128xbf16> to vector<256x128xbf16>
    %c8 = arith.constant 8 : index
    %c0_68 = arith.constant 0 : index
    %c0_69 = arith.constant 0 : index
    %58 = vector.load %arg3[%c8, %c0_68, %c0_69] : memref<9x128x128xbf16, #tpu.memory_space<vmem>>, vector<1x128x128xbf16>
    %59 = vector.shape_cast %58 : vector<1x128x128xbf16> to vector<128x128xbf16>
    %cst_70 = arith.constant dense<0.000000e+00> : vector<256x128xf32>
    %60 = tpu.matmul %57, %59, %cst_70 {dimension_numbers = #tpu.dot_dimension_numbers<[1], [0], [0], [1], [0, 0, 1, 1], [], []>} : vector<256x128xbf16>, vector<128x128xbf16>, vector<256x128xf32> -> vector<256x128xf32>
    %61 = arith.addf %54, %60 : vector<256x128xf32>
    %c0_71 = arith.constant 0 : index
    %c0_72 = arith.constant 0 : index
    %62 = vector.load %arg4[%c0_71, %c0_72] : memref<1x128xf32, #tpu.memory_space<vmem>>, vector<1x128xf32>
    %63 = vector.broadcast %62 : vector<1x128xf32> to vector<256x128xf32>
    %64 = arith.addf %61, %63 : vector<256x128xf32>
    %cst_73 = arith.constant 0.000000e+00 : f32
    %65 = vector.broadcast %cst_73 : f32 to vector<256x128xf32>
    %66 = arith.maximumf %64, %65 : vector<256x128xf32>
    %67 = vector.shape_cast %66 : vector<256x128xf32> to vector<16x16x128xf32>
    %68 = arith.truncf %67 : vector<16x16x128xf32> to vector<16x16x128xbf16>
    %c0_74 = arith.constant 0 : index
    %c0_75 = arith.constant 0 : index
    %c0_76 = arith.constant 0 : index
    %c0_77 = arith.constant 0 : index
    %69 = vector.load %arg5[%c0_74, %c0_75, %c0_76, %c0_77] : memref<1x16x16x128xbf16, #tpu.memory_space<vmem>>, vector<1x16x16x128xbf16>
    %70 = vector.shape_cast %69 : vector<1x16x16x128xbf16> to vector<16x16x128xbf16>
    %71 = vector.shape_cast %68 : vector<16x16x128xbf16> to vector<1x16x16x128xbf16>
    tpu.vector_store %arg5[%c0_74, %c0_75, %c0_76, %c0_77], %71 {strides = array<i32>} : memref<1x16x16x128xbf16, #tpu.memory_space<vmem>>, vector<1x16x16x128xbf16>,
    return
  }
  func.func @transform_0(%arg0: i32, %arg1: i32) -> (i32, i32, i32, i32, i32) {
    %c0_i32 = arith.constant 0 : i32
    %c0_i32_0 = arith.constant 0 : i32
    %c0_i32_1 = arith.constant 0 : i32
    %c0_i32_2 = arith.constant 0 : i32
    return %arg0, %arg1, %c0_i32, %c0_i32_0, %c0_i32_1 : i32, i32, i32, i32, i32
  }
  func.func @transform_1(%arg0: i32, %arg1: i32) -> (i32, i32, i32) {
    %c0_i32 = arith.constant 0 : i32
    %c0_i32_0 = arith.constant 0 : i32
    %c0_i32_1 = arith.constant 0 : i32
    %c0_i32_2 = arith.constant 0 : i32
    return %c0_i32, %c0_i32_0, %c0_i32_1 : i32, i32, i32
  }
  func.func @transform_2(%arg0: i32, %arg1: i32) -> (i32, i32) {
    %c0_i32 = arith.constant 0 : i32
    %c0_i32_0 = arith.constant 0 : i32
    %c0_i32_1 = arith.constant 0 : i32
    return %c0_i32, %c0_i32_0 : i32, i32
  }
  func.func @transform_3(%arg0: i32, %arg1: i32) -> (i32, i32, i32, i32) {
    %c0_i32 = arith.constant 0 : i32
    %c0_i32_0 = arith.constant 0 : i32
    %c0_i32_1 = arith.constant 0 : i32
    return %arg0, %arg1, %c0_i32, %c0_i32_0 : i32, i32, i32, i32
  }
}

module attributes {stable_mosaic.version = 11 : i64} {
  func.func @_conv3x3_kernel(%arg0: i32, %arg1: i32, %arg2: memref<1x1x18x18x128xbf16, #tpu.memory_space<vmem>>, %arg3: memref<9x128x128xbf16, #tpu.memory_space<vmem>>, %arg4: memref<1x128xf32, #tpu.memory_space<vmem>>, %arg5: memref<1x16x16x128xf32, #tpu.memory_space<vmem>>, %arg6: memref<1x8x8x128xf32, #tpu.memory_space<vmem>>) attributes {dimension_semantics = [#tpu.dimension_semantics<parallel>, #tpu.dimension_semantics<parallel>], iteration_bounds = array<i64: 2, 1>, scalar_prefetch = 0 : i64, scratch_operands = 0 : i64, tpu.core_type = #tpu.core_type<tc>, window_params = [{transform_indices = @transform_0, window_bounds = array<i64: 1, 1, 18, 18, 128>}, {pipeline_mode = #tpu.pipeline_mode<synchronous>, transform_indices = @transform_1, window_bounds = array<i64: 9, 128, 128>}, {pipeline_mode = #tpu.pipeline_mode<synchronous>, transform_indices = @transform_2, window_bounds = array<i64: 1, 128>}, {transform_indices = @transform_3, window_bounds = array<i64: 1, 16, 16, 128>}, {transform_indices = @transform_4, window_bounds = array<i64: 1, 8, 8, 128>}]} {
    %c0 = arith.constant 0 : index
    %c0_0 = arith.constant 0 : index
    %c0_1 = arith.constant 0 : index
    %c0_2 = arith.constant 0 : index
    %c0_3 = arith.constant 0 : index
    %0 = vector.load %arg2[%c0, %c0_0, %c0_1, %c0_2, %c0_3] : memref<1x1x18x18x128xbf16, #tpu.memory_space<vmem>>, vector<1x1x16x16x128xbf16>
    %1 = vector.shape_cast %0 : vector<1x1x16x16x128xbf16> to vector<16x16x128xbf16>
    %2 = vector.shape_cast %1 : vector<16x16x128xbf16> to vector<256x128xbf16>
    %c0_4 = arith.constant 0 : index
    %c0_5 = arith.constant 0 : index
    %c0_6 = arith.constant 0 : index
    %3 = vector.load %arg3[%c0_4, %c0_5, %c0_6] : memref<9x128x128xbf16, #tpu.memory_space<vmem>>, vector<1x128x128xbf16>
    %4 = vector.shape_cast %3 : vector<1x128x128xbf16> to vector<128x128xbf16>
    %cst = arith.constant dense<0.000000e+00> : vector<256x128xf32>
    %5 = tpu.matmul %2, %4, %cst {dimension_numbers = #tpu.dot_dimension_numbers<[1], [0], [0], [1], [0, 0, 1, 1], [], []>} : vector<256x128xbf16>, vector<128x128xbf16>, vector<256x128xf32> -> vector<256x128xf32>
    %c0_7 = arith.constant 0 : index
    %c0_8 = arith.constant 0 : index
    %c0_9 = arith.constant 0 : index
    %c1 = arith.constant 1 : index
    %c0_10 = arith.constant 0 : index
    %6 = vector.load %arg2[%c0_7, %c0_8, %c0_9, %c1, %c0_10] : memref<1x1x18x18x128xbf16, #tpu.memory_space<vmem>>, vector<1x1x16x16x128xbf16>
    %7 = vector.shape_cast %6 : vector<1x1x16x16x128xbf16> to vector<16x16x128xbf16>
    %8 = vector.shape_cast %7 : vector<16x16x128xbf16> to vector<256x128xbf16>
    %c1_11 = arith.constant 1 : index
    %c0_12 = arith.constant 0 : index
    %c0_13 = arith.constant 0 : index
    %9 = vector.load %arg3[%c1_11, %c0_12, %c0_13] : memref<9x128x128xbf16, #tpu.memory_space<vmem>>, vector<1x128x128xbf16>
    %10 = vector.shape_cast %9 : vector<1x128x128xbf16> to vector<128x128xbf16>
    %cst_14 = arith.constant dense<0.000000e+00> : vector<256x128xf32>
    %11 = tpu.matmul %8, %10, %cst_14 {dimension_numbers = #tpu.dot_dimension_numbers<[1], [0], [0], [1], [0, 0, 1, 1], [], []>} : vector<256x128xbf16>, vector<128x128xbf16>, vector<256x128xf32> -> vector<256x128xf32>
    %12 = arith.addf %5, %11 : vector<256x128xf32>
    %c0_15 = arith.constant 0 : index
    %c0_16 = arith.constant 0 : index
    %c0_17 = arith.constant 0 : index
    %c2 = arith.constant 2 : index
    %c0_18 = arith.constant 0 : index
    %13 = vector.load %arg2[%c0_15, %c0_16, %c0_17, %c2, %c0_18] : memref<1x1x18x18x128xbf16, #tpu.memory_space<vmem>>, vector<1x1x16x16x128xbf16>
    %14 = vector.shape_cast %13 : vector<1x1x16x16x128xbf16> to vector<16x16x128xbf16>
    %15 = vector.shape_cast %14 : vector<16x16x128xbf16> to vector<256x128xbf16>
    %c2_19 = arith.constant 2 : index
    %c0_20 = arith.constant 0 : index
    %c0_21 = arith.constant 0 : index
    %16 = vector.load %arg3[%c2_19, %c0_20, %c0_21] : memref<9x128x128xbf16, #tpu.memory_space<vmem>>, vector<1x128x128xbf16>
    %17 = vector.shape_cast %16 : vector<1x128x128xbf16> to vector<128x128xbf16>
    %cst_22 = arith.constant dense<0.000000e+00> : vector<256x128xf32>
    %18 = tpu.matmul %15, %17, %cst_22 {dimension_numbers = #tpu.dot_dimension_numbers<[1], [0], [0], [1], [0, 0, 1, 1], [], []>} : vector<256x128xbf16>, vector<128x128xbf16>, vector<256x128xf32> -> vector<256x128xf32>
    %19 = arith.addf %12, %18 : vector<256x128xf32>
    %c0_23 = arith.constant 0 : index
    %c0_24 = arith.constant 0 : index
    %c1_25 = arith.constant 1 : index
    %c0_26 = arith.constant 0 : index
    %c0_27 = arith.constant 0 : index
    %20 = vector.load %arg2[%c0_23, %c0_24, %c1_25, %c0_26, %c0_27] : memref<1x1x18x18x128xbf16, #tpu.memory_space<vmem>>, vector<1x1x16x16x128xbf16>
    %21 = vector.shape_cast %20 : vector<1x1x16x16x128xbf16> to vector<16x16x128xbf16>
    %22 = vector.shape_cast %21 : vector<16x16x128xbf16> to vector<256x128xbf16>
    %c3 = arith.constant 3 : index
    %c0_28 = arith.constant 0 : index
    %c0_29 = arith.constant 0 : index
    %23 = vector.load %arg3[%c3, %c0_28, %c0_29] : memref<9x128x128xbf16, #tpu.memory_space<vmem>>, vector<1x128x128xbf16>
    %24 = vector.shape_cast %23 : vector<1x128x128xbf16> to vector<128x128xbf16>
    %cst_30 = arith.constant dense<0.000000e+00> : vector<256x128xf32>
    %25 = tpu.matmul %22, %24, %cst_30 {dimension_numbers = #tpu.dot_dimension_numbers<[1], [0], [0], [1], [0, 0, 1, 1], [], []>} : vector<256x128xbf16>, vector<128x128xbf16>, vector<256x128xf32> -> vector<256x128xf32>
    %26 = arith.addf %19, %25 : vector<256x128xf32>
    %c0_31 = arith.constant 0 : index
    %c0_32 = arith.constant 0 : index
    %c1_33 = arith.constant 1 : index
    %c1_34 = arith.constant 1 : index
    %c0_35 = arith.constant 0 : index
    %27 = vector.load %arg2[%c0_31, %c0_32, %c1_33, %c1_34, %c0_35] : memref<1x1x18x18x128xbf16, #tpu.memory_space<vmem>>, vector<1x1x16x16x128xbf16>
    %28 = vector.shape_cast %27 : vector<1x1x16x16x128xbf16> to vector<16x16x128xbf16>
    %29 = vector.shape_cast %28 : vector<16x16x128xbf16> to vector<256x128xbf16>
    %c4 = arith.constant 4 : index
    %c0_36 = arith.constant 0 : index
    %c0_37 = arith.constant 0 : index
    %30 = vector.load %arg3[%c4, %c0_36, %c0_37] : memref<9x128x128xbf16, #tpu.memory_space<vmem>>, vector<1x128x128xbf16>
    %31 = vector.shape_cast %30 : vector<1x128x128xbf16> to vector<128x128xbf16>
    %cst_38 = arith.constant dense<0.000000e+00> : vector<256x128xf32>
    %32 = tpu.matmul %29, %31, %cst_38 {dimension_numbers = #tpu.dot_dimension_numbers<[1], [0], [0], [1], [0, 0, 1, 1], [], []>} : vector<256x128xbf16>, vector<128x128xbf16>, vector<256x128xf32> -> vector<256x128xf32>
    %33 = arith.addf %26, %32 : vector<256x128xf32>
    %c0_39 = arith.constant 0 : index
    %c0_40 = arith.constant 0 : index
    %c1_41 = arith.constant 1 : index
    %c2_42 = arith.constant 2 : index
    %c0_43 = arith.constant 0 : index
    %34 = vector.load %arg2[%c0_39, %c0_40, %c1_41, %c2_42, %c0_43] : memref<1x1x18x18x128xbf16, #tpu.memory_space<vmem>>, vector<1x1x16x16x128xbf16>
    %35 = vector.shape_cast %34 : vector<1x1x16x16x128xbf16> to vector<16x16x128xbf16>
    %36 = vector.shape_cast %35 : vector<16x16x128xbf16> to vector<256x128xbf16>
    %c5 = arith.constant 5 : index
    %c0_44 = arith.constant 0 : index
    %c0_45 = arith.constant 0 : index
    %37 = vector.load %arg3[%c5, %c0_44, %c0_45] : memref<9x128x128xbf16, #tpu.memory_space<vmem>>, vector<1x128x128xbf16>
    %38 = vector.shape_cast %37 : vector<1x128x128xbf16> to vector<128x128xbf16>
    %cst_46 = arith.constant dense<0.000000e+00> : vector<256x128xf32>
    %39 = tpu.matmul %36, %38, %cst_46 {dimension_numbers = #tpu.dot_dimension_numbers<[1], [0], [0], [1], [0, 0, 1, 1], [], []>} : vector<256x128xbf16>, vector<128x128xbf16>, vector<256x128xf32> -> vector<256x128xf32>
    %40 = arith.addf %33, %39 : vector<256x128xf32>
    %c0_47 = arith.constant 0 : index
    %c0_48 = arith.constant 0 : index
    %c2_49 = arith.constant 2 : index
    %c0_50 = arith.constant 0 : index
    %c0_51 = arith.constant 0 : index
    %41 = vector.load %arg2[%c0_47, %c0_48, %c2_49, %c0_50, %c0_51] : memref<1x1x18x18x128xbf16, #tpu.memory_space<vmem>>, vector<1x1x16x16x128xbf16>
    %42 = vector.shape_cast %41 : vector<1x1x16x16x128xbf16> to vector<16x16x128xbf16>
    %43 = vector.shape_cast %42 : vector<16x16x128xbf16> to vector<256x128xbf16>
    %c6 = arith.constant 6 : index
    %c0_52 = arith.constant 0 : index
    %c0_53 = arith.constant 0 : index
    %44 = vector.load %arg3[%c6, %c0_52, %c0_53] : memref<9x128x128xbf16, #tpu.memory_space<vmem>>, vector<1x128x128xbf16>
    %45 = vector.shape_cast %44 : vector<1x128x128xbf16> to vector<128x128xbf16>
    %cst_54 = arith.constant dense<0.000000e+00> : vector<256x128xf32>
    %46 = tpu.matmul %43, %45, %cst_54 {dimension_numbers = #tpu.dot_dimension_numbers<[1], [0], [0], [1], [0, 0, 1, 1], [], []>} : vector<256x128xbf16>, vector<128x128xbf16>, vector<256x128xf32> -> vector<256x128xf32>
    %47 = arith.addf %40, %46 : vector<256x128xf32>
    %c0_55 = arith.constant 0 : index
    %c0_56 = arith.constant 0 : index
    %c2_57 = arith.constant 2 : index
    %c1_58 = arith.constant 1 : index
    %c0_59 = arith.constant 0 : index
    %48 = vector.load %arg2[%c0_55, %c0_56, %c2_57, %c1_58, %c0_59] : memref<1x1x18x18x128xbf16, #tpu.memory_space<vmem>>, vector<1x1x16x16x128xbf16>
    %49 = vector.shape_cast %48 : vector<1x1x16x16x128xbf16> to vector<16x16x128xbf16>
    %50 = vector.shape_cast %49 : vector<16x16x128xbf16> to vector<256x128xbf16>
    %c7 = arith.constant 7 : index
    %c0_60 = arith.constant 0 : index
    %c0_61 = arith.constant 0 : index
    %51 = vector.load %arg3[%c7, %c0_60, %c0_61] : memref<9x128x128xbf16, #tpu.memory_space<vmem>>, vector<1x128x128xbf16>
    %52 = vector.shape_cast %51 : vector<1x128x128xbf16> to vector<128x128xbf16>
    %cst_62 = arith.constant dense<0.000000e+00> : vector<256x128xf32>
    %53 = tpu.matmul %50, %52, %cst_62 {dimension_numbers = #tpu.dot_dimension_numbers<[1], [0], [0], [1], [0, 0, 1, 1], [], []>} : vector<256x128xbf16>, vector<128x128xbf16>, vector<256x128xf32> -> vector<256x128xf32>
    %54 = arith.addf %47, %53 : vector<256x128xf32>
    %c0_63 = arith.constant 0 : index
    %c0_64 = arith.constant 0 : index
    %c2_65 = arith.constant 2 : index
    %c2_66 = arith.constant 2 : index
    %c0_67 = arith.constant 0 : index
    %55 = vector.load %arg2[%c0_63, %c0_64, %c2_65, %c2_66, %c0_67] : memref<1x1x18x18x128xbf16, #tpu.memory_space<vmem>>, vector<1x1x16x16x128xbf16>
    %56 = vector.shape_cast %55 : vector<1x1x16x16x128xbf16> to vector<16x16x128xbf16>
    %57 = vector.shape_cast %56 : vector<16x16x128xbf16> to vector<256x128xbf16>
    %c8 = arith.constant 8 : index
    %c0_68 = arith.constant 0 : index
    %c0_69 = arith.constant 0 : index
    %58 = vector.load %arg3[%c8, %c0_68, %c0_69] : memref<9x128x128xbf16, #tpu.memory_space<vmem>>, vector<1x128x128xbf16>
    %59 = vector.shape_cast %58 : vector<1x128x128xbf16> to vector<128x128xbf16>
    %cst_70 = arith.constant dense<0.000000e+00> : vector<256x128xf32>
    %60 = tpu.matmul %57, %59, %cst_70 {dimension_numbers = #tpu.dot_dimension_numbers<[1], [0], [0], [1], [0, 0, 1, 1], [], []>} : vector<256x128xbf16>, vector<128x128xbf16>, vector<256x128xf32> -> vector<256x128xf32>
    %61 = arith.addf %54, %60 : vector<256x128xf32>
    %c0_71 = arith.constant 0 : index
    %c0_72 = arith.constant 0 : index
    %62 = vector.load %arg4[%c0_71, %c0_72] : memref<1x128xf32, #tpu.memory_space<vmem>>, vector<1x128xf32>
    %63 = vector.broadcast %62 : vector<1x128xf32> to vector<256x128xf32>
    %64 = arith.addf %61, %63 : vector<256x128xf32>
    %cst_73 = arith.constant 0.000000e+00 : f32
    %65 = vector.broadcast %cst_73 : f32 to vector<256x128xf32>
    %66 = arith.maximumf %64, %65 : vector<256x128xf32>
    %67 = vector.shape_cast %66 : vector<256x128xf32> to vector<16x16x128xf32>
    %c0_74 = arith.constant 0 : index
    %c0_75 = arith.constant 0 : index
    %c0_76 = arith.constant 0 : index
    %c0_77 = arith.constant 0 : index
    %68 = vector.load %arg5[%c0_74, %c0_75, %c0_76, %c0_77] : memref<1x16x16x128xf32, #tpu.memory_space<vmem>>, vector<1x16x16x128xf32>
    %69 = vector.shape_cast %68 : vector<1x16x16x128xf32> to vector<16x16x128xf32>
    %70 = vector.shape_cast %67 : vector<16x16x128xf32> to vector<1x16x16x128xf32>
    tpu.vector_store %arg5[%c0_74, %c0_75, %c0_76, %c0_77], %70 {strides = array<i32>} : memref<1x16x16x128xf32, #tpu.memory_space<vmem>>, vector<1x16x16x128xf32>,
    %c0_78 = arith.constant 0 : index
    %c0_79 = arith.constant 0 : index
    %c0_80 = arith.constant 0 : index
    %c0_81 = arith.constant 0 : index
    %71 = tpu.strided_load %arg5[%c0_78, %c0_79, %c0_80, %c0_81] {strides = array<i32: 1, 1, 2, 1>} : memref<1x16x16x128xf32, #tpu.memory_space<vmem>>, vector<1x16x8x128xf32>
    %72 = vector.shape_cast %71 : vector<1x16x8x128xf32> to vector<16x8x128xf32>
    %c0_82 = arith.constant 0 : index
    %c0_83 = arith.constant 0 : index
    %c1_84 = arith.constant 1 : index
    %c0_85 = arith.constant 0 : index
    %73 = tpu.strided_load %arg5[%c0_82, %c0_83, %c1_84, %c0_85] {strides = array<i32: 1, 1, 2, 1>} : memref<1x16x16x128xf32, #tpu.memory_space<vmem>>, vector<1x16x8x128xf32>
    %74 = vector.shape_cast %73 : vector<1x16x8x128xf32> to vector<16x8x128xf32>
    %75 = arith.maximumf %72, %74 : vector<16x8x128xf32>
    %76 = vector.shape_cast %75 : vector<16x8x128xf32> to vector<8x2x8x128xf32>
    %77 = vector.extract_strided_slice %76 {offsets = [0, 0, 0, 0], sizes = [8, 1, 8, 128], strides = [1, 1, 1, 1]} : vector<8x2x8x128xf32> to vector<8x1x8x128xf32>
    %78 = vector.shape_cast %77 : vector<8x1x8x128xf32> to vector<8x8x128xf32>
    %79 = vector.extract_strided_slice %76 {offsets = [0, 1, 0, 0], sizes = [8, 1, 8, 128], strides = [1, 1, 1, 1]} : vector<8x2x8x128xf32> to vector<8x1x8x128xf32>
    %80 = vector.shape_cast %79 : vector<8x1x8x128xf32> to vector<8x8x128xf32>
    %81 = arith.maximumf %78, %80 : vector<8x8x128xf32>
    %c0_86 = arith.constant 0 : index
    %c0_87 = arith.constant 0 : index
    %c0_88 = arith.constant 0 : index
    %c0_89 = arith.constant 0 : index
    %82 = vector.load %arg6[%c0_86, %c0_87, %c0_88, %c0_89] : memref<1x8x8x128xf32, #tpu.memory_space<vmem>>, vector<1x8x8x128xf32>
    %83 = vector.shape_cast %82 : vector<1x8x8x128xf32> to vector<8x8x128xf32>
    %84 = vector.shape_cast %81 : vector<8x8x128xf32> to vector<1x8x8x128xf32>
    tpu.vector_store %arg6[%c0_86, %c0_87, %c0_88, %c0_89], %84 {strides = array<i32>} : memref<1x8x8x128xf32, #tpu.memory_space<vmem>>, vector<1x8x8x128xf32>,
    return
  }
  func.func @transform_0(%arg0: i32, %arg1: i32) -> (i32, i32, i32, i32, i32) {
    %c0_i32 = arith.constant 0 : i32
    %c0_i32_0 = arith.constant 0 : i32
    %c0_i32_1 = arith.constant 0 : i32
    %c0_i32_2 = arith.constant 0 : i32
    return %arg0, %arg1, %c0_i32, %c0_i32_0, %c0_i32_1 : i32, i32, i32, i32, i32
  }
  func.func @transform_1(%arg0: i32, %arg1: i32) -> (i32, i32, i32) {
    %c0_i32 = arith.constant 0 : i32
    %c0_i32_0 = arith.constant 0 : i32
    %c0_i32_1 = arith.constant 0 : i32
    %c0_i32_2 = arith.constant 0 : i32
    return %c0_i32, %c0_i32_0, %c0_i32_1 : i32, i32, i32
  }
  func.func @transform_2(%arg0: i32, %arg1: i32) -> (i32, i32) {
    %c0_i32 = arith.constant 0 : i32
    %c0_i32_0 = arith.constant 0 : i32
    %c0_i32_1 = arith.constant 0 : i32
    return %c0_i32, %c0_i32_0 : i32, i32
  }
  func.func @transform_3(%arg0: i32, %arg1: i32) -> (i32, i32, i32, i32) {
    %c0_i32 = arith.constant 0 : i32
    %c0_i32_0 = arith.constant 0 : i32
    %c0_i32_1 = arith.constant 0 : i32
    return %arg0, %arg1, %c0_i32, %c0_i32_0 : i32, i32, i32, i32
  }
  func.func @transform_4(%arg0: i32, %arg1: i32) -> (i32, i32, i32, i32) {
    %c0_i32 = arith.constant 0 : i32
    %c0_i32_0 = arith.constant 0 : i32
    %c0_i32_1 = arith.constant 0 : i32
    return %arg0, %arg1, %c0_i32, %c0_i32_0 : i32, i32, i32, i32
  }
}

</mosaic_0001>

<llo_original>
// kernel: downsampling_forward.2
$region0: #{downsampling_forward.2}
  #allocation0 [shape = 'u32[]', space=smem, size = 0x4, offset = 0x4, fixed_abs, tag = 'smem constant byte address 0x4 - core index']
  #allocation1 [shape = 'u32[144,128]{1,0:T(1,128)}', space=vmem, size = 0x12000, scoped, tag = 'internal scratch']
  %s0 = inlined_call_operand.vmem [shape: bf16[2,1,18,18,128], index: 0, kind: input, shape index: {}]
  %s1 = inlined_call_operand.vmem [shape: bf16[9,128,128], index: 1, kind: input, shape index: {}]
  %s2 = inlined_call_operand.vmem [shape: f32[1,128], index: 2, kind: input, shape index: {}]
  %s3 = inlined_call_operand.vmem [shape: bf16[2,16,16,128], index: 3, kind: output, shape index: {}]
  %s4 = sld [smem:[#allocation0]]
  $region45: #{downsampling_forward.2} parent=0
    _
  %s6 = ssub.s32 1, %s4
  %s7 = scalar_select 0, %s6, %s4
  loop: start=0, step=1, limit=4
  $region2: #{downsampling_forward.2} parent=0 // loop_pre_header
    _
  $region3: #{downsampling_forward.2} parent=0 // loop_header
    %s9 = sphi 0, %s13
    %p10 = scmp.ge.s32.totalorder %s9, 4
    %s16 = sphi 0, %s28
    %s17 = sphi 0, %s24
    %s18 = sphi 0, %s16
    %s19 = sphi 0, %s17
    %s20 = sphi 0, %s18
    %s21 = sphi 0, %s19
    %s33 = sphi 0, %s35
    %s36 = sphi 0, %s33
    %s37 = sphi 0, %s36
    %s53 = sphi 0, %s37
    %s57 = sphi 0, %s57
    %s59 = sphi 0, %s57
    %s60 = sphi 0, %s59
    %s74 = sphi 0, %s60
    %s78 = sphi 0, %s78
    %s80 = sphi 0, %s78
    %s81 = sphi 0, %s80
    %s95 = sphi 0, %s81
    %s103 = sphi 0, %s105
    %s106 = sphi 0, %s103
    %s107 = sphi 0, %s106
    %s123 = sphi 0, %s107
  $region4: #{downsampling_forward.2} parent=0 // loop_header_branch
    %12 = sbr.rel (%p10) target = $region8
  $region5: #{downsampling_forward.2} parent=0 // loop_body
    %s14 = ssub.s32 %s9, 1
    %s15 = ssub.s32 %s9, 2
    %s22 = sadd.s32 1, %s17
    %p23 = scmp.ge.s32.totalorder %s22, 1
    %s24 = scalar_select %p23, 0, %s22
    %s25 = sadd.s32 1, %s16
    %s26 = scalar_select %p23, %s25, %s16
    %p27 = scmp.ge.s32.totalorder %s26, 2
    %s28 = scalar_select %p27, 0, %s26
    %s29 = ssub.s32 %s16, %s28
    %s30 = ssub.s32 %s17, %s24
    %s31 = sor.u32 %s29, %s30
    %p32 = scmp.eq.s32.totalorder %s31, 0
    %s34 = sadd.s32 %s33, 1
    %s35 = scalar_select %p32, %s33, %s34
    %p38 = pneg %p32
    %p39 = scmp.eq.s32.totalorder %s9, 1
    %p40 = por %p38, %p39
    %p41 = scmp.ne.s32.totalorder %s33, %s36
    %p42 = scmp.eq.s32.totalorder %s9, 0
    %p43 = por %p41, %p42
    %p44 = scmp.ne.s32.totalorder %s33, %s36
    %p45 = scmp.eq.s32.totalorder %s14, 1
    %p46 = por %p44, %p45
    %p47 = scmp.ne.s32.totalorder %s36, %s37
    %p48 = scmp.eq.s32.totalorder %s14, 0
    %p49 = por %p47, %p48
    %p50 = scmp.ne.s32.totalorder %s36, %s37
    %p51 = scmp.eq.s32.totalorder %s15, 1
    %p52 = por %p50, %p51
    %p54 = scmp.ne.s32.totalorder %s37, %s53
    %p55 = scmp.eq.s32.totalorder %s15, 0
    %p56 = por %p54, %p55
    %s58 = sadd.s32 %s57, 1
    %p61 = scmp.eq.s32.totalorder %s9, 1
    %p62 = scmp.ne.s32.totalorder %s57, %s59
    %p63 = scmp.eq.s32.totalorder %s9, 0
    %p64 = por %p62, %p63
    %p65 = scmp.ne.s32.totalorder %s57, %s59
    %p66 = scmp.eq.s32.totalorder %s14, 1
    %p67 = por %p65, %p66
    %p68 = scmp.ne.s32.totalorder %s59, %s60
    %p69 = scmp.eq.s32.totalorder %s14, 0
    %p70 = por %p68, %p69
    %p71 = scmp.ne.s32.totalorder %s59, %s60
    %p72 = scmp.eq.s32.totalorder %s15, 1
    %p73 = por %p71, %p72
    %p75 = scmp.ne.s32.totalorder %s60, %s74
    %p76 = scmp.eq.s32.totalorder %s15, 0
    %p77 = por %p75, %p76
    %s79 = sadd.s32 %s78, 1
    %p82 = scmp.eq.s32.totalorder %s9, 1
    %p83 = scmp.ne.s32.totalorder %s78, %s80
    %p84 = scmp.eq.s32.totalorder %s9, 0
    %p85 = por %p83, %p84
    %p86 = scmp.ne.s32.totalorder %s78, %s80
    %p87 = scmp.eq.s32.totalorder %s14, 1
    %p88 = por %p86, %p87
    %p89 = scmp.ne.s32.totalorder %s80, %s81
    %p90 = scmp.eq.s32.totalorder %s14, 0
    %p91 = por %p89, %p90
    %p92 = scmp.ne.s32.totalorder %s80, %s81
    %p93 = scmp.eq.s32.totalorder %s15, 1
    %p94 = por %p92, %p93
    %p96 = scmp.ne.s32.totalorder %s81, %s95
    %p97 = scmp.eq.s32.totalorder %s15, 0
    %p98 = por %p96, %p97
    %s99 = ssub.s32 %s16, %s28
    %s100 = ssub.s32 %s17, %s24
    %s101 = sor.u32 %s99, %s100
    %p102 = scmp.eq.s32.totalorder %s101, 0
    %s104 = sadd.s32 %s103, 1
    %s105 = scalar_select %p102, %s103, %s104
    %p108 = pneg %p102
    %p109 = scmp.eq.s32.totalorder %s9, 1
    %p110 = por %p108, %p109
    %p111 = scmp.ne.s32.totalorder %s103, %s106
    %p112 = scmp.eq.s32.totalorder %s9, 0
    %p113 = por %p111, %p112
    %p114 = scmp.ne.s32.totalorder %s103, %s106
    %p115 = scmp.eq.s32.totalorder %s14, 1
    %p116 = por %p114, %p115
    %p117 = scmp.ne.s32.totalorder %s106, %s107
    %p118 = scmp.eq.s32.totalorder %s14, 0
    %p119 = por %p117, %p118
    %p120 = scmp.ne.s32.totalorder %s106, %s107
    %p121 = scmp.eq.s32.totalorder %s15, 1
    %p122 = por %p120, %p121
    %p124 = scmp.ne.s32.totalorder %s107, %s123
    %p125 = scmp.eq.s32.totalorder %s15, 0
    %p126 = por %p124, %p125
    %p127 = scmp.le.s32.totalorder 1, %s9
    %p128 = scmp.lt.s32.totalorder %s9, 3
    %p129 = pnand %p127, %p128
    %p130 = pneg %p129
    // Predicated region
    $region9: #{downsampling_forward.2} parent=5 // pred_check
      _
    $region10: #{downsampling_forward.2} parent=5 // pred_check_branch
      %132 = sbr.rel (%p129) target = $region12
    $region11: #{downsampling_forward.2} parent=5 // pred_region
      %s133 = ssub.s32 %s9, 1
      // Predicated region
      $region13: #{downsampling_forward.2} parent=11 // pred_check
        %p134 = pneg %p70
      $region14: #{downsampling_forward.2} parent=11 // pred_check_branch
        %136 = sbr.rel (%p134) target = $region16
      $region15: #{downsampling_forward.2} parent=11 // pred_region
        _
      $region16: #{downsampling_forward.2} parent=11 // pred_fallthru
        _
      // Predicated region
      $region17: #{downsampling_forward.2} parent=11 // pred_check
        %p137 = pneg %p91
      $region18: #{downsampling_forward.2} parent=11 // pred_check_branch
        %139 = sbr.rel (%p137) target = $region20
      $region19: #{downsampling_forward.2} parent=11 // pred_region
        _
      $region20: #{downsampling_forward.2} parent=11 // pred_fallthru
        _
    $region12: #{downsampling_forward.2} parent=5 // pred_fallthru
      _
    %p140 = scmp.lt.s32.totalorder %s9, 2
    // Predicated region
    $region21: #{downsampling_forward.2} parent=5 // pred_check
      %p141 = pneg %p140
    $region22: #{downsampling_forward.2} parent=5 // pred_check_branch
      %143 = sbr.rel (%p141) target = $region24
    $region23: #{downsampling_forward.2} parent=5 // pred_region
      // Predicated region
      $region25: #{downsampling_forward.2} parent=23 // pred_check
        %p144 = pneg %p43
      $region26: #{downsampling_forward.2} parent=23 // pred_check_branch
        %146 = sbr.rel (%p144) target = $region28
      $region27: #{downsampling_forward.2} parent=23 // pred_region
        %p147 = scmp.lt.s32.totalorder %s16, 1
        %s148 = scalar_select %p147, %s16, 1
        %p149 = scmp.lt.s32.totalorder %s17, 0
        %s150 = scalar_select %p149, %s17, 0
        %s151 = smul.addr %s150, 54
        %s152 = smul.addr %s148, 54
        %s153 = sadd.s32 %s151, %s152
        %s154 = smul.addr %s153, 4
        %s155 = scalar_lea.vmem %s0, %s154
      $region28: #{downsampling_forward.2} parent=23 // pred_fallthru
        _
    $region24: #{downsampling_forward.2} parent=5 // pred_fallthru
      _
    %p156 = scmp.le.s32.totalorder 1, %s9
    %p157 = scmp.lt.s32.totalorder %s9, 3
    %p158 = pnand %p156, %p157
    %p159 = pneg %p158
    // Predicated region
    $region29: #{downsampling_forward.2} parent=5 // pred_check
      _
    $region30: #{downsampling_forward.2} parent=5 // pred_check_branch
      %161 = sbr.rel (%p158) target = $region32
    $region31: #{downsampling_forward.2} parent=5 // pred_region
      %s162 = ssub.s32 %s9, 1
      %p163 = scmp.lt.s32.totalorder %s18, 1
      %s164 = scalar_select %p163, %s18, 1
      %p165 = scmp.lt.s32.totalorder %s19, 0
      %s166 = scalar_select %p165, %s19, 0
      %s167 = smul.addr %s166, 54
      %s168 = smul.addr %s164, 54
      %s169 = sadd.s32 %s167, %s168
      %s170 = smul.addr %s169, 4
      %s171 = scalar_lea.vmem %s0, %s170
      %p172 = pneg %p49
      %p173 = pneg %p46
      %p174 = pneg %p70
      %p175 = pneg %p67
      %p176 = pneg %p91
      %p177 = pneg %p88
      %p178 = pneg %p119
      %p179 = pneg %p116
      %s180 = smul.u32 16, %s19
      %p181 = scmp.lt.s32.totalorder %s18, 1
      %s182 = scalar_select %p181, %s18, 1
      %p183 = scmp.lt.s32.totalorder %s180, 15
      %s184 = scalar_select %p183, %s180, 15
      %s185 = smul.addr %s184, 2
      %s186 = smul.addr %s182, 32
      %s187 = sadd.s32 %s185, %s186
      %s188 = smul.addr %s187, 4
      %s189 = scalar_lea.vmem %s3, %s188
      %p190 = scmp.lt.s32.totalorder %s18, 1
      %s191 = scalar_select %p190, %s18, 1
      %p192 = scmp.lt.s32.totalorder %s19, 0
      %s193 = scalar_select %p192, %s19, 0
      %s194 = smul.addr %s193, 54
      %s195 = smul.addr %s191, 54
      %s196 = sadd.s32 %s194, %s195
      %s197 = smul.addr %s196, 4
      %s198 = scalar_lea.vmem %s0, %s197
      %s199 = smul.u32 16, %s19
      %p200 = scmp.lt.s32.totalorder %s18, 1
      %s201 = scalar_select %p200, %s18, 1
      %p202 = scmp.lt.s32.totalorder %s199, 15
      %s203 = scalar_select %p202, %s199, 15
      %s204 = smul.addr %s203, 2
      %s205 = smul.addr %s201, 32
      %s206 = sadd.s32 %s204, %s205
      %s207 = smul.addr %s206, 4
      %s208 = scalar_lea.vmem %s3, %s207
      %s209 = smul.u32 16, %s19
      %v211 = vld [vmem:[%s198] sm:$0xf]
      %v212 = vld [vmem:[%s198 + $0x4] sm:$0xf]
      %v213 = vld [vmem:[%s198 + $0xc] sm:$0xf]
      %v214 = vld [vmem:[%s198 + $0x10] sm:$0xf]
      %v215 = vld [vmem:[%s198 + $0x18] sm:$0xf]
      %v216 = vld [vmem:[%s198 + $0x1c] sm:$0xf]
      %v217 = vld [vmem:[%s198 + $0x24] sm:$0xf]
      %v218 = vld [vmem:[%s198 + $0x28] sm:$0xf]
      %v219 = vld [vmem:[%s198 + $0x30] sm:$0xf]
      %v220 = vld [vmem:[%s198 + $0x34] sm:$0xf]
      %v221 = vld [vmem:[%s198 + $0x3c] sm:$0xf]
      %v222 = vld [vmem:[%s198 + $0x40] sm:$0xf]
      %v223 = vld [vmem:[%s198 + $0x48] sm:$0xf]
      %v224 = vld [vmem:[%s198 + $0x4c] sm:$0xf]
      %v225 = vld [vmem:[%s198 + $0x54] sm:$0xf]
      %v226 = vld [vmem:[%s198 + $0x58] sm:$0xf]
      %v227 = vld [vmem:[%s198 + $0x60] sm:$0xf]
      %v228 = vld [vmem:[%s198 + $0x64] sm:$0xf]
      %v229 = vld [vmem:[%s198 + $0x6c] sm:$0xf]
      %v230 = vld [vmem:[%s198 + $0x70] sm:$0xf]
      %v231 = vld [vmem:[%s198 + $0x78] sm:$0xf]
      %v232 = vld [vmem:[%s198 + $0x7c] sm:$0xf]
      %v233 = vld [vmem:[%s198 + $0x84] sm:$0xf]
      %v234 = vld [vmem:[%s198 + $0x88] sm:$0xf]
      %v235 = vld [vmem:[%s198 + $0x90] sm:$0xf]
      %v236 = vld [vmem:[%s198 + $0x94] sm:$0xf]
      %v237 = vld [vmem:[%s198 + $0x9c] sm:$0xf]
      %v238 = vld [vmem:[%s198 + $0xa0] sm:$0xf]
      %v239 = vld [vmem:[%s198 + $0xa8] sm:$0xf]
      %v240 = vld [vmem:[%s198 + $0xac] sm:$0xf]
      %v241 = vld [vmem:[%s198 + $0xb4] sm:$0xf]
      %v242 = vld [vmem:[%s198 + $0xb8] sm:$0xf]
      %v243 = vld [vmem:[%s1] sm:$0xf]
      %v244 = vld [vmem:[%s1 + $0x4] sm:$0xf]
      %v245 = vld [vmem:[%s1 + $0x8] sm:$0xf]
      %v246 = vld [vmem:[%s1 + $0xc] sm:$0xf]
      %v247 = vld [vmem:[%s1 + $0x10] sm:$0xf]
      %v248 = vld [vmem:[%s1 + $0x14] sm:$0xf]
      %v249 = vld [vmem:[%s1 + $0x18] sm:$0xf]
      %v250 = vld [vmem:[%s1 + $0x1c] sm:$0xf]
      %v251 = vld [vmem:[%s1 + $0x20] sm:$0xf]
      %v252 = vld [vmem:[%s1 + $0x24] sm:$0xf]
      %v253 = vld [vmem:[%s1 + $0x28] sm:$0xf]
      %v254 = vld [vmem:[%s1 + $0x2c] sm:$0xf]
      %v255 = vld [vmem:[%s1 + $0x30] sm:$0xf]
      %v256 = vld [vmem:[%s1 + $0x34] sm:$0xf]
      %v257 = vld [vmem:[%s1 + $0x38] sm:$0xf]
      %v258 = vld [vmem:[%s1 + $0x3c] sm:$0xf]
      %v259 = vld [vmem:[%s198 + $0x8] sm:$0x1]
      %v260 = vld [vmem:[%s198 + $0x14] sm:$0x1]
      %v261 = vld [vmem:[%s198 + $0x20] sm:$0x1]
      %v262 = vld [vmem:[%s198 + $0x2c] sm:$0x1]
      %v263 = vld [vmem:[%s198 + $0x38] sm:$0x1]
      %v264 = vld [vmem:[%s198 + $0x44] sm:$0x1]
      %v265 = vld [vmem:[%s198 + $0x50] sm:$0x1]
      %v266 = vld [vmem:[%s198 + $0x5c] sm:$0x1]
      %v267 = vld [vmem:[%s198 + $0x68] sm:$0x1]
      %v268 = vld [vmem:[%s198 + $0x74] sm:$0x1]
      %v269 = vld [vmem:[%s198 + $0x80] sm:$0x1]
      %v270 = vld [vmem:[%s198 + $0x8c] sm:$0x1]
      %v271 = vld [vmem:[%s198 + $0x98] sm:$0x1]
      %v272 = vld [vmem:[%s198 + $0xa4] sm:$0x1]
      %v273 = vld [vmem:[%s198 + $0xb0] sm:$0x1]
      %v274 = vld [vmem:[%s198 + $0xbc] sm:$0x1]
      %vm275 = vsmask.f32 3328
      %vm276 = vsmask.f32 7440
      %vm277 = vmor %vm275, %vm276
      %v279 = vshrl.u32 %v211, 16
      %v281 = vrot.slane %v279, 4
      %v282 = vshll.u32 %v211, 16
      %v284 = vrot.slane %v282, 5
      %v285 = vor.u32 %v281, %v284
      %v286 = vrot.slane %v285, 4
      %v288 = vshll.u32 %v212, 16
      %v290 = vrot.slane %v288, 5
      %v291 = vsel %vm277, %v286, %v290
      %v292 = vshrl.u32 %v212, 16
      %v294 = vrot.slane %v292, 4
      %v295 = vor.u32 %v294, %v290
      %v296 = vrot.slane %v295, 4
      %v298 = vshll.u32 %v259, 16
      %v300 = vrot.slane %v298, 5
      %v301 = vsel %vm277, %v296, %v300
      %v303 = vshrl.u32 %v213, 16
      %v305 = vrot.slane %v303, 4
      %v306 = vshll.u32 %v213, 16
      %v308 = vrot.slane %v306, 5
      %v309 = vor.u32 %v305, %v308
      %v310 = vrot.slane %v309, 4
      %v312 = vshll.u32 %v214, 16
      %v314 = vrot.slane %v312, 5
      %v315 = vsel %vm277, %v310, %v314
      %v316 = vshrl.u32 %v214, 16
      %v318 = vrot.slane %v316, 4
      %v319 = vor.u32 %v318, %v314
      %v320 = vrot.slane %v319, 4
      %v322 = vshll.u32 %v260, 16
      %v324 = vrot.slane %v322, 5
      %v325 = vsel %vm277, %v320, %v324
      %v327 = vshrl.u32 %v215, 16
      %v329 = vrot.slane %v327, 4
      %v330 = vshll.u32 %v215, 16
      %v332 = vrot.slane %v330, 5
      %v333 = vor.u32 %v329, %v332
      %v334 = vrot.slane %v333, 4
      %v336 = vshll.u32 %v216, 16
      %v338 = vrot.slane %v336, 5
      %v339 = vsel %vm277, %v334, %v338
      %v340 = vshrl.u32 %v216, 16
      %v342 = vrot.slane %v340, 4
      %v343 = vor.u32 %v342, %v338
      %v344 = vrot.slane %v343, 4
      %v346 = vshll.u32 %v261, 16
      %v348 = vrot.slane %v346, 5
      %v349 = vsel %vm277, %v344, %v348
      %v351 = vshrl.u32 %v217, 16
      %v353 = vrot.slane %v351, 4
      %v354 = vshll.u32 %v217, 16
      %v356 = vrot.slane %v354, 5
      %v357 = vor.u32 %v353, %v356
      %v358 = vrot.slane %v357, 4
      %v360 = vshll.u32 %v218, 16
      %v362 = vrot.slane %v360, 5
      %v363 = vsel %vm277, %v358, %v362
      %v364 = vshrl.u32 %v218, 16
      %v366 = vrot.slane %v364, 4
      %v367 = vor.u32 %v366, %v362
      %v368 = vrot.slane %v367, 4
      %v370 = vshll.u32 %v262, 16
      %v372 = vrot.slane %v370, 5
      %v373 = vsel %vm277, %v368, %v372
      %v375 = vshrl.u32 %v219, 16
      %v377 = vrot.slane %v375, 4
      %v378 = vshll.u32 %v219, 16
      %v380 = vrot.slane %v378, 5
      %v381 = vor.u32 %v377, %v380
      %v382 = vrot.slane %v381, 4
      %v384 = vshll.u32 %v220, 16
      %v386 = vrot.slane %v384, 5
      %v387 = vsel %vm277, %v382, %v386
      %v388 = vshrl.u32 %v220, 16
      %v390 = vrot.slane %v388, 4
      %v391 = vor.u32 %v390, %v386
      %v392 = vrot.slane %v391, 4
      %v394 = vshll.u32 %v263, 16
      %v396 = vrot.slane %v394, 5
      %v397 = vsel %vm277, %v392, %v396
      %v399 = vshrl.u32 %v221, 16
      %v401 = vrot.slane %v399, 4
      %v402 = vshll.u32 %v221, 16
      %v404 = vrot.slane %v402, 5
      %v405 = vor.u32 %v401, %v404
      %v406 = vrot.slane %v405, 4
      %v408 = vshll.u32 %v222, 16
      %v410 = vrot.slane %v408, 5
      %v411 = vsel %vm277, %v406, %v410
      %v412 = vshrl.u32 %v222, 16
      %v414 = vrot.slane %v412, 4
      %v415 = vor.u32 %v414, %v410
      %v416 = vrot.slane %v415, 4
      %v418 = vshll.u32 %v264, 16
      %v420 = vrot.slane %v418, 5
      %v421 = vsel %vm277, %v416, %v420
      %v423 = vshrl.u32 %v223, 16
      %v425 = vrot.slane %v423, 4
      %v426 = vshll.u32 %v223, 16
      %v428 = vrot.slane %v426, 5
      %v429 = vor.u32 %v425, %v428
      %v430 = vrot.slane %v429, 4
      %v432 = vshll.u32 %v224, 16
      %v434 = vrot.slane %v432, 5
      %v435 = vsel %vm277, %v430, %v434
      %v436 = vshrl.u32 %v224, 16
      %v438 = vrot.slane %v436, 4
      %v439 = vor.u32 %v438, %v434
      %v440 = vrot.slane %v439, 4
      %v442 = vshll.u32 %v265, 16
      %v444 = vrot.slane %v442, 5
      %v445 = vsel %vm277, %v440, %v444
      %v447 = vshrl.u32 %v225, 16
      %v449 = vrot.slane %v447, 4
      %v450 = vshll.u32 %v225, 16
      %v452 = vrot.slane %v450, 5
      %v453 = vor.u32 %v449, %v452
      %v454 = vrot.slane %v453, 4
      %v456 = vshll.u32 %v226, 16
      %v458 = vrot.slane %v456, 5
      %v459 = vsel %vm277, %v454, %v458
      %v460 = vshrl.u32 %v226, 16
      %v462 = vrot.slane %v460, 4
      %v463 = vor.u32 %v462, %v458
      %v464 = vrot.slane %v463, 4
      %v466 = vshll.u32 %v266, 16
      %v468 = vrot.slane %v466, 5
      %v469 = vsel %vm277, %v464, %v468
      %v471 = vshrl.u32 %v227, 16
      %v473 = vrot.slane %v471, 4
      %v474 = vshll.u32 %v227, 16
      %v476 = vrot.slane %v474, 5
      %v477 = vor.u32 %v473, %v476
      %v478 = vrot.slane %v477, 4
      %v480 = vshll.u32 %v228, 16
      %v482 = vrot.slane %v480, 5
      %v483 = vsel %vm277, %v478, %v482
      %v484 = vshrl.u32 %v228, 16
      %v486 = vrot.slane %v484, 4
      %v487 = vor.u32 %v486, %v482
      %v488 = vrot.slane %v487, 4
      %v490 = vshll.u32 %v267, 16
      %v492 = vrot.slane %v490, 5
      %v493 = vsel %vm277, %v488, %v492
      %v495 = vshrl.u32 %v229, 16
      %v497 = vrot.slane %v495, 4
      %v498 = vshll.u32 %v229, 16
      %v500 = vrot.slane %v498, 5
      %v501 = vor.u32 %v497, %v500
      %v502 = vrot.slane %v501, 4
      %v504 = vshll.u32 %v230, 16
      %v506 = vrot.slane %v504, 5
      %v507 = vsel %vm277, %v502, %v506
      %v508 = vshrl.u32 %v230, 16
      %v510 = vrot.slane %v508, 4
      %v511 = vor.u32 %v510, %v506
      %v512 = vrot.slane %v511, 4
      %v514 = vshll.u32 %v268, 16
      %v516 = vrot.slane %v514, 5
      %v517 = vsel %vm277, %v512, %v516
      %v519 = vshrl.u32 %v231, 16
      %v521 = vrot.slane %v519, 4
      %v522 = vshll.u32 %v231, 16
      %v524 = vrot.slane %v522, 5
      %v525 = vor.u32 %v521, %v524
      %v526 = vrot.slane %v525, 4
      %v528 = vshll.u32 %v232, 16
      %v530 = vrot.slane %v528, 5
      %v531 = vsel %vm277, %v526, %v530
      %v532 = vshrl.u32 %v232, 16
      %v534 = vrot.slane %v532, 4
      %v535 = vor.u32 %v534, %v530
      %v536 = vrot.slane %v535, 4
      %v538 = vshll.u32 %v269, 16
      %v540 = vrot.slane %v538, 5
      %v541 = vsel %vm277, %v536, %v540
      %v543 = vshrl.u32 %v233, 16
      %v545 = vrot.slane %v543, 4
      %v546 = vshll.u32 %v233, 16
      %v548 = vrot.slane %v546, 5
      %v549 = vor.u32 %v545, %v548
      %v550 = vrot.slane %v549, 4
      %v552 = vshll.u32 %v234, 16
      %v554 = vrot.slane %v552, 5
      %v555 = vsel %vm277, %v550, %v554
      %v556 = vshrl.u32 %v234, 16
      %v558 = vrot.slane %v556, 4
      %v559 = vor.u32 %v558, %v554
      %v560 = vrot.slane %v559, 4
      %v562 = vshll.u32 %v270, 16
      %v564 = vrot.slane %v562, 5
      %v565 = vsel %vm277, %v560, %v564
      %v567 = vshrl.u32 %v235, 16
      %v569 = vrot.slane %v567, 4
      %v570 = vshll.u32 %v235, 16
      %v572 = vrot.slane %v570, 5
      %v573 = vor.u32 %v569, %v572
      %v574 = vrot.slane %v573, 4
      %v576 = vshll.u32 %v236, 16
      %v578 = vrot.slane %v576, 5
      %v579 = vsel %vm277, %v574, %v578
      %v580 = vshrl.u32 %v236, 16
      %v582 = vrot.slane %v580, 4
      %v583 = vor.u32 %v582, %v578
      %v584 = vrot.slane %v583, 4
      %v586 = vshll.u32 %v271, 16
      %v588 = vrot.slane %v586, 5
      %v589 = vsel %vm277, %v584, %v588
      %v591 = vshrl.u32 %v237, 16
      %v593 = vrot.slane %v591, 4
      %v594 = vshll.u32 %v237, 16
      %v596 = vrot.slane %v594, 5
      %v597 = vor.u32 %v593, %v596
      %v598 = vrot.slane %v597, 4
      %v600 = vshll.u32 %v238, 16
      %v602 = vrot.slane %v600, 5
      %v603 = vsel %vm277, %v598, %v602
      %v604 = vshrl.u32 %v238, 16
      %v606 = vrot.slane %v604, 4
      %v607 = vor.u32 %v606, %v602
      %v608 = vrot.slane %v607, 4
      %v610 = vshll.u32 %v272, 16
      %v612 = vrot.slane %v610, 5
      %v613 = vsel %vm277, %v608, %v612
      %v615 = vshrl.u32 %v239, 16
      %v617 = vrot.slane %v615, 4
      %v618 = vshll.u32 %v239, 16
      %v620 = vrot.slane %v618, 5
      %v621 = vor.u32 %v617, %v620
      %v622 = vrot.slane %v621, 4
      %v624 = vshll.u32 %v240, 16
      %v626 = vrot.slane %v624, 5
      %v627 = vsel %vm277, %v622, %v626
      %v628 = vshrl.u32 %v240, 16
      %v630 = vrot.slane %v628, 4
      %v631 = vor.u32 %v630, %v626
      %v632 = vrot.slane %v631, 4
      %v634 = vshll.u32 %v273, 16
      %v636 = vrot.slane %v634, 5
      %v637 = vsel %vm277, %v632, %v636
      %v639 = vshrl.u32 %v241, 16
      %v641 = vrot.slane %v639, 4
      %v642 = vshll.u32 %v241, 16
      %v644 = vrot.slane %v642, 5
      %v645 = vor.u32 %v641, %v644
      %v646 = vrot.slane %v645, 4
      %v648 = vshll.u32 %v242, 16
      %v650 = vrot.slane %v648, 5
      %v651 = vsel %vm277, %v646, %v650
      %v652 = vshrl.u32 %v242, 16
      %v654 = vrot.slane %v652, 4
      %v655 = vor.u32 %v654, %v650
      %v656 = vrot.slane %v655, 4
      %v658 = vshll.u32 %v274, 16
      %v660 = vrot.slane %v658, 5
      %v661 = vsel %vm277, %v656, %v660
      %s662 = scalar_lea.vmem %s1, 64
      %v663 = vld [vmem:[%s662] sm:$0xf]
      %v664 = vld [vmem:[%s662 + $0x4] sm:$0xf]
      %v665 = vld [vmem:[%s662 + $0x8] sm:$0xf]
      %v666 = vld [vmem:[%s662 + $0xc] sm:$0xf]
      %v667 = vld [vmem:[%s662 + $0x10] sm:$0xf]
      %v668 = vld [vmem:[%s662 + $0x14] sm:$0xf]
      %v669 = vld [vmem:[%s662 + $0x18] sm:$0xf]
      %v670 = vld [vmem:[%s662 + $0x1c] sm:$0xf]
      %v671 = vld [vmem:[%s662 + $0x20] sm:$0xf]
      %v672 = vld [vmem:[%s662 + $0x24] sm:$0xf]
      %v673 = vld [vmem:[%s662 + $0x28] sm:$0xf]
      %v674 = vld [vmem:[%s662 + $0x2c] sm:$0xf]
      %v675 = vld [vmem:[%s662 + $0x30] sm:$0xf]
      %v676 = vld [vmem:[%s662 + $0x34] sm:$0xf]
      %v677 = vld [vmem:[%s662 + $0x38] sm:$0xf]
      %v678 = vld [vmem:[%s662 + $0x3c] sm:$0xf]
      %v679 = vunpack.c.l.b16 %v291
      %v680 = vunpack.c.l.b16 %v301
      %v681 = vunpack.c.l.b16 %v315
      %v682 = vunpack.c.l.b16 %v325
      %v683 = vunpack.c.l.b16 %v339
      %v684 = vunpack.c.l.b16 %v349
      %v685 = vunpack.c.l.b16 %v363
      %v686 = vunpack.c.l.b16 %v373
      %v687 = vunpack.c.l.b16 %v387
      %v688 = vunpack.c.l.b16 %v397
      %v689 = vunpack.c.l.b16 %v411
      %v690 = vunpack.c.l.b16 %v421
      %v691 = vunpack.c.l.b16 %v435
      %v692 = vunpack.c.l.b16 %v445
      %v693 = vunpack.c.l.b16 %v459
      %v694 = vunpack.c.l.b16 %v469
      %v695 = vunpack.c.l.b16 %v483
      %v696 = vunpack.c.l.b16 %v493
      %v697 = vunpack.c.l.b16 %v507
      %v698 = vunpack.c.l.b16 %v517
      %v699 = vunpack.c.l.b16 %v531
      %v700 = vunpack.c.l.b16 %v541
      %v701 = vunpack.c.l.b16 %v555
      %v702 = vunpack.c.l.b16 %v565
      %v703 = vunpack.c.l.b16 %v579
      %v704 = vunpack.c.l.b16 %v589
      %v705 = vunpack.c.l.b16 %v603
      %v706 = vunpack.c.l.b16 %v613
      %v707 = vunpack.c.l.b16 %v627
      %v708 = vunpack.c.l.b16 %v637
      %v709 = vunpack.c.l.b16 %v651
      %v710 = vunpack.c.l.b16 %v661
      %v711 = vpack.c.b16 %v680, %v679
      %v712 = vpack.c.b16 %v682, %v681
      %v713 = vpack.c.b16 %v684, %v683
      %v714 = vpack.c.b16 %v686, %v685
      %v715 = vpack.c.b16 %v688, %v687
      %v716 = vpack.c.b16 %v690, %v689
      %v717 = vpack.c.b16 %v692, %v691
      %v718 = vpack.c.b16 %v694, %v693
      %v719 = vpack.c.b16 %v696, %v695
      %v720 = vpack.c.b16 %v698, %v697
      %v721 = vpack.c.b16 %v700, %v699
      %v722 = vpack.c.b16 %v702, %v701
      %v723 = vpack.c.b16 %v704, %v703
      %v724 = vpack.c.b16 %v706, %v705
      %v725 = vpack.c.b16 %v708, %v707
      %v726 = vpack.c.b16 %v710, %v709
      %v759 = vunpack.c.l.b16 %v663
      %v760 = vunpack.c.l.b16 %v664
      %v761 = vunpack.c.l.b16 %v665
      %v762 = vunpack.c.l.b16 %v666
      %v763 = vunpack.c.l.b16 %v667
      %v764 = vunpack.c.l.b16 %v668
      %v765 = vunpack.c.l.b16 %v669
      %v766 = vunpack.c.l.b16 %v670
      %v767 = vunpack.c.l.b16 %v671
      %v768 = vunpack.c.l.b16 %v672
      %v769 = vunpack.c.l.b16 %v673
      %v770 = vunpack.c.l.b16 %v674
      %v771 = vunpack.c.l.b16 %v675
      %v772 = vunpack.c.l.b16 %v676
      %v773 = vunpack.c.l.b16 %v677
      %v774 = vunpack.c.l.b16 %v678
      %v775 = vpack.c.b16 %v760, %v759
      %v776 = vpack.c.b16 %v762, %v761
      %v777 = vpack.c.b16 %v764, %v763
      %v778 = vpack.c.b16 %v766, %v765
      %v779 = vpack.c.b16 %v768, %v767
      %v780 = vpack.c.b16 %v770, %v769
      %v781 = vpack.c.b16 %v772, %v771
      %v782 = vpack.c.b16 %v774, %v773
      %791 = vmatprep.subr.bf16.mxu0 0
      %792 = vmatpush1.bf16.msra.mxu0 %v782
      %793 = vmatprep.subr.bf16.mxu0 0
      %794 = vmatpush1.bf16.msra.mxu0 %v781
      %795 = vmatprep.subr.bf16.mxu0 0
      %796 = vmatpush1.bf16.msra.mxu0 %v780
      %797 = vmatprep.subr.bf16.mxu0 0
      %798 = vmatpush1.bf16.msra.mxu0 %v779
      %799 = vmatprep.subr.bf16.mxu0 0
      %800 = vmatpush1.bf16.msra.mxu0 %v778
      %801 = vmatprep.subr.bf16.mxu0 0
      %802 = vmatpush1.bf16.msra.mxu0 %v777
      %803 = vmatprep.subr.bf16.mxu0 0
      %804 = vmatpush1.bf16.msra.mxu0 %v776
      %805 = vmatprep.subr.bf16.mxu0 0
      %806 = vmatpush1.bf16.msra.mxu0 %v775
      %807 = vmatprep.subr.bf16.mxu0 0
      %808 = vmatpush2.bf16.msra.mxu0 0
      %809 = vmatprep.subr.bf16.mxu0 0
      %810 = vmatpush2.bf16.msra.mxu0 0
      %811 = vmatprep.subr.bf16.mxu0 0
      %812 = vmatpush2.bf16.msra.mxu0 0
      %813 = vmatprep.subr.bf16.mxu0 0
      %814 = vmatpush2.bf16.msra.mxu0 0
      %815 = vmatprep.subr.bf16.mxu0 0
      %816 = vmatpush2.bf16.msra.mxu0 0
      %817 = vmatprep.subr.bf16.mxu0 0
      %818 = vmatpush2.bf16.msra.mxu0 0
      %819 = vmatprep.subr.bf16.mxu0 0
      %820 = vmatpush2.bf16.msra.mxu0 0
      %821 = vmatprep.subr.bf16.mxu0 0
      %822 = vmatpush2.bf16.msra.mxu0 0
      %823 = vmatprep.mubr.bf16.mxu0 0
      %824 = vmatmul.mubr.bf16.gmra.mxu0 %v711
      %v825 = vpop.f32.mrf.mxu0
      %v826 = vadd.f32 0.0, %v825
      %v827 = vpop.f32.mrf.mxu0
      %v828 = vpop.f32.mrf.mxu0
      %v829 = vadd.f32 0.0, %v828
      %v830 = vpop.f32.mrf.mxu0
      %831 = vmatprep.mubr.bf16.mxu0 0
      %832 = vmatmul.mubr.bf16.gmra.mxu0 %v712
      %v833 = vpop.f32.mrf.mxu0
      %v834 = vadd.f32 0.0, %v833
      %v835 = vpop.f32.mrf.mxu0
      %v836 = vpop.f32.mrf.mxu0
      %v837 = vadd.f32 0.0, %v836
      %v838 = vpop.f32.mrf.mxu0
      %839 = vmatprep.mubr.bf16.mxu0 0
      %840 = vmatmul.mubr.bf16.gmra.mxu0 %v713
      %v841 = vpop.f32.mrf.mxu0
      %v842 = vadd.f32 0.0, %v841
      %v843 = vpop.f32.mrf.mxu0
      %v844 = vpop.f32.mrf.mxu0
      %v845 = vadd.f32 0.0, %v844
      %v846 = vpop.f32.mrf.mxu0
      %847 = vmatprep.mubr.bf16.mxu0 0
      %848 = vmatmul.mubr.bf16.gmra.mxu0 %v714
      %v849 = vpop.f32.mrf.mxu0
      %v850 = vadd.f32 0.0, %v849
      %v851 = vpop.f32.mrf.mxu0
      %v852 = vpop.f32.mrf.mxu0
      %v853 = vadd.f32 0.0, %v852
      %v854 = vpop.f32.mrf.mxu0
      %855 = vmatprep.mubr.bf16.mxu0 0
      %856 = vmatmul.mubr.bf16.gmra.mxu0 %v715
      %v857 = vpop.f32.mrf.mxu0
      %v858 = vadd.f32 0.0, %v857
      %v859 = vpop.f32.mrf.mxu0
      %v860 = vpop.f32.mrf.mxu0
      %v861 = vadd.f32 0.0, %v860
      %v862 = vpop.f32.mrf.mxu0
      %863 = vmatprep.mubr.bf16.mxu0 0
      %864 = vmatmul.mubr.bf16.gmra.mxu0 %v716
      %v865 = vpop.f32.mrf.mxu0
      %v866 = vadd.f32 0.0, %v865
      %v867 = vpop.f32.mrf.mxu0
      %v868 = vpop.f32.mrf.mxu0
      %v869 = vadd.f32 0.0, %v868
      %v870 = vpop.f32.mrf.mxu0
      %871 = vmatprep.mubr.bf16.mxu0 0
      %872 = vmatmul.mubr.bf16.gmra.mxu0 %v717
      %v873 = vpop.f32.mrf.mxu0
      %v874 = vadd.f32 0.0, %v873
      %v875 = vpop.f32.mrf.mxu0
      %v876 = vpop.f32.mrf.mxu0
      %v877 = vadd.f32 0.0, %v876
      %v878 = vpop.f32.mrf.mxu0
      %879 = vmatprep.mubr.bf16.mxu0 0
      %880 = vmatmul.mubr.bf16.gmra.mxu0 %v718
      %v881 = vpop.f32.mrf.mxu0
      %v882 = vadd.f32 0.0, %v881
      %v883 = vpop.f32.mrf.mxu0
      %v884 = vpop.f32.mrf.mxu0
      %v885 = vadd.f32 0.0, %v884
      %v886 = vpop.f32.mrf.mxu0
      %887 = vmatprep.mubr.bf16.mxu0 0
      %888 = vmatmul.mubr.bf16.gmra.mxu0 %v719
      %v889 = vpop.f32.mrf.mxu0
      %v890 = vadd.f32 0.0, %v889
      %v891 = vpop.f32.mrf.mxu0
      %v892 = vpop.f32.mrf.mxu0
      %v893 = vadd.f32 0.0, %v892
      %v894 = vpop.f32.mrf.mxu0
      %895 = vmatprep.mubr.bf16.mxu0 0
      %896 = vmatmul.mubr.bf16.gmra.mxu0 %v720
      %v897 = vpop.f32.mrf.mxu0
      %v898 = vadd.f32 0.0, %v897
      %v899 = vpop.f32.mrf.mxu0
      %v900 = vpop.f32.mrf.mxu0
      %v901 = vadd.f32 0.0, %v900
      %v902 = vpop.f32.mrf.mxu0
      %903 = vmatprep.mubr.bf16.mxu0 0
      %904 = vmatmul.mubr.bf16.gmra.mxu0 %v721
      %v905 = vpop.f32.mrf.mxu0
      %v906 = vadd.f32 0.0, %v905
      %v907 = vpop.f32.mrf.mxu0
      %v908 = vpop.f32.mrf.mxu0
      %v909 = vadd.f32 0.0, %v908
      %v910 = vpop.f32.mrf.mxu0
      %911 = vmatprep.mubr.bf16.mxu0 0
      %912 = vmatmul.mubr.bf16.gmra.mxu0 %v722
      %v913 = vpop.f32.mrf.mxu0
      %v914 = vadd.f32 0.0, %v913
      %v915 = vpop.f32.mrf.mxu0
      %v916 = vpop.f32.mrf.mxu0
      %v917 = vadd.f32 0.0, %v916
      %v918 = vpop.f32.mrf.mxu0
      %919 = vmatprep.mubr.bf16.mxu0 0
      %920 = vmatmul.mubr.bf16.gmra.mxu0 %v723
      %v921 = vpop.f32.mrf.mxu0
      %v922 = vadd.f32 0.0, %v921
      %v923 = vpop.f32.mrf.mxu0
      %v924 = vpop.f32.mrf.mxu0
      %v925 = vadd.f32 0.0, %v924
      %v926 = vpop.f32.mrf.mxu0
      %927 = vmatprep.mubr.bf16.mxu0 0
      %928 = vmatmul.mubr.bf16.gmra.mxu0 %v724
      %v929 = vpop.f32.mrf.mxu0
      %v930 = vadd.f32 0.0, %v929
      %v931 = vpop.f32.mrf.mxu0
      %v932 = vpop.f32.mrf.mxu0
      %v933 = vadd.f32 0.0, %v932
      %v934 = vpop.f32.mrf.mxu0
      %935 = vmatprep.mubr.bf16.mxu0 0
      %936 = vmatmul.mubr.bf16.gmra.mxu0 %v725
      %v937 = vpop.f32.mrf.mxu0
      %v938 = vadd.f32 0.0, %v937
      %v939 = vpop.f32.mrf.mxu0
      %v940 = vpop.f32.mrf.mxu0
      %v941 = vadd.f32 0.0, %v940
      %v942 = vpop.f32.mrf.mxu0
      %943 = vmatprep.mubr.bf16.mxu0 0
      %944 = vmatmul.mubr.bf16.gmra.mxu0 %v726
      %v945 = vpop.f32.mrf.mxu0
      %v946 = vadd.f32 0.0, %v945
      %v947 = vpop.f32.mrf.mxu0
      %v948 = vpop.f32.mrf.mxu0
      %v949 = vadd.f32 0.0, %v948
      %v950 = vpop.f32.mrf.mxu0
      %951 = vdwg.mxu0
      %v984 = vunpack.c.l.b16 %v211
      %v985 = vunpack.c.l.b16 %v212
      %v986 = vunpack.c.l.b16 %v213
      %v987 = vunpack.c.l.b16 %v214
      %v988 = vunpack.c.l.b16 %v215
      %v989 = vunpack.c.l.b16 %v216
      %v990 = vunpack.c.l.b16 %v217
      %v991 = vunpack.c.l.b16 %v218
      %v992 = vunpack.c.l.b16 %v219
      %v993 = vunpack.c.l.b16 %v220
      %v994 = vunpack.c.l.b16 %v221
      %v995 = vunpack.c.l.b16 %v222
      %v996 = vunpack.c.l.b16 %v223
      %v997 = vunpack.c.l.b16 %v224
      %v998 = vunpack.c.l.b16 %v225
      %v999 = vunpack.c.l.b16 %v226
      %v1000 = vunpack.c.l.b16 %v227
      %v1001 = vunpack.c.l.b16 %v228
      %v1002 = vunpack.c.l.b16 %v229
      %v1003 = vunpack.c.l.b16 %v230
      %v1004 = vunpack.c.l.b16 %v231
      %v1005 = vunpack.c.l.b16 %v232
      %v1006 = vunpack.c.l.b16 %v233
      %v1007 = vunpack.c.l.b16 %v234
      %v1008 = vunpack.c.l.b16 %v235
      %v1009 = vunpack.c.l.b16 %v236
      %v1010 = vunpack.c.l.b16 %v237
      %v1011 = vunpack.c.l.b16 %v238
      %v1012 = vunpack.c.l.b16 %v239
      %v1013 = vunpack.c.l.b16 %v240
      %v1014 = vunpack.c.l.b16 %v241
      %v1015 = vunpack.c.l.b16 %v242
      %v1016 = vpack.c.b16 %v985, %v984
      %v1017 = vpack.c.b16 %v987, %v986
      %v1018 = vpack.c.b16 %v989, %v988
      %v1019 = vpack.c.b16 %v991, %v990
      %v1020 = vpack.c.b16 %v993, %v992
      %v1021 = vpack.c.b16 %v995, %v994
      %v1022 = vpack.c.b16 %v997, %v996
      %v1023 = vpack.c.b16 %v999, %v998
      %v1024 = vpack.c.b16 %v1001, %v1000
      %v1025 = vpack.c.b16 %v1003, %v1002
      %v1026 = vpack.c.b16 %v1005, %v1004
      %v1027 = vpack.c.b16 %v1007, %v1006
      %v1028 = vpack.c.b16 %v1009, %v1008
      %v1029 = vpack.c.b16 %v1011, %v1010
      %v1030 = vpack.c.b16 %v1013, %v1012
      %v1031 = vpack.c.b16 %v1015, %v1014
      %v1064 = vunpack.c.l.b16 %v243
      %v1065 = vunpack.c.l.b16 %v244
      %v1066 = vunpack.c.l.b16 %v245
      %v1067 = vunpack.c.l.b16 %v246
      %v1068 = vunpack.c.l.b16 %v247
      %v1069 = vunpack.c.l.b16 %v248
      %v1070 = vunpack.c.l.b16 %v249
      %v1071 = vunpack.c.l.b16 %v250
      %v1072 = vunpack.c.l.b16 %v251
      %v1073 = vunpack.c.l.b16 %v252
      %v1074 = vunpack.c.l.b16 %v253
      %v1075 = vunpack.c.l.b16 %v254
      %v1076 = vunpack.c.l.b16 %v255
      %v1077 = vunpack.c.l.b16 %v256
      %v1078 = vunpack.c.l.b16 %v257
      %v1079 = vunpack.c.l.b16 %v258
      %v1080 = vpack.c.b16 %v1065, %v1064
      %v1081 = vpack.c.b16 %v1067, %v1066
      %v1082 = vpack.c.b16 %v1069, %v1068
      %v1083 = vpack.c.b16 %v1071, %v1070
      %v1084 = vpack.c.b16 %v1073, %v1072
      %v1085 = vpack.c.b16 %v1075, %v1074
      %v1086 = vpack.c.b16 %v1077, %v1076
      %v1087 = vpack.c.b16 %v1079, %v1078
      %1096 = vmatprep.subr.bf16.mxu0 0
      %1097 = vmatpush1.bf16.msra.mxu0 %v1087
      %1098 = vmatprep.subr.bf16.mxu0 0
      %1099 = vmatpush1.bf16.msra.mxu0 %v1086
      %1100 = vmatprep.subr.bf16.mxu0 0
      %1101 = vmatpush1.bf16.msra.mxu0 %v1085
      %1102 = vmatprep.subr.bf16.mxu0 0
      %1103 = vmatpush1.bf16.msra.mxu0 %v1084
      %1104 = vmatprep.subr.bf16.mxu0 0
      %1105 = vmatpush1.bf16.msra.mxu0 %v1083
      %1106 = vmatprep.subr.bf16.mxu0 0
      %1107 = vmatpush1.bf16.msra.mxu0 %v1082
      %1108 = vmatprep.subr.bf16.mxu0 0
      %1109 = vmatpush1.bf16.msra.mxu0 %v1081
      %1110 = vmatprep.subr.bf16.mxu0 0
      %1111 = vmatpush1.bf16.msra.mxu0 %v1080
      %1112 = vmatprep.subr.bf16.mxu0 0
      %1113 = vmatpush2.bf16.msra.mxu0 0
      %1114 = vmatprep.subr.bf16.mxu0 0
      %1115 = vmatpush2.bf16.msra.mxu0 0
      %1116 = vmatprep.subr.bf16.mxu0 0
      %1117 = vmatpush2.bf16.msra.mxu0 0
      %1118 = vmatprep.subr.bf16.mxu0 0
      %1119 = vmatpush2.bf16.msra.mxu0 0
      %1120 = vmatprep.subr.bf16.mxu0 0
      %1121 = vmatpush2.bf16.msra.mxu0 0
      %1122 = vmatprep.subr.bf16.mxu0 0
      %1123 = vmatpush2.bf16.msra.mxu0 0
      %1124 = vmatprep.subr.bf16.mxu0 0
      %1125 = vmatpush2.bf16.msra.mxu0 0
      %1126 = vmatprep.subr.bf16.mxu0 0
      %1127 = vmatpush2.bf16.msra.mxu0 0
      %1128 = vmatprep.mubr.bf16.mxu0 0
      %1129 = vmatmul.mubr.bf16.gmra.mxu0 %v1016
      %v1130 = vpop.f32.mrf.mxu0
      %v1131 = vadd.f32 %v826, %v1130
      %v1132 = vpop.f32.mrf.mxu0
      %v1133 = vpop.f32.mrf.mxu0
      %v1134 = vadd.f32 %v829, %v1133
      %v1135 = vpop.f32.mrf.mxu0
      %1136 = vmatprep.mubr.bf16.mxu0 0
      %1137 = vmatmul.mubr.bf16.gmra.mxu0 %v1017
      %v1138 = vpop.f32.mrf.mxu0
      %v1139 = vadd.f32 %v834, %v1138
      %v1140 = vpop.f32.mrf.mxu0
      %v1141 = vpop.f32.mrf.mxu0
      %v1142 = vadd.f32 %v837, %v1141
      %v1143 = vpop.f32.mrf.mxu0
      %1144 = vmatprep.mubr.bf16.mxu0 0
      %1145 = vmatmul.mubr.bf16.gmra.mxu0 %v1018
      %v1146 = vpop.f32.mrf.mxu0
      %v1147 = vadd.f32 %v842, %v1146
      %v1148 = vpop.f32.mrf.mxu0
      %v1149 = vpop.f32.mrf.mxu0
      %v1150 = vadd.f32 %v845, %v1149
      %v1151 = vpop.f32.mrf.mxu0
      %1152 = vmatprep.mubr.bf16.mxu0 0
      %1153 = vmatmul.mubr.bf16.gmra.mxu0 %v1019
      %v1154 = vpop.f32.mrf.mxu0
      %v1155 = vadd.f32 %v850, %v1154
      %v1156 = vpop.f32.mrf.mxu0
      %v1157 = vpop.f32.mrf.mxu0
      %v1158 = vadd.f32 %v853, %v1157
      %v1159 = vpop.f32.mrf.mxu0
      %1160 = vmatprep.mubr.bf16.mxu0 0
      %1161 = vmatmul.mubr.bf16.gmra.mxu0 %v1020
      %v1162 = vpop.f32.mrf.mxu0
      %v1163 = vadd.f32 %v858, %v1162
      %v1164 = vpop.f32.mrf.mxu0
      %v1165 = vpop.f32.mrf.mxu0
      %v1166 = vadd.f32 %v861, %v1165
      %v1167 = vpop.f32.mrf.mxu0
      %1168 = vmatprep.mubr.bf16.mxu0 0
      %1169 = vmatmul.mubr.bf16.gmra.mxu0 %v1021
      %v1170 = vpop.f32.mrf.mxu0
      %v1171 = vadd.f32 %v866, %v1170
      %v1172 = vpop.f32.mrf.mxu0
      %v1173 = vpop.f32.mrf.mxu0
      %v1174 = vadd.f32 %v869, %v1173
      %v1175 = vpop.f32.mrf.mxu0
      %1176 = vmatprep.mubr.bf16.mxu0 0
      %1177 = vmatmul.mubr.bf16.gmra.mxu0 %v1022
      %v1178 = vpop.f32.mrf.mxu0
      %v1179 = vadd.f32 %v874, %v1178
      %v1180 = vpop.f32.mrf.mxu0
      %v1181 = vpop.f32.mrf.mxu0
      %v1182 = vadd.f32 %v877, %v1181
      %v1183 = vpop.f32.mrf.mxu0
      %1184 = vmatprep.mubr.bf16.mxu0 0
      %1185 = vmatmul.mubr.bf16.gmra.mxu0 %v1023
      %v1186 = vpop.f32.mrf.mxu0
      %v1187 = vadd.f32 %v882, %v1186
      %v1188 = vpop.f32.mrf.mxu0
      %v1189 = vpop.f32.mrf.mxu0
      %v1190 = vadd.f32 %v885, %v1189
      %v1191 = vpop.f32.mrf.mxu0
      %1192 = vmatprep.mubr.bf16.mxu0 0
      %1193 = vmatmul.mubr.bf16.gmra.mxu0 %v1024
      %v1194 = vpop.f32.mrf.mxu0
      %v1195 = vadd.f32 %v890, %v1194
      %v1196 = vpop.f32.mrf.mxu0
      %v1197 = vpop.f32.mrf.mxu0
      %v1198 = vadd.f32 %v893, %v1197
      %v1199 = vpop.f32.mrf.mxu0
      %1200 = vmatprep.mubr.bf16.mxu0 0
      %1201 = vmatmul.mubr.bf16.gmra.mxu0 %v1025
      %v1202 = vpop.f32.mrf.mxu0
      %v1203 = vadd.f32 %v898, %v1202
      %v1204 = vpop.f32.mrf.mxu0
      %v1205 = vpop.f32.mrf.mxu0
      %v1206 = vadd.f32 %v901, %v1205
      %v1207 = vpop.f32.mrf.mxu0
      %1208 = vmatprep.mubr.bf16.mxu0 0
      %1209 = vmatmul.mubr.bf16.gmra.mxu0 %v1026
      %v1210 = vpop.f32.mrf.mxu0
      %v1211 = vadd.f32 %v906, %v1210
      %v1212 = vpop.f32.mrf.mxu0
      %v1213 = vpop.f32.mrf.mxu0
      %v1214 = vadd.f32 %v909, %v1213
      %v1215 = vpop.f32.mrf.mxu0
      %1216 = vmatprep.mubr.bf16.mxu0 0
      %1217 = vmatmul.mubr.bf16.gmra.mxu0 %v1027
      %v1218 = vpop.f32.mrf.mxu0
      %v1219 = vadd.f32 %v914, %v1218
      %v1220 = vpop.f32.mrf.mxu0
      %v1221 = vpop.f32.mrf.mxu0
      %v1222 = vadd.f32 %v917, %v1221
      %v1223 = vpop.f32.mrf.mxu0
      %1224 = vmatprep.mubr.bf16.mxu0 0
      %1225 = vmatmul.mubr.bf16.gmra.mxu0 %v1028
      %v1226 = vpop.f32.mrf.mxu0
      %v1227 = vadd.f32 %v922, %v1226
      %v1228 = vpop.f32.mrf.mxu0
      %v1229 = vpop.f32.mrf.mxu0
      %v1230 = vadd.f32 %v925, %v1229
      %v1231 = vpop.f32.mrf.mxu0
      %1232 = vmatprep.mubr.bf16.mxu0 0
      %1233 = vmatmul.mubr.bf16.gmra.mxu0 %v1029
      %v1234 = vpop.f32.mrf.mxu0
      %v1235 = vadd.f32 %v930, %v1234
      %v1236 = vpop.f32.mrf.mxu0
      %v1237 = vpop.f32.mrf.mxu0
      %v1238 = vadd.f32 %v933, %v1237
      %v1239 = vpop.f32.mrf.mxu0
      %1240 = vmatprep.mubr.bf16.mxu0 0
      %1241 = vmatmul.mubr.bf16.gmra.mxu0 %v1030
      %v1242 = vpop.f32.mrf.mxu0
      %v1243 = vadd.f32 %v938, %v1242
      %v1244 = vpop.f32.mrf.mxu0
      %v1245 = vpop.f32.mrf.mxu0
      %v1246 = vadd.f32 %v941, %v1245
      %v1247 = vpop.f32.mrf.mxu0
      %1248 = vmatprep.mubr.bf16.mxu0 0
      %1249 = vmatmul.mubr.bf16.gmra.mxu0 %v1031
      %v1250 = vpop.f32.mrf.mxu0
      %v1251 = vadd.f32 %v946, %v1250
      %v1252 = vpop.f32.mrf.mxu0
      %v1253 = vpop.f32.mrf.mxu0
      %v1254 = vadd.f32 %v949, %v1253
      %v1255 = vpop.f32.mrf.mxu0
      %1256 = vdwg.mxu0
      %v1257 = vld [vmem:[%s198] sm:$0xe]
      %v1258 = vld [vmem:[%s198 + $0xc] sm:$0xe]
      %v1259 = vld [vmem:[%s198 + $0x18] sm:$0xe]
      %v1260 = vld [vmem:[%s198 + $0x24] sm:$0xe]
      %v1261 = vld [vmem:[%s198 + $0x30] sm:$0xe]
      %v1262 = vld [vmem:[%s198 + $0x3c] sm:$0xe]
      %v1263 = vld [vmem:[%s198 + $0x48] sm:$0xe]
      %v1264 = vld [vmem:[%s198 + $0x54] sm:$0xe]
      %v1265 = vld [vmem:[%s198 + $0x60] sm:$0xe]
      %v1266 = vld [vmem:[%s198 + $0x6c] sm:$0xe]
      %v1267 = vld [vmem:[%s198 + $0x78] sm:$0xe]
      %v1268 = vld [vmem:[%s198 + $0x84] sm:$0xe]
      %v1269 = vld [vmem:[%s198 + $0x90] sm:$0xe]
      %v1270 = vld [vmem:[%s198 + $0x9c] sm:$0xe]
      %v1271 = vld [vmem:[%s198 + $0xa8] sm:$0xe]
      %v1272 = vld [vmem:[%s198 + $0xb4] sm:$0xe]
      %vm1305 = vcmask 1042432
      %vm1306 = vcmask 1046532
      %vm1307 = vmor %vm1305, %vm1306
      %v1308 = vrot.slane %v1257, 5
      %v1309 = vrot.slane %v1308, 4
      %v1310 = vrot.slane %v212, 5
      %v1311 = vsel %vm1307, %v1309, %v1310
      %v1312 = vrot.slane %v1310, 4
      %v1313 = vrot.slane %v259, 5
      %v1314 = vsel %vm1307, %v1312, %v1313
      %v1315 = vrot.slane %v1258, 5
      %v1316 = vrot.slane %v1315, 4
      %v1317 = vrot.slane %v214, 5
      %v1318 = vsel %vm1307, %v1316, %v1317
      %v1319 = vrot.slane %v1317, 4
      %v1320 = vrot.slane %v260, 5
      %v1321 = vsel %vm1307, %v1319, %v1320
      %v1322 = vrot.slane %v1259, 5
      %v1323 = vrot.slane %v1322, 4
      %v1324 = vrot.slane %v216, 5
      %v1325 = vsel %vm1307, %v1323, %v1324
      %v1326 = vrot.slane %v1324, 4
      %v1327 = vrot.slane %v261, 5
      %v1328 = vsel %vm1307, %v1326, %v1327
      %v1329 = vrot.slane %v1260, 5
      %v1330 = vrot.slane %v1329, 4
      %v1331 = vrot.slane %v218, 5
      %v1332 = vsel %vm1307, %v1330, %v1331
      %v1333 = vrot.slane %v1331, 4
      %v1334 = vrot.slane %v262, 5
      %v1335 = vsel %vm1307, %v1333, %v1334
      %v1336 = vrot.slane %v1261, 5
      %v1337 = vrot.slane %v1336, 4
      %v1338 = vrot.slane %v220, 5
      %v1339 = vsel %vm1307, %v1337, %v1338
      %v1340 = vrot.slane %v1338, 4
      %v1341 = vrot.slane %v263, 5
      %v1342 = vsel %vm1307, %v1340, %v1341
      %v1343 = vrot.slane %v1262, 5
      %v1344 = vrot.slane %v1343, 4
      %v1345 = vrot.slane %v222, 5
      %v1346 = vsel %vm1307, %v1344, %v1345
      %v1347 = vrot.slane %v1345, 4
      %v1348 = vrot.slane %v264, 5
      %v1349 = vsel %vm1307, %v1347, %v1348
      %v1350 = vrot.slane %v1263, 5
      %v1351 = vrot.slane %v1350, 4
      %v1352 = vrot.slane %v224, 5
      %v1353 = vsel %vm1307, %v1351, %v1352
      %v1354 = vrot.slane %v1352, 4
      %v1355 = vrot.slane %v265, 5
      %v1356 = vsel %vm1307, %v1354, %v1355
      %v1357 = vrot.slane %v1264, 5
      %v1358 = vrot.slane %v1357, 4
      %v1359 = vrot.slane %v226, 5
      %v1360 = vsel %vm1307, %v1358, %v1359
      %v1361 = vrot.slane %v1359, 4
      %v1362 = vrot.slane %v266, 5
      %v1363 = vsel %vm1307, %v1361, %v1362
      %v1364 = vrot.slane %v1265, 5
      %v1365 = vrot.slane %v1364, 4
      %v1366 = vrot.slane %v228, 5
      %v1367 = vsel %vm1307, %v1365, %v1366
      %v1368 = vrot.slane %v1366, 4
      %v1369 = vrot.slane %v267, 5
      %v1370 = vsel %vm1307, %v1368, %v1369
      %v1371 = vrot.slane %v1266, 5
      %v1372 = vrot.slane %v1371, 4
      %v1373 = vrot.slane %v230, 5
      %v1374 = vsel %vm1307, %v1372, %v1373
      %v1375 = vrot.slane %v1373, 4
      %v1376 = vrot.slane %v268, 5
      %v1377 = vsel %vm1307, %v1375, %v1376
      %v1378 = vrot.slane %v1267, 5
      %v1379 = vrot.slane %v1378, 4
      %v1380 = vrot.slane %v232, 5
      %v1381 = vsel %vm1307, %v1379, %v1380
      %v1382 = vrot.slane %v1380, 4
      %v1383 = vrot.slane %v269, 5
      %v1384 = vsel %vm1307, %v1382, %v1383
      %v1385 = vrot.slane %v1268, 5
      %v1386 = vrot.slane %v1385, 4
      %v1387 = vrot.slane %v234, 5
      %v1388 = vsel %vm1307, %v1386, %v1387
      %v1389 = vrot.slane %v1387, 4
      %v1390 = vrot.slane %v270, 5
      %v1391 = vsel %vm1307, %v1389, %v1390
      %v1392 = vrot.slane %v1269, 5
      %v1393 = vrot.slane %v1392, 4
      %v1394 = vrot.slane %v236, 5
      %v1395 = vsel %vm1307, %v1393, %v1394
      %v1396 = vrot.slane %v1394, 4
      %v1397 = vrot.slane %v271, 5
      %v1398 = vsel %vm1307, %v1396, %v1397
      %v1399 = vrot.slane %v1270, 5
      %v1400 = vrot.slane %v1399, 4
      %v1401 = vrot.slane %v238, 5
      %v1402 = vsel %vm1307, %v1400, %v1401
      %v1403 = vrot.slane %v1401, 4
      %v1404 = vrot.slane %v272, 5
      %v1405 = vsel %vm1307, %v1403, %v1404
      %v1406 = vrot.slane %v1271, 5
      %v1407 = vrot.slane %v1406, 4
      %v1408 = vrot.slane %v240, 5
      %v1409 = vsel %vm1307, %v1407, %v1408
      %v1410 = vrot.slane %v1408, 4
      %v1411 = vrot.slane %v273, 5
      %v1412 = vsel %vm1307, %v1410, %v1411
      %v1413 = vrot.slane %v1272, 5
      %v1414 = vrot.slane %v1413, 4
      %v1415 = vrot.slane %v242, 5
      %v1416 = vsel %vm1307, %v1414, %v1415
      %v1417 = vrot.slane %v1415, 4
      %v1418 = vrot.slane %v274, 5
      %v1419 = vsel %vm1307, %v1417, %v1418
      %s1420 = scalar_lea.vmem %s1, 128
      %v1421 = vld [vmem:[%s1420] sm:$0xf]
      %v1422 = vld [vmem:[%s1420 + $0x4] sm:$0xf]
      %v1423 = vld [vmem:[%s1420 + $0x8] sm:$0xf]
      %v1424 = vld [vmem:[%s1420 + $0xc] sm:$0xf]
      %v1425 = vld [vmem:[%s1420 + $0x10] sm:$0xf]
      %v1426 = vld [vmem:[%s1420 + $0x14] sm:$0xf]
      %v1427 = vld [vmem:[%s1420 + $0x18] sm:$0xf]
      %v1428 = vld [vmem:[%s1420 + $0x1c] sm:$0xf]
      %v1429 = vld [vmem:[%s1420 + $0x20] sm:$0xf]
      %v1430 = vld [vmem:[%s1420 + $0x24] sm:$0xf]
      %v1431 = vld [vmem:[%s1420 + $0x28] sm:$0xf]
      %v1432 = vld [vmem:[%s1420 + $0x2c] sm:$0xf]
      %v1433 = vld [vmem:[%s1420 + $0x30] sm:$0xf]
      %v1434 = vld [vmem:[%s1420 + $0x34] sm:$0xf]
      %v1435 = vld [vmem:[%s1420 + $0x38] sm:$0xf]
      %v1436 = vld [vmem:[%s1420 + $0x3c] sm:$0xf]
      %v1437 = vunpack.c.l.b16 %v1311
      %v1438 = vunpack.c.l.b16 %v1314
      %v1439 = vunpack.c.l.b16 %v1318
      %v1440 = vunpack.c.l.b16 %v1321
      %v1441 = vunpack.c.l.b16 %v1325
      %v1442 = vunpack.c.l.b16 %v1328
      %v1443 = vunpack.c.l.b16 %v1332
      %v1444 = vunpack.c.l.b16 %v1335
      %v1445 = vunpack.c.l.b16 %v1339
      %v1446 = vunpack.c.l.b16 %v1342
      %v1447 = vunpack.c.l.b16 %v1346
      %v1448 = vunpack.c.l.b16 %v1349
      %v1449 = vunpack.c.l.b16 %v1353
      %v1450 = vunpack.c.l.b16 %v1356
      %v1451 = vunpack.c.l.b16 %v1360
      %v1452 = vunpack.c.l.b16 %v1363
      %v1453 = vunpack.c.l.b16 %v1367
      %v1454 = vunpack.c.l.b16 %v1370
      %v1455 = vunpack.c.l.b16 %v1374
      %v1456 = vunpack.c.l.b16 %v1377
      %v1457 = vunpack.c.l.b16 %v1381
      %v1458 = vunpack.c.l.b16 %v1384
      %v1459 = vunpack.c.l.b16 %v1388
      %v1460 = vunpack.c.l.b16 %v1391
      %v1461 = vunpack.c.l.b16 %v1395
      %v1462 = vunpack.c.l.b16 %v1398
      %v1463 = vunpack.c.l.b16 %v1402
      %v1464 = vunpack.c.l.b16 %v1405
      %v1465 = vunpack.c.l.b16 %v1409
      %v1466 = vunpack.c.l.b16 %v1412
      %v1467 = vunpack.c.l.b16 %v1416
      %v1468 = vunpack.c.l.b16 %v1419
      %v1469 = vpack.c.b16 %v1438, %v1437
      %v1470 = vpack.c.b16 %v1440, %v1439
      %v1471 = vpack.c.b16 %v1442, %v1441
      %v1472 = vpack.c.b16 %v1444, %v1443
      %v1473 = vpack.c.b16 %v1446, %v1445
      %v1474 = vpack.c.b16 %v1448, %v1447
      %v1475 = vpack.c.b16 %v1450, %v1449
      %v1476 = vpack.c.b16 %v1452, %v1451
      %v1477 = vpack.c.b16 %v1454, %v1453
      %v1478 = vpack.c.b16 %v1456, %v1455
      %v1479 = vpack.c.b16 %v1458, %v1457
      %v1480 = vpack.c.b16 %v1460, %v1459
      %v1481 = vpack.c.b16 %v1462, %v1461
      %v1482 = vpack.c.b16 %v1464, %v1463
      %v1483 = vpack.c.b16 %v1466, %v1465
      %v1484 = vpack.c.b16 %v1468, %v1467
      %v1517 = vunpack.c.l.b16 %v1421
      %v1518 = vunpack.c.l.b16 %v1422
      %v1519 = vunpack.c.l.b16 %v1423
      %v1520 = vunpack.c.l.b16 %v1424
      %v1521 = vunpack.c.l.b16 %v1425
      %v1522 = vunpack.c.l.b16 %v1426
      %v1523 = vunpack.c.l.b16 %v1427
      %v1524 = vunpack.c.l.b16 %v1428
      %v1525 = vunpack.c.l.b16 %v1429
      %v1526 = vunpack.c.l.b16 %v1430
      %v1527 = vunpack.c.l.b16 %v1431
      %v1528 = vunpack.c.l.b16 %v1432
      %v1529 = vunpack.c.l.b16 %v1433
      %v1530 = vunpack.c.l.b16 %v1434
      %v1531 = vunpack.c.l.b16 %v1435
      %v1532 = vunpack.c.l.b16 %v1436
      %v1533 = vpack.c.b16 %v1518, %v1517
      %v1534 = vpack.c.b16 %v1520, %v1519
      %v1535 = vpack.c.b16 %v1522, %v1521
      %v1536 = vpack.c.b16 %v1524, %v1523
      %v1537 = vpack.c.b16 %v1526, %v1525
      %v1538 = vpack.c.b16 %v1528, %v1527
      %v1539 = vpack.c.b16 %v1530, %v1529
      %v1540 = vpack.c.b16 %v1532, %v1531
      %1549 = vmatprep.subr.bf16.mxu0 0
      %1550 = vmatpush1.bf16.msra.mxu0 %v1540
      %1551 = vmatprep.subr.bf16.mxu0 0
      %1552 = vmatpush1.bf16.msra.mxu0 %v1539
      %1553 = vmatprep.subr.bf16.mxu0 0
      %1554 = vmatpush1.bf16.msra.mxu0 %v1538
      %1555 = vmatprep.subr.bf16.mxu0 0
      %1556 = vmatpush1.bf16.msra.mxu0 %v1537
      %1557 = vmatprep.subr.bf16.mxu0 0
      %1558 = vmatpush1.bf16.msra.mxu0 %v1536
      %1559 = vmatprep.subr.bf16.mxu0 0
      %1560 = vmatpush1.bf16.msra.mxu0 %v1535
      %1561 = vmatprep.subr.bf16.mxu0 0
      %1562 = vmatpush1.bf16.msra.mxu0 %v1534
      %1563 = vmatprep.subr.bf16.mxu0 0
      %1564 = vmatpush1.bf16.msra.mxu0 %v1533
      %1565 = vmatprep.subr.bf16.mxu0 0
      %1566 = vmatpush2.bf16.msra.mxu0 0
      %1567 = vmatprep.subr.bf16.mxu0 0
      %1568 = vmatpush2.bf16.msra.mxu0 0
      %1569 = vmatprep.subr.bf16.mxu0 0
      %1570 = vmatpush2.bf16.msra.mxu0 0
      %1571 = vmatprep.subr.bf16.mxu0 0
      %1572 = vmatpush2.bf16.msra.mxu0 0
      %1573 = vmatprep.subr.bf16.mxu0 0
      %1574 = vmatpush2.bf16.msra.mxu0 0
      %1575 = vmatprep.subr.bf16.mxu0 0
      %1576 = vmatpush2.bf16.msra.mxu0 0
      %1577 = vmatprep.subr.bf16.mxu0 0
      %1578 = vmatpush2.bf16.msra.mxu0 0
      %1579 = vmatprep.subr.bf16.mxu0 0
      %1580 = vmatpush2.bf16.msra.mxu0 0
      %1581 = vmatprep.mubr.bf16.mxu0 0
      %1582 = vmatmul.mubr.bf16.gmra.mxu0 %v1469
      %v1583 = vpop.f32.mrf.mxu0
      %v1584 = vadd.f32 0.0, %v1583
      %v1585 = vpop.f32.mrf.mxu0
      %v1586 = vpop.f32.mrf.mxu0
      %v1587 = vadd.f32 0.0, %v1586
      %v1588 = vpop.f32.mrf.mxu0
      %1589 = vmatprep.mubr.bf16.mxu0 0
      %1590 = vmatmul.mubr.bf16.gmra.mxu0 %v1470
      %v1591 = vpop.f32.mrf.mxu0
      %v1592 = vadd.f32 0.0, %v1591
      %v1593 = vpop.f32.mrf.mxu0
      %v1594 = vpop.f32.mrf.mxu0
      %v1595 = vadd.f32 0.0, %v1594
      %v1596 = vpop.f32.mrf.mxu0
      %1597 = vmatprep.mubr.bf16.mxu0 0
      %1598 = vmatmul.mubr.bf16.gmra.mxu0 %v1471
      %v1599 = vpop.f32.mrf.mxu0
      %v1600 = vadd.f32 0.0, %v1599
      %v1601 = vpop.f32.mrf.mxu0
      %v1602 = vpop.f32.mrf.mxu0
      %v1603 = vadd.f32 0.0, %v1602
      %v1604 = vpop.f32.mrf.mxu0
      %1605 = vmatprep.mubr.bf16.mxu0 0
      %1606 = vmatmul.mubr.bf16.gmra.mxu0 %v1472
      %v1607 = vpop.f32.mrf.mxu0
      %v1608 = vadd.f32 0.0, %v1607
      %v1609 = vpop.f32.mrf.mxu0
      %v1610 = vpop.f32.mrf.mxu0
      %v1611 = vadd.f32 0.0, %v1610
      %v1612 = vpop.f32.mrf.mxu0
      %1613 = vmatprep.mubr.bf16.mxu0 0
      %1614 = vmatmul.mubr.bf16.gmra.mxu0 %v1473
      %v1615 = vpop.f32.mrf.mxu0
      %v1616 = vadd.f32 0.0, %v1615
      %v1617 = vpop.f32.mrf.mxu0
      %v1618 = vpop.f32.mrf.mxu0
      %v1619 = vadd.f32 0.0, %v1618
      %v1620 = vpop.f32.mrf.mxu0
      %1621 = vmatprep.mubr.bf16.mxu0 0
      %1622 = vmatmul.mubr.bf16.gmra.mxu0 %v1474
      %v1623 = vpop.f32.mrf.mxu0
      %v1624 = vadd.f32 0.0, %v1623
      %v1625 = vpop.f32.mrf.mxu0
      %v1626 = vpop.f32.mrf.mxu0
      %v1627 = vadd.f32 0.0, %v1626
      %v1628 = vpop.f32.mrf.mxu0
      %1629 = vmatprep.mubr.bf16.mxu0 0
      %1630 = vmatmul.mubr.bf16.gmra.mxu0 %v1475
      %v1631 = vpop.f32.mrf.mxu0
      %v1632 = vadd.f32 0.0, %v1631
      %v1633 = vpop.f32.mrf.mxu0
      %v1634 = vpop.f32.mrf.mxu0
      %v1635 = vadd.f32 0.0, %v1634
      %v1636 = vpop.f32.mrf.mxu0
      %1637 = vmatprep.mubr.bf16.mxu0 0
      %1638 = vmatmul.mubr.bf16.gmra.mxu0 %v1476
      %v1639 = vpop.f32.mrf.mxu0
      %v1640 = vadd.f32 0.0, %v1639
      %v1641 = vpop.f32.mrf.mxu0
      %v1642 = vpop.f32.mrf.mxu0
      %v1643 = vadd.f32 0.0, %v1642
      %v1644 = vpop.f32.mrf.mxu0
      %1645 = vmatprep.mubr.bf16.mxu0 0
      %1646 = vmatmul.mubr.bf16.gmra.mxu0 %v1477
      %v1647 = vpop.f32.mrf.mxu0
      %v1648 = vadd.f32 0.0, %v1647
      %v1649 = vpop.f32.mrf.mxu0
      %v1650 = vpop.f32.mrf.mxu0
      %v1651 = vadd.f32 0.0, %v1650
      %v1652 = vpop.f32.mrf.mxu0
      %1653 = vmatprep.mubr.bf16.mxu0 0
      %1654 = vmatmul.mubr.bf16.gmra.mxu0 %v1478
      %v1655 = vpop.f32.mrf.mxu0
      %v1656 = vadd.f32 0.0, %v1655
      %v1657 = vpop.f32.mrf.mxu0
      %v1658 = vpop.f32.mrf.mxu0
      %v1659 = vadd.f32 0.0, %v1658
      %v1660 = vpop.f32.mrf.mxu0
      %1661 = vmatprep.mubr.bf16.mxu0 0
      %1662 = vmatmul.mubr.bf16.gmra.mxu0 %v1479
      %v1663 = vpop.f32.mrf.mxu0
      %v1664 = vadd.f32 0.0, %v1663
      %v1665 = vpop.f32.mrf.mxu0
      %v1666 = vpop.f32.mrf.mxu0
      %v1667 = vadd.f32 0.0, %v1666
      %v1668 = vpop.f32.mrf.mxu0
      %1669 = vmatprep.mubr.bf16.mxu0 0
      %1670 = vmatmul.mubr.bf16.gmra.mxu0 %v1480
      %v1671 = vpop.f32.mrf.mxu0
      %v1672 = vadd.f32 0.0, %v1671
      %v1673 = vpop.f32.mrf.mxu0
      %v1674 = vpop.f32.mrf.mxu0
      %v1675 = vadd.f32 0.0, %v1674
      %v1676 = vpop.f32.mrf.mxu0
      %1677 = vmatprep.mubr.bf16.mxu0 0
      %1678 = vmatmul.mubr.bf16.gmra.mxu0 %v1481
      %v1679 = vpop.f32.mrf.mxu0
      %v1680 = vadd.f32 0.0, %v1679
      %v1681 = vpop.f32.mrf.mxu0
      %v1682 = vpop.f32.mrf.mxu0
      %v1683 = vadd.f32 0.0, %v1682
      %v1684 = vpop.f32.mrf.mxu0
      %1685 = vmatprep.mubr.bf16.mxu0 0
      %1686 = vmatmul.mubr.bf16.gmra.mxu0 %v1482
      %v1687 = vpop.f32.mrf.mxu0
      %v1688 = vadd.f32 0.0, %v1687
      %v1689 = vpop.f32.mrf.mxu0
      %v1690 = vpop.f32.mrf.mxu0
      %v1691 = vadd.f32 0.0, %v1690
      %v1692 = vpop.f32.mrf.mxu0
      %1693 = vmatprep.mubr.bf16.mxu0 0
      %1694 = vmatmul.mubr.bf16.gmra.mxu0 %v1483
      %v1695 = vpop.f32.mrf.mxu0
      %v1696 = vadd.f32 0.0, %v1695
      %v1697 = vpop.f32.mrf.mxu0
      %v1698 = vpop.f32.mrf.mxu0
      %v1699 = vadd.f32 0.0, %v1698
      %v1700 = vpop.f32.mrf.mxu0
      %1701 = vmatprep.mubr.bf16.mxu0 0
      %1702 = vmatmul.mubr.bf16.gmra.mxu0 %v1484
      %v1703 = vpop.f32.mrf.mxu0
      %v1704 = vadd.f32 0.0, %v1703
      %v1705 = vpop.f32.mrf.mxu0
      %v1706 = vpop.f32.mrf.mxu0
      %v1707 = vadd.f32 0.0, %v1706
      %v1708 = vpop.f32.mrf.mxu0
      %1709 = vdwg.mxu0
      %v1710 = vadd.f32 %v1131, %v1584
      %v1711 = vadd.f32 %v1134, %v1587
      %v1712 = vadd.f32 %v1139, %v1592
      %v1713 = vadd.f32 %v1142, %v1595
      %v1714 = vadd.f32 %v1147, %v1600
      %v1715 = vadd.f32 %v1150, %v1603
      %v1716 = vadd.f32 %v1155, %v1608
      %v1717 = vadd.f32 %v1158, %v1611
      %v1718 = vadd.f32 %v1163, %v1616
      %v1719 = vadd.f32 %v1166, %v1619
      %v1720 = vadd.f32 %v1171, %v1624
      %v1721 = vadd.f32 %v1174, %v1627
      %v1722 = vadd.f32 %v1179, %v1632
      %v1723 = vadd.f32 %v1182, %v1635
      %v1724 = vadd.f32 %v1187, %v1640
      %v1725 = vadd.f32 %v1190, %v1643
      %v1726 = vadd.f32 %v1195, %v1648
      %v1727 = vadd.f32 %v1198, %v1651
      %v1728 = vadd.f32 %v1203, %v1656
      %v1729 = vadd.f32 %v1206, %v1659
      %v1730 = vadd.f32 %v1211, %v1664
      %v1731 = vadd.f32 %v1214, %v1667
      %v1732 = vadd.f32 %v1219, %v1672
      %v1733 = vadd.f32 %v1222, %v1675
      %v1734 = vadd.f32 %v1227, %v1680
      %v1735 = vadd.f32 %v1230, %v1683
      %v1736 = vadd.f32 %v1235, %v1688
      %v1737 = vadd.f32 %v1238, %v1691
      %v1738 = vadd.f32 %v1243, %v1696
      %v1739 = vadd.f32 %v1246, %v1699
      %v1740 = vadd.f32 %v1251, %v1704
      %v1741 = vadd.f32 %v1254, %v1707
      %s1742 = scalar_lea.vmem %s198, 12
      %v1743 = vld [vmem:[%s1742] sm:$0xf]
      %v1744 = vld [vmem:[%s1742 + $0x4] sm:$0xf]
      %v1745 = vld [vmem:[%s1742 + $0xc] sm:$0xf]
      %v1746 = vld [vmem:[%s1742 + $0x10] sm:$0xf]
      %v1747 = vld [vmem:[%s1742 + $0x18] sm:$0xf]
      %v1748 = vld [vmem:[%s1742 + $0x1c] sm:$0xf]
      %v1749 = vld [vmem:[%s1742 + $0x24] sm:$0xf]
      %v1750 = vld [vmem:[%s1742 + $0x28] sm:$0xf]
      %v1751 = vld [vmem:[%s1742 + $0x30] sm:$0xf]
      %v1752 = vld [vmem:[%s1742 + $0x34] sm:$0xf]
      %v1753 = vld [vmem:[%s1742 + $0x3c] sm:$0xf]
      %v1754 = vld [vmem:[%s1742 + $0x40] sm:$0xf]
      %v1755 = vld [vmem:[%s1742 + $0x48] sm:$0xf]
      %v1756 = vld [vmem:[%s1742 + $0x4c] sm:$0xf]
      %v1757 = vld [vmem:[%s1742 + $0x54] sm:$0xf]
      %v1758 = vld [vmem:[%s1742 + $0x58] sm:$0xf]
      %v1759 = vld [vmem:[%s1742 + $0x60] sm:$0xf]
      %v1760 = vld [vmem:[%s1742 + $0x64] sm:$0xf]
      %v1761 = vld [vmem:[%s1742 + $0x6c] sm:$0xf]
      %v1762 = vld [vmem:[%s1742 + $0x70] sm:$0xf]
      %v1763 = vld [vmem:[%s1742 + $0x78] sm:$0xf]
      %v1764 = vld [vmem:[%s1742 + $0x7c] sm:$0xf]
      %v1765 = vld [vmem:[%s1742 + $0x84] sm:$0xf]
      %v1766 = vld [vmem:[%s1742 + $0x88] sm:$0xf]
      %v1767 = vld [vmem:[%s1742 + $0x90] sm:$0xf]
      %v1768 = vld [vmem:[%s1742 + $0x94] sm:$0xf]
      %v1769 = vld [vmem:[%s1742 + $0x9c] sm:$0xf]
      %v1770 = vld [vmem:[%s1742 + $0xa0] sm:$0xf]
      %v1771 = vld [vmem:[%s1742 + $0xa8] sm:$0xf]
      %v1772 = vld [vmem:[%s1742 + $0xac] sm:$0xf]
      %v1773 = vld [vmem:[%s1742 + $0xb4] sm:$0xf]
      %v1774 = vld [vmem:[%s1742 + $0xb8] sm:$0xf]
      %s1775 = scalar_lea.vmem %s1, 192
      %v1776 = vld [vmem:[%s1775] sm:$0xf]
      %v1777 = vld [vmem:[%s1775 + $0x4] sm:$0xf]
      %v1778 = vld [vmem:[%s1775 + $0x8] sm:$0xf]
      %v1779 = vld [vmem:[%s1775 + $0xc] sm:$0xf]
      %v1780 = vld [vmem:[%s1775 + $0x10] sm:$0xf]
      %v1781 = vld [vmem:[%s1775 + $0x14] sm:$0xf]
      %v1782 = vld [vmem:[%s1775 + $0x18] sm:$0xf]
      %v1783 = vld [vmem:[%s1775 + $0x1c] sm:$0xf]
      %v1784 = vld [vmem:[%s1775 + $0x20] sm:$0xf]
      %v1785 = vld [vmem:[%s1775 + $0x24] sm:$0xf]
      %v1786 = vld [vmem:[%s1775 + $0x28] sm:$0xf]
      %v1787 = vld [vmem:[%s1775 + $0x2c] sm:$0xf]
      %v1788 = vld [vmem:[%s1775 + $0x30] sm:$0xf]
      %v1789 = vld [vmem:[%s1775 + $0x34] sm:$0xf]
      %v1790 = vld [vmem:[%s1775 + $0x38] sm:$0xf]
      %v1791 = vld [vmem:[%s1775 + $0x3c] sm:$0xf]
      %v1824 = vunpack.c.l.b16 %v1743
      %v1825 = vunpack.c.l.b16 %v1744
      %v1826 = vunpack.c.l.b16 %v1745
      %v1827 = vunpack.c.l.b16 %v1746
      %v1828 = vunpack.c.l.b16 %v1747
      %v1829 = vunpack.c.l.b16 %v1748
      %v1830 = vunpack.c.l.b16 %v1749
      %v1831 = vunpack.c.l.b16 %v1750
      %v1832 = vunpack.c.l.b16 %v1751
      %v1833 = vunpack.c.l.b16 %v1752
      %v1834 = vunpack.c.l.b16 %v1753
      %v1835 = vunpack.c.l.b16 %v1754
      %v1836 = vunpack.c.l.b16 %v1755
      %v1837 = vunpack.c.l.b16 %v1756
      %v1838 = vunpack.c.l.b16 %v1757
      %v1839 = vunpack.c.l.b16 %v1758
      %v1840 = vunpack.c.l.b16 %v1759
      %v1841 = vunpack.c.l.b16 %v1760
      %v1842 = vunpack.c.l.b16 %v1761
      %v1843 = vunpack.c.l.b16 %v1762
      %v1844 = vunpack.c.l.b16 %v1763
      %v1845 = vunpack.c.l.b16 %v1764
      %v1846 = vunpack.c.l.b16 %v1765
      %v1847 = vunpack.c.l.b16 %v1766
      %v1848 = vunpack.c.l.b16 %v1767
      %v1849 = vunpack.c.l.b16 %v1768
      %v1850 = vunpack.c.l.b16 %v1769
      %v1851 = vunpack.c.l.b16 %v1770
      %v1852 = vunpack.c.l.b16 %v1771
      %v1853 = vunpack.c.l.b16 %v1772
      %v1854 = vunpack.c.l.b16 %v1773
      %v1855 = vunpack.c.l.b16 %v1774
      %v1856 = vpack.c.b16 %v1825, %v1824
      %v1857 = vpack.c.b16 %v1827, %v1826
      %v1858 = vpack.c.b16 %v1829, %v1828
      %v1859 = vpack.c.b16 %v1831, %v1830
      %v1860 = vpack.c.b16 %v1833, %v1832
      %v1861 = vpack.c.b16 %v1835, %v1834
      %v1862 = vpack.c.b16 %v1837, %v1836
      %v1863 = vpack.c.b16 %v1839, %v1838
      %v1864 = vpack.c.b16 %v1841, %v1840
      %v1865 = vpack.c.b16 %v1843, %v1842
      %v1866 = vpack.c.b16 %v1845, %v1844
      %v1867 = vpack.c.b16 %v1847, %v1846
      %v1868 = vpack.c.b16 %v1849, %v1848
      %v1869 = vpack.c.b16 %v1851, %v1850
      %v1870 = vpack.c.b16 %v1853, %v1852
      %v1871 = vpack.c.b16 %v1855, %v1854
      %v1904 = vunpack.c.l.b16 %v1776
      %v1905 = vunpack.c.l.b16 %v1777
      %v1906 = vunpack.c.l.b16 %v1778
      %v1907 = vunpack.c.l.b16 %v1779
      %v1908 = vunpack.c.l.b16 %v1780
      %v1909 = vunpack.c.l.b16 %v1781
      %v1910 = vunpack.c.l.b16 %v1782
      %v1911 = vunpack.c.l.b16 %v1783
      %v1912 = vunpack.c.l.b16 %v1784
      %v1913 = vunpack.c.l.b16 %v1785
      %v1914 = vunpack.c.l.b16 %v1786
      %v1915 = vunpack.c.l.b16 %v1787
      %v1916 = vunpack.c.l.b16 %v1788
      %v1917 = vunpack.c.l.b16 %v1789
      %v1918 = vunpack.c.l.b16 %v1790
      %v1919 = vunpack.c.l.b16 %v1791
      %v1920 = vpack.c.b16 %v1905, %v1904
      %v1921 = vpack.c.b16 %v1907, %v1906
      %v1922 = vpack.c.b16 %v1909, %v1908
      %v1923 = vpack.c.b16 %v1911, %v1910
      %v1924 = vpack.c.b16 %v1913, %v1912
      %v1925 = vpack.c.b16 %v1915, %v1914
      %v1926 = vpack.c.b16 %v1917, %v1916
      %v1927 = vpack.c.b16 %v1919, %v1918
      %1936 = vmatprep.subr.bf16.mxu0 0
      %1937 = vmatpush1.bf16.msra.mxu0 %v1927
      %1938 = vmatprep.subr.bf16.mxu0 0
      %1939 = vmatpush1.bf16.msra.mxu0 %v1926
      %1940 = vmatprep.subr.bf16.mxu0 0
      %1941 = vmatpush1.bf16.msra.mxu0 %v1925
      %1942 = vmatprep.subr.bf16.mxu0 0
      %1943 = vmatpush1.bf16.msra.mxu0 %v1924
      %1944 = vmatprep.subr.bf16.mxu0 0
      %1945 = vmatpush1.bf16.msra.mxu0 %v1923
      %1946 = vmatprep.subr.bf16.mxu0 0
      %1947 = vmatpush1.bf16.msra.mxu0 %v1922
      %1948 = vmatprep.subr.bf16.mxu0 0
      %1949 = vmatpush1.bf16.msra.mxu0 %v1921
      %1950 = vmatprep.subr.bf16.mxu0 0
      %1951 = vmatpush1.bf16.msra.mxu0 %v1920
      %1952 = vmatprep.subr.bf16.mxu0 0
      %1953 = vmatpush2.bf16.msra.mxu0 0
      %1954 = vmatprep.subr.bf16.mxu0 0
      %1955 = vmatpush2.bf16.msra.mxu0 0
      %1956 = vmatprep.subr.bf16.mxu0 0
      %1957 = vmatpush2.bf16.msra.mxu0 0
      %1958 = vmatprep.subr.bf16.mxu0 0
      %1959 = vmatpush2.bf16.msra.mxu0 0
      %1960 = vmatprep.subr.bf16.mxu0 0
      %1961 = vmatpush2.bf16.msra.mxu0 0
      %1962 = vmatprep.subr.bf16.mxu0 0
      %1963 = vmatpush2.bf16.msra.mxu0 0
      %1964 = vmatprep.subr.bf16.mxu0 0
      %1965 = vmatpush2.bf16.msra.mxu0 0
      %1966 = vmatprep.subr.bf16.mxu0 0
      %1967 = vmatpush2.bf16.msra.mxu0 0
      %1968 = vmatprep.mubr.bf16.mxu0 0
      %1969 = vmatmul.mubr.bf16.gmra.mxu0 %v1856
      %v1970 = vpop.f32.mrf.mxu0
      %v1971 = vadd.f32 0.0, %v1970
      %v1972 = vpop.f32.mrf.mxu0
      %v1973 = vpop.f32.mrf.mxu0
      %v1974 = vadd.f32 0.0, %v1973
      %v1975 = vpop.f32.mrf.mxu0
      %1976 = vmatprep.mubr.bf16.mxu0 0
      %1977 = vmatmul.mubr.bf16.gmra.mxu0 %v1857
      %v1978 = vpop.f32.mrf.mxu0
      %v1979 = vadd.f32 0.0, %v1978
      %v1980 = vpop.f32.mrf.mxu0
      %v1981 = vpop.f32.mrf.mxu0
      %v1982 = vadd.f32 0.0, %v1981
      %v1983 = vpop.f32.mrf.mxu0
      %1984 = vmatprep.mubr.bf16.mxu0 0
      %1985 = vmatmul.mubr.bf16.gmra.mxu0 %v1858
      %v1986 = vpop.f32.mrf.mxu0
      %v1987 = vadd.f32 0.0, %v1986
      %v1988 = vpop.f32.mrf.mxu0
      %v1989 = vpop.f32.mrf.mxu0
      %v1990 = vadd.f32 0.0, %v1989
      %v1991 = vpop.f32.mrf.mxu0
      %1992 = vmatprep.mubr.bf16.mxu0 0
      %1993 = vmatmul.mubr.bf16.gmra.mxu0 %v1859
      %v1994 = vpop.f32.mrf.mxu0
      %v1995 = vadd.f32 0.0, %v1994
      %v1996 = vpop.f32.mrf.mxu0
      %v1997 = vpop.f32.mrf.mxu0
      %v1998 = vadd.f32 0.0, %v1997
      %v1999 = vpop.f32.mrf.mxu0
      %2000 = vmatprep.mubr.bf16.mxu0 0
      %2001 = vmatmul.mubr.bf16.gmra.mxu0 %v1860
      %v2002 = vpop.f32.mrf.mxu0
      %v2003 = vadd.f32 0.0, %v2002
      %v2004 = vpop.f32.mrf.mxu0
      %v2005 = vpop.f32.mrf.mxu0
      %v2006 = vadd.f32 0.0, %v2005
      %v2007 = vpop.f32.mrf.mxu0
      %2008 = vmatprep.mubr.bf16.mxu0 0
      %2009 = vmatmul.mubr.bf16.gmra.mxu0 %v1861
      %v2010 = vpop.f32.mrf.mxu0
      %v2011 = vadd.f32 0.0, %v2010
      %v2012 = vpop.f32.mrf.mxu0
      %v2013 = vpop.f32.mrf.mxu0
      %v2014 = vadd.f32 0.0, %v2013
      %v2015 = vpop.f32.mrf.mxu0
      %2016 = vmatprep.mubr.bf16.mxu0 0
      %2017 = vmatmul.mubr.bf16.gmra.mxu0 %v1862
      %v2018 = vpop.f32.mrf.mxu0
      %v2019 = vadd.f32 0.0, %v2018
      %v2020 = vpop.f32.mrf.mxu0
      %v2021 = vpop.f32.mrf.mxu0
      %v2022 = vadd.f32 0.0, %v2021
      %v2023 = vpop.f32.mrf.mxu0
      %2024 = vmatprep.mubr.bf16.mxu0 0
      %2025 = vmatmul.mubr.bf16.gmra.mxu0 %v1863
      %v2026 = vpop.f32.mrf.mxu0
      %v2027 = vadd.f32 0.0, %v2026
      %v2028 = vpop.f32.mrf.mxu0
      %v2029 = vpop.f32.mrf.mxu0
      %v2030 = vadd.f32 0.0, %v2029
      %v2031 = vpop.f32.mrf.mxu0
      %2032 = vmatprep.mubr.bf16.mxu0 0
      %2033 = vmatmul.mubr.bf16.gmra.mxu0 %v1864
      %v2034 = vpop.f32.mrf.mxu0
      %v2035 = vadd.f32 0.0, %v2034
      %v2036 = vpop.f32.mrf.mxu0
      %v2037 = vpop.f32.mrf.mxu0
      %v2038 = vadd.f32 0.0, %v2037
      %v2039 = vpop.f32.mrf.mxu0
      %2040 = vmatprep.mubr.bf16.mxu0 0
      %2041 = vmatmul.mubr.bf16.gmra.mxu0 %v1865
      %v2042 = vpop.f32.mrf.mxu0
      %v2043 = vadd.f32 0.0, %v2042
      %v2044 = vpop.f32.mrf.mxu0
      %v2045 = vpop.f32.mrf.mxu0
      %v2046 = vadd.f32 0.0, %v2045
      %v2047 = vpop.f32.mrf.mxu0
      %2048 = vmatprep.mubr.bf16.mxu0 0
      %2049 = vmatmul.mubr.bf16.gmra.mxu0 %v1866
      %v2050 = vpop.f32.mrf.mxu0
      %v2051 = vadd.f32 0.0, %v2050
      %v2052 = vpop.f32.mrf.mxu0
      %v2053 = vpop.f32.mrf.mxu0
      %v2054 = vadd.f32 0.0, %v2053
      %v2055 = vpop.f32.mrf.mxu0
      %2056 = vmatprep.mubr.bf16.mxu0 0
      %2057 = vmatmul.mubr.bf16.gmra.mxu0 %v1867
      %v2058 = vpop.f32.mrf.mxu0
      %v2059 = vadd.f32 0.0, %v2058
      %v2060 = vpop.f32.mrf.mxu0
      %v2061 = vpop.f32.mrf.mxu0
      %v2062 = vadd.f32 0.0, %v2061
      %v2063 = vpop.f32.mrf.mxu0
      %2064 = vmatprep.mubr.bf16.mxu0 0
      %2065 = vmatmul.mubr.bf16.gmra.mxu0 %v1868
      %v2066 = vpop.f32.mrf.mxu0
      %v2067 = vadd.f32 0.0, %v2066
      %v2068 = vpop.f32.mrf.mxu0
      %v2069 = vpop.f32.mrf.mxu0
      %v2070 = vadd.f32 0.0, %v2069
      %v2071 = vpop.f32.mrf.mxu0
      %2072 = vmatprep.mubr.bf16.mxu0 0
      %2073 = vmatmul.mubr.bf16.gmra.mxu0 %v1869
      %v2074 = vpop.f32.mrf.mxu0
      %v2075 = vadd.f32 0.0, %v2074
      %v2076 = vpop.f32.mrf.mxu0
      %v2077 = vpop.f32.mrf.mxu0
      %v2078 = vadd.f32 0.0, %v2077
      %v2079 = vpop.f32.mrf.mxu0
      %2080 = vmatprep.mubr.bf16.mxu0 0
      %2081 = vmatmul.mubr.bf16.gmra.mxu0 %v1870
      %v2082 = vpop.f32.mrf.mxu0
      %v2083 = vadd.f32 0.0, %v2082
      %v2084 = vpop.f32.mrf.mxu0
      %v2085 = vpop.f32.mrf.mxu0
      %v2086 = vadd.f32 0.0, %v2085
      %v2087 = vpop.f32.mrf.mxu0
      %2088 = vmatprep.mubr.bf16.mxu0 0
      %2089 = vmatmul.mubr.bf16.gmra.mxu0 %v1871
      %v2090 = vpop.f32.mrf.mxu0
      %v2091 = vadd.f32 0.0, %v2090
      %v2092 = vpop.f32.mrf.mxu0
      %v2093 = vpop.f32.mrf.mxu0
      %v2094 = vadd.f32 0.0, %v2093
      %v2095 = vpop.f32.mrf.mxu0
      %2096 = vdwg.mxu0
      %v2097 = vadd.f32 %v1710, %v1971
      %v2098 = vadd.f32 %v1711, %v1974
      %v2099 = vadd.f32 %v1712, %v1979
      %v2100 = vadd.f32 %v1713, %v1982
      %v2101 = vadd.f32 %v1714, %v1987
      %v2102 = vadd.f32 %v1715, %v1990
      %v2103 = vadd.f32 %v1716, %v1995
      %v2104 = vadd.f32 %v1717, %v1998
      %v2105 = vadd.f32 %v1718, %v2003
      %v2106 = vadd.f32 %v1719, %v2006
      %v2107 = vadd.f32 %v1720, %v2011
      %v2108 = vadd.f32 %v1721, %v2014
      %v2109 = vadd.f32 %v1722, %v2019
      %v2110 = vadd.f32 %v1723, %v2022
      %v2111 = vadd.f32 %v1724, %v2027
      %v2112 = vadd.f32 %v1725, %v2030
      %v2113 = vadd.f32 %v1726, %v2035
      %v2114 = vadd.f32 %v1727, %v2038
      %v2115 = vadd.f32 %v1728, %v2043
      %v2116 = vadd.f32 %v1729, %v2046
      %v2117 = vadd.f32 %v1730, %v2051
      %v2118 = vadd.f32 %v1731, %v2054
      %v2119 = vadd.f32 %v1732, %v2059
      %v2120 = vadd.f32 %v1733, %v2062
      %v2121 = vadd.f32 %v1734, %v2067
      %v2122 = vadd.f32 %v1735, %v2070
      %v2123 = vadd.f32 %v1736, %v2075
      %v2124 = vadd.f32 %v1737, %v2078
      %v2125 = vadd.f32 %v1738, %v2083
      %v2126 = vadd.f32 %v1739, %v2086
      %v2127 = vadd.f32 %v1740, %v2091
      %v2128 = vadd.f32 %v1741, %v2094
      %v2129 = vld [vmem:[%s1742] sm:$0xf]
      %v2130 = vld [vmem:[%s1742 + $0x4] sm:$0xf]
      %v2131 = vld [vmem:[%s1742 + $0x8] sm:$0x1]
      %v2132 = vld [vmem:[%s1742 + $0xc] sm:$0xf]
      %v2133 = vld [vmem:[%s1742 + $0x10] sm:$0xf]
      %v2134 = vld [vmem:[%s1742 + $0x14] sm:$0x1]
      %v2135 = vld [vmem:[%s1742 + $0x18] sm:$0xf]
      %v2136 = vld [vmem:[%s1742 + $0x1c] sm:$0xf]
      %v2137 = vld [vmem:[%s1742 + $0x20] sm:$0x1]
      %v2138 = vld [vmem:[%s1742 + $0x24] sm:$0xf]
      %v2139 = vld [vmem:[%s1742 + $0x28] sm:$0xf]
      %v2140 = vld [vmem:[%s1742 + $0x2c] sm:$0x1]
      %v2141 = vld [vmem:[%s1742 + $0x30] sm:$0xf]
      %v2142 = vld [vmem:[%s1742 + $0x34] sm:$0xf]
      %v2143 = vld [vmem:[%s1742 + $0x38] sm:$0x1]
      %v2144 = vld [vmem:[%s1742 + $0x3c] sm:$0xf]
      %v2145 = vld [vmem:[%s1742 + $0x40] sm:$0xf]
      %v2146 = vld [vmem:[%s1742 + $0x44] sm:$0x1]
      %v2147 = vld [vmem:[%s1742 + $0x48] sm:$0xf]
      %v2148 = vld [vmem:[%s1742 + $0x4c] sm:$0xf]
      %v2149 = vld [vmem:[%s1742 + $0x50] sm:$0x1]
      %v2150 = vld [vmem:[%s1742 + $0x54] sm:$0xf]
      %v2151 = vld [vmem:[%s1742 + $0x58] sm:$0xf]
      %v2152 = vld [vmem:[%s1742 + $0x5c] sm:$0x1]
      %v2153 = vld [vmem:[%s1742 + $0x60] sm:$0xf]
      %v2154 = vld [vmem:[%s1742 + $0x64] sm:$0xf]
      %v2155 = vld [vmem:[%s1742 + $0x68] sm:$0x1]
      %v2156 = vld [vmem:[%s1742 + $0x6c] sm:$0xf]
      %v2157 = vld [vmem:[%s1742 + $0x70] sm:$0xf]
      %v2158 = vld [vmem:[%s1742 + $0x74] sm:$0x1]
      %v2159 = vld [vmem:[%s1742 + $0x78] sm:$0xf]
      %v2160 = vld [vmem:[%s1742 + $0x7c] sm:$0xf]
      %v2161 = vld [vmem:[%s1742 + $0x80] sm:$0x1]
      %v2162 = vld [vmem:[%s1742 + $0x84] sm:$0xf]
      %v2163 = vld [vmem:[%s1742 + $0x88] sm:$0xf]
      %v2164 = vld [vmem:[%s1742 + $0x8c] sm:$0x1]
      %v2165 = vld [vmem:[%s1742 + $0x90] sm:$0xf]
      %v2166 = vld [vmem:[%s1742 + $0x94] sm:$0xf]
      %v2167 = vld [vmem:[%s1742 + $0x98] sm:$0x1]
      %v2168 = vld [vmem:[%s1742 + $0x9c] sm:$0xf]
      %v2169 = vld [vmem:[%s1742 + $0xa0] sm:$0xf]
      %v2170 = vld [vmem:[%s1742 + $0xa4] sm:$0x1]
      %v2171 = vld [vmem:[%s1742 + $0xa8] sm:$0xf]
      %v2172 = vld [vmem:[%s1742 + $0xac] sm:$0xf]
      %v2173 = vld [vmem:[%s1742 + $0xb0] sm:$0x1]
      %v2174 = vld [vmem:[%s1742 + $0xb4] sm:$0xf]
      %v2175 = vld [vmem:[%s1742 + $0xb8] sm:$0xf]
      %v2176 = vld [vmem:[%s1742 + $0xbc] sm:$0x1]
      %v2178 = vshrl.u32 %v2129, 16
      %v2180 = vrot.slane %v2178, 4
      %v2181 = vshll.u32 %v2129, 16
      %v2183 = vrot.slane %v2181, 5
      %v2184 = vor.u32 %v2180, %v2183
      %v2185 = vrot.slane %v2184, 4
      %v2187 = vshll.u32 %v2130, 16
      %v2189 = vrot.slane %v2187, 5
      %v2190 = vsel %vm277, %v2185, %v2189
      %v2191 = vshrl.u32 %v2130, 16
      %v2193 = vrot.slane %v2191, 4
      %v2194 = vor.u32 %v2193, %v2189
      %v2195 = vrot.slane %v2194, 4
      %v2197 = vshll.u32 %v2131, 16
      %v2199 = vrot.slane %v2197, 5
      %v2200 = vsel %vm277, %v2195, %v2199
      %v2202 = vshrl.u32 %v2132, 16
      %v2204 = vrot.slane %v2202, 4
      %v2205 = vshll.u32 %v2132, 16
      %v2207 = vrot.slane %v2205, 5
      %v2208 = vor.u32 %v2204, %v2207
      %v2209 = vrot.slane %v2208, 4
      %v2211 = vshll.u32 %v2133, 16
      %v2213 = vrot.slane %v2211, 5
      %v2214 = vsel %vm277, %v2209, %v2213
      %v2215 = vshrl.u32 %v2133, 16
      %v2217 = vrot.slane %v2215, 4
      %v2218 = vor.u32 %v2217, %v2213
      %v2219 = vrot.slane %v2218, 4
      %v2221 = vshll.u32 %v2134, 16
      %v2223 = vrot.slane %v2221, 5
      %v2224 = vsel %vm277, %v2219, %v2223
      %v2226 = vshrl.u32 %v2135, 16
      %v2228 = vrot.slane %v2226, 4
      %v2229 = vshll.u32 %v2135, 16
      %v2231 = vrot.slane %v2229, 5
      %v2232 = vor.u32 %v2228, %v2231
      %v2233 = vrot.slane %v2232, 4
      %v2235 = vshll.u32 %v2136, 16
      %v2237 = vrot.slane %v2235, 5
      %v2238 = vsel %vm277, %v2233, %v2237
      %v2239 = vshrl.u32 %v2136, 16
      %v2241 = vrot.slane %v2239, 4
      %v2242 = vor.u32 %v2241, %v2237
      %v2243 = vrot.slane %v2242, 4
      %v2245 = vshll.u32 %v2137, 16
      %v2247 = vrot.slane %v2245, 5
      %v2248 = vsel %vm277, %v2243, %v2247
      %v2250 = vshrl.u32 %v2138, 16
      %v2252 = vrot.slane %v2250, 4
      %v2253 = vshll.u32 %v2138, 16
      %v2255 = vrot.slane %v2253, 5
      %v2256 = vor.u32 %v2252, %v2255
      %v2257 = vrot.slane %v2256, 4
      %v2259 = vshll.u32 %v2139, 16
      %v2261 = vrot.slane %v2259, 5
      %v2262 = vsel %vm277, %v2257, %v2261
      %v2263 = vshrl.u32 %v2139, 16
      %v2265 = vrot.slane %v2263, 4
      %v2266 = vor.u32 %v2265, %v2261
      %v2267 = vrot.slane %v2266, 4
      %v2269 = vshll.u32 %v2140, 16
      %v2271 = vrot.slane %v2269, 5
      %v2272 = vsel %vm277, %v2267, %v2271
      %v2274 = vshrl.u32 %v2141, 16
      %v2276 = vrot.slane %v2274, 4
      %v2277 = vshll.u32 %v2141, 16
      %v2279 = vrot.slane %v2277, 5
      %v2280 = vor.u32 %v2276, %v2279
      %v2281 = vrot.slane %v2280, 4
      %v2283 = vshll.u32 %v2142, 16
      %v2285 = vrot.slane %v2283, 5
      %v2286 = vsel %vm277, %v2281, %v2285
      %v2287 = vshrl.u32 %v2142, 16
      %v2289 = vrot.slane %v2287, 4
      %v2290 = vor.u32 %v2289, %v2285
      %v2291 = vrot.slane %v2290, 4
      %v2293 = vshll.u32 %v2143, 16
      %v2295 = vrot.slane %v2293, 5
      %v2296 = vsel %vm277, %v2291, %v2295
      %v2298 = vshrl.u32 %v2144, 16
      %v2300 = vrot.slane %v2298, 4
      %v2301 = vshll.u32 %v2144, 16
      %v2303 = vrot.slane %v2301, 5
      %v2304 = vor.u32 %v2300, %v2303
      %v2305 = vrot.slane %v2304, 4
      %v2307 = vshll.u32 %v2145, 16
      %v2309 = vrot.slane %v2307, 5
      %v2310 = vsel %vm277, %v2305, %v2309
      %v2311 = vshrl.u32 %v2145, 16
      %v2313 = vrot.slane %v2311, 4
      %v2314 = vor.u32 %v2313, %v2309
      %v2315 = vrot.slane %v2314, 4
      %v2317 = vshll.u32 %v2146, 16
      %v2319 = vrot.slane %v2317, 5
      %v2320 = vsel %vm277, %v2315, %v2319
      %v2322 = vshrl.u32 %v2147, 16
      %v2324 = vrot.slane %v2322, 4
      %v2325 = vshll.u32 %v2147, 16
      %v2327 = vrot.slane %v2325, 5
      %v2328 = vor.u32 %v2324, %v2327
      %v2329 = vrot.slane %v2328, 4
      %v2331 = vshll.u32 %v2148, 16
      %v2333 = vrot.slane %v2331, 5
      %v2334 = vsel %vm277, %v2329, %v2333
      %v2335 = vshrl.u32 %v2148, 16
      %v2337 = vrot.slane %v2335, 4
      %v2338 = vor.u32 %v2337, %v2333
      %v2339 = vrot.slane %v2338, 4
      %v2341 = vshll.u32 %v2149, 16
      %v2343 = vrot.slane %v2341, 5
      %v2344 = vsel %vm277, %v2339, %v2343
      %v2346 = vshrl.u32 %v2150, 16
      %v2348 = vrot.slane %v2346, 4
      %v2349 = vshll.u32 %v2150, 16
      %v2351 = vrot.slane %v2349, 5
      %v2352 = vor.u32 %v2348, %v2351
      %v2353 = vrot.slane %v2352, 4
      %v2355 = vshll.u32 %v2151, 16
      %v2357 = vrot.slane %v2355, 5
      %v2358 = vsel %vm277, %v2353, %v2357
      %v2359 = vshrl.u32 %v2151, 16
      %v2361 = vrot.slane %v2359, 4
      %v2362 = vor.u32 %v2361, %v2357
      %v2363 = vrot.slane %v2362, 4
      %v2365 = vshll.u32 %v2152, 16
      %v2367 = vrot.slane %v2365, 5
      %v2368 = vsel %vm277, %v2363, %v2367
      %v2370 = vshrl.u32 %v2153, 16
      %v2372 = vrot.slane %v2370, 4
      %v2373 = vshll.u32 %v2153, 16
      %v2375 = vrot.slane %v2373, 5
      %v2376 = vor.u32 %v2372, %v2375
      %v2377 = vrot.slane %v2376, 4
      %v2379 = vshll.u32 %v2154, 16
      %v2381 = vrot.slane %v2379, 5
      %v2382 = vsel %vm277, %v2377, %v2381
      %v2383 = vshrl.u32 %v2154, 16
      %v2385 = vrot.slane %v2383, 4
      %v2386 = vor.u32 %v2385, %v2381
      %v2387 = vrot.slane %v2386, 4
      %v2389 = vshll.u32 %v2155, 16
      %v2391 = vrot.slane %v2389, 5
      %v2392 = vsel %vm277, %v2387, %v2391
      %v2394 = vshrl.u32 %v2156, 16
      %v2396 = vrot.slane %v2394, 4
      %v2397 = vshll.u32 %v2156, 16
      %v2399 = vrot.slane %v2397, 5
      %v2400 = vor.u32 %v2396, %v2399
      %v2401 = vrot.slane %v2400, 4
      %v2403 = vshll.u32 %v2157, 16
      %v2405 = vrot.slane %v2403, 5
      %v2406 = vsel %vm277, %v2401, %v2405
      %v2407 = vshrl.u32 %v2157, 16
      %v2409 = vrot.slane %v2407, 4
      %v2410 = vor.u32 %v2409, %v2405
      %v2411 = vrot.slane %v2410, 4
      %v2413 = vshll.u32 %v2158, 16
      %v2415 = vrot.slane %v2413, 5
      %v2416 = vsel %vm277, %v2411, %v2415
      %v2418 = vshrl.u32 %v2159, 16
      %v2420 = vrot.slane %v2418, 4
      %v2421 = vshll.u32 %v2159, 16
      %v2423 = vrot.slane %v2421, 5
      %v2424 = vor.u32 %v2420, %v2423
      %v2425 = vrot.slane %v2424, 4
      %v2427 = vshll.u32 %v2160, 16
      %v2429 = vrot.slane %v2427, 5
      %v2430 = vsel %vm277, %v2425, %v2429
      %v2431 = vshrl.u32 %v2160, 16
      %v2433 = vrot.slane %v2431, 4
      %v2434 = vor.u32 %v2433, %v2429
      %v2435 = vrot.slane %v2434, 4
      %v2437 = vshll.u32 %v2161, 16
      %v2439 = vrot.slane %v2437, 5
      %v2440 = vsel %vm277, %v2435, %v2439
      %v2442 = vshrl.u32 %v2162, 16
      %v2444 = vrot.slane %v2442, 4
      %v2445 = vshll.u32 %v2162, 16
      %v2447 = vrot.slane %v2445, 5
      %v2448 = vor.u32 %v2444, %v2447
      %v2449 = vrot.slane %v2448, 4
      %v2451 = vshll.u32 %v2163, 16
      %v2453 = vrot.slane %v2451, 5
      %v2454 = vsel %vm277, %v2449, %v2453
      %v2455 = vshrl.u32 %v2163, 16
      %v2457 = vrot.slane %v2455, 4
      %v2458 = vor.u32 %v2457, %v2453
      %v2459 = vrot.slane %v2458, 4
      %v2461 = vshll.u32 %v2164, 16
      %v2463 = vrot.slane %v2461, 5
      %v2464 = vsel %vm277, %v2459, %v2463
      %v2466 = vshrl.u32 %v2165, 16
      %v2468 = vrot.slane %v2466, 4
      %v2469 = vshll.u32 %v2165, 16
      %v2471 = vrot.slane %v2469, 5
      %v2472 = vor.u32 %v2468, %v2471
      %v2473 = vrot.slane %v2472, 4
      %v2475 = vshll.u32 %v2166, 16
      %v2477 = vrot.slane %v2475, 5
      %v2478 = vsel %vm277, %v2473, %v2477
      %v2479 = vshrl.u32 %v2166, 16
      %v2481 = vrot.slane %v2479, 4
      %v2482 = vor.u32 %v2481, %v2477
      %v2483 = vrot.slane %v2482, 4
      %v2485 = vshll.u32 %v2167, 16
      %v2487 = vrot.slane %v2485, 5
      %v2488 = vsel %vm277, %v2483, %v2487
      %v2490 = vshrl.u32 %v2168, 16
      %v2492 = vrot.slane %v2490, 4
      %v2493 = vshll.u32 %v2168, 16
      %v2495 = vrot.slane %v2493, 5
      %v2496 = vor.u32 %v2492, %v2495
      %v2497 = vrot.slane %v2496, 4
      %v2499 = vshll.u32 %v2169, 16
      %v2501 = vrot.slane %v2499, 5
      %v2502 = vsel %vm277, %v2497, %v2501
      %v2503 = vshrl.u32 %v2169, 16
      %v2505 = vrot.slane %v2503, 4
      %v2506 = vor.u32 %v2505, %v2501
      %v2507 = vrot.slane %v2506, 4
      %v2509 = vshll.u32 %v2170, 16
      %v2511 = vrot.slane %v2509, 5
      %v2512 = vsel %vm277, %v2507, %v2511
      %v2514 = vshrl.u32 %v2171, 16
      %v2516 = vrot.slane %v2514, 4
      %v2517 = vshll.u32 %v2171, 16
      %v2519 = vrot.slane %v2517, 5
      %v2520 = vor.u32 %v2516, %v2519
      %v2521 = vrot.slane %v2520, 4
      %v2523 = vshll.u32 %v2172, 16
      %v2525 = vrot.slane %v2523, 5
      %v2526 = vsel %vm277, %v2521, %v2525
      %v2527 = vshrl.u32 %v2172, 16
      %v2529 = vrot.slane %v2527, 4
      %v2530 = vor.u32 %v2529, %v2525
      %v2531 = vrot.slane %v2530, 4
      %v2533 = vshll.u32 %v2173, 16
      %v2535 = vrot.slane %v2533, 5
      %v2536 = vsel %vm277, %v2531, %v2535
      %v2538 = vshrl.u32 %v2174, 16
      %v2540 = vrot.slane %v2538, 4
      %v2541 = vshll.u32 %v2174, 16
      %v2543 = vrot.slane %v2541, 5
      %v2544 = vor.u32 %v2540, %v2543
      %v2545 = vrot.slane %v2544, 4
      %v2547 = vshll.u32 %v2175, 16
      %v2549 = vrot.slane %v2547, 5
      %v2550 = vsel %vm277, %v2545, %v2549
      %v2551 = vshrl.u32 %v2175, 16
      %v2553 = vrot.slane %v2551, 4
      %v2554 = vor.u32 %v2553, %v2549
      %v2555 = vrot.slane %v2554, 4
      %v2557 = vshll.u32 %v2176, 16
      %v2559 = vrot.slane %v2557, 5
      %v2560 = vsel %vm277, %v2555, %v2559
      %s2561 = scalar_lea.vmem %s1, 256
      %v2562 = vld [vmem:[%s2561] sm:$0xf]
      %v2563 = vld [vmem:[%s2561 + $0x4] sm:$0xf]
      %v2564 = vld [vmem:[%s2561 + $0x8] sm:$0xf]
      %v2565 = vld [vmem:[%s2561 + $0xc] sm:$0xf]
      %v2566 = vld [vmem:[%s2561 + $0x10] sm:$0xf]
      %v2567 = vld [vmem:[%s2561 + $0x14] sm:$0xf]
      %v2568 = vld [vmem:[%s2561 + $0x18] sm:$0xf]
      %v2569 = vld [vmem:[%s2561 + $0x1c] sm:$0xf]
      %v2570 = vld [vmem:[%s2561 + $0x20] sm:$0xf]
      %v2571 = vld [vmem:[%s2561 + $0x24] sm:$0xf]
      %v2572 = vld [vmem:[%s2561 + $0x28] sm:$0xf]
      %v2573 = vld [vmem:[%s2561 + $0x2c] sm:$0xf]
      %v2574 = vld [vmem:[%s2561 + $0x30] sm:$0xf]
      %v2575 = vld [vmem:[%s2561 + $0x34] sm:$0xf]
      %v2576 = vld [vmem:[%s2561 + $0x38] sm:$0xf]
      %v2577 = vld [vmem:[%s2561 + $0x3c] sm:$0xf]
      %v2578 = vunpack.c.l.b16 %v2190
      %v2579 = vunpack.c.l.b16 %v2200
      %v2580 = vunpack.c.l.b16 %v2214
      %v2581 = vunpack.c.l.b16 %v2224
      %v2582 = vunpack.c.l.b16 %v2238
      %v2583 = vunpack.c.l.b16 %v2248
      %v2584 = vunpack.c.l.b16 %v2262
      %v2585 = vunpack.c.l.b16 %v2272
      %v2586 = vunpack.c.l.b16 %v2286
      %v2587 = vunpack.c.l.b16 %v2296
      %v2588 = vunpack.c.l.b16 %v2310
      %v2589 = vunpack.c.l.b16 %v2320
      %v2590 = vunpack.c.l.b16 %v2334
      %v2591 = vunpack.c.l.b16 %v2344
      %v2592 = vunpack.c.l.b16 %v2358
      %v2593 = vunpack.c.l.b16 %v2368
      %v2594 = vunpack.c.l.b16 %v2382
      %v2595 = vunpack.c.l.b16 %v2392
      %v2596 = vunpack.c.l.b16 %v2406
      %v2597 = vunpack.c.l.b16 %v2416
      %v2598 = vunpack.c.l.b16 %v2430
      %v2599 = vunpack.c.l.b16 %v2440
      %v2600 = vunpack.c.l.b16 %v2454
      %v2601 = vunpack.c.l.b16 %v2464
      %v2602 = vunpack.c.l.b16 %v2478
      %v2603 = vunpack.c.l.b16 %v2488
      %v2604 = vunpack.c.l.b16 %v2502
      %v2605 = vunpack.c.l.b16 %v2512
      %v2606 = vunpack.c.l.b16 %v2526
      %v2607 = vunpack.c.l.b16 %v2536
      %v2608 = vunpack.c.l.b16 %v2550
      %v2609 = vunpack.c.l.b16 %v2560
      %v2610 = vpack.c.b16 %v2579, %v2578
      %v2611 = vpack.c.b16 %v2581, %v2580
      %v2612 = vpack.c.b16 %v2583, %v2582
      %v2613 = vpack.c.b16 %v2585, %v2584
      %v2614 = vpack.c.b16 %v2587, %v2586
      %v2615 = vpack.c.b16 %v2589, %v2588
      %v2616 = vpack.c.b16 %v2591, %v2590
      %v2617 = vpack.c.b16 %v2593, %v2592
      %v2618 = vpack.c.b16 %v2595, %v2594
      %v2619 = vpack.c.b16 %v2597, %v2596
      %v2620 = vpack.c.b16 %v2599, %v2598
      %v2621 = vpack.c.b16 %v2601, %v2600
      %v2622 = vpack.c.b16 %v2603, %v2602
      %v2623 = vpack.c.b16 %v2605, %v2604
      %v2624 = vpack.c.b16 %v2607, %v2606
      %v2625 = vpack.c.b16 %v2609, %v2608
      %v2658 = vunpack.c.l.b16 %v2562
      %v2659 = vunpack.c.l.b16 %v2563
      %v2660 = vunpack.c.l.b16 %v2564
      %v2661 = vunpack.c.l.b16 %v2565
      %v2662 = vunpack.c.l.b16 %v2566
      %v2663 = vunpack.c.l.b16 %v2567
      %v2664 = vunpack.c.l.b16 %v2568
      %v2665 = vunpack.c.l.b16 %v2569
      %v2666 = vunpack.c.l.b16 %v2570
      %v2667 = vunpack.c.l.b16 %v2571
      %v2668 = vunpack.c.l.b16 %v2572
      %v2669 = vunpack.c.l.b16 %v2573
      %v2670 = vunpack.c.l.b16 %v2574
      %v2671 = vunpack.c.l.b16 %v2575
      %v2672 = vunpack.c.l.b16 %v2576
      %v2673 = vunpack.c.l.b16 %v2577
      %v2674 = vpack.c.b16 %v2659, %v2658
      %v2675 = vpack.c.b16 %v2661, %v2660
      %v2676 = vpack.c.b16 %v2663, %v2662
      %v2677 = vpack.c.b16 %v2665, %v2664
      %v2678 = vpack.c.b16 %v2667, %v2666
      %v2679 = vpack.c.b16 %v2669, %v2668
      %v2680 = vpack.c.b16 %v2671, %v2670
      %v2681 = vpack.c.b16 %v2673, %v2672
      %2690 = vmatprep.subr.bf16.mxu0 0
      %2691 = vmatpush1.bf16.msra.mxu0 %v2681
      %2692 = vmatprep.subr.bf16.mxu0 0
      %2693 = vmatpush1.bf16.msra.mxu0 %v2680
      %2694 = vmatprep.subr.bf16.mxu0 0
      %2695 = vmatpush1.bf16.msra.mxu0 %v2679
      %2696 = vmatprep.subr.bf16.mxu0 0
      %2697 = vmatpush1.bf16.msra.mxu0 %v2678
      %2698 = vmatprep.subr.bf16.mxu0 0
      %2699 = vmatpush1.bf16.msra.mxu0 %v2677
      %2700 = vmatprep.subr.bf16.mxu0 0
      %2701 = vmatpush1.bf16.msra.mxu0 %v2676
      %2702 = vmatprep.subr.bf16.mxu0 0
      %2703 = vmatpush1.bf16.msra.mxu0 %v2675
      %2704 = vmatprep.subr.bf16.mxu0 0
      %2705 = vmatpush1.bf16.msra.mxu0 %v2674
      %2706 = vmatprep.subr.bf16.mxu0 0
      %2707 = vmatpush2.bf16.msra.mxu0 0
      %2708 = vmatprep.subr.bf16.mxu0 0
      %2709 = vmatpush2.bf16.msra.mxu0 0
      %2710 = vmatprep.subr.bf16.mxu0 0
      %2711 = vmatpush2.bf16.msra.mxu0 0
      %2712 = vmatprep.subr.bf16.mxu0 0
      %2713 = vmatpush2.bf16.msra.mxu0 0
      %2714 = vmatprep.subr.bf16.mxu0 0
      %2715 = vmatpush2.bf16.msra.mxu0 0
      %2716 = vmatprep.subr.bf16.mxu0 0
      %2717 = vmatpush2.bf16.msra.mxu0 0
      %2718 = vmatprep.subr.bf16.mxu0 0
      %2719 = vmatpush2.bf16.msra.mxu0 0
      %2720 = vmatprep.subr.bf16.mxu0 0
      %2721 = vmatpush2.bf16.msra.mxu0 0
      %2722 = vmatprep.mubr.bf16.mxu0 0
      %2723 = vmatmul.mubr.bf16.gmra.mxu0 %v2610
      %v2724 = vpop.f32.mrf.mxu0
      %v2725 = vadd.f32 0.0, %v2724
      %v2726 = vpop.f32.mrf.mxu0
      %v2727 = vpop.f32.mrf.mxu0
      %v2728 = vadd.f32 0.0, %v2727
      %v2729 = vpop.f32.mrf.mxu0
      %2730 = vmatprep.mubr.bf16.mxu0 0
      %2731 = vmatmul.mubr.bf16.gmra.mxu0 %v2611
      %v2732 = vpop.f32.mrf.mxu0
      %v2733 = vadd.f32 0.0, %v2732
      %v2734 = vpop.f32.mrf.mxu0
      %v2735 = vpop.f32.mrf.mxu0
      %v2736 = vadd.f32 0.0, %v2735
      %v2737 = vpop.f32.mrf.mxu0
      %2738 = vmatprep.mubr.bf16.mxu0 0
      %2739 = vmatmul.mubr.bf16.gmra.mxu0 %v2612
      %v2740 = vpop.f32.mrf.mxu0
      %v2741 = vadd.f32 0.0, %v2740
      %v2742 = vpop.f32.mrf.mxu0
      %v2743 = vpop.f32.mrf.mxu0
      %v2744 = vadd.f32 0.0, %v2743
      %v2745 = vpop.f32.mrf.mxu0
      %2746 = vmatprep.mubr.bf16.mxu0 0
      %2747 = vmatmul.mubr.bf16.gmra.mxu0 %v2613
      %v2748 = vpop.f32.mrf.mxu0
      %v2749 = vadd.f32 0.0, %v2748
      %v2750 = vpop.f32.mrf.mxu0
      %v2751 = vpop.f32.mrf.mxu0
      %v2752 = vadd.f32 0.0, %v2751
      %v2753 = vpop.f32.mrf.mxu0
      %2754 = vmatprep.mubr.bf16.mxu0 0
      %2755 = vmatmul.mubr.bf16.gmra.mxu0 %v2614
      %v2756 = vpop.f32.mrf.mxu0
      %v2757 = vadd.f32 0.0, %v2756
      %v2758 = vpop.f32.mrf.mxu0
      %v2759 = vpop.f32.mrf.mxu0
      %v2760 = vadd.f32 0.0, %v2759
      %v2761 = vpop.f32.mrf.mxu0
      %2762 = vmatprep.mubr.bf16.mxu0 0
      %2763 = vmatmul.mubr.bf16.gmra.mxu0 %v2615
      %v2764 = vpop.f32.mrf.mxu0
      %v2765 = vadd.f32 0.0, %v2764
      %v2766 = vpop.f32.mrf.mxu0
      %v2767 = vpop.f32.mrf.mxu0
      %v2768 = vadd.f32 0.0, %v2767
      %v2769 = vpop.f32.mrf.mxu0
      %2770 = vmatprep.mubr.bf16.mxu0 0
      %2771 = vmatmul.mubr.bf16.gmra.mxu0 %v2616
      %v2772 = vpop.f32.mrf.mxu0
      %v2773 = vadd.f32 0.0, %v2772
      %v2774 = vpop.f32.mrf.mxu0
      %v2775 = vpop.f32.mrf.mxu0
      %v2776 = vadd.f32 0.0, %v2775
      %v2777 = vpop.f32.mrf.mxu0
      %2778 = vmatprep.mubr.bf16.mxu0 0
      %2779 = vmatmul.mubr.bf16.gmra.mxu0 %v2617
      %v2780 = vpop.f32.mrf.mxu0
      %v2781 = vadd.f32 0.0, %v2780
      %v2782 = vpop.f32.mrf.mxu0
      %v2783 = vpop.f32.mrf.mxu0
      %v2784 = vadd.f32 0.0, %v2783
      %v2785 = vpop.f32.mrf.mxu0
      %2786 = vmatprep.mubr.bf16.mxu0 0
      %2787 = vmatmul.mubr.bf16.gmra.mxu0 %v2618
      %v2788 = vpop.f32.mrf.mxu0
      %v2789 = vadd.f32 0.0, %v2788
      %v2790 = vpop.f32.mrf.mxu0
      %v2791 = vpop.f32.mrf.mxu0
      %v2792 = vadd.f32 0.0, %v2791
      %v2793 = vpop.f32.mrf.mxu0
      %2794 = vmatprep.mubr.bf16.mxu0 0
      %2795 = vmatmul.mubr.bf16.gmra.mxu0 %v2619
      %v2796 = vpop.f32.mrf.mxu0
      %v2797 = vadd.f32 0.0, %v2796
      %v2798 = vpop.f32.mrf.mxu0
      %v2799 = vpop.f32.mrf.mxu0
      %v2800 = vadd.f32 0.0, %v2799
      %v2801 = vpop.f32.mrf.mxu0
      %2802 = vmatprep.mubr.bf16.mxu0 0
      %2803 = vmatmul.mubr.bf16.gmra.mxu0 %v2620
      %v2804 = vpop.f32.mrf.mxu0
      %v2805 = vadd.f32 0.0, %v2804
      %v2806 = vpop.f32.mrf.mxu0
      %v2807 = vpop.f32.mrf.mxu0
      %v2808 = vadd.f32 0.0, %v2807
      %v2809 = vpop.f32.mrf.mxu0
      %2810 = vmatprep.mubr.bf16.mxu0 0
      %2811 = vmatmul.mubr.bf16.gmra.mxu0 %v2621
      %v2812 = vpop.f32.mrf.mxu0
      %v2813 = vadd.f32 0.0, %v2812
      %v2814 = vpop.f32.mrf.mxu0
      %v2815 = vpop.f32.mrf.mxu0
      %v2816 = vadd.f32 0.0, %v2815
      %v2817 = vpop.f32.mrf.mxu0
      %2818 = vmatprep.mubr.bf16.mxu0 0
      %2819 = vmatmul.mubr.bf16.gmra.mxu0 %v2622
      %v2820 = vpop.f32.mrf.mxu0
      %v2821 = vadd.f32 0.0, %v2820
      %v2822 = vpop.f32.mrf.mxu0
      %v2823 = vpop.f32.mrf.mxu0
      %v2824 = vadd.f32 0.0, %v2823
      %v2825 = vpop.f32.mrf.mxu0
      %2826 = vmatprep.mubr.bf16.mxu0 0
      %2827 = vmatmul.mubr.bf16.gmra.mxu0 %v2623
      %v2828 = vpop.f32.mrf.mxu0
      %v2829 = vadd.f32 0.0, %v2828
      %v2830 = vpop.f32.mrf.mxu0
      %v2831 = vpop.f32.mrf.mxu0
      %v2832 = vadd.f32 0.0, %v2831
      %v2833 = vpop.f32.mrf.mxu0
      %2834 = vmatprep.mubr.bf16.mxu0 0
      %2835 = vmatmul.mubr.bf16.gmra.mxu0 %v2624
      %v2836 = vpop.f32.mrf.mxu0
      %v2837 = vadd.f32 0.0, %v2836
      %v2838 = vpop.f32.mrf.mxu0
      %v2839 = vpop.f32.mrf.mxu0
      %v2840 = vadd.f32 0.0, %v2839
      %v2841 = vpop.f32.mrf.mxu0
      %2842 = vmatprep.mubr.bf16.mxu0 0
      %2843 = vmatmul.mubr.bf16.gmra.mxu0 %v2625
      %v2844 = vpop.f32.mrf.mxu0
      %v2845 = vadd.f32 0.0, %v2844
      %v2846 = vpop.f32.mrf.mxu0
      %v2847 = vpop.f32.mrf.mxu0
      %v2848 = vadd.f32 0.0, %v2847
      %v2849 = vpop.f32.mrf.mxu0
      %2850 = vdwg.mxu0
      %v2851 = vadd.f32 %v2097, %v2725
      %v2852 = vadd.f32 %v2098, %v2728
      %v2853 = vadd.f32 %v2099, %v2733
      %v2854 = vadd.f32 %v2100, %v2736
      %v2855 = vadd.f32 %v2101, %v2741
      %v2856 = vadd.f32 %v2102, %v2744
      %v2857 = vadd.f32 %v2103, %v2749
      %v2858 = vadd.f32 %v2104, %v2752
      %v2859 = vadd.f32 %v2105, %v2757
      %v2860 = vadd.f32 %v2106, %v2760
      %v2861 = vadd.f32 %v2107, %v2765
      %v2862 = vadd.f32 %v2108, %v2768
      %v2863 = vadd.f32 %v2109, %v2773
      %v2864 = vadd.f32 %v2110, %v2776
      %v2865 = vadd.f32 %v2111, %v2781
      %v2866 = vadd.f32 %v2112, %v2784
      %v2867 = vadd.f32 %v2113, %v2789
      %v2868 = vadd.f32 %v2114, %v2792
      %v2869 = vadd.f32 %v2115, %v2797
      %v2870 = vadd.f32 %v2116, %v2800
      %v2871 = vadd.f32 %v2117, %v2805
      %v2872 = vadd.f32 %v2118, %v2808
      %v2873 = vadd.f32 %v2119, %v2813
      %v2874 = vadd.f32 %v2120, %v2816
      %v2875 = vadd.f32 %v2121, %v2821
      %v2876 = vadd.f32 %v2122, %v2824
      %v2877 = vadd.f32 %v2123, %v2829
      %v2878 = vadd.f32 %v2124, %v2832
      %v2879 = vadd.f32 %v2125, %v2837
      %v2880 = vadd.f32 %v2126, %v2840
      %v2881 = vadd.f32 %v2127, %v2845
      %v2882 = vadd.f32 %v2128, %v2848
      %v2883 = vld [vmem:[%s1742] sm:$0xe]
      %v2884 = vld [vmem:[%s1742 + $0xc] sm:$0xe]
      %v2885 = vld [vmem:[%s1742 + $0x18] sm:$0xe]
      %v2886 = vld [vmem:[%s1742 + $0x24] sm:$0xe]
      %v2887 = vld [vmem:[%s1742 + $0x30] sm:$0xe]
      %v2888 = vld [vmem:[%s1742 + $0x3c] sm:$0xe]
      %v2889 = vld [vmem:[%s1742 + $0x48] sm:$0xe]
      %v2890 = vld [vmem:[%s1742 + $0x54] sm:$0xe]
      %v2891 = vld [vmem:[%s1742 + $0x60] sm:$0xe]
      %v2892 = vld [vmem:[%s1742 + $0x6c] sm:$0xe]
      %v2893 = vld [vmem:[%s1742 + $0x78] sm:$0xe]
      %v2894 = vld [vmem:[%s1742 + $0x84] sm:$0xe]
      %v2895 = vld [vmem:[%s1742 + $0x90] sm:$0xe]
      %v2896 = vld [vmem:[%s1742 + $0x9c] sm:$0xe]
      %v2897 = vld [vmem:[%s1742 + $0xa8] sm:$0xe]
      %v2898 = vld [vmem:[%s1742 + $0xb4] sm:$0xe]
      %v2947 = vrot.slane %v2883, 5
      %v2948 = vrot.slane %v2947, 4
      %v2949 = vrot.slane %v2130, 5
      %v2950 = vsel %vm1307, %v2948, %v2949
      %v2951 = vrot.slane %v2949, 4
      %v2952 = vrot.slane %v2131, 5
      %v2953 = vsel %vm1307, %v2951, %v2952
      %v2954 = vrot.slane %v2884, 5
      %v2955 = vrot.slane %v2954, 4
      %v2956 = vrot.slane %v2133, 5
      %v2957 = vsel %vm1307, %v2955, %v2956
      %v2958 = vrot.slane %v2956, 4
      %v2959 = vrot.slane %v2134, 5
      %v2960 = vsel %vm1307, %v2958, %v2959
      %v2961 = vrot.slane %v2885, 5
      %v2962 = vrot.slane %v2961, 4
      %v2963 = vrot.slane %v2136, 5
      %v2964 = vsel %vm1307, %v2962, %v2963
      %v2965 = vrot.slane %v2963, 4
      %v2966 = vrot.slane %v2137, 5
      %v2967 = vsel %vm1307, %v2965, %v2966
      %v2968 = vrot.slane %v2886, 5
      %v2969 = vrot.slane %v2968, 4
      %v2970 = vrot.slane %v2139, 5
      %v2971 = vsel %vm1307, %v2969, %v2970
      %v2972 = vrot.slane %v2970, 4
      %v2973 = vrot.slane %v2140, 5
      %v2974 = vsel %vm1307, %v2972, %v2973
      %v2975 = vrot.slane %v2887, 5
      %v2976 = vrot.slane %v2975, 4
      %v2977 = vrot.slane %v2142, 5
      %v2978 = vsel %vm1307, %v2976, %v2977
      %v2979 = vrot.slane %v2977, 4
      %v2980 = vrot.slane %v2143, 5
      %v2981 = vsel %vm1307, %v2979, %v2980
      %v2982 = vrot.slane %v2888, 5
      %v2983 = vrot.slane %v2982, 4
      %v2984 = vrot.slane %v2145, 5
      %v2985 = vsel %vm1307, %v2983, %v2984
      %v2986 = vrot.slane %v2984, 4
      %v2987 = vrot.slane %v2146, 5
      %v2988 = vsel %vm1307, %v2986, %v2987
      %v2989 = vrot.slane %v2889, 5
      %v2990 = vrot.slane %v2989, 4
      %v2991 = vrot.slane %v2148, 5
      %v2992 = vsel %vm1307, %v2990, %v2991
      %v2993 = vrot.slane %v2991, 4
      %v2994 = vrot.slane %v2149, 5
      %v2995 = vsel %vm1307, %v2993, %v2994
      %v2996 = vrot.slane %v2890, 5
      %v2997 = vrot.slane %v2996, 4
      %v2998 = vrot.slane %v2151, 5
      %v2999 = vsel %vm1307, %v2997, %v2998
      %v3000 = vrot.slane %v2998, 4
      %v3001 = vrot.slane %v2152, 5
      %v3002 = vsel %vm1307, %v3000, %v3001
      %v3003 = vrot.slane %v2891, 5
      %v3004 = vrot.slane %v3003, 4
      %v3005 = vrot.slane %v2154, 5
      %v3006 = vsel %vm1307, %v3004, %v3005
      %v3007 = vrot.slane %v3005, 4
      %v3008 = vrot.slane %v2155, 5
      %v3009 = vsel %vm1307, %v3007, %v3008
      %v3010 = vrot.slane %v2892, 5
      %v3011 = vrot.slane %v3010, 4
      %v3012 = vrot.slane %v2157, 5
      %v3013 = vsel %vm1307, %v3011, %v3012
      %v3014 = vrot.slane %v3012, 4
      %v3015 = vrot.slane %v2158, 5
      %v3016 = vsel %vm1307, %v3014, %v3015
      %v3017 = vrot.slane %v2893, 5
      %v3018 = vrot.slane %v3017, 4
      %v3019 = vrot.slane %v2160, 5
      %v3020 = vsel %vm1307, %v3018, %v3019
      %v3021 = vrot.slane %v3019, 4
      %v3022 = vrot.slane %v2161, 5
      %v3023 = vsel %vm1307, %v3021, %v3022
      %v3024 = vrot.slane %v2894, 5
      %v3025 = vrot.slane %v3024, 4
      %v3026 = vrot.slane %v2163, 5
      %v3027 = vsel %vm1307, %v3025, %v3026
      %v3028 = vrot.slane %v3026, 4
      %v3029 = vrot.slane %v2164, 5
      %v3030 = vsel %vm1307, %v3028, %v3029
      %v3031 = vrot.slane %v2895, 5
      %v3032 = vrot.slane %v3031, 4
      %v3033 = vrot.slane %v2166, 5
      %v3034 = vsel %vm1307, %v3032, %v3033
      %v3035 = vrot.slane %v3033, 4
      %v3036 = vrot.slane %v2167, 5
      %v3037 = vsel %vm1307, %v3035, %v3036
      %v3038 = vrot.slane %v2896, 5
      %v3039 = vrot.slane %v3038, 4
      %v3040 = vrot.slane %v2169, 5
      %v3041 = vsel %vm1307, %v3039, %v3040
      %v3042 = vrot.slane %v3040, 4
      %v3043 = vrot.slane %v2170, 5
      %v3044 = vsel %vm1307, %v3042, %v3043
      %v3045 = vrot.slane %v2897, 5
      %v3046 = vrot.slane %v3045, 4
      %v3047 = vrot.slane %v2172, 5
      %v3048 = vsel %vm1307, %v3046, %v3047
      %v3049 = vrot.slane %v3047, 4
      %v3050 = vrot.slane %v2173, 5
      %v3051 = vsel %vm1307, %v3049, %v3050
      %v3052 = vrot.slane %v2898, 5
      %v3053 = vrot.slane %v3052, 4
      %v3054 = vrot.slane %v2175, 5
      %v3055 = vsel %vm1307, %v3053, %v3054
      %v3056 = vrot.slane %v3054, 4
      %v3057 = vrot.slane %v2176, 5
      %v3058 = vsel %vm1307, %v3056, %v3057
      %s3059 = scalar_lea.vmem %s1, 320
      %v3060 = vld [vmem:[%s3059] sm:$0xf]
      %v3061 = vld [vmem:[%s3059 + $0x4] sm:$0xf]
      %v3062 = vld [vmem:[%s3059 + $0x8] sm:$0xf]
      %v3063 = vld [vmem:[%s3059 + $0xc] sm:$0xf]
      %v3064 = vld [vmem:[%s3059 + $0x10] sm:$0xf]
      %v3065 = vld [vmem:[%s3059 + $0x14] sm:$0xf]
      %v3066 = vld [vmem:[%s3059 + $0x18] sm:$0xf]
      %v3067 = vld [vmem:[%s3059 + $0x1c] sm:$0xf]
      %v3068 = vld [vmem:[%s3059 + $0x20] sm:$0xf]
      %v3069 = vld [vmem:[%s3059 + $0x24] sm:$0xf]
      %v3070 = vld [vmem:[%s3059 + $0x28] sm:$0xf]
      %v3071 = vld [vmem:[%s3059 + $0x2c] sm:$0xf]
      %v3072 = vld [vmem:[%s3059 + $0x30] sm:$0xf]
      %v3073 = vld [vmem:[%s3059 + $0x34] sm:$0xf]
      %v3074 = vld [vmem:[%s3059 + $0x38] sm:$0xf]
      %v3075 = vld [vmem:[%s3059 + $0x3c] sm:$0xf]
      %v3076 = vunpack.c.l.b16 %v2950
      %v3077 = vunpack.c.l.b16 %v2953
      %v3078 = vunpack.c.l.b16 %v2957
      %v3079 = vunpack.c.l.b16 %v2960
      %v3080 = vunpack.c.l.b16 %v2964
      %v3081 = vunpack.c.l.b16 %v2967
      %v3082 = vunpack.c.l.b16 %v2971
      %v3083 = vunpack.c.l.b16 %v2974
      %v3084 = vunpack.c.l.b16 %v2978
      %v3085 = vunpack.c.l.b16 %v2981
      %v3086 = vunpack.c.l.b16 %v2985
      %v3087 = vunpack.c.l.b16 %v2988
      %v3088 = vunpack.c.l.b16 %v2992
      %v3089 = vunpack.c.l.b16 %v2995
      %v3090 = vunpack.c.l.b16 %v2999
      %v3091 = vunpack.c.l.b16 %v3002
      %v3092 = vunpack.c.l.b16 %v3006
      %v3093 = vunpack.c.l.b16 %v3009
      %v3094 = vunpack.c.l.b16 %v3013
      %v3095 = vunpack.c.l.b16 %v3016
      %v3096 = vunpack.c.l.b16 %v3020
      %v3097 = vunpack.c.l.b16 %v3023
      %v3098 = vunpack.c.l.b16 %v3027
      %v3099 = vunpack.c.l.b16 %v3030
      %v3100 = vunpack.c.l.b16 %v3034
      %v3101 = vunpack.c.l.b16 %v3037
      %v3102 = vunpack.c.l.b16 %v3041
      %v3103 = vunpack.c.l.b16 %v3044
      %v3104 = vunpack.c.l.b16 %v3048
      %v3105 = vunpack.c.l.b16 %v3051
      %v3106 = vunpack.c.l.b16 %v3055
      %v3107 = vunpack.c.l.b16 %v3058
      %v3108 = vpack.c.b16 %v3077, %v3076
      %v3109 = vpack.c.b16 %v3079, %v3078
      %v3110 = vpack.c.b16 %v3081, %v3080
      %v3111 = vpack.c.b16 %v3083, %v3082
      %v3112 = vpack.c.b16 %v3085, %v3084
      %v3113 = vpack.c.b16 %v3087, %v3086
      %v3114 = vpack.c.b16 %v3089, %v3088
      %v3115 = vpack.c.b16 %v3091, %v3090
      %v3116 = vpack.c.b16 %v3093, %v3092
      %v3117 = vpack.c.b16 %v3095, %v3094
      %v3118 = vpack.c.b16 %v3097, %v3096
      %v3119 = vpack.c.b16 %v3099, %v3098
      %v3120 = vpack.c.b16 %v3101, %v3100
      %v3121 = vpack.c.b16 %v3103, %v3102
      %v3122 = vpack.c.b16 %v3105, %v3104
      %v3123 = vpack.c.b16 %v3107, %v3106
      %v3156 = vunpack.c.l.b16 %v3060
      %v3157 = vunpack.c.l.b16 %v3061
      %v3158 = vunpack.c.l.b16 %v3062
      %v3159 = vunpack.c.l.b16 %v3063
      %v3160 = vunpack.c.l.b16 %v3064
      %v3161 = vunpack.c.l.b16 %v3065
      %v3162 = vunpack.c.l.b16 %v3066
      %v3163 = vunpack.c.l.b16 %v3067
      %v3164 = vunpack.c.l.b16 %v3068
      %v3165 = vunpack.c.l.b16 %v3069
      %v3166 = vunpack.c.l.b16 %v3070
      %v3167 = vunpack.c.l.b16 %v3071
      %v3168 = vunpack.c.l.b16 %v3072
      %v3169 = vunpack.c.l.b16 %v3073
      %v3170 = vunpack.c.l.b16 %v3074
      %v3171 = vunpack.c.l.b16 %v3075
      %v3172 = vpack.c.b16 %v3157, %v3156
      %v3173 = vpack.c.b16 %v3159, %v3158
      %v3174 = vpack.c.b16 %v3161, %v3160
      %v3175 = vpack.c.b16 %v3163, %v3162
      %v3176 = vpack.c.b16 %v3165, %v3164
      %v3177 = vpack.c.b16 %v3167, %v3166
      %v3178 = vpack.c.b16 %v3169, %v3168
      %v3179 = vpack.c.b16 %v3171, %v3170
      %3188 = vmatprep.subr.bf16.mxu0 0
      %3189 = vmatpush1.bf16.msra.mxu0 %v3179
      %3190 = vmatprep.subr.bf16.mxu0 0
      %3191 = vmatpush1.bf16.msra.mxu0 %v3178
      %3192 = vmatprep.subr.bf16.mxu0 0
      %3193 = vmatpush1.bf16.msra.mxu0 %v3177
      %3194 = vmatprep.subr.bf16.mxu0 0
      %3195 = vmatpush1.bf16.msra.mxu0 %v3176
      %3196 = vmatprep.subr.bf16.mxu0 0
      %3197 = vmatpush1.bf16.msra.mxu0 %v3175
      %3198 = vmatprep.subr.bf16.mxu0 0
      %3199 = vmatpush1.bf16.msra.mxu0 %v3174
      %3200 = vmatprep.subr.bf16.mxu0 0
      %3201 = vmatpush1.bf16.msra.mxu0 %v3173
      %3202 = vmatprep.subr.bf16.mxu0 0
      %3203 = vmatpush1.bf16.msra.mxu0 %v3172
      %3204 = vmatprep.subr.bf16.mxu0 0
      %3205 = vmatpush2.bf16.msra.mxu0 0
      %3206 = vmatprep.subr.bf16.mxu0 0
      %3207 = vmatpush2.bf16.msra.mxu0 0
      %3208 = vmatprep.subr.bf16.mxu0 0
      %3209 = vmatpush2.bf16.msra.mxu0 0
      %3210 = vmatprep.subr.bf16.mxu0 0
      %3211 = vmatpush2.bf16.msra.mxu0 0
      %3212 = vmatprep.subr.bf16.mxu0 0
      %3213 = vmatpush2.bf16.msra.mxu0 0
      %3214 = vmatprep.subr.bf16.mxu0 0
      %3215 = vmatpush2.bf16.msra.mxu0 0
      %3216 = vmatprep.subr.bf16.mxu0 0
      %3217 = vmatpush2.bf16.msra.mxu0 0
      %3218 = vmatprep.subr.bf16.mxu0 0
      %3219 = vmatpush2.bf16.msra.mxu0 0
      %3220 = vmatprep.mubr.bf16.mxu0 0
      %3221 = vmatmul.mubr.bf16.gmra.mxu0 %v3108
      %v3222 = vpop.f32.mrf.mxu0
      %v3223 = vadd.f32 0.0, %v3222
      %v3224 = vpop.f32.mrf.mxu0
      %v3225 = vpop.f32.mrf.mxu0
      %v3226 = vadd.f32 0.0, %v3225
      %v3227 = vpop.f32.mrf.mxu0
      %3228 = vmatprep.mubr.bf16.mxu0 0
      %3229 = vmatmul.mubr.bf16.gmra.mxu0 %v3109
      %v3230 = vpop.f32.mrf.mxu0
      %v3231 = vadd.f32 0.0, %v3230
      %v3232 = vpop.f32.mrf.mxu0
      %v3233 = vpop.f32.mrf.mxu0
      %v3234 = vadd.f32 0.0, %v3233
      %v3235 = vpop.f32.mrf.mxu0
      %3236 = vmatprep.mubr.bf16.mxu0 0
      %3237 = vmatmul.mubr.bf16.gmra.mxu0 %v3110
      %v3238 = vpop.f32.mrf.mxu0
      %v3239 = vadd.f32 0.0, %v3238
      %v3240 = vpop.f32.mrf.mxu0
      %v3241 = vpop.f32.mrf.mxu0
      %v3242 = vadd.f32 0.0, %v3241
      %v3243 = vpop.f32.mrf.mxu0
      %3244 = vmatprep.mubr.bf16.mxu0 0
      %3245 = vmatmul.mubr.bf16.gmra.mxu0 %v3111
      %v3246 = vpop.f32.mrf.mxu0
      %v3247 = vadd.f32 0.0, %v3246
      %v3248 = vpop.f32.mrf.mxu0
      %v3249 = vpop.f32.mrf.mxu0
      %v3250 = vadd.f32 0.0, %v3249
      %v3251 = vpop.f32.mrf.mxu0
      %3252 = vmatprep.mubr.bf16.mxu0 0
      %3253 = vmatmul.mubr.bf16.gmra.mxu0 %v3112
      %v3254 = vpop.f32.mrf.mxu0
      %v3255 = vadd.f32 0.0, %v3254
      %v3256 = vpop.f32.mrf.mxu0
      %v3257 = vpop.f32.mrf.mxu0
      %v3258 = vadd.f32 0.0, %v3257
      %v3259 = vpop.f32.mrf.mxu0
      %3260 = vmatprep.mubr.bf16.mxu0 0
      %3261 = vmatmul.mubr.bf16.gmra.mxu0 %v3113
      %v3262 = vpop.f32.mrf.mxu0
      %v3263 = vadd.f32 0.0, %v3262
      %v3264 = vpop.f32.mrf.mxu0
      %v3265 = vpop.f32.mrf.mxu0
      %v3266 = vadd.f32 0.0, %v3265
      %v3267 = vpop.f32.mrf.mxu0
      %3268 = vmatprep.mubr.bf16.mxu0 0
      %3269 = vmatmul.mubr.bf16.gmra.mxu0 %v3114
      %v3270 = vpop.f32.mrf.mxu0
      %v3271 = vadd.f32 0.0, %v3270
      %v3272 = vpop.f32.mrf.mxu0
      %v3273 = vpop.f32.mrf.mxu0
      %v3274 = vadd.f32 0.0, %v3273
      %v3275 = vpop.f32.mrf.mxu0
      %3276 = vmatprep.mubr.bf16.mxu0 0
      %3277 = vmatmul.mubr.bf16.gmra.mxu0 %v3115
      %v3278 = vpop.f32.mrf.mxu0
      %v3279 = vadd.f32 0.0, %v3278
      %v3280 = vpop.f32.mrf.mxu0
      %v3281 = vpop.f32.mrf.mxu0
      %v3282 = vadd.f32 0.0, %v3281
      %v3283 = vpop.f32.mrf.mxu0
      %3284 = vmatprep.mubr.bf16.mxu0 0
      %3285 = vmatmul.mubr.bf16.gmra.mxu0 %v3116
      %v3286 = vpop.f32.mrf.mxu0
      %v3287 = vadd.f32 0.0, %v3286
      %v3288 = vpop.f32.mrf.mxu0
      %v3289 = vpop.f32.mrf.mxu0
      %v3290 = vadd.f32 0.0, %v3289
      %v3291 = vpop.f32.mrf.mxu0
      %3292 = vmatprep.mubr.bf16.mxu0 0
      %3293 = vmatmul.mubr.bf16.gmra.mxu0 %v3117
      %v3294 = vpop.f32.mrf.mxu0
      %v3295 = vadd.f32 0.0, %v3294
      %v3296 = vpop.f32.mrf.mxu0
      %v3297 = vpop.f32.mrf.mxu0
      %v3298 = vadd.f32 0.0, %v3297
      %v3299 = vpop.f32.mrf.mxu0
      %3300 = vmatprep.mubr.bf16.mxu0 0
      %3301 = vmatmul.mubr.bf16.gmra.mxu0 %v3118
      %v3302 = vpop.f32.mrf.mxu0
      %v3303 = vadd.f32 0.0, %v3302
      %v3304 = vpop.f32.mrf.mxu0
      %v3305 = vpop.f32.mrf.mxu0
      %v3306 = vadd.f32 0.0, %v3305
      %v3307 = vpop.f32.mrf.mxu0
      %3308 = vmatprep.mubr.bf16.mxu0 0
      %3309 = vmatmul.mubr.bf16.gmra.mxu0 %v3119
      %v3310 = vpop.f32.mrf.mxu0
      %v3311 = vadd.f32 0.0, %v3310
      %v3312 = vpop.f32.mrf.mxu0
      %v3313 = vpop.f32.mrf.mxu0
      %v3314 = vadd.f32 0.0, %v3313
      %v3315 = vpop.f32.mrf.mxu0
      %3316 = vmatprep.mubr.bf16.mxu0 0
      %3317 = vmatmul.mubr.bf16.gmra.mxu0 %v3120
      %v3318 = vpop.f32.mrf.mxu0
      %v3319 = vadd.f32 0.0, %v3318
      %v3320 = vpop.f32.mrf.mxu0
      %v3321 = vpop.f32.mrf.mxu0
      %v3322 = vadd.f32 0.0, %v3321
      %v3323 = vpop.f32.mrf.mxu0
      %3324 = vmatprep.mubr.bf16.mxu0 0
      %3325 = vmatmul.mubr.bf16.gmra.mxu0 %v3121
      %v3326 = vpop.f32.mrf.mxu0
      %v3327 = vadd.f32 0.0, %v3326
      %v3328 = vpop.f32.mrf.mxu0
      %v3329 = vpop.f32.mrf.mxu0
      %v3330 = vadd.f32 0.0, %v3329
      %v3331 = vpop.f32.mrf.mxu0
      %3332 = vmatprep.mubr.bf16.mxu0 0
      %3333 = vmatmul.mubr.bf16.gmra.mxu0 %v3122
      %v3334 = vpop.f32.mrf.mxu0
      %v3335 = vadd.f32 0.0, %v3334
      %v3336 = vpop.f32.mrf.mxu0
      %v3337 = vpop.f32.mrf.mxu0
      %v3338 = vadd.f32 0.0, %v3337
      %v3339 = vpop.f32.mrf.mxu0
      %3340 = vmatprep.mubr.bf16.mxu0 0
      %3341 = vmatmul.mubr.bf16.gmra.mxu0 %v3123
      %v3342 = vpop.f32.mrf.mxu0
      %v3343 = vadd.f32 0.0, %v3342
      %v3344 = vpop.f32.mrf.mxu0
      %v3345 = vpop.f32.mrf.mxu0
      %v3346 = vadd.f32 0.0, %v3345
      %v3347 = vpop.f32.mrf.mxu0
      %3348 = vdwg.mxu0
      %v3349 = vadd.f32 %v2851, %v3223
      %v3350 = vadd.f32 %v2852, %v3226
      %v3351 = vadd.f32 %v2853, %v3231
      %v3352 = vadd.f32 %v2854, %v3234
      %v3353 = vadd.f32 %v2855, %v3239
      %v3354 = vadd.f32 %v2856, %v3242
      %v3355 = vadd.f32 %v2857, %v3247
      %v3356 = vadd.f32 %v2858, %v3250
      %v3357 = vadd.f32 %v2859, %v3255
      %v3358 = vadd.f32 %v2860, %v3258
      %v3359 = vadd.f32 %v2861, %v3263
      %v3360 = vadd.f32 %v2862, %v3266
      %v3361 = vadd.f32 %v2863, %v3271
      %v3362 = vadd.f32 %v2864, %v3274
      %v3363 = vadd.f32 %v2865, %v3279
      %v3364 = vadd.f32 %v2866, %v3282
      %v3365 = vadd.f32 %v2867, %v3287
      %v3366 = vadd.f32 %v2868, %v3290
      %v3367 = vadd.f32 %v2869, %v3295
      %v3368 = vadd.f32 %v2870, %v3298
      %v3369 = vadd.f32 %v2871, %v3303
      %v3370 = vadd.f32 %v2872, %v3306
      %v3371 = vadd.f32 %v2873, %v3311
      %v3372 = vadd.f32 %v2874, %v3314
      %v3373 = vadd.f32 %v2875, %v3319
      %v3374 = vadd.f32 %v2876, %v3322
      %v3375 = vadd.f32 %v2877, %v3327
      %v3376 = vadd.f32 %v2878, %v3330
      %v3377 = vadd.f32 %v2879, %v3335
      %v3378 = vadd.f32 %v2880, %v3338
      %v3379 = vadd.f32 %v2881, %v3343
      %v3380 = vadd.f32 %v2882, %v3346
      %s3381 = scalar_lea.vmem %s198, 24
      %v3382 = vld [vmem:[%s3381] sm:$0xf]
      %v3383 = vld [vmem:[%s3381 + $0x4] sm:$0xf]
      %v3384 = vld [vmem:[%s3381 + $0xc] sm:$0xf]
      %v3385 = vld [vmem:[%s3381 + $0x10] sm:$0xf]
      %v3386 = vld [vmem:[%s3381 + $0x18] sm:$0xf]
      %v3387 = vld [vmem:[%s3381 + $0x1c] sm:$0xf]
      %v3388 = vld [vmem:[%s3381 + $0x24] sm:$0xf]
      %v3389 = vld [vmem:[%s3381 + $0x28] sm:$0xf]
      %v3390 = vld [vmem:[%s3381 + $0x30] sm:$0xf]
      %v3391 = vld [vmem:[%s3381 + $0x34] sm:$0xf]
      %v3392 = vld [vmem:[%s3381 + $0x3c] sm:$0xf]
      %v3393 = vld [vmem:[%s3381 + $0x40] sm:$0xf]
      %v3394 = vld [vmem:[%s3381 + $0x48] sm:$0xf]
      %v3395 = vld [vmem:[%s3381 + $0x4c] sm:$0xf]
      %v3396 = vld [vmem:[%s3381 + $0x54] sm:$0xf]
      %v3397 = vld [vmem:[%s3381 + $0x58] sm:$0xf]
      %v3398 = vld [vmem:[%s3381 + $0x60] sm:$0xf]
      %v3399 = vld [vmem:[%s3381 + $0x64] sm:$0xf]
      %v3400 = vld [vmem:[%s3381 + $0x6c] sm:$0xf]
      %v3401 = vld [vmem:[%s3381 + $0x70] sm:$0xf]
      %v3402 = vld [vmem:[%s3381 + $0x78] sm:$0xf]
      %v3403 = vld [vmem:[%s3381 + $0x7c] sm:$0xf]
      %v3404 = vld [vmem:[%s3381 + $0x84] sm:$0xf]
      %v3405 = vld [vmem:[%s3381 + $0x88] sm:$0xf]
      %v3406 = vld [vmem:[%s3381 + $0x90] sm:$0xf]
      %v3407 = vld [vmem:[%s3381 + $0x94] sm:$0xf]
      %v3408 = vld [vmem:[%s3381 + $0x9c] sm:$0xf]
      %v3409 = vld [vmem:[%s3381 + $0xa0] sm:$0xf]
      %v3410 = vld [vmem:[%s3381 + $0xa8] sm:$0xf]
      %v3411 = vld [vmem:[%s3381 + $0xac] sm:$0xf]
      %v3412 = vld [vmem:[%s3381 + $0xb4] sm:$0xf]
      %v3413 = vld [vmem:[%s3381 + $0xb8] sm:$0xf]
      %s3414 = scalar_lea.vmem %s1, 384
      %v3415 = vld [vmem:[%s3414] sm:$0xf]
      %v3416 = vld [vmem:[%s3414 + $0x4] sm:$0xf]
      %v3417 = vld [vmem:[%s3414 + $0x8] sm:$0xf]
      %v3418 = vld [vmem:[%s3414 + $0xc] sm:$0xf]
      %v3419 = vld [vmem:[%s3414 + $0x10] sm:$0xf]
      %v3420 = vld [vmem:[%s3414 + $0x14] sm:$0xf]
      %v3421 = vld [vmem:[%s3414 + $0x18] sm:$0xf]
      %v3422 = vld [vmem:[%s3414 + $0x1c] sm:$0xf]
      %v3423 = vld [vmem:[%s3414 + $0x20] sm:$0xf]
      %v3424 = vld [vmem:[%s3414 + $0x24] sm:$0xf]
      %v3425 = vld [vmem:[%s3414 + $0x28] sm:$0xf]
      %v3426 = vld [vmem:[%s3414 + $0x2c] sm:$0xf]
      %v3427 = vld [vmem:[%s3414 + $0x30] sm:$0xf]
      %v3428 = vld [vmem:[%s3414 + $0x34] sm:$0xf]
      %v3429 = vld [vmem:[%s3414 + $0x38] sm:$0xf]
      %v3430 = vld [vmem:[%s3414 + $0x3c] sm:$0xf]
      %v3463 = vunpack.c.l.b16 %v3382
      %v3464 = vunpack.c.l.b16 %v3383
      %v3465 = vunpack.c.l.b16 %v3384
      %v3466 = vunpack.c.l.b16 %v3385
      %v3467 = vunpack.c.l.b16 %v3386
      %v3468 = vunpack.c.l.b16 %v3387
      %v3469 = vunpack.c.l.b16 %v3388
      %v3470 = vunpack.c.l.b16 %v3389
      %v3471 = vunpack.c.l.b16 %v3390
      %v3472 = vunpack.c.l.b16 %v3391
      %v3473 = vunpack.c.l.b16 %v3392
      %v3474 = vunpack.c.l.b16 %v3393
      %v3475 = vunpack.c.l.b16 %v3394
      %v3476 = vunpack.c.l.b16 %v3395
      %v3477 = vunpack.c.l.b16 %v3396
      %v3478 = vunpack.c.l.b16 %v3397
      %v3479 = vunpack.c.l.b16 %v3398
      %v3480 = vunpack.c.l.b16 %v3399
      %v3481 = vunpack.c.l.b16 %v3400
      %v3482 = vunpack.c.l.b16 %v3401
      %v3483 = vunpack.c.l.b16 %v3402
      %v3484 = vunpack.c.l.b16 %v3403
      %v3485 = vunpack.c.l.b16 %v3404
      %v3486 = vunpack.c.l.b16 %v3405
      %v3487 = vunpack.c.l.b16 %v3406
      %v3488 = vunpack.c.l.b16 %v3407
      %v3489 = vunpack.c.l.b16 %v3408
      %v3490 = vunpack.c.l.b16 %v3409
      %v3491 = vunpack.c.l.b16 %v3410
      %v3492 = vunpack.c.l.b16 %v3411
      %v3493 = vunpack.c.l.b16 %v3412
      %v3494 = vunpack.c.l.b16 %v3413
      %v3495 = vpack.c.b16 %v3464, %v3463
      %v3496 = vpack.c.b16 %v3466, %v3465
      %v3497 = vpack.c.b16 %v3468, %v3467
      %v3498 = vpack.c.b16 %v3470, %v3469
      %v3499 = vpack.c.b16 %v3472, %v3471
      %v3500 = vpack.c.b16 %v3474, %v3473
      %v3501 = vpack.c.b16 %v3476, %v3475
      %v3502 = vpack.c.b16 %v3478, %v3477
      %v3503 = vpack.c.b16 %v3480, %v3479
      %v3504 = vpack.c.b16 %v3482, %v3481
      %v3505 = vpack.c.b16 %v3484, %v3483
      %v3506 = vpack.c.b16 %v3486, %v3485
      %v3507 = vpack.c.b16 %v3488, %v3487
      %v3508 = vpack.c.b16 %v3490, %v3489
      %v3509 = vpack.c.b16 %v3492, %v3491
      %v3510 = vpack.c.b16 %v3494, %v3493
      %v3543 = vunpack.c.l.b16 %v3415
      %v3544 = vunpack.c.l.b16 %v3416
      %v3545 = vunpack.c.l.b16 %v3417
      %v3546 = vunpack.c.l.b16 %v3418
      %v3547 = vunpack.c.l.b16 %v3419
      %v3548 = vunpack.c.l.b16 %v3420
      %v3549 = vunpack.c.l.b16 %v3421
      %v3550 = vunpack.c.l.b16 %v3422
      %v3551 = vunpack.c.l.b16 %v3423
      %v3552 = vunpack.c.l.b16 %v3424
      %v3553 = vunpack.c.l.b16 %v3425
      %v3554 = vunpack.c.l.b16 %v3426
      %v3555 = vunpack.c.l.b16 %v3427
      %v3556 = vunpack.c.l.b16 %v3428
      %v3557 = vunpack.c.l.b16 %v3429
      %v3558 = vunpack.c.l.b16 %v3430
      %v3559 = vpack.c.b16 %v3544, %v3543
      %v3560 = vpack.c.b16 %v3546, %v3545
      %v3561 = vpack.c.b16 %v3548, %v3547
      %v3562 = vpack.c.b16 %v3550, %v3549
      %v3563 = vpack.c.b16 %v3552, %v3551
      %v3564 = vpack.c.b16 %v3554, %v3553
      %v3565 = vpack.c.b16 %v3556, %v3555
      %v3566 = vpack.c.b16 %v3558, %v3557
      %3575 = vmatprep.subr.bf16.mxu0 0
      %3576 = vmatpush1.bf16.msra.mxu0 %v3566
      %3577 = vmatprep.subr.bf16.mxu0 0
      %3578 = vmatpush1.bf16.msra.mxu0 %v3565
      %3579 = vmatprep.subr.bf16.mxu0 0
      %3580 = vmatpush1.bf16.msra.mxu0 %v3564
      %3581 = vmatprep.subr.bf16.mxu0 0
      %3582 = vmatpush1.bf16.msra.mxu0 %v3563
      %3583 = vmatprep.subr.bf16.mxu0 0
      %3584 = vmatpush1.bf16.msra.mxu0 %v3562
      %3585 = vmatprep.subr.bf16.mxu0 0
      %3586 = vmatpush1.bf16.msra.mxu0 %v3561
      %3587 = vmatprep.subr.bf16.mxu0 0
      %3588 = vmatpush1.bf16.msra.mxu0 %v3560
      %3589 = vmatprep.subr.bf16.mxu0 0
      %3590 = vmatpush1.bf16.msra.mxu0 %v3559
      %3591 = vmatprep.subr.bf16.mxu0 0
      %3592 = vmatpush2.bf16.msra.mxu0 0
      %3593 = vmatprep.subr.bf16.mxu0 0
      %3594 = vmatpush2.bf16.msra.mxu0 0
      %3595 = vmatprep.subr.bf16.mxu0 0
      %3596 = vmatpush2.bf16.msra.mxu0 0
      %3597 = vmatprep.subr.bf16.mxu0 0
      %3598 = vmatpush2.bf16.msra.mxu0 0
      %3599 = vmatprep.subr.bf16.mxu0 0
      %3600 = vmatpush2.bf16.msra.mxu0 0
      %3601 = vmatprep.subr.bf16.mxu0 0
      %3602 = vmatpush2.bf16.msra.mxu0 0
      %3603 = vmatprep.subr.bf16.mxu0 0
      %3604 = vmatpush2.bf16.msra.mxu0 0
      %3605 = vmatprep.subr.bf16.mxu0 0
      %3606 = vmatpush2.bf16.msra.mxu0 0
      %3607 = vmatprep.mubr.bf16.mxu0 0
      %3608 = vmatmul.mubr.bf16.gmra.mxu0 %v3495
      %v3609 = vpop.f32.mrf.mxu0
      %v3610 = vadd.f32 0.0, %v3609
      %v3611 = vpop.f32.mrf.mxu0
      %v3612 = vpop.f32.mrf.mxu0
      %v3613 = vadd.f32 0.0, %v3612
      %v3614 = vpop.f32.mrf.mxu0
      %3615 = vmatprep.mubr.bf16.mxu0 0
      %3616 = vmatmul.mubr.bf16.gmra.mxu0 %v3496
      %v3617 = vpop.f32.mrf.mxu0
      %v3618 = vadd.f32 0.0, %v3617
      %v3619 = vpop.f32.mrf.mxu0
      %v3620 = vpop.f32.mrf.mxu0
      %v3621 = vadd.f32 0.0, %v3620
      %v3622 = vpop.f32.mrf.mxu0
      %3623 = vmatprep.mubr.bf16.mxu0 0
      %3624 = vmatmul.mubr.bf16.gmra.mxu0 %v3497
      %v3625 = vpop.f32.mrf.mxu0
      %v3626 = vadd.f32 0.0, %v3625
      %v3627 = vpop.f32.mrf.mxu0
      %v3628 = vpop.f32.mrf.mxu0
      %v3629 = vadd.f32 0.0, %v3628
      %v3630 = vpop.f32.mrf.mxu0
      %3631 = vmatprep.mubr.bf16.mxu0 0
      %3632 = vmatmul.mubr.bf16.gmra.mxu0 %v3498
      %v3633 = vpop.f32.mrf.mxu0
      %v3634 = vadd.f32 0.0, %v3633
      %v3635 = vpop.f32.mrf.mxu0
      %v3636 = vpop.f32.mrf.mxu0
      %v3637 = vadd.f32 0.0, %v3636
      %v3638 = vpop.f32.mrf.mxu0
      %3639 = vmatprep.mubr.bf16.mxu0 0
      %3640 = vmatmul.mubr.bf16.gmra.mxu0 %v3499
      %v3641 = vpop.f32.mrf.mxu0
      %v3642 = vadd.f32 0.0, %v3641
      %v3643 = vpop.f32.mrf.mxu0
      %v3644 = vpop.f32.mrf.mxu0
      %v3645 = vadd.f32 0.0, %v3644
      %v3646 = vpop.f32.mrf.mxu0
      %3647 = vmatprep.mubr.bf16.mxu0 0
      %3648 = vmatmul.mubr.bf16.gmra.mxu0 %v3500
      %v3649 = vpop.f32.mrf.mxu0
      %v3650 = vadd.f32 0.0, %v3649
      %v3651 = vpop.f32.mrf.mxu0
      %v3652 = vpop.f32.mrf.mxu0
      %v3653 = vadd.f32 0.0, %v3652
      %v3654 = vpop.f32.mrf.mxu0
      %3655 = vmatprep.mubr.bf16.mxu0 0
      %3656 = vmatmul.mubr.bf16.gmra.mxu0 %v3501
      %v3657 = vpop.f32.mrf.mxu0
      %v3658 = vadd.f32 0.0, %v3657
      %v3659 = vpop.f32.mrf.mxu0
      %v3660 = vpop.f32.mrf.mxu0
      %v3661 = vadd.f32 0.0, %v3660
      %v3662 = vpop.f32.mrf.mxu0
      %3663 = vmatprep.mubr.bf16.mxu0 0
      %3664 = vmatmul.mubr.bf16.gmra.mxu0 %v3502
      %v3665 = vpop.f32.mrf.mxu0
      %v3666 = vadd.f32 0.0, %v3665
      %v3667 = vpop.f32.mrf.mxu0
      %v3668 = vpop.f32.mrf.mxu0
      %v3669 = vadd.f32 0.0, %v3668
      %v3670 = vpop.f32.mrf.mxu0
      %3671 = vmatprep.mubr.bf16.mxu0 0
      %3672 = vmatmul.mubr.bf16.gmra.mxu0 %v3503
      %v3673 = vpop.f32.mrf.mxu0
      %v3674 = vadd.f32 0.0, %v3673
      %v3675 = vpop.f32.mrf.mxu0
      %v3676 = vpop.f32.mrf.mxu0
      %v3677 = vadd.f32 0.0, %v3676
      %v3678 = vpop.f32.mrf.mxu0
      %3679 = vmatprep.mubr.bf16.mxu0 0
      %3680 = vmatmul.mubr.bf16.gmra.mxu0 %v3504
      %v3681 = vpop.f32.mrf.mxu0
      %v3682 = vadd.f32 0.0, %v3681
      %v3683 = vpop.f32.mrf.mxu0
      %v3684 = vpop.f32.mrf.mxu0
      %v3685 = vadd.f32 0.0, %v3684
      %v3686 = vpop.f32.mrf.mxu0
      %3687 = vmatprep.mubr.bf16.mxu0 0
      %3688 = vmatmul.mubr.bf16.gmra.mxu0 %v3505
      %v3689 = vpop.f32.mrf.mxu0
      %v3690 = vadd.f32 0.0, %v3689
      %v3691 = vpop.f32.mrf.mxu0
      %v3692 = vpop.f32.mrf.mxu0
      %v3693 = vadd.f32 0.0, %v3692
      %v3694 = vpop.f32.mrf.mxu0
      %3695 = vmatprep.mubr.bf16.mxu0 0
      %3696 = vmatmul.mubr.bf16.gmra.mxu0 %v3506
      %v3697 = vpop.f32.mrf.mxu0
      %v3698 = vadd.f32 0.0, %v3697
      %v3699 = vpop.f32.mrf.mxu0
      %v3700 = vpop.f32.mrf.mxu0
      %v3701 = vadd.f32 0.0, %v3700
      %v3702 = vpop.f32.mrf.mxu0
      %3703 = vmatprep.mubr.bf16.mxu0 0
      %3704 = vmatmul.mubr.bf16.gmra.mxu0 %v3507
      %v3705 = vpop.f32.mrf.mxu0
      %v3706 = vadd.f32 0.0, %v3705
      %v3707 = vpop.f32.mrf.mxu0
      %v3708 = vpop.f32.mrf.mxu0
      %v3709 = vadd.f32 0.0, %v3708
      %v3710 = vpop.f32.mrf.mxu0
      %3711 = vmatprep.mubr.bf16.mxu0 0
      %3712 = vmatmul.mubr.bf16.gmra.mxu0 %v3508
      %v3713 = vpop.f32.mrf.mxu0
      %v3714 = vadd.f32 0.0, %v3713
      %v3715 = vpop.f32.mrf.mxu0
      %v3716 = vpop.f32.mrf.mxu0
      %v3717 = vadd.f32 0.0, %v3716
      %v3718 = vpop.f32.mrf.mxu0
      %3719 = vmatprep.mubr.bf16.mxu0 0
      %3720 = vmatmul.mubr.bf16.gmra.mxu0 %v3509
      %v3721 = vpop.f32.mrf.mxu0
      %v3722 = vadd.f32 0.0, %v3721
      %v3723 = vpop.f32.mrf.mxu0
      %v3724 = vpop.f32.mrf.mxu0
      %v3725 = vadd.f32 0.0, %v3724
      %v3726 = vpop.f32.mrf.mxu0
      %3727 = vmatprep.mubr.bf16.mxu0 0
      %3728 = vmatmul.mubr.bf16.gmra.mxu0 %v3510
      %v3729 = vpop.f32.mrf.mxu0
      %v3730 = vadd.f32 0.0, %v3729
      %v3731 = vpop.f32.mrf.mxu0
      %v3732 = vpop.f32.mrf.mxu0
      %v3733 = vadd.f32 0.0, %v3732
      %v3734 = vpop.f32.mrf.mxu0
      %3735 = vdwg.mxu0
      %v3736 = vadd.f32 %v3349, %v3610
      %v3737 = vadd.f32 %v3350, %v3613
      %v3738 = vadd.f32 %v3351, %v3618
      %v3739 = vadd.f32 %v3352, %v3621
      %v3740 = vadd.f32 %v3353, %v3626
      %v3741 = vadd.f32 %v3354, %v3629
      %v3742 = vadd.f32 %v3355, %v3634
      %v3743 = vadd.f32 %v3356, %v3637
      %v3744 = vadd.f32 %v3357, %v3642
      %v3745 = vadd.f32 %v3358, %v3645
      %v3746 = vadd.f32 %v3359, %v3650
      %v3747 = vadd.f32 %v3360, %v3653
      %v3748 = vadd.f32 %v3361, %v3658
      %v3749 = vadd.f32 %v3362, %v3661
      %v3750 = vadd.f32 %v3363, %v3666
      %v3751 = vadd.f32 %v3364, %v3669
      %v3752 = vadd.f32 %v3365, %v3674
      %v3753 = vadd.f32 %v3366, %v3677
      %v3754 = vadd.f32 %v3367, %v3682
      %v3755 = vadd.f32 %v3368, %v3685
      %v3756 = vadd.f32 %v3369, %v3690
      %v3757 = vadd.f32 %v3370, %v3693
      %v3758 = vadd.f32 %v3371, %v3698
      %v3759 = vadd.f32 %v3372, %v3701
      %v3760 = vadd.f32 %v3373, %v3706
      %v3761 = vadd.f32 %v3374, %v3709
      %v3762 = vadd.f32 %v3375, %v3714
      %v3763 = vadd.f32 %v3376, %v3717
      %v3764 = vadd.f32 %v3377, %v3722
      %v3765 = vadd.f32 %v3378, %v3725
      %v3766 = vadd.f32 %v3379, %v3730
      %v3767 = vadd.f32 %v3380, %v3733
      %v3768 = vld [vmem:[%s3381] sm:$0xf]
      %v3769 = vld [vmem:[%s3381 + $0x4] sm:$0xf]
      %v3770 = vld [vmem:[%s3381 + $0x8] sm:$0x1]
      %v3771 = vld [vmem:[%s3381 + $0xc] sm:$0xf]
      %v3772 = vld [vmem:[%s3381 + $0x10] sm:$0xf]
      %v3773 = vld [vmem:[%s3381 + $0x14] sm:$0x1]
      %v3774 = vld [vmem:[%s3381 + $0x18] sm:$0xf]
      %v3775 = vld [vmem:[%s3381 + $0x1c] sm:$0xf]
      %v3776 = vld [vmem:[%s3381 + $0x20] sm:$0x1]
      %v3777 = vld [vmem:[%s3381 + $0x24] sm:$0xf]
      %v3778 = vld [vmem:[%s3381 + $0x28] sm:$0xf]
      %v3779 = vld [vmem:[%s3381 + $0x2c] sm:$0x1]
      %v3780 = vld [vmem:[%s3381 + $0x30] sm:$0xf]
      %v3781 = vld [vmem:[%s3381 + $0x34] sm:$0xf]
      %v3782 = vld [vmem:[%s3381 + $0x38] sm:$0x1]
      %v3783 = vld [vmem:[%s3381 + $0x3c] sm:$0xf]
      %v3784 = vld [vmem:[%s3381 + $0x40] sm:$0xf]
      %v3785 = vld [vmem:[%s3381 + $0x44] sm:$0x1]
      %v3786 = vld [vmem:[%s3381 + $0x48] sm:$0xf]
      %v3787 = vld [vmem:[%s3381 + $0x4c] sm:$0xf]
      %v3788 = vld [vmem:[%s3381 + $0x50] sm:$0x1]
      %v3789 = vld [vmem:[%s3381 + $0x54] sm:$0xf]
      %v3790 = vld [vmem:[%s3381 + $0x58] sm:$0xf]
      %v3791 = vld [vmem:[%s3381 + $0x5c] sm:$0x1]
      %v3792 = vld [vmem:[%s3381 + $0x60] sm:$0xf]
      %v3793 = vld [vmem:[%s3381 + $0x64] sm:$0xf]
      %v3794 = vld [vmem:[%s3381 + $0x68] sm:$0x1]
      %v3795 = vld [vmem:[%s3381 + $0x6c] sm:$0xf]
      %v3796 = vld [vmem:[%s3381 + $0x70] sm:$0xf]
      %v3797 = vld [vmem:[%s3381 + $0x74] sm:$0x1]
      %v3798 = vld [vmem:[%s3381 + $0x78] sm:$0xf]
      %v3799 = vld [vmem:[%s3381 + $0x7c] sm:$0xf]
      %v3800 = vld [vmem:[%s3381 + $0x80] sm:$0x1]
      %v3801 = vld [vmem:[%s3381 + $0x84] sm:$0xf]
      %v3802 = vld [vmem:[%s3381 + $0x88] sm:$0xf]
      %v3803 = vld [vmem:[%s3381 + $0x8c] sm:$0x1]
      %v3804 = vld [vmem:[%s3381 + $0x90] sm:$0xf]
      %v3805 = vld [vmem:[%s3381 + $0x94] sm:$0xf]
      %v3806 = vld [vmem:[%s3381 + $0x98] sm:$0x1]
      %v3807 = vld [vmem:[%s3381 + $0x9c] sm:$0xf]
      %v3808 = vld [vmem:[%s3381 + $0xa0] sm:$0xf]
      %v3809 = vld [vmem:[%s3381 + $0xa4] sm:$0x1]
      %v3810 = vld [vmem:[%s3381 + $0xa8] sm:$0xf]
      %v3811 = vld [vmem:[%s3381 + $0xac] sm:$0xf]
      %v3812 = vld [vmem:[%s3381 + $0xb0] sm:$0x1]
      %v3813 = vld [vmem:[%s3381 + $0xb4] sm:$0xf]
      %v3814 = vld [vmem:[%s3381 + $0xb8] sm:$0xf]
      %v3815 = vld [vmem:[%s3381 + $0xbc] sm:$0x1]
      %v3817 = vshrl.u32 %v3768, 16
      %v3819 = vrot.slane %v3817, 4
      %v3820 = vshll.u32 %v3768, 16
      %v3822 = vrot.slane %v3820, 5
      %v3823 = vor.u32 %v3819, %v3822
      %v3824 = vrot.slane %v3823, 4
      %v3826 = vshll.u32 %v3769, 16
      %v3828 = vrot.slane %v3826, 5
      %v3829 = vsel %vm277, %v3824, %v3828
      %v3830 = vshrl.u32 %v3769, 16
      %v3832 = vrot.slane %v3830, 4
      %v3833 = vor.u32 %v3832, %v3828
      %v3834 = vrot.slane %v3833, 4
      %v3836 = vshll.u32 %v3770, 16
      %v3838 = vrot.slane %v3836, 5
      %v3839 = vsel %vm277, %v3834, %v3838
      %v3841 = vshrl.u32 %v3771, 16
      %v3843 = vrot.slane %v3841, 4
      %v3844 = vshll.u32 %v3771, 16
      %v3846 = vrot.slane %v3844, 5
      %v3847 = vor.u32 %v3843, %v3846
      %v3848 = vrot.slane %v3847, 4
      %v3850 = vshll.u32 %v3772, 16
      %v3852 = vrot.slane %v3850, 5
      %v3853 = vsel %vm277, %v3848, %v3852
      %v3854 = vshrl.u32 %v3772, 16
      %v3856 = vrot.slane %v3854, 4
      %v3857 = vor.u32 %v3856, %v3852
      %v3858 = vrot.slane %v3857, 4
      %v3860 = vshll.u32 %v3773, 16
      %v3862 = vrot.slane %v3860, 5
      %v3863 = vsel %vm277, %v3858, %v3862
      %v3865 = vshrl.u32 %v3774, 16
      %v3867 = vrot.slane %v3865, 4
      %v3868 = vshll.u32 %v3774, 16
      %v3870 = vrot.slane %v3868, 5
      %v3871 = vor.u32 %v3867, %v3870
      %v3872 = vrot.slane %v3871, 4
      %v3874 = vshll.u32 %v3775, 16
      %v3876 = vrot.slane %v3874, 5
      %v3877 = vsel %vm277, %v3872, %v3876
      %v3878 = vshrl.u32 %v3775, 16
      %v3880 = vrot.slane %v3878, 4
      %v3881 = vor.u32 %v3880, %v3876
      %v3882 = vrot.slane %v3881, 4
      %v3884 = vshll.u32 %v3776, 16
      %v3886 = vrot.slane %v3884, 5
      %v3887 = vsel %vm277, %v3882, %v3886
      %v3889 = vshrl.u32 %v3777, 16
      %v3891 = vrot.slane %v3889, 4
      %v3892 = vshll.u32 %v3777, 16
      %v3894 = vrot.slane %v3892, 5
      %v3895 = vor.u32 %v3891, %v3894
      %v3896 = vrot.slane %v3895, 4
      %v3898 = vshll.u32 %v3778, 16
      %v3900 = vrot.slane %v3898, 5
      %v3901 = vsel %vm277, %v3896, %v3900
      %v3902 = vshrl.u32 %v3778, 16
      %v3904 = vrot.slane %v3902, 4
      %v3905 = vor.u32 %v3904, %v3900
      %v3906 = vrot.slane %v3905, 4
      %v3908 = vshll.u32 %v3779, 16
      %v3910 = vrot.slane %v3908, 5
      %v3911 = vsel %vm277, %v3906, %v3910
      %v3913 = vshrl.u32 %v3780, 16
      %v3915 = vrot.slane %v3913, 4
      %v3916 = vshll.u32 %v3780, 16
      %v3918 = vrot.slane %v3916, 5
      %v3919 = vor.u32 %v3915, %v3918
      %v3920 = vrot.slane %v3919, 4
      %v3922 = vshll.u32 %v3781, 16
      %v3924 = vrot.slane %v3922, 5
      %v3925 = vsel %vm277, %v3920, %v3924
      %v3926 = vshrl.u32 %v3781, 16
      %v3928 = vrot.slane %v3926, 4
      %v3929 = vor.u32 %v3928, %v3924
      %v3930 = vrot.slane %v3929, 4
      %v3932 = vshll.u32 %v3782, 16
      %v3934 = vrot.slane %v3932, 5
      %v3935 = vsel %vm277, %v3930, %v3934
      %v3937 = vshrl.u32 %v3783, 16
      %v3939 = vrot.slane %v3937, 4
      %v3940 = vshll.u32 %v3783, 16
      %v3942 = vrot.slane %v3940, 5
      %v3943 = vor.u32 %v3939, %v3942
      %v3944 = vrot.slane %v3943, 4
      %v3946 = vshll.u32 %v3784, 16
      %v3948 = vrot.slane %v3946, 5
      %v3949 = vsel %vm277, %v3944, %v3948
      %v3950 = vshrl.u32 %v3784, 16
      %v3952 = vrot.slane %v3950, 4
      %v3953 = vor.u32 %v3952, %v3948
      %v3954 = vrot.slane %v3953, 4
      %v3956 = vshll.u32 %v3785, 16
      %v3958 = vrot.slane %v3956, 5
      %v3959 = vsel %vm277, %v3954, %v3958
      %v3961 = vshrl.u32 %v3786, 16
      %v3963 = vrot.slane %v3961, 4
      %v3964 = vshll.u32 %v3786, 16
      %v3966 = vrot.slane %v3964, 5
      %v3967 = vor.u32 %v3963, %v3966
      %v3968 = vrot.slane %v3967, 4
      %v3970 = vshll.u32 %v3787, 16
      %v3972 = vrot.slane %v3970, 5
      %v3973 = vsel %vm277, %v3968, %v3972
      %v3974 = vshrl.u32 %v3787, 16
      %v3976 = vrot.slane %v3974, 4
      %v3977 = vor.u32 %v3976, %v3972
      %v3978 = vrot.slane %v3977, 4
      %v3980 = vshll.u32 %v3788, 16
      %v3982 = vrot.slane %v3980, 5
      %v3983 = vsel %vm277, %v3978, %v3982
      %v3985 = vshrl.u32 %v3789, 16
      %v3987 = vrot.slane %v3985, 4
      %v3988 = vshll.u32 %v3789, 16
      %v3990 = vrot.slane %v3988, 5
      %v3991 = vor.u32 %v3987, %v3990
      %v3992 = vrot.slane %v3991, 4
      %v3994 = vshll.u32 %v3790, 16
      %v3996 = vrot.slane %v3994, 5
      %v3997 = vsel %vm277, %v3992, %v3996
      %v3998 = vshrl.u32 %v3790, 16
      %v4000 = vrot.slane %v3998, 4
      %v4001 = vor.u32 %v4000, %v3996
      %v4002 = vrot.slane %v4001, 4
      %v4004 = vshll.u32 %v3791, 16
      %v4006 = vrot.slane %v4004, 5
      %v4007 = vsel %vm277, %v4002, %v4006
      %v4009 = vshrl.u32 %v3792, 16
      %v4011 = vrot.slane %v4009, 4
      %v4012 = vshll.u32 %v3792, 16
      %v4014 = vrot.slane %v4012, 5
      %v4015 = vor.u32 %v4011, %v4014
      %v4016 = vrot.slane %v4015, 4
      %v4018 = vshll.u32 %v3793, 16
      %v4020 = vrot.slane %v4018, 5
      %v4021 = vsel %vm277, %v4016, %v4020
      %v4022 = vshrl.u32 %v3793, 16
      %v4024 = vrot.slane %v4022, 4
      %v4025 = vor.u32 %v4024, %v4020
      %v4026 = vrot.slane %v4025, 4
      %v4028 = vshll.u32 %v3794, 16
      %v4030 = vrot.slane %v4028, 5
      %v4031 = vsel %vm277, %v4026, %v4030
      %v4033 = vshrl.u32 %v3795, 16
      %v4035 = vrot.slane %v4033, 4
      %v4036 = vshll.u32 %v3795, 16
      %v4038 = vrot.slane %v4036, 5
      %v4039 = vor.u32 %v4035, %v4038
      %v4040 = vrot.slane %v4039, 4
      %v4042 = vshll.u32 %v3796, 16
      %v4044 = vrot.slane %v4042, 5
      %v4045 = vsel %vm277, %v4040, %v4044
      %v4046 = vshrl.u32 %v3796, 16
      %v4048 = vrot.slane %v4046, 4
      %v4049 = vor.u32 %v4048, %v4044
      %v4050 = vrot.slane %v4049, 4
      %v4052 = vshll.u32 %v3797, 16
      %v4054 = vrot.slane %v4052, 5
      %v4055 = vsel %vm277, %v4050, %v4054
      %v4057 = vshrl.u32 %v3798, 16
      %v4059 = vrot.slane %v4057, 4
      %v4060 = vshll.u32 %v3798, 16
      %v4062 = vrot.slane %v4060, 5
      %v4063 = vor.u32 %v4059, %v4062
      %v4064 = vrot.slane %v4063, 4
      %v4066 = vshll.u32 %v3799, 16
      %v4068 = vrot.slane %v4066, 5
      %v4069 = vsel %vm277, %v4064, %v4068
      %v4070 = vshrl.u32 %v3799, 16
      %v4072 = vrot.slane %v4070, 4
      %v4073 = vor.u32 %v4072, %v4068
      %v4074 = vrot.slane %v4073, 4
      %v4076 = vshll.u32 %v3800, 16
      %v4078 = vrot.slane %v4076, 5
      %v4079 = vsel %vm277, %v4074, %v4078
      %v4081 = vshrl.u32 %v3801, 16
      %v4083 = vrot.slane %v4081, 4
      %v4084 = vshll.u32 %v3801, 16
      %v4086 = vrot.slane %v4084, 5
      %v4087 = vor.u32 %v4083, %v4086
      %v4088 = vrot.slane %v4087, 4
      %v4090 = vshll.u32 %v3802, 16
      %v4092 = vrot.slane %v4090, 5
      %v4093 = vsel %vm277, %v4088, %v4092
      %v4094 = vshrl.u32 %v3802, 16
      %v4096 = vrot.slane %v4094, 4
      %v4097 = vor.u32 %v4096, %v4092
      %v4098 = vrot.slane %v4097, 4
      %v4100 = vshll.u32 %v3803, 16
      %v4102 = vrot.slane %v4100, 5
      %v4103 = vsel %vm277, %v4098, %v4102
      %v4105 = vshrl.u32 %v3804, 16
      %v4107 = vrot.slane %v4105, 4
      %v4108 = vshll.u32 %v3804, 16
      %v4110 = vrot.slane %v4108, 5
      %v4111 = vor.u32 %v4107, %v4110
      %v4112 = vrot.slane %v4111, 4
      %v4114 = vshll.u32 %v3805, 16
      %v4116 = vrot.slane %v4114, 5
      %v4117 = vsel %vm277, %v4112, %v4116
      %v4118 = vshrl.u32 %v3805, 16
      %v4120 = vrot.slane %v4118, 4
      %v4121 = vor.u32 %v4120, %v4116
      %v4122 = vrot.slane %v4121, 4
      %v4124 = vshll.u32 %v3806, 16
      %v4126 = vrot.slane %v4124, 5
      %v4127 = vsel %vm277, %v4122, %v4126
      %v4129 = vshrl.u32 %v3807, 16
      %v4131 = vrot.slane %v4129, 4
      %v4132 = vshll.u32 %v3807, 16
      %v4134 = vrot.slane %v4132, 5
      %v4135 = vor.u32 %v4131, %v4134
      %v4136 = vrot.slane %v4135, 4
      %v4138 = vshll.u32 %v3808, 16
      %v4140 = vrot.slane %v4138, 5
      %v4141 = vsel %vm277, %v4136, %v4140
      %v4142 = vshrl.u32 %v3808, 16
      %v4144 = vrot.slane %v4142, 4
      %v4145 = vor.u32 %v4144, %v4140
      %v4146 = vrot.slane %v4145, 4
      %v4148 = vshll.u32 %v3809, 16
      %v4150 = vrot.slane %v4148, 5
      %v4151 = vsel %vm277, %v4146, %v4150
      %v4153 = vshrl.u32 %v3810, 16
      %v4155 = vrot.slane %v4153, 4
      %v4156 = vshll.u32 %v3810, 16
      %v4158 = vrot.slane %v4156, 5
      %v4159 = vor.u32 %v4155, %v4158
      %v4160 = vrot.slane %v4159, 4
      %v4162 = vshll.u32 %v3811, 16
      %v4164 = vrot.slane %v4162, 5
      %v4165 = vsel %vm277, %v4160, %v4164
      %v4166 = vshrl.u32 %v3811, 16
      %v4168 = vrot.slane %v4166, 4
      %v4169 = vor.u32 %v4168, %v4164
      %v4170 = vrot.slane %v4169, 4
      %v4172 = vshll.u32 %v3812, 16
      %v4174 = vrot.slane %v4172, 5
      %v4175 = vsel %vm277, %v4170, %v4174
      %v4177 = vshrl.u32 %v3813, 16
      %v4179 = vrot.slane %v4177, 4
      %v4180 = vshll.u32 %v3813, 16
      %v4182 = vrot.slane %v4180, 5
      %v4183 = vor.u32 %v4179, %v4182
      %v4184 = vrot.slane %v4183, 4
      %v4186 = vshll.u32 %v3814, 16
      %v4188 = vrot.slane %v4186, 5
      %v4189 = vsel %vm277, %v4184, %v4188
      %v4190 = vshrl.u32 %v3814, 16
      %v4192 = vrot.slane %v4190, 4
      %v4193 = vor.u32 %v4192, %v4188
      %v4194 = vrot.slane %v4193, 4
      %v4196 = vshll.u32 %v3815, 16
      %v4198 = vrot.slane %v4196, 5
      %v4199 = vsel %vm277, %v4194, %v4198
      %s4200 = scalar_lea.vmem %s1, 448
      %v4201 = vld [vmem:[%s4200] sm:$0xf]
      %v4202 = vld [vmem:[%s4200 + $0x4] sm:$0xf]
      %v4203 = vld [vmem:[%s4200 + $0x8] sm:$0xf]
      %v4204 = vld [vmem:[%s4200 + $0xc] sm:$0xf]
      %v4205 = vld [vmem:[%s4200 + $0x10] sm:$0xf]
      %v4206 = vld [vmem:[%s4200 + $0x14] sm:$0xf]
      %v4207 = vld [vmem:[%s4200 + $0x18] sm:$0xf]
      %v4208 = vld [vmem:[%s4200 + $0x1c] sm:$0xf]
      %v4209 = vld [vmem:[%s4200 + $0x20] sm:$0xf]
      %v4210 = vld [vmem:[%s4200 + $0x24] sm:$0xf]
      %v4211 = vld [vmem:[%s4200 + $0x28] sm:$0xf]
      %v4212 = vld [vmem:[%s4200 + $0x2c] sm:$0xf]
      %v4213 = vld [vmem:[%s4200 + $0x30] sm:$0xf]
      %v4214 = vld [vmem:[%s4200 + $0x34] sm:$0xf]
      %v4215 = vld [vmem:[%s4200 + $0x38] sm:$0xf]
      %v4216 = vld [vmem:[%s4200 + $0x3c] sm:$0xf]
      %v4217 = vunpack.c.l.b16 %v3829
      %v4218 = vunpack.c.l.b16 %v3839
      %v4219 = vunpack.c.l.b16 %v3853
      %v4220 = vunpack.c.l.b16 %v3863
      %v4221 = vunpack.c.l.b16 %v3877
      %v4222 = vunpack.c.l.b16 %v3887
      %v4223 = vunpack.c.l.b16 %v3901
      %v4224 = vunpack.c.l.b16 %v3911
      %v4225 = vunpack.c.l.b16 %v3925
      %v4226 = vunpack.c.l.b16 %v3935
      %v4227 = vunpack.c.l.b16 %v3949
      %v4228 = vunpack.c.l.b16 %v3959
      %v4229 = vunpack.c.l.b16 %v3973
      %v4230 = vunpack.c.l.b16 %v3983
      %v4231 = vunpack.c.l.b16 %v3997
      %v4232 = vunpack.c.l.b16 %v4007
      %v4233 = vunpack.c.l.b16 %v4021
      %v4234 = vunpack.c.l.b16 %v4031
      %v4235 = vunpack.c.l.b16 %v4045
      %v4236 = vunpack.c.l.b16 %v4055
      %v4237 = vunpack.c.l.b16 %v4069
      %v4238 = vunpack.c.l.b16 %v4079
      %v4239 = vunpack.c.l.b16 %v4093
      %v4240 = vunpack.c.l.b16 %v4103
      %v4241 = vunpack.c.l.b16 %v4117
      %v4242 = vunpack.c.l.b16 %v4127
      %v4243 = vunpack.c.l.b16 %v4141
      %v4244 = vunpack.c.l.b16 %v4151
      %v4245 = vunpack.c.l.b16 %v4165
      %v4246 = vunpack.c.l.b16 %v4175
      %v4247 = vunpack.c.l.b16 %v4189
      %v4248 = vunpack.c.l.b16 %v4199
      %v4249 = vpack.c.b16 %v4218, %v4217
      %v4250 = vpack.c.b16 %v4220, %v4219
      %v4251 = vpack.c.b16 %v4222, %v4221
      %v4252 = vpack.c.b16 %v4224, %v4223
      %v4253 = vpack.c.b16 %v4226, %v4225
      %v4254 = vpack.c.b16 %v4228, %v4227
      %v4255 = vpack.c.b16 %v4230, %v4229
      %v4256 = vpack.c.b16 %v4232, %v4231
      %v4257 = vpack.c.b16 %v4234, %v4233
      %v4258 = vpack.c.b16 %v4236, %v4235
      %v4259 = vpack.c.b16 %v4238, %v4237
      %v4260 = vpack.c.b16 %v4240, %v4239
      %v4261 = vpack.c.b16 %v4242, %v4241
      %v4262 = vpack.c.b16 %v4244, %v4243
      %v4263 = vpack.c.b16 %v4246, %v4245
      %v4264 = vpack.c.b16 %v4248, %v4247
      %v4297 = vunpack.c.l.b16 %v4201
      %v4298 = vunpack.c.l.b16 %v4202
      %v4299 = vunpack.c.l.b16 %v4203
      %v4300 = vunpack.c.l.b16 %v4204
      %v4301 = vunpack.c.l.b16 %v4205
      %v4302 = vunpack.c.l.b16 %v4206
      %v4303 = vunpack.c.l.b16 %v4207
      %v4304 = vunpack.c.l.b16 %v4208
      %v4305 = vunpack.c.l.b16 %v4209
      %v4306 = vunpack.c.l.b16 %v4210
      %v4307 = vunpack.c.l.b16 %v4211
      %v4308 = vunpack.c.l.b16 %v4212
      %v4309 = vunpack.c.l.b16 %v4213
      %v4310 = vunpack.c.l.b16 %v4214
      %v4311 = vunpack.c.l.b16 %v4215
      %v4312 = vunpack.c.l.b16 %v4216
      %v4313 = vpack.c.b16 %v4298, %v4297
      %v4314 = vpack.c.b16 %v4300, %v4299
      %v4315 = vpack.c.b16 %v4302, %v4301
      %v4316 = vpack.c.b16 %v4304, %v4303
      %v4317 = vpack.c.b16 %v4306, %v4305
      %v4318 = vpack.c.b16 %v4308, %v4307
      %v4319 = vpack.c.b16 %v4310, %v4309
      %v4320 = vpack.c.b16 %v4312, %v4311
      %4329 = vmatprep.subr.bf16.mxu0 0
      %4330 = vmatpush1.bf16.msra.mxu0 %v4320
      %4331 = vmatprep.subr.bf16.mxu0 0
      %4332 = vmatpush1.bf16.msra.mxu0 %v4319
      %4333 = vmatprep.subr.bf16.mxu0 0
      %4334 = vmatpush1.bf16.msra.mxu0 %v4318
      %4335 = vmatprep.subr.bf16.mxu0 0
      %4336 = vmatpush1.bf16.msra.mxu0 %v4317
      %4337 = vmatprep.subr.bf16.mxu0 0
      %4338 = vmatpush1.bf16.msra.mxu0 %v4316
      %4339 = vmatprep.subr.bf16.mxu0 0
      %4340 = vmatpush1.bf16.msra.mxu0 %v4315
      %4341 = vmatprep.subr.bf16.mxu0 0
      %4342 = vmatpush1.bf16.msra.mxu0 %v4314
      %4343 = vmatprep.subr.bf16.mxu0 0
      %4344 = vmatpush1.bf16.msra.mxu0 %v4313
      %4345 = vmatprep.subr.bf16.mxu0 0
      %4346 = vmatpush2.bf16.msra.mxu0 0
      %4347 = vmatprep.subr.bf16.mxu0 0
      %4348 = vmatpush2.bf16.msra.mxu0 0
      %4349 = vmatprep.subr.bf16.mxu0 0
      %4350 = vmatpush2.bf16.msra.mxu0 0
      %4351 = vmatprep.subr.bf16.mxu0 0
      %4352 = vmatpush2.bf16.msra.mxu0 0
      %4353 = vmatprep.subr.bf16.mxu0 0
      %4354 = vmatpush2.bf16.msra.mxu0 0
      %4355 = vmatprep.subr.bf16.mxu0 0
      %4356 = vmatpush2.bf16.msra.mxu0 0
      %4357 = vmatprep.subr.bf16.mxu0 0
      %4358 = vmatpush2.bf16.msra.mxu0 0
      %4359 = vmatprep.subr.bf16.mxu0 0
      %4360 = vmatpush2.bf16.msra.mxu0 0
      %4361 = vmatprep.mubr.bf16.mxu0 0
      %4362 = vmatmul.mubr.bf16.gmra.mxu0 %v4249
      %v4363 = vpop.f32.mrf.mxu0
      %v4364 = vadd.f32 0.0, %v4363
      %v4365 = vpop.f32.mrf.mxu0
      %v4366 = vpop.f32.mrf.mxu0
      %v4367 = vadd.f32 0.0, %v4366
      %v4368 = vpop.f32.mrf.mxu0
      %4369 = vmatprep.mubr.bf16.mxu0 0
      %4370 = vmatmul.mubr.bf16.gmra.mxu0 %v4250
      %v4371 = vpop.f32.mrf.mxu0
      %v4372 = vadd.f32 0.0, %v4371
      %v4373 = vpop.f32.mrf.mxu0
      %v4374 = vpop.f32.mrf.mxu0
      %v4375 = vadd.f32 0.0, %v4374
      %v4376 = vpop.f32.mrf.mxu0
      %4377 = vmatprep.mubr.bf16.mxu0 0
      %4378 = vmatmul.mubr.bf16.gmra.mxu0 %v4251
      %v4379 = vpop.f32.mrf.mxu0
      %v4380 = vadd.f32 0.0, %v4379
      %v4381 = vpop.f32.mrf.mxu0
      %v4382 = vpop.f32.mrf.mxu0
      %v4383 = vadd.f32 0.0, %v4382
      %v4384 = vpop.f32.mrf.mxu0
      %4385 = vmatprep.mubr.bf16.mxu0 0
      %4386 = vmatmul.mubr.bf16.gmra.mxu0 %v4252
      %v4387 = vpop.f32.mrf.mxu0
      %v4388 = vadd.f32 0.0, %v4387
      %v4389 = vpop.f32.mrf.mxu0
      %v4390 = vpop.f32.mrf.mxu0
      %v4391 = vadd.f32 0.0, %v4390
      %v4392 = vpop.f32.mrf.mxu0
      %4393 = vmatprep.mubr.bf16.mxu0 0
      %4394 = vmatmul.mubr.bf16.gmra.mxu0 %v4253
      %v4395 = vpop.f32.mrf.mxu0
      %v4396 = vadd.f32 0.0, %v4395
      %v4397 = vpop.f32.mrf.mxu0
      %v4398 = vpop.f32.mrf.mxu0
      %v4399 = vadd.f32 0.0, %v4398
      %v4400 = vpop.f32.mrf.mxu0
      %4401 = vmatprep.mubr.bf16.mxu0 0
      %4402 = vmatmul.mubr.bf16.gmra.mxu0 %v4254
      %v4403 = vpop.f32.mrf.mxu0
      %v4404 = vadd.f32 0.0, %v4403
      %v4405 = vpop.f32.mrf.mxu0
      %v4406 = vpop.f32.mrf.mxu0
      %v4407 = vadd.f32 0.0, %v4406
      %v4408 = vpop.f32.mrf.mxu0
      %4409 = vmatprep.mubr.bf16.mxu0 0
      %4410 = vmatmul.mubr.bf16.gmra.mxu0 %v4255
      %v4411 = vpop.f32.mrf.mxu0
      %v4412 = vadd.f32 0.0, %v4411
      %v4413 = vpop.f32.mrf.mxu0
      %v4414 = vpop.f32.mrf.mxu0
      %v4415 = vadd.f32 0.0, %v4414
      %v4416 = vpop.f32.mrf.mxu0
      %4417 = vmatprep.mubr.bf16.mxu0 0
      %4418 = vmatmul.mubr.bf16.gmra.mxu0 %v4256
      %v4419 = vpop.f32.mrf.mxu0
      %v4420 = vadd.f32 0.0, %v4419
      %v4421 = vpop.f32.mrf.mxu0
      %v4422 = vpop.f32.mrf.mxu0
      %v4423 = vadd.f32 0.0, %v4422
      %v4424 = vpop.f32.mrf.mxu0
      %4425 = vmatprep.mubr.bf16.mxu0 0
      %4426 = vmatmul.mubr.bf16.gmra.mxu0 %v4257
      %v4427 = vpop.f32.mrf.mxu0
      %v4428 = vadd.f32 0.0, %v4427
      %v4429 = vpop.f32.mrf.mxu0
      %v4430 = vpop.f32.mrf.mxu0
      %v4431 = vadd.f32 0.0, %v4430
      %v4432 = vpop.f32.mrf.mxu0
      %4433 = vmatprep.mubr.bf16.mxu0 0
      %4434 = vmatmul.mubr.bf16.gmra.mxu0 %v4258
      %v4435 = vpop.f32.mrf.mxu0
      %v4436 = vadd.f32 0.0, %v4435
      %v4437 = vpop.f32.mrf.mxu0
      %v4438 = vpop.f32.mrf.mxu0
      %v4439 = vadd.f32 0.0, %v4438
      %v4440 = vpop.f32.mrf.mxu0
      %4441 = vmatprep.mubr.bf16.mxu0 0
      %4442 = vmatmul.mubr.bf16.gmra.mxu0 %v4259
      %v4443 = vpop.f32.mrf.mxu0
      %v4444 = vadd.f32 0.0, %v4443
      %v4445 = vpop.f32.mrf.mxu0
      %v4446 = vpop.f32.mrf.mxu0
      %v4447 = vadd.f32 0.0, %v4446
      %v4448 = vpop.f32.mrf.mxu0
      %4449 = vmatprep.mubr.bf16.mxu0 0
      %4450 = vmatmul.mubr.bf16.gmra.mxu0 %v4260
      %v4451 = vpop.f32.mrf.mxu0
      %v4452 = vadd.f32 0.0, %v4451
      %v4453 = vpop.f32.mrf.mxu0
      %v4454 = vpop.f32.mrf.mxu0
      %v4455 = vadd.f32 0.0, %v4454
      %v4456 = vpop.f32.mrf.mxu0
      %4457 = vmatprep.mubr.bf16.mxu0 0
      %4458 = vmatmul.mubr.bf16.gmra.mxu0 %v4261
      %v4459 = vpop.f32.mrf.mxu0
      %v4460 = vadd.f32 0.0, %v4459
      %v4461 = vpop.f32.mrf.mxu0
      %v4462 = vpop.f32.mrf.mxu0
      %v4463 = vadd.f32 0.0, %v4462
      %v4464 = vpop.f32.mrf.mxu0
      %4465 = vmatprep.mubr.bf16.mxu0 0
      %4466 = vmatmul.mubr.bf16.gmra.mxu0 %v4262
      %v4467 = vpop.f32.mrf.mxu0
      %v4468 = vadd.f32 0.0, %v4467
      %v4469 = vpop.f32.mrf.mxu0
      %v4470 = vpop.f32.mrf.mxu0
      %v4471 = vadd.f32 0.0, %v4470
      %v4472 = vpop.f32.mrf.mxu0
      %4473 = vmatprep.mubr.bf16.mxu0 0
      %4474 = vmatmul.mubr.bf16.gmra.mxu0 %v4263
      %v4475 = vpop.f32.mrf.mxu0
      %v4476 = vadd.f32 0.0, %v4475
      %v4477 = vpop.f32.mrf.mxu0
      %v4478 = vpop.f32.mrf.mxu0
      %v4479 = vadd.f32 0.0, %v4478
      %v4480 = vpop.f32.mrf.mxu0
      %4481 = vmatprep.mubr.bf16.mxu0 0
      %4482 = vmatmul.mubr.bf16.gmra.mxu0 %v4264
      %v4483 = vpop.f32.mrf.mxu0
      %v4484 = vadd.f32 0.0, %v4483
      %v4485 = vpop.f32.mrf.mxu0
      %v4486 = vpop.f32.mrf.mxu0
      %v4487 = vadd.f32 0.0, %v4486
      %v4488 = vpop.f32.mrf.mxu0
      %4489 = vdwg.mxu0
      %v4490 = vadd.f32 %v3736, %v4364
      %v4491 = vadd.f32 %v3737, %v4367
      %v4492 = vadd.f32 %v3738, %v4372
      %v4493 = vadd.f32 %v3739, %v4375
      %v4494 = vadd.f32 %v3740, %v4380
      %v4495 = vadd.f32 %v3741, %v4383
      %v4496 = vadd.f32 %v3742, %v4388
      %v4497 = vadd.f32 %v3743, %v4391
      %v4498 = vadd.f32 %v3744, %v4396
      %v4499 = vadd.f32 %v3745, %v4399
      %v4500 = vadd.f32 %v3746, %v4404
      %v4501 = vadd.f32 %v3747, %v4407
      %v4502 = vadd.f32 %v3748, %v4412
      %v4503 = vadd.f32 %v3749, %v4415
      %v4504 = vadd.f32 %v3750, %v4420
      %v4505 = vadd.f32 %v3751, %v4423
      %v4506 = vadd.f32 %v3752, %v4428
      %v4507 = vadd.f32 %v3753, %v4431
      %v4508 = vadd.f32 %v3754, %v4436
      %v4509 = vadd.f32 %v3755, %v4439
      %v4510 = vadd.f32 %v3756, %v4444
      %v4511 = vadd.f32 %v3757, %v4447
      %v4512 = vadd.f32 %v3758, %v4452
      %v4513 = vadd.f32 %v3759, %v4455
      %v4514 = vadd.f32 %v3760, %v4460
      %v4515 = vadd.f32 %v3761, %v4463
      %v4516 = vadd.f32 %v3762, %v4468
      %v4517 = vadd.f32 %v3763, %v4471
      %v4518 = vadd.f32 %v3764, %v4476
      %v4519 = vadd.f32 %v3765, %v4479
      %v4520 = vadd.f32 %v3766, %v4484
      %v4521 = vadd.f32 %v3767, %v4487
      %v4522 = vld [vmem:[%s3381] sm:$0xe]
      %v4523 = vld [vmem:[%s3381 + $0xc] sm:$0xe]
      %v4524 = vld [vmem:[%s3381 + $0x18] sm:$0xe]
      %v4525 = vld [vmem:[%s3381 + $0x24] sm:$0xe]
      %v4526 = vld [vmem:[%s3381 + $0x30] sm:$0xe]
      %v4527 = vld [vmem:[%s3381 + $0x3c] sm:$0xe]
      %v4528 = vld [vmem:[%s3381 + $0x48] sm:$0xe]
      %v4529 = vld [vmem:[%s3381 + $0x54] sm:$0xe]
      %v4530 = vld [vmem:[%s3381 + $0x60] sm:$0xe]
      %v4531 = vld [vmem:[%s3381 + $0x6c] sm:$0xe]
      %v4532 = vld [vmem:[%s3381 + $0x78] sm:$0xe]
      %v4533 = vld [vmem:[%s3381 + $0x84] sm:$0xe]
      %v4534 = vld [vmem:[%s3381 + $0x90] sm:$0xe]
      %v4535 = vld [vmem:[%s3381 + $0x9c] sm:$0xe]
      %v4536 = vld [vmem:[%s3381 + $0xa8] sm:$0xe]
      %v4537 = vld [vmem:[%s3381 + $0xb4] sm:$0xe]
      %v4586 = vrot.slane %v4522, 5
      %v4587 = vrot.slane %v4586, 4
      %v4588 = vrot.slane %v3769, 5
      %v4589 = vsel %vm1307, %v4587, %v4588
      %v4590 = vrot.slane %v4588, 4
      %v4591 = vrot.slane %v3770, 5
      %v4592 = vsel %vm1307, %v4590, %v4591
      %v4593 = vrot.slane %v4523, 5
      %v4594 = vrot.slane %v4593, 4
      %v4595 = vrot.slane %v3772, 5
      %v4596 = vsel %vm1307, %v4594, %v4595
      %v4597 = vrot.slane %v4595, 4
      %v4598 = vrot.slane %v3773, 5
      %v4599 = vsel %vm1307, %v4597, %v4598
      %v4600 = vrot.slane %v4524, 5
      %v4601 = vrot.slane %v4600, 4
      %v4602 = vrot.slane %v3775, 5
      %v4603 = vsel %vm1307, %v4601, %v4602
      %v4604 = vrot.slane %v4602, 4
      %v4605 = vrot.slane %v3776, 5
      %v4606 = vsel %vm1307, %v4604, %v4605
      %v4607 = vrot.slane %v4525, 5
      %v4608 = vrot.slane %v4607, 4
      %v4609 = vrot.slane %v3778, 5
      %v4610 = vsel %vm1307, %v4608, %v4609
      %v4611 = vrot.slane %v4609, 4
      %v4612 = vrot.slane %v3779, 5
      %v4613 = vsel %vm1307, %v4611, %v4612
      %v4614 = vrot.slane %v4526, 5
      %v4615 = vrot.slane %v4614, 4
      %v4616 = vrot.slane %v3781, 5
      %v4617 = vsel %vm1307, %v4615, %v4616
      %v4618 = vrot.slane %v4616, 4
      %v4619 = vrot.slane %v3782, 5
      %v4620 = vsel %vm1307, %v4618, %v4619
      %v4621 = vrot.slane %v4527, 5
      %v4622 = vrot.slane %v4621, 4
      %v4623 = vrot.slane %v3784, 5
      %v4624 = vsel %vm1307, %v4622, %v4623
      %v4625 = vrot.slane %v4623, 4
      %v4626 = vrot.slane %v3785, 5
      %v4627 = vsel %vm1307, %v4625, %v4626
      %v4628 = vrot.slane %v4528, 5
      %v4629 = vrot.slane %v4628, 4
      %v4630 = vrot.slane %v3787, 5
      %v4631 = vsel %vm1307, %v4629, %v4630
      %v4632 = vrot.slane %v4630, 4
      %v4633 = vrot.slane %v3788, 5
      %v4634 = vsel %vm1307, %v4632, %v4633
      %v4635 = vrot.slane %v4529, 5
      %v4636 = vrot.slane %v4635, 4
      %v4637 = vrot.slane %v3790, 5
      %v4638 = vsel %vm1307, %v4636, %v4637
      %v4639 = vrot.slane %v4637, 4
      %v4640 = vrot.slane %v3791, 5
      %v4641 = vsel %vm1307, %v4639, %v4640
      %v4642 = vrot.slane %v4530, 5
      %v4643 = vrot.slane %v4642, 4
      %v4644 = vrot.slane %v3793, 5
      %v4645 = vsel %vm1307, %v4643, %v4644
      %v4646 = vrot.slane %v4644, 4
      %v4647 = vrot.slane %v3794, 5
      %v4648 = vsel %vm1307, %v4646, %v4647
      %v4649 = vrot.slane %v4531, 5
      %v4650 = vrot.slane %v4649, 4
      %v4651 = vrot.slane %v3796, 5
      %v4652 = vsel %vm1307, %v4650, %v4651
      %v4653 = vrot.slane %v4651, 4
      %v4654 = vrot.slane %v3797, 5
      %v4655 = vsel %vm1307, %v4653, %v4654
      %v4656 = vrot.slane %v4532, 5
      %v4657 = vrot.slane %v4656, 4
      %v4658 = vrot.slane %v3799, 5
      %v4659 = vsel %vm1307, %v4657, %v4658
      %v4660 = vrot.slane %v4658, 4
      %v4661 = vrot.slane %v3800, 5
      %v4662 = vsel %vm1307, %v4660, %v4661
      %v4663 = vrot.slane %v4533, 5
      %v4664 = vrot.slane %v4663, 4
      %v4665 = vrot.slane %v3802, 5
      %v4666 = vsel %vm1307, %v4664, %v4665
      %v4667 = vrot.slane %v4665, 4
      %v4668 = vrot.slane %v3803, 5
      %v4669 = vsel %vm1307, %v4667, %v4668
      %v4670 = vrot.slane %v4534, 5
      %v4671 = vrot.slane %v4670, 4
      %v4672 = vrot.slane %v3805, 5
      %v4673 = vsel %vm1307, %v4671, %v4672
      %v4674 = vrot.slane %v4672, 4
      %v4675 = vrot.slane %v3806, 5
      %v4676 = vsel %vm1307, %v4674, %v4675
      %v4677 = vrot.slane %v4535, 5
      %v4678 = vrot.slane %v4677, 4
      %v4679 = vrot.slane %v3808, 5
      %v4680 = vsel %vm1307, %v4678, %v4679
      %v4681 = vrot.slane %v4679, 4
      %v4682 = vrot.slane %v3809, 5
      %v4683 = vsel %vm1307, %v4681, %v4682
      %v4684 = vrot.slane %v4536, 5
      %v4685 = vrot.slane %v4684, 4
      %v4686 = vrot.slane %v3811, 5
      %v4687 = vsel %vm1307, %v4685, %v4686
      %v4688 = vrot.slane %v4686, 4
      %v4689 = vrot.slane %v3812, 5
      %v4690 = vsel %vm1307, %v4688, %v4689
      %v4691 = vrot.slane %v4537, 5
      %v4692 = vrot.slane %v4691, 4
      %v4693 = vrot.slane %v3814, 5
      %v4694 = vsel %vm1307, %v4692, %v4693
      %v4695 = vrot.slane %v4693, 4
      %v4696 = vrot.slane %v3815, 5
      %v4697 = vsel %vm1307, %v4695, %v4696
      %s4698 = scalar_lea.vmem %s1, 512
      %v4699 = vld [vmem:[%s4698] sm:$0xf]
      %v4700 = vld [vmem:[%s4698 + $0x4] sm:$0xf]
      %v4701 = vld [vmem:[%s4698 + $0x8] sm:$0xf]
      %v4702 = vld [vmem:[%s4698 + $0xc] sm:$0xf]
      %v4703 = vld [vmem:[%s4698 + $0x10] sm:$0xf]
      %v4704 = vld [vmem:[%s4698 + $0x14] sm:$0xf]
      %v4705 = vld [vmem:[%s4698 + $0x18] sm:$0xf]
      %v4706 = vld [vmem:[%s4698 + $0x1c] sm:$0xf]
      %v4707 = vld [vmem:[%s4698 + $0x20] sm:$0xf]
      %v4708 = vld [vmem:[%s4698 + $0x24] sm:$0xf]
      %v4709 = vld [vmem:[%s4698 + $0x28] sm:$0xf]
      %v4710 = vld [vmem:[%s4698 + $0x2c] sm:$0xf]
      %v4711 = vld [vmem:[%s4698 + $0x30] sm:$0xf]
      %v4712 = vld [vmem:[%s4698 + $0x34] sm:$0xf]
      %v4713 = vld [vmem:[%s4698 + $0x38] sm:$0xf]
      %v4714 = vld [vmem:[%s4698 + $0x3c] sm:$0xf]
      %v4715 = vunpack.c.l.b16 %v4589
      %v4716 = vunpack.c.l.b16 %v4592
      %v4717 = vunpack.c.l.b16 %v4596
      %v4718 = vunpack.c.l.b16 %v4599
      %v4719 = vunpack.c.l.b16 %v4603
      %v4720 = vunpack.c.l.b16 %v4606
      %v4721 = vunpack.c.l.b16 %v4610
      %v4722 = vunpack.c.l.b16 %v4613
      %v4723 = vunpack.c.l.b16 %v4617
      %v4724 = vunpack.c.l.b16 %v4620
      %v4725 = vunpack.c.l.b16 %v4624
      %v4726 = vunpack.c.l.b16 %v4627
      %v4727 = vunpack.c.l.b16 %v4631
      %v4728 = vunpack.c.l.b16 %v4634
      %v4729 = vunpack.c.l.b16 %v4638
      %v4730 = vunpack.c.l.b16 %v4641
      %v4731 = vunpack.c.l.b16 %v4645
      %v4732 = vunpack.c.l.b16 %v4648
      %v4733 = vunpack.c.l.b16 %v4652
      %v4734 = vunpack.c.l.b16 %v4655
      %v4735 = vunpack.c.l.b16 %v4659
      %v4736 = vunpack.c.l.b16 %v4662
      %v4737 = vunpack.c.l.b16 %v4666
      %v4738 = vunpack.c.l.b16 %v4669
      %v4739 = vunpack.c.l.b16 %v4673
      %v4740 = vunpack.c.l.b16 %v4676
      %v4741 = vunpack.c.l.b16 %v4680
      %v4742 = vunpack.c.l.b16 %v4683
      %v4743 = vunpack.c.l.b16 %v4687
      %v4744 = vunpack.c.l.b16 %v4690
      %v4745 = vunpack.c.l.b16 %v4694
      %v4746 = vunpack.c.l.b16 %v4697
      %v4747 = vpack.c.b16 %v4716, %v4715
      %v4748 = vpack.c.b16 %v4718, %v4717
      %v4749 = vpack.c.b16 %v4720, %v4719
      %v4750 = vpack.c.b16 %v4722, %v4721
      %v4751 = vpack.c.b16 %v4724, %v4723
      %v4752 = vpack.c.b16 %v4726, %v4725
      %v4753 = vpack.c.b16 %v4728, %v4727
      %v4754 = vpack.c.b16 %v4730, %v4729
      %v4755 = vpack.c.b16 %v4732, %v4731
      %v4756 = vpack.c.b16 %v4734, %v4733
      %v4757 = vpack.c.b16 %v4736, %v4735
      %v4758 = vpack.c.b16 %v4738, %v4737
      %v4759 = vpack.c.b16 %v4740, %v4739
      %v4760 = vpack.c.b16 %v4742, %v4741
      %v4761 = vpack.c.b16 %v4744, %v4743
      %v4762 = vpack.c.b16 %v4746, %v4745
      %v4795 = vunpack.c.l.b16 %v4699
      %v4796 = vunpack.c.l.b16 %v4700
      %v4797 = vunpack.c.l.b16 %v4701
      %v4798 = vunpack.c.l.b16 %v4702
      %v4799 = vunpack.c.l.b16 %v4703
      %v4800 = vunpack.c.l.b16 %v4704
      %v4801 = vunpack.c.l.b16 %v4705
      %v4802 = vunpack.c.l.b16 %v4706
      %v4803 = vunpack.c.l.b16 %v4707
      %v4804 = vunpack.c.l.b16 %v4708
      %v4805 = vunpack.c.l.b16 %v4709
      %v4806 = vunpack.c.l.b16 %v4710
      %v4807 = vunpack.c.l.b16 %v4711
      %v4808 = vunpack.c.l.b16 %v4712
      %v4809 = vunpack.c.l.b16 %v4713
      %v4810 = vunpack.c.l.b16 %v4714
      %v4811 = vpack.c.b16 %v4796, %v4795
      %v4812 = vpack.c.b16 %v4798, %v4797
      %v4813 = vpack.c.b16 %v4800, %v4799
      %v4814 = vpack.c.b16 %v4802, %v4801
      %v4815 = vpack.c.b16 %v4804, %v4803
      %v4816 = vpack.c.b16 %v4806, %v4805
      %v4817 = vpack.c.b16 %v4808, %v4807
      %v4818 = vpack.c.b16 %v4810, %v4809
      %4827 = vmatprep.subr.bf16.mxu0 0
      %4828 = vmatpush1.bf16.msra.mxu0 %v4818
      %4829 = vmatprep.subr.bf16.mxu0 0
      %4830 = vmatpush1.bf16.msra.mxu0 %v4817
      %4831 = vmatprep.subr.bf16.mxu0 0
      %4832 = vmatpush1.bf16.msra.mxu0 %v4816
      %4833 = vmatprep.subr.bf16.mxu0 0
      %4834 = vmatpush1.bf16.msra.mxu0 %v4815
      %4835 = vmatprep.subr.bf16.mxu0 0
      %4836 = vmatpush1.bf16.msra.mxu0 %v4814
      %4837 = vmatprep.subr.bf16.mxu0 0
      %4838 = vmatpush1.bf16.msra.mxu0 %v4813
      %4839 = vmatprep.subr.bf16.mxu0 0
      %4840 = vmatpush1.bf16.msra.mxu0 %v4812
      %4841 = vmatprep.subr.bf16.mxu0 0
      %4842 = vmatpush1.bf16.msra.mxu0 %v4811
      %4843 = vmatprep.subr.bf16.mxu0 0
      %4844 = vmatpush2.bf16.msra.mxu0 0
      %4845 = vmatprep.subr.bf16.mxu0 0
      %4846 = vmatpush2.bf16.msra.mxu0 0
      %4847 = vmatprep.subr.bf16.mxu0 0
      %4848 = vmatpush2.bf16.msra.mxu0 0
      %4849 = vmatprep.subr.bf16.mxu0 0
      %4850 = vmatpush2.bf16.msra.mxu0 0
      %4851 = vmatprep.subr.bf16.mxu0 0
      %4852 = vmatpush2.bf16.msra.mxu0 0
      %4853 = vmatprep.subr.bf16.mxu0 0
      %4854 = vmatpush2.bf16.msra.mxu0 0
      %4855 = vmatprep.subr.bf16.mxu0 0
      %4856 = vmatpush2.bf16.msra.mxu0 0
      %4857 = vmatprep.subr.bf16.mxu0 0
      %4858 = vmatpush2.bf16.msra.mxu0 0
      %4859 = vmatprep.mubr.bf16.mxu0 0
      %4860 = vmatmul.mubr.bf16.gmra.mxu0 %v4747
      %v4861 = vpop.f32.mrf.mxu0
      %v4862 = vadd.f32 0.0, %v4861
      %v4863 = vpop.f32.mrf.mxu0
      %v4864 = vpop.f32.mrf.mxu0
      %v4865 = vadd.f32 0.0, %v4864
      %v4866 = vpop.f32.mrf.mxu0
      %4867 = vmatprep.mubr.bf16.mxu0 0
      %4868 = vmatmul.mubr.bf16.gmra.mxu0 %v4748
      %v4869 = vpop.f32.mrf.mxu0
      %v4870 = vadd.f32 0.0, %v4869
      %v4871 = vpop.f32.mrf.mxu0
      %v4872 = vpop.f32.mrf.mxu0
      %v4873 = vadd.f32 0.0, %v4872
      %v4874 = vpop.f32.mrf.mxu0
      %4875 = vmatprep.mubr.bf16.mxu0 0
      %4876 = vmatmul.mubr.bf16.gmra.mxu0 %v4749
      %v4877 = vpop.f32.mrf.mxu0
      %v4878 = vadd.f32 0.0, %v4877
      %v4879 = vpop.f32.mrf.mxu0
      %v4880 = vpop.f32.mrf.mxu0
      %v4881 = vadd.f32 0.0, %v4880
      %v4882 = vpop.f32.mrf.mxu0
      %4883 = vmatprep.mubr.bf16.mxu0 0
      %4884 = vmatmul.mubr.bf16.gmra.mxu0 %v4750
      %v4885 = vpop.f32.mrf.mxu0
      %v4886 = vadd.f32 0.0, %v4885
      %v4887 = vpop.f32.mrf.mxu0
      %v4888 = vpop.f32.mrf.mxu0
      %v4889 = vadd.f32 0.0, %v4888
      %v4890 = vpop.f32.mrf.mxu0
      %4891 = vmatprep.mubr.bf16.mxu0 0
      %4892 = vmatmul.mubr.bf16.gmra.mxu0 %v4751
      %v4893 = vpop.f32.mrf.mxu0
      %v4894 = vadd.f32 0.0, %v4893
      %v4895 = vpop.f32.mrf.mxu0
      %v4896 = vpop.f32.mrf.mxu0
      %v4897 = vadd.f32 0.0, %v4896
      %v4898 = vpop.f32.mrf.mxu0
      %4899 = vmatprep.mubr.bf16.mxu0 0
      %4900 = vmatmul.mubr.bf16.gmra.mxu0 %v4752
      %v4901 = vpop.f32.mrf.mxu0
      %v4902 = vadd.f32 0.0, %v4901
      %v4903 = vpop.f32.mrf.mxu0
      %v4904 = vpop.f32.mrf.mxu0
      %v4905 = vadd.f32 0.0, %v4904
      %v4906 = vpop.f32.mrf.mxu0
      %4907 = vmatprep.mubr.bf16.mxu0 0
      %4908 = vmatmul.mubr.bf16.gmra.mxu0 %v4753
      %v4909 = vpop.f32.mrf.mxu0
      %v4910 = vadd.f32 0.0, %v4909
      %v4911 = vpop.f32.mrf.mxu0
      %v4912 = vpop.f32.mrf.mxu0
      %v4913 = vadd.f32 0.0, %v4912
      %v4914 = vpop.f32.mrf.mxu0
      %4915 = vmatprep.mubr.bf16.mxu0 0
      %4916 = vmatmul.mubr.bf16.gmra.mxu0 %v4754
      %v4917 = vpop.f32.mrf.mxu0
      %v4918 = vadd.f32 0.0, %v4917
      %v4919 = vpop.f32.mrf.mxu0
      %v4920 = vpop.f32.mrf.mxu0
      %v4921 = vadd.f32 0.0, %v4920
      %v4922 = vpop.f32.mrf.mxu0
      %4923 = vmatprep.mubr.bf16.mxu0 0
      %4924 = vmatmul.mubr.bf16.gmra.mxu0 %v4755
      %v4925 = vpop.f32.mrf.mxu0
      %v4926 = vadd.f32 0.0, %v4925
      %v4927 = vpop.f32.mrf.mxu0
      %v4928 = vpop.f32.mrf.mxu0
      %v4929 = vadd.f32 0.0, %v4928
      %v4930 = vpop.f32.mrf.mxu0
      %4931 = vmatprep.mubr.bf16.mxu0 0
      %4932 = vmatmul.mubr.bf16.gmra.mxu0 %v4756
      %v4933 = vpop.f32.mrf.mxu0
      %v4934 = vadd.f32 0.0, %v4933
      %v4935 = vpop.f32.mrf.mxu0
      %v4936 = vpop.f32.mrf.mxu0
      %v4937 = vadd.f32 0.0, %v4936
      %v4938 = vpop.f32.mrf.mxu0
      %4939 = vmatprep.mubr.bf16.mxu0 0
      %4940 = vmatmul.mubr.bf16.gmra.mxu0 %v4757
      %v4941 = vpop.f32.mrf.mxu0
      %v4942 = vadd.f32 0.0, %v4941
      %v4943 = vpop.f32.mrf.mxu0
      %v4944 = vpop.f32.mrf.mxu0
      %v4945 = vadd.f32 0.0, %v4944
      %v4946 = vpop.f32.mrf.mxu0
      %4947 = vmatprep.mubr.bf16.mxu0 0
      %4948 = vmatmul.mubr.bf16.gmra.mxu0 %v4758
      %v4949 = vpop.f32.mrf.mxu0
      %v4950 = vadd.f32 0.0, %v4949
      %v4951 = vpop.f32.mrf.mxu0
      %v4952 = vpop.f32.mrf.mxu0
      %v4953 = vadd.f32 0.0, %v4952
      %v4954 = vpop.f32.mrf.mxu0
      %4955 = vmatprep.mubr.bf16.mxu0 0
      %4956 = vmatmul.mubr.bf16.gmra.mxu0 %v4759
      %v4957 = vpop.f32.mrf.mxu0
      %v4958 = vadd.f32 0.0, %v4957
      %v4959 = vpop.f32.mrf.mxu0
      %v4960 = vpop.f32.mrf.mxu0
      %v4961 = vadd.f32 0.0, %v4960
      %v4962 = vpop.f32.mrf.mxu0
      %4963 = vmatprep.mubr.bf16.mxu0 0
      %4964 = vmatmul.mubr.bf16.gmra.mxu0 %v4760
      %v4965 = vpop.f32.mrf.mxu0
      %v4966 = vadd.f32 0.0, %v4965
      %v4967 = vpop.f32.mrf.mxu0
      %v4968 = vpop.f32.mrf.mxu0
      %v4969 = vadd.f32 0.0, %v4968
      %v4970 = vpop.f32.mrf.mxu0
      %4971 = vmatprep.mubr.bf16.mxu0 0
      %4972 = vmatmul.mubr.bf16.gmra.mxu0 %v4761
      %v4973 = vpop.f32.mrf.mxu0
      %v4974 = vadd.f32 0.0, %v4973
      %v4975 = vpop.f32.mrf.mxu0
      %v4976 = vpop.f32.mrf.mxu0
      %v4977 = vadd.f32 0.0, %v4976
      %v4978 = vpop.f32.mrf.mxu0
      %4979 = vmatprep.mubr.bf16.mxu0 0
      %4980 = vmatmul.mubr.bf16.gmra.mxu0 %v4762
      %v4981 = vpop.f32.mrf.mxu0
      %v4982 = vadd.f32 0.0, %v4981
      %v4983 = vpop.f32.mrf.mxu0
      %v4984 = vpop.f32.mrf.mxu0
      %v4985 = vadd.f32 0.0, %v4984
      %v4986 = vpop.f32.mrf.mxu0
      %4987 = vdwg.mxu0
      %v4988 = vadd.f32 %v4490, %v4862
      %v4989 = vadd.f32 %v4491, %v4865
      %v4990 = vadd.f32 %v4492, %v4870
      %v4991 = vadd.f32 %v4493, %v4873
      %v4992 = vadd.f32 %v4494, %v4878
      %v4993 = vadd.f32 %v4495, %v4881
      %v4994 = vadd.f32 %v4496, %v4886
      %v4995 = vadd.f32 %v4497, %v4889
      %v4996 = vadd.f32 %v4498, %v4894
      %v4997 = vadd.f32 %v4499, %v4897
      %v4998 = vadd.f32 %v4500, %v4902
      %v4999 = vadd.f32 %v4501, %v4905
      %v5000 = vadd.f32 %v4502, %v4910
      %v5001 = vadd.f32 %v4503, %v4913
      %v5002 = vadd.f32 %v4504, %v4918
      %v5003 = vadd.f32 %v4505, %v4921
      %v5004 = vadd.f32 %v4506, %v4926
      %v5005 = vadd.f32 %v4507, %v4929
      %v5006 = vadd.f32 %v4508, %v4934
      %v5007 = vadd.f32 %v4509, %v4937
      %v5008 = vadd.f32 %v4510, %v4942
      %v5009 = vadd.f32 %v4511, %v4945
      %v5010 = vadd.f32 %v4512, %v4950
      %v5011 = vadd.f32 %v4513, %v4953
      %v5012 = vadd.f32 %v4514, %v4958
      %v5013 = vadd.f32 %v4515, %v4961
      %v5014 = vadd.f32 %v4516, %v4966
      %v5015 = vadd.f32 %v4517, %v4969
      %v5016 = vadd.f32 %v4518, %v4974
      %v5017 = vadd.f32 %v4519, %v4977
      %v5018 = vadd.f32 %v4520, %v4982
      %v5019 = vadd.f32 %v4521, %v4985
      %v5020 = vld [vmem:[%s2] sm:$0x1]
      %v5022 = vlaneseq
      %v5023 = vshrl.u32 %v5022, 7
      %v5024 = vsub.s32 0, %v5023
      %v5025 = vrot.slane %v5020, %v5024
      %v5027 = vadd.f32 %v4988, %v5025
      %v5028 = vadd.f32 %v4989, %v5025
      %v5029 = vadd.f32 %v4990, %v5025
      %v5030 = vadd.f32 %v4991, %v5025
      %v5031 = vadd.f32 %v4992, %v5025
      %v5032 = vadd.f32 %v4993, %v5025
      %v5033 = vadd.f32 %v4994, %v5025
      %v5034 = vadd.f32 %v4995, %v5025
      %v5035 = vadd.f32 %v4996, %v5025
      %v5036 = vadd.f32 %v4997, %v5025
      %v5037 = vadd.f32 %v4998, %v5025
      %v5038 = vadd.f32 %v4999, %v5025
      %v5039 = vadd.f32 %v5000, %v5025
      %v5040 = vadd.f32 %v5001, %v5025
      %v5041 = vadd.f32 %v5002, %v5025
      %v5042 = vadd.f32 %v5003, %v5025
      %v5043 = vadd.f32 %v5004, %v5025
      %v5044 = vadd.f32 %v5005, %v5025
      %v5045 = vadd.f32 %v5006, %v5025
      %v5046 = vadd.f32 %v5007, %v5025
      %v5047 = vadd.f32 %v5008, %v5025
      %v5048 = vadd.f32 %v5009, %v5025
      %v5049 = vadd.f32 %v5010, %v5025
      %v5050 = vadd.f32 %v5011, %v5025
      %v5051 = vadd.f32 %v5012, %v5025
      %v5052 = vadd.f32 %v5013, %v5025
      %v5053 = vadd.f32 %v5014, %v5025
      %v5054 = vadd.f32 %v5015, %v5025
      %v5055 = vadd.f32 %v5016, %v5025
      %v5056 = vadd.f32 %v5017, %v5025
      %v5057 = vadd.f32 %v5018, %v5025
      %v5058 = vadd.f32 %v5019, %v5025
      %v5059 = vmax.f32 %v5027, 0.0
      %v5060 = vmax.f32 %v5028, 0.0
      %v5061 = vmax.f32 %v5029, 0.0
      %v5062 = vmax.f32 %v5030, 0.0
      %v5063 = vmax.f32 %v5031, 0.0
      %v5064 = vmax.f32 %v5032, 0.0
      %v5065 = vmax.f32 %v5033, 0.0
      %v5066 = vmax.f32 %v5034, 0.0
      %v5067 = vmax.f32 %v5035, 0.0
      %v5068 = vmax.f32 %v5036, 0.0
      %v5069 = vmax.f32 %v5037, 0.0
      %v5070 = vmax.f32 %v5038, 0.0
      %v5071 = vmax.f32 %v5039, 0.0
      %v5072 = vmax.f32 %v5040, 0.0
      %v5073 = vmax.f32 %v5041, 0.0
      %v5074 = vmax.f32 %v5042, 0.0
      %v5075 = vmax.f32 %v5043, 0.0
      %v5076 = vmax.f32 %v5044, 0.0
      %v5077 = vmax.f32 %v5045, 0.0
      %v5078 = vmax.f32 %v5046, 0.0
      %v5079 = vmax.f32 %v5047, 0.0
      %v5080 = vmax.f32 %v5048, 0.0
      %v5081 = vmax.f32 %v5049, 0.0
      %v5082 = vmax.f32 %v5050, 0.0
      %v5083 = vmax.f32 %v5051, 0.0
      %v5084 = vmax.f32 %v5052, 0.0
      %v5085 = vmax.f32 %v5053, 0.0
      %v5086 = vmax.f32 %v5054, 0.0
      %v5087 = vmax.f32 %v5055, 0.0
      %v5088 = vmax.f32 %v5056, 0.0
      %v5089 = vmax.f32 %v5057, 0.0
      %v5090 = vmax.f32 %v5058, 0.0
      %v5091 = vpack.c.bf16 %v5060, %v5059
      %v5092 = vpack.c.bf16 %v5062, %v5061
      %v5093 = vpack.c.bf16 %v5064, %v5063
      %v5094 = vpack.c.bf16 %v5066, %v5065
      %v5095 = vpack.c.bf16 %v5068, %v5067
      %v5096 = vpack.c.bf16 %v5070, %v5069
      %v5097 = vpack.c.bf16 %v5072, %v5071
      %v5098 = vpack.c.bf16 %v5074, %v5073
      %v5099 = vpack.c.bf16 %v5076, %v5075
      %v5100 = vpack.c.bf16 %v5078, %v5077
      %v5101 = vpack.c.bf16 %v5080, %v5079
      %v5102 = vpack.c.bf16 %v5082, %v5081
      %v5103 = vpack.c.bf16 %v5084, %v5083
      %v5104 = vpack.c.bf16 %v5086, %v5085
      %v5105 = vpack.c.bf16 %v5088, %v5087
      %v5106 = vpack.c.bf16 %v5090, %v5089
      %v5123 = vunpack.c.l.b16 %v5091
      %v5124 = vunpack.c.h.b16 %v5091
      %v5125 = vunpack.c.l.b16 %v5092
      %v5126 = vunpack.c.h.b16 %v5092
      %v5127 = vunpack.c.l.b16 %v5093
      %v5128 = vunpack.c.h.b16 %v5093
      %v5129 = vunpack.c.l.b16 %v5094
      %v5130 = vunpack.c.h.b16 %v5094
      %v5131 = vunpack.c.l.b16 %v5095
      %v5132 = vunpack.c.h.b16 %v5095
      %v5133 = vunpack.c.l.b16 %v5096
      %v5134 = vunpack.c.h.b16 %v5096
      %v5135 = vunpack.c.l.b16 %v5097
      %v5136 = vunpack.c.h.b16 %v5097
      %v5137 = vunpack.c.l.b16 %v5098
      %v5138 = vunpack.c.h.b16 %v5098
      %v5139 = vunpack.c.l.b16 %v5099
      %v5140 = vunpack.c.h.b16 %v5099
      %v5141 = vunpack.c.l.b16 %v5100
      %v5142 = vunpack.c.h.b16 %v5100
      %v5143 = vunpack.c.l.b16 %v5101
      %v5144 = vunpack.c.h.b16 %v5101
      %v5145 = vunpack.c.l.b16 %v5102
      %v5146 = vunpack.c.h.b16 %v5102
      %v5147 = vunpack.c.l.b16 %v5103
      %v5148 = vunpack.c.h.b16 %v5103
      %v5149 = vunpack.c.l.b16 %v5104
      %v5150 = vunpack.c.h.b16 %v5104
      %v5151 = vunpack.c.l.b16 %v5105
      %v5152 = vunpack.c.h.b16 %v5105
      %v5153 = vunpack.c.l.b16 %v5106
      %v5154 = vunpack.c.h.b16 %v5106
      %v5155 = vpack.c.b16 %v5123, %v5123
      %v5156 = vpack.c.b16 %v5124, %v5124
      %v5157 = vpack.c.b16 %v5125, %v5125
      %v5158 = vpack.c.b16 %v5126, %v5126
      %v5159 = vpack.c.b16 %v5127, %v5127
      %v5160 = vpack.c.b16 %v5128, %v5128
      %v5161 = vpack.c.b16 %v5129, %v5129
      %v5162 = vpack.c.b16 %v5130, %v5130
      %v5163 = vpack.c.b16 %v5131, %v5131
      %v5164 = vpack.c.b16 %v5132, %v5132
      %v5165 = vpack.c.b16 %v5133, %v5133
      %v5166 = vpack.c.b16 %v5134, %v5134
      %v5167 = vpack.c.b16 %v5135, %v5135
      %v5168 = vpack.c.b16 %v5136, %v5136
      %v5169 = vpack.c.b16 %v5137, %v5137
      %v5170 = vpack.c.b16 %v5138, %v5138
      %v5171 = vpack.c.b16 %v5139, %v5139
      %v5172 = vpack.c.b16 %v5140, %v5140
      %v5173 = vpack.c.b16 %v5141, %v5141
      %v5174 = vpack.c.b16 %v5142, %v5142
      %v5175 = vpack.c.b16 %v5143, %v5143
      %v5176 = vpack.c.b16 %v5144, %v5144
      %v5177 = vpack.c.b16 %v5145, %v5145
      %v5178 = vpack.c.b16 %v5146, %v5146
      %v5179 = vpack.c.b16 %v5147, %v5147
      %v5180 = vpack.c.b16 %v5148, %v5148
      %v5181 = vpack.c.b16 %v5149, %v5149
      %v5182 = vpack.c.b16 %v5150, %v5150
      %v5183 = vpack.c.b16 %v5151, %v5151
      %v5184 = vpack.c.b16 %v5152, %v5152
      %v5185 = vpack.c.b16 %v5153, %v5153
      %v5186 = vpack.c.b16 %v5154, %v5154
      %5219 = vst [vmem:[%s208] sm:$0xf] %v5155
      %5220 = vst [vmem:[%s208 + $0x4] sm:$0xf] %v5156
      %5221 = vst [vmem:[%s208 + $0x8] sm:$0xf] %v5157
      %5222 = vst [vmem:[%s208 + $0xc] sm:$0xf] %v5158
      %5223 = vst [vmem:[%s208 + $0x10] sm:$0xf] %v5159
      %5224 = vst [vmem:[%s208 + $0x14] sm:$0xf] %v5160
      %5225 = vst [vmem:[%s208 + $0x18] sm:$0xf] %v5161
      %5226 = vst [vmem:[%s208 + $0x1c] sm:$0xf] %v5162
      %5227 = vst [vmem:[%s208 + $0x20] sm:$0xf] %v5163
      %5228 = vst [vmem:[%s208 + $0x24] sm:$0xf] %v5164
      %5229 = vst [vmem:[%s208 + $0x28] sm:$0xf] %v5165
      %5230 = vst [vmem:[%s208 + $0x2c] sm:$0xf] %v5166
      %5231 = vst [vmem:[%s208 + $0x30] sm:$0xf] %v5167
      %5232 = vst [vmem:[%s208 + $0x34] sm:$0xf] %v5168
      %5233 = vst [vmem:[%s208 + $0x38] sm:$0xf] %v5169
      %5234 = vst [vmem:[%s208 + $0x3c] sm:$0xf] %v5170
      %5235 = vst [vmem:[%s208 + $0x40] sm:$0xf] %v5171
      %5236 = vst [vmem:[%s208 + $0x44] sm:$0xf] %v5172
      %5237 = vst [vmem:[%s208 + $0x48] sm:$0xf] %v5173
      %5238 = vst [vmem:[%s208 + $0x4c] sm:$0xf] %v5174
      %5239 = vst [vmem:[%s208 + $0x50] sm:$0xf] %v5175
      %5240 = vst [vmem:[%s208 + $0x54] sm:$0xf] %v5176
      %5241 = vst [vmem:[%s208 + $0x58] sm:$0xf] %v5177
      %5242 = vst [vmem:[%s208 + $0x5c] sm:$0xf] %v5178
      %5243 = vst [vmem:[%s208 + $0x60] sm:$0xf] %v5179
      %5244 = vst [vmem:[%s208 + $0x64] sm:$0xf] %v5180
      %5245 = vst [vmem:[%s208 + $0x68] sm:$0xf] %v5181
      %5246 = vst [vmem:[%s208 + $0x6c] sm:$0xf] %v5182
      %5247 = vst [vmem:[%s208 + $0x70] sm:$0xf] %v5183
      %5248 = vst [vmem:[%s208 + $0x74] sm:$0xf] %v5184
      %5249 = vst [vmem:[%s208 + $0x78] sm:$0xf] %v5185
      %5250 = vst [vmem:[%s208 + $0x7c] sm:$0xf] %v5186
      %s5251 = smul.u32 16, %s19
      %p5252 = scmp.lt.s32.totalorder %s18, 1
      %s5253 = scalar_select %p5252, %s18, 1
      %p5254 = scmp.lt.s32.totalorder %s5251, 15
      %s5255 = scalar_select %p5254, %s5251, 15
      %s5256 = smul.addr %s5255, 2
      %s5257 = smul.addr %s5253, 32
      %s5258 = sadd.s32 %s5256, %s5257
      %s5259 = smul.addr %s5258, 4
      %s5260 = scalar_lea.vmem %s3, %s5259
      // Predicated region
      $region33: #{downsampling_forward.2} parent=31 // pred_check
        %p5261 = pneg %p116
      $region34: #{downsampling_forward.2} parent=31 // pred_check_branch
        %5263 = sbr.rel (%p5261) target = $region36
      $region35: #{downsampling_forward.2} parent=31 // pred_region
        %s5264 = smul.u32 16, %s19
      $region36: #{downsampling_forward.2} parent=31 // pred_fallthru
        _
    $region32: #{downsampling_forward.2} parent=5 // pred_fallthru
      _
    %p5265 = scmp.le.s32.totalorder 2, %s9
    // Predicated region
    $region37: #{downsampling_forward.2} parent=5 // pred_check
      %p5266 = pneg %p5265
    $region38: #{downsampling_forward.2} parent=5 // pred_check_branch
      %5268 = sbr.rel (%p5266) target = $region40
    $region39: #{downsampling_forward.2} parent=5 // pred_region
      %s5269 = ssub.s32 %s9, 2
      // Predicated region
      $region41: #{downsampling_forward.2} parent=39 // pred_check
        %p5270 = pneg %p122
      $region42: #{downsampling_forward.2} parent=39 // pred_check_branch
        %5272 = sbr.rel (%p5270) target = $region44
      $region43: #{downsampling_forward.2} parent=39 // pred_region
        %s5273 = smul.u32 16, %s21
        %p5274 = scmp.lt.s32.totalorder %s20, 1
        %s5275 = scalar_select %p5274, %s20, 1
        %p5276 = scmp.lt.s32.totalorder %s5273, 15
        %s5277 = scalar_select %p5276, %s5273, 15
        %s5278 = smul.addr %s5277, 2
        %s5279 = smul.addr %s5275, 32
        %s5280 = sadd.s32 %s5278, %s5279
        %s5281 = smul.addr %s5280, 4
        %s5282 = scalar_lea.vmem %s3, %s5281
      $region44: #{downsampling_forward.2} parent=39 // pred_fallthru
        _
    $region40: #{downsampling_forward.2} parent=5 // pred_fallthru
      _
  $region6: #{downsampling_forward.2} parent=0 // loop_footer
    %s13 = sadd.s32 1, %s9
  $region7: #{downsampling_forward.2} parent=0 // loop_footer_branch
    %8 = sbr.rel target = $region3
  $region8: #{downsampling_forward.2} parent=0 // loop_exit
    _

// kernel: downsampling_forward.3
$region0: #{downsampling_forward.3}
  #allocation0 [shape = 'u32[]', space=smem, size = 0x4, offset = 0x4, fixed_abs, tag = 'smem constant byte address 0x4 - core index']
  #allocation1 [shape = 'u32[144,128]{1,0:T(1,128)}', space=vmem, size = 0x12000, scoped, tag = 'internal scratch']
  %s0 = inlined_call_operand.vmem [shape: bf16[2,1,18,18,128], index: 0, kind: input, shape index: {}]
  %s1 = inlined_call_operand.vmem [shape: bf16[9,128,128], index: 1, kind: input, shape index: {}]
  %s2 = inlined_call_operand.vmem [shape: f32[1,128], index: 2, kind: input, shape index: {}]
  %s3 = inlined_call_operand.vmem [shape: f32[2,16,16,128], index: 3, kind: output, shape index: {0}]
  %s4 = inlined_call_operand.vmem [shape: f32[2,8,8,128], index: 4, kind: output, shape index: {1}]
  %5 = xla_tuple %s3, %s4
  %s6 = sld [smem:[#allocation0]]
  $region53: #{downsampling_forward.3} parent=0
    _
  %s8 = ssub.s32 1, %s6
  %s9 = scalar_select 0, %s8, %s6
  loop: start=0, step=1, limit=4
  $region2: #{downsampling_forward.3} parent=0 // loop_pre_header
    _
  $region3: #{downsampling_forward.3} parent=0 // loop_header
    %s11 = sphi 0, %s15
    %p12 = scmp.ge.s32.totalorder %s11, 4
    %s18 = sphi 0, %s30
    %s19 = sphi 0, %s26
    %s20 = sphi 0, %s18
    %s21 = sphi 0, %s19
    %s22 = sphi 0, %s20
    %s23 = sphi 0, %s21
    %s35 = sphi 0, %s37
    %s38 = sphi 0, %s35
    %s39 = sphi 0, %s38
    %s55 = sphi 0, %s39
    %s59 = sphi 0, %s59
    %s61 = sphi 0, %s59
    %s62 = sphi 0, %s61
    %s76 = sphi 0, %s62
    %s80 = sphi 0, %s80
    %s82 = sphi 0, %s80
    %s83 = sphi 0, %s82
    %s97 = sphi 0, %s83
    %s105 = sphi 0, %s107
    %s108 = sphi 0, %s105
    %s109 = sphi 0, %s108
    %s125 = sphi 0, %s109
    %s133 = sphi 0, %s135
    %s136 = sphi 0, %s133
    %s137 = sphi 0, %s136
    %s153 = sphi 0, %s137
  $region4: #{downsampling_forward.3} parent=0 // loop_header_branch
    %14 = sbr.rel (%p12) target = $region8
  $region5: #{downsampling_forward.3} parent=0 // loop_body
    %s16 = ssub.s32 %s11, 1
    %s17 = ssub.s32 %s11, 2
    %s24 = sadd.s32 1, %s19
    %p25 = scmp.ge.s32.totalorder %s24, 1
    %s26 = scalar_select %p25, 0, %s24
    %s27 = sadd.s32 1, %s18
    %s28 = scalar_select %p25, %s27, %s18
    %p29 = scmp.ge.s32.totalorder %s28, 2
    %s30 = scalar_select %p29, 0, %s28
    %s31 = ssub.s32 %s18, %s30
    %s32 = ssub.s32 %s19, %s26
    %s33 = sor.u32 %s31, %s32
    %p34 = scmp.eq.s32.totalorder %s33, 0
    %s36 = sadd.s32 %s35, 1
    %s37 = scalar_select %p34, %s35, %s36
    %p40 = pneg %p34
    %p41 = scmp.eq.s32.totalorder %s11, 1
    %p42 = por %p40, %p41
    %p43 = scmp.ne.s32.totalorder %s35, %s38
    %p44 = scmp.eq.s32.totalorder %s11, 0
    %p45 = por %p43, %p44
    %p46 = scmp.ne.s32.totalorder %s35, %s38
    %p47 = scmp.eq.s32.totalorder %s16, 1
    %p48 = por %p46, %p47
    %p49 = scmp.ne.s32.totalorder %s38, %s39
    %p50 = scmp.eq.s32.totalorder %s16, 0
    %p51 = por %p49, %p50
    %p52 = scmp.ne.s32.totalorder %s38, %s39
    %p53 = scmp.eq.s32.totalorder %s17, 1
    %p54 = por %p52, %p53
    %p56 = scmp.ne.s32.totalorder %s39, %s55
    %p57 = scmp.eq.s32.totalorder %s17, 0
    %p58 = por %p56, %p57
    %s60 = sadd.s32 %s59, 1
    %p63 = scmp.eq.s32.totalorder %s11, 1
    %p64 = scmp.ne.s32.totalorder %s59, %s61
    %p65 = scmp.eq.s32.totalorder %s11, 0
    %p66 = por %p64, %p65
    %p67 = scmp.ne.s32.totalorder %s59, %s61
    %p68 = scmp.eq.s32.totalorder %s16, 1
    %p69 = por %p67, %p68
    %p70 = scmp.ne.s32.totalorder %s61, %s62
    %p71 = scmp.eq.s32.totalorder %s16, 0
    %p72 = por %p70, %p71
    %p73 = scmp.ne.s32.totalorder %s61, %s62
    %p74 = scmp.eq.s32.totalorder %s17, 1
    %p75 = por %p73, %p74
    %p77 = scmp.ne.s32.totalorder %s62, %s76
    %p78 = scmp.eq.s32.totalorder %s17, 0
    %p79 = por %p77, %p78
    %s81 = sadd.s32 %s80, 1
    %p84 = scmp.eq.s32.totalorder %s11, 1
    %p85 = scmp.ne.s32.totalorder %s80, %s82
    %p86 = scmp.eq.s32.totalorder %s11, 0
    %p87 = por %p85, %p86
    %p88 = scmp.ne.s32.totalorder %s80, %s82
    %p89 = scmp.eq.s32.totalorder %s16, 1
    %p90 = por %p88, %p89
    %p91 = scmp.ne.s32.totalorder %s82, %s83
    %p92 = scmp.eq.s32.totalorder %s16, 0
    %p93 = por %p91, %p92
    %p94 = scmp.ne.s32.totalorder %s82, %s83
    %p95 = scmp.eq.s32.totalorder %s17, 1
    %p96 = por %p94, %p95
    %p98 = scmp.ne.s32.totalorder %s83, %s97
    %p99 = scmp.eq.s32.totalorder %s17, 0
    %p100 = por %p98, %p99
    %s101 = ssub.s32 %s18, %s30
    %s102 = ssub.s32 %s19, %s26
    %s103 = sor.u32 %s101, %s102
    %p104 = scmp.eq.s32.totalorder %s103, 0
    %s106 = sadd.s32 %s105, 1
    %s107 = scalar_select %p104, %s105, %s106
    %p110 = pneg %p104
    %p111 = scmp.eq.s32.totalorder %s11, 1
    %p112 = por %p110, %p111
    %p113 = scmp.ne.s32.totalorder %s105, %s108
    %p114 = scmp.eq.s32.totalorder %s11, 0
    %p115 = por %p113, %p114
    %p116 = scmp.ne.s32.totalorder %s105, %s108
    %p117 = scmp.eq.s32.totalorder %s16, 1
    %p118 = por %p116, %p117
    %p119 = scmp.ne.s32.totalorder %s108, %s109
    %p120 = scmp.eq.s32.totalorder %s16, 0
    %p121 = por %p119, %p120
    %p122 = scmp.ne.s32.totalorder %s108, %s109
    %p123 = scmp.eq.s32.totalorder %s17, 1
    %p124 = por %p122, %p123
    %p126 = scmp.ne.s32.totalorder %s109, %s125
    %p127 = scmp.eq.s32.totalorder %s17, 0
    %p128 = por %p126, %p127
    %s129 = ssub.s32 %s18, %s30
    %s130 = ssub.s32 %s19, %s26
    %s131 = sor.u32 %s129, %s130
    %p132 = scmp.eq.s32.totalorder %s131, 0
    %s134 = sadd.s32 %s133, 1
    %s135 = scalar_select %p132, %s133, %s134
    %p138 = pneg %p132
    %p139 = scmp.eq.s32.totalorder %s11, 1
    %p140 = por %p138, %p139
    %p141 = scmp.ne.s32.totalorder %s133, %s136
    %p142 = scmp.eq.s32.totalorder %s11, 0
    %p143 = por %p141, %p142
    %p144 = scmp.ne.s32.totalorder %s133, %s136
    %p145 = scmp.eq.s32.totalorder %s16, 1
    %p146 = por %p144, %p145
    %p147 = scmp.ne.s32.totalorder %s136, %s137
    %p148 = scmp.eq.s32.totalorder %s16, 0
    %p149 = por %p147, %p148
    %p150 = scmp.ne.s32.totalorder %s136, %s137
    %p151 = scmp.eq.s32.totalorder %s17, 1
    %p152 = por %p150, %p151
    %p154 = scmp.ne.s32.totalorder %s137, %s153
    %p155 = scmp.eq.s32.totalorder %s17, 0
    %p156 = por %p154, %p155
    %p157 = scmp.le.s32.totalorder 1, %s11
    %p158 = scmp.lt.s32.totalorder %s11, 3
    %p159 = pnand %p157, %p158
    %p160 = pneg %p159
    // Predicated region
    $region9: #{downsampling_forward.3} parent=5 // pred_check
      _
    $region10: #{downsampling_forward.3} parent=5 // pred_check_branch
      %162 = sbr.rel (%p159) target = $region12
    $region11: #{downsampling_forward.3} parent=5 // pred_region
      %s163 = ssub.s32 %s11, 1
      // Predicated region
      $region13: #{downsampling_forward.3} parent=11 // pred_check
        %p164 = pneg %p72
      $region14: #{downsampling_forward.3} parent=11 // pred_check_branch
        %166 = sbr.rel (%p164) target = $region16
      $region15: #{downsampling_forward.3} parent=11 // pred_region
        _
      $region16: #{downsampling_forward.3} parent=11 // pred_fallthru
        _
      // Predicated region
      $region17: #{downsampling_forward.3} parent=11 // pred_check
        %p167 = pneg %p93
      $region18: #{downsampling_forward.3} parent=11 // pred_check_branch
        %169 = sbr.rel (%p167) target = $region20
      $region19: #{downsampling_forward.3} parent=11 // pred_region
        _
      $region20: #{downsampling_forward.3} parent=11 // pred_fallthru
        _
    $region12: #{downsampling_forward.3} parent=5 // pred_fallthru
      _
    %p170 = scmp.lt.s32.totalorder %s11, 2
    // Predicated region
    $region21: #{downsampling_forward.3} parent=5 // pred_check
      %p171 = pneg %p170
    $region22: #{downsampling_forward.3} parent=5 // pred_check_branch
      %173 = sbr.rel (%p171) target = $region24
    $region23: #{downsampling_forward.3} parent=5 // pred_region
      // Predicated region
      $region25: #{downsampling_forward.3} parent=23 // pred_check
        %p174 = pneg %p45
      $region26: #{downsampling_forward.3} parent=23 // pred_check_branch
        %176 = sbr.rel (%p174) target = $region28
      $region27: #{downsampling_forward.3} parent=23 // pred_region
        %p177 = scmp.lt.s32.totalorder %s18, 1
        %s178 = scalar_select %p177, %s18, 1
        %p179 = scmp.lt.s32.totalorder %s19, 0
        %s180 = scalar_select %p179, %s19, 0
        %s181 = smul.addr %s180, 54
        %s182 = smul.addr %s178, 54
        %s183 = sadd.s32 %s181, %s182
        %s184 = smul.addr %s183, 4
        %s185 = scalar_lea.vmem %s0, %s184
      $region28: #{downsampling_forward.3} parent=23 // pred_fallthru
        _
    $region24: #{downsampling_forward.3} parent=5 // pred_fallthru
      _
    %p186 = scmp.le.s32.totalorder 1, %s11
    %p187 = scmp.lt.s32.totalorder %s11, 3
    %p188 = pnand %p186, %p187
    %p189 = pneg %p188
    // Predicated region
    $region29: #{downsampling_forward.3} parent=5 // pred_check
      _
    $region30: #{downsampling_forward.3} parent=5 // pred_check_branch
      %191 = sbr.rel (%p188) target = $region32
    $region31: #{downsampling_forward.3} parent=5 // pred_region
      %s192 = ssub.s32 %s11, 1
      %p193 = scmp.lt.s32.totalorder %s20, 1
      %s194 = scalar_select %p193, %s20, 1
      %p195 = scmp.lt.s32.totalorder %s21, 0
      %s196 = scalar_select %p195, %s21, 0
      %s197 = smul.addr %s196, 54
      %s198 = smul.addr %s194, 54
      %s199 = sadd.s32 %s197, %s198
      %s200 = smul.addr %s199, 4
      %s201 = scalar_lea.vmem %s0, %s200
      %p202 = pneg %p51
      %p203 = pneg %p48
      %p204 = pneg %p72
      %p205 = pneg %p69
      %p206 = pneg %p93
      %p207 = pneg %p90
      %p208 = pneg %p121
      %p209 = pneg %p118
      %s210 = smul.u32 16, %s21
      %p211 = scmp.lt.s32.totalorder %s20, 1
      %s212 = scalar_select %p211, %s20, 1
      %p213 = scmp.lt.s32.totalorder %s210, 15
      %s214 = scalar_select %p213, %s210, 15
      %s215 = smul.addr %s214, 2
      %s216 = smul.addr %s212, 32
      %s217 = sadd.s32 %s215, %s216
      %s218 = smul.addr %s217, 8
      %s219 = scalar_lea.vmem %s3, %s218
      %p220 = pneg %p149
      %p221 = pneg %p146
      %s222 = smul.u32 8, %s21
      %p223 = scmp.lt.s32.totalorder %s20, 1
      %s224 = scalar_select %p223, %s20, 1
      %p225 = scmp.lt.s32.totalorder %s222, 7
      %s226 = scalar_select %p225, %s222, 7
      %s227 = smul.addr %s224, 8
      %s228 = sadd.s32 %s226, %s227
      %s229 = smul.addr %s228, 8
      %s230 = scalar_lea.vmem %s4, %s229
      %p231 = scmp.lt.s32.totalorder %s20, 1
      %s232 = scalar_select %p231, %s20, 1
      %p233 = scmp.lt.s32.totalorder %s21, 0
      %s234 = scalar_select %p233, %s21, 0
      %s235 = smul.addr %s234, 54
      %s236 = smul.addr %s232, 54
      %s237 = sadd.s32 %s235, %s236
      %s238 = smul.addr %s237, 4
      %s239 = scalar_lea.vmem %s0, %s238
      %s240 = smul.u32 16, %s21
      %p241 = scmp.lt.s32.totalorder %s20, 1
      %s242 = scalar_select %p241, %s20, 1
      %p243 = scmp.lt.s32.totalorder %s240, 15
      %s244 = scalar_select %p243, %s240, 15
      %s245 = smul.addr %s244, 2
      %s246 = smul.addr %s242, 32
      %s247 = sadd.s32 %s245, %s246
      %s248 = smul.addr %s247, 8
      %s249 = scalar_lea.vmem %s3, %s248
      %s250 = smul.u32 16, %s21
      %s251 = smul.u32 8, %s21
      %p252 = scmp.lt.s32.totalorder %s20, 1
      %s253 = scalar_select %p252, %s20, 1
      %p254 = scmp.lt.s32.totalorder %s251, 7
      %s255 = scalar_select %p254, %s251, 7
      %s256 = smul.addr %s253, 8
      %s257 = sadd.s32 %s255, %s256
      %s258 = smul.addr %s257, 8
      %s259 = scalar_lea.vmem %s4, %s258
      %s260 = smul.u32 8, %s21
      %v262 = vld [vmem:[%s239] sm:$0xf]
      %v263 = vld [vmem:[%s239 + $0x4] sm:$0xf]
      %v264 = vld [vmem:[%s239 + $0xc] sm:$0xf]
      %v265 = vld [vmem:[%s239 + $0x10] sm:$0xf]
      %v266 = vld [vmem:[%s239 + $0x18] sm:$0xf]
      %v267 = vld [vmem:[%s239 + $0x1c] sm:$0xf]
      %v268 = vld [vmem:[%s239 + $0x24] sm:$0xf]
      %v269 = vld [vmem:[%s239 + $0x28] sm:$0xf]
      %v270 = vld [vmem:[%s239 + $0x30] sm:$0xf]
      %v271 = vld [vmem:[%s239 + $0x34] sm:$0xf]
      %v272 = vld [vmem:[%s239 + $0x3c] sm:$0xf]
      %v273 = vld [vmem:[%s239 + $0x40] sm:$0xf]
      %v274 = vld [vmem:[%s239 + $0x48] sm:$0xf]
      %v275 = vld [vmem:[%s239 + $0x4c] sm:$0xf]
      %v276 = vld [vmem:[%s239 + $0x54] sm:$0xf]
      %v277 = vld [vmem:[%s239 + $0x58] sm:$0xf]
      %v278 = vld [vmem:[%s239 + $0x60] sm:$0xf]
      %v279 = vld [vmem:[%s239 + $0x64] sm:$0xf]
      %v280 = vld [vmem:[%s239 + $0x6c] sm:$0xf]
      %v281 = vld [vmem:[%s239 + $0x70] sm:$0xf]
      %v282 = vld [vmem:[%s239 + $0x78] sm:$0xf]
      %v283 = vld [vmem:[%s239 + $0x7c] sm:$0xf]
      %v284 = vld [vmem:[%s239 + $0x84] sm:$0xf]
      %v285 = vld [vmem:[%s239 + $0x88] sm:$0xf]
      %v286 = vld [vmem:[%s239 + $0x90] sm:$0xf]
      %v287 = vld [vmem:[%s239 + $0x94] sm:$0xf]
      %v288 = vld [vmem:[%s239 + $0x9c] sm:$0xf]
      %v289 = vld [vmem:[%s239 + $0xa0] sm:$0xf]
      %v290 = vld [vmem:[%s239 + $0xa8] sm:$0xf]
      %v291 = vld [vmem:[%s239 + $0xac] sm:$0xf]
      %v292 = vld [vmem:[%s239 + $0xb4] sm:$0xf]
      %v293 = vld [vmem:[%s239 + $0xb8] sm:$0xf]
      %v294 = vld [vmem:[%s1] sm:$0xf]
      %v295 = vld [vmem:[%s1 + $0x4] sm:$0xf]
      %v296 = vld [vmem:[%s1 + $0x8] sm:$0xf]
      %v297 = vld [vmem:[%s1 + $0xc] sm:$0xf]
      %v298 = vld [vmem:[%s1 + $0x10] sm:$0xf]
      %v299 = vld [vmem:[%s1 + $0x14] sm:$0xf]
      %v300 = vld [vmem:[%s1 + $0x18] sm:$0xf]
      %v301 = vld [vmem:[%s1 + $0x1c] sm:$0xf]
      %v302 = vld [vmem:[%s1 + $0x20] sm:$0xf]
      %v303 = vld [vmem:[%s1 + $0x24] sm:$0xf]
      %v304 = vld [vmem:[%s1 + $0x28] sm:$0xf]
      %v305 = vld [vmem:[%s1 + $0x2c] sm:$0xf]
      %v306 = vld [vmem:[%s1 + $0x30] sm:$0xf]
      %v307 = vld [vmem:[%s1 + $0x34] sm:$0xf]
      %v308 = vld [vmem:[%s1 + $0x38] sm:$0xf]
      %v309 = vld [vmem:[%s1 + $0x3c] sm:$0xf]
      %v310 = vld [vmem:[%s239 + $0x8] sm:$0x1]
      %v311 = vld [vmem:[%s239 + $0x14] sm:$0x1]
      %v312 = vld [vmem:[%s239 + $0x20] sm:$0x1]
      %v313 = vld [vmem:[%s239 + $0x2c] sm:$0x1]
      %v314 = vld [vmem:[%s239 + $0x38] sm:$0x1]
      %v315 = vld [vmem:[%s239 + $0x44] sm:$0x1]
      %v316 = vld [vmem:[%s239 + $0x50] sm:$0x1]
      %v317 = vld [vmem:[%s239 + $0x5c] sm:$0x1]
      %v318 = vld [vmem:[%s239 + $0x68] sm:$0x1]
      %v319 = vld [vmem:[%s239 + $0x74] sm:$0x1]
      %v320 = vld [vmem:[%s239 + $0x80] sm:$0x1]
      %v321 = vld [vmem:[%s239 + $0x8c] sm:$0x1]
      %v322 = vld [vmem:[%s239 + $0x98] sm:$0x1]
      %v323 = vld [vmem:[%s239 + $0xa4] sm:$0x1]
      %v324 = vld [vmem:[%s239 + $0xb0] sm:$0x1]
      %v325 = vld [vmem:[%s239 + $0xbc] sm:$0x1]
      %vm326 = vsmask.f32 3328
      %vm327 = vsmask.f32 7440
      %vm328 = vmor %vm326, %vm327
      %v330 = vshrl.u32 %v262, 16
      %v332 = vrot.slane %v330, 4
      %v333 = vshll.u32 %v262, 16
      %v335 = vrot.slane %v333, 5
      %v336 = vor.u32 %v332, %v335
      %v337 = vrot.slane %v336, 4
      %v339 = vshll.u32 %v263, 16
      %v341 = vrot.slane %v339, 5
      %v342 = vsel %vm328, %v337, %v341
      %v343 = vshrl.u32 %v263, 16
      %v345 = vrot.slane %v343, 4
      %v346 = vor.u32 %v345, %v341
      %v347 = vrot.slane %v346, 4
      %v349 = vshll.u32 %v310, 16
      %v351 = vrot.slane %v349, 5
      %v352 = vsel %vm328, %v347, %v351
      %v354 = vshrl.u32 %v264, 16
      %v356 = vrot.slane %v354, 4
      %v357 = vshll.u32 %v264, 16
      %v359 = vrot.slane %v357, 5
      %v360 = vor.u32 %v356, %v359
      %v361 = vrot.slane %v360, 4
      %v363 = vshll.u32 %v265, 16
      %v365 = vrot.slane %v363, 5
      %v366 = vsel %vm328, %v361, %v365
      %v367 = vshrl.u32 %v265, 16
      %v369 = vrot.slane %v367, 4
      %v370 = vor.u32 %v369, %v365
      %v371 = vrot.slane %v370, 4
      %v373 = vshll.u32 %v311, 16
      %v375 = vrot.slane %v373, 5
      %v376 = vsel %vm328, %v371, %v375
      %v378 = vshrl.u32 %v266, 16
      %v380 = vrot.slane %v378, 4
      %v381 = vshll.u32 %v266, 16
      %v383 = vrot.slane %v381, 5
      %v384 = vor.u32 %v380, %v383
      %v385 = vrot.slane %v384, 4
      %v387 = vshll.u32 %v267, 16
      %v389 = vrot.slane %v387, 5
      %v390 = vsel %vm328, %v385, %v389
      %v391 = vshrl.u32 %v267, 16
      %v393 = vrot.slane %v391, 4
      %v394 = vor.u32 %v393, %v389
      %v395 = vrot.slane %v394, 4
      %v397 = vshll.u32 %v312, 16
      %v399 = vrot.slane %v397, 5
      %v400 = vsel %vm328, %v395, %v399
      %v402 = vshrl.u32 %v268, 16
      %v404 = vrot.slane %v402, 4
      %v405 = vshll.u32 %v268, 16
      %v407 = vrot.slane %v405, 5
      %v408 = vor.u32 %v404, %v407
      %v409 = vrot.slane %v408, 4
      %v411 = vshll.u32 %v269, 16
      %v413 = vrot.slane %v411, 5
      %v414 = vsel %vm328, %v409, %v413
      %v415 = vshrl.u32 %v269, 16
      %v417 = vrot.slane %v415, 4
      %v418 = vor.u32 %v417, %v413
      %v419 = vrot.slane %v418, 4
      %v421 = vshll.u32 %v313, 16
      %v423 = vrot.slane %v421, 5
      %v424 = vsel %vm328, %v419, %v423
      %v426 = vshrl.u32 %v270, 16
      %v428 = vrot.slane %v426, 4
      %v429 = vshll.u32 %v270, 16
      %v431 = vrot.slane %v429, 5
      %v432 = vor.u32 %v428, %v431
      %v433 = vrot.slane %v432, 4
      %v435 = vshll.u32 %v271, 16
      %v437 = vrot.slane %v435, 5
      %v438 = vsel %vm328, %v433, %v437
      %v439 = vshrl.u32 %v271, 16
      %v441 = vrot.slane %v439, 4
      %v442 = vor.u32 %v441, %v437
      %v443 = vrot.slane %v442, 4
      %v445 = vshll.u32 %v314, 16
      %v447 = vrot.slane %v445, 5
      %v448 = vsel %vm328, %v443, %v447
      %v450 = vshrl.u32 %v272, 16
      %v452 = vrot.slane %v450, 4
      %v453 = vshll.u32 %v272, 16
      %v455 = vrot.slane %v453, 5
      %v456 = vor.u32 %v452, %v455
      %v457 = vrot.slane %v456, 4
      %v459 = vshll.u32 %v273, 16
      %v461 = vrot.slane %v459, 5
      %v462 = vsel %vm328, %v457, %v461
      %v463 = vshrl.u32 %v273, 16
      %v465 = vrot.slane %v463, 4
      %v466 = vor.u32 %v465, %v461
      %v467 = vrot.slane %v466, 4
      %v469 = vshll.u32 %v315, 16
      %v471 = vrot.slane %v469, 5
      %v472 = vsel %vm328, %v467, %v471
      %v474 = vshrl.u32 %v274, 16
      %v476 = vrot.slane %v474, 4
      %v477 = vshll.u32 %v274, 16
      %v479 = vrot.slane %v477, 5
      %v480 = vor.u32 %v476, %v479
      %v481 = vrot.slane %v480, 4
      %v483 = vshll.u32 %v275, 16
      %v485 = vrot.slane %v483, 5
      %v486 = vsel %vm328, %v481, %v485
      %v487 = vshrl.u32 %v275, 16
      %v489 = vrot.slane %v487, 4
      %v490 = vor.u32 %v489, %v485
      %v491 = vrot.slane %v490, 4
      %v493 = vshll.u32 %v316, 16
      %v495 = vrot.slane %v493, 5
      %v496 = vsel %vm328, %v491, %v495
      %v498 = vshrl.u32 %v276, 16
      %v500 = vrot.slane %v498, 4
      %v501 = vshll.u32 %v276, 16
      %v503 = vrot.slane %v501, 5
      %v504 = vor.u32 %v500, %v503
      %v505 = vrot.slane %v504, 4
      %v507 = vshll.u32 %v277, 16
      %v509 = vrot.slane %v507, 5
      %v510 = vsel %vm328, %v505, %v509
      %v511 = vshrl.u32 %v277, 16
      %v513 = vrot.slane %v511, 4
      %v514 = vor.u32 %v513, %v509
      %v515 = vrot.slane %v514, 4
      %v517 = vshll.u32 %v317, 16
      %v519 = vrot.slane %v517, 5
      %v520 = vsel %vm328, %v515, %v519
      %v522 = vshrl.u32 %v278, 16
      %v524 = vrot.slane %v522, 4
      %v525 = vshll.u32 %v278, 16
      %v527 = vrot.slane %v525, 5
      %v528 = vor.u32 %v524, %v527
      %v529 = vrot.slane %v528, 4
      %v531 = vshll.u32 %v279, 16
      %v533 = vrot.slane %v531, 5
      %v534 = vsel %vm328, %v529, %v533
      %v535 = vshrl.u32 %v279, 16
      %v537 = vrot.slane %v535, 4
      %v538 = vor.u32 %v537, %v533
      %v539 = vrot.slane %v538, 4
      %v541 = vshll.u32 %v318, 16
      %v543 = vrot.slane %v541, 5
      %v544 = vsel %vm328, %v539, %v543
      %v546 = vshrl.u32 %v280, 16
      %v548 = vrot.slane %v546, 4
      %v549 = vshll.u32 %v280, 16
      %v551 = vrot.slane %v549, 5
      %v552 = vor.u32 %v548, %v551
      %v553 = vrot.slane %v552, 4
      %v555 = vshll.u32 %v281, 16
      %v557 = vrot.slane %v555, 5
      %v558 = vsel %vm328, %v553, %v557
      %v559 = vshrl.u32 %v281, 16
      %v561 = vrot.slane %v559, 4
      %v562 = vor.u32 %v561, %v557
      %v563 = vrot.slane %v562, 4
      %v565 = vshll.u32 %v319, 16
      %v567 = vrot.slane %v565, 5
      %v568 = vsel %vm328, %v563, %v567
      %v570 = vshrl.u32 %v282, 16
      %v572 = vrot.slane %v570, 4
      %v573 = vshll.u32 %v282, 16
      %v575 = vrot.slane %v573, 5
      %v576 = vor.u32 %v572, %v575
      %v577 = vrot.slane %v576, 4
      %v579 = vshll.u32 %v283, 16
      %v581 = vrot.slane %v579, 5
      %v582 = vsel %vm328, %v577, %v581
      %v583 = vshrl.u32 %v283, 16
      %v585 = vrot.slane %v583, 4
      %v586 = vor.u32 %v585, %v581
      %v587 = vrot.slane %v586, 4
      %v589 = vshll.u32 %v320, 16
      %v591 = vrot.slane %v589, 5
      %v592 = vsel %vm328, %v587, %v591
      %v594 = vshrl.u32 %v284, 16
      %v596 = vrot.slane %v594, 4
      %v597 = vshll.u32 %v284, 16
      %v599 = vrot.slane %v597, 5
      %v600 = vor.u32 %v596, %v599
      %v601 = vrot.slane %v600, 4
      %v603 = vshll.u32 %v285, 16
      %v605 = vrot.slane %v603, 5
      %v606 = vsel %vm328, %v601, %v605
      %v607 = vshrl.u32 %v285, 16
      %v609 = vrot.slane %v607, 4
      %v610 = vor.u32 %v609, %v605
      %v611 = vrot.slane %v610, 4
      %v613 = vshll.u32 %v321, 16
      %v615 = vrot.slane %v613, 5
      %v616 = vsel %vm328, %v611, %v615
      %v618 = vshrl.u32 %v286, 16
      %v620 = vrot.slane %v618, 4
      %v621 = vshll.u32 %v286, 16
      %v623 = vrot.slane %v621, 5
      %v624 = vor.u32 %v620, %v623
      %v625 = vrot.slane %v624, 4
      %v627 = vshll.u32 %v287, 16
      %v629 = vrot.slane %v627, 5
      %v630 = vsel %vm328, %v625, %v629
      %v631 = vshrl.u32 %v287, 16
      %v633 = vrot.slane %v631, 4
      %v634 = vor.u32 %v633, %v629
      %v635 = vrot.slane %v634, 4
      %v637 = vshll.u32 %v322, 16
      %v639 = vrot.slane %v637, 5
      %v640 = vsel %vm328, %v635, %v639
      %v642 = vshrl.u32 %v288, 16
      %v644 = vrot.slane %v642, 4
      %v645 = vshll.u32 %v288, 16
      %v647 = vrot.slane %v645, 5
      %v648 = vor.u32 %v644, %v647
      %v649 = vrot.slane %v648, 4
      %v651 = vshll.u32 %v289, 16
      %v653 = vrot.slane %v651, 5
      %v654 = vsel %vm328, %v649, %v653
      %v655 = vshrl.u32 %v289, 16
      %v657 = vrot.slane %v655, 4
      %v658 = vor.u32 %v657, %v653
      %v659 = vrot.slane %v658, 4
      %v661 = vshll.u32 %v323, 16
      %v663 = vrot.slane %v661, 5
      %v664 = vsel %vm328, %v659, %v663
      %v666 = vshrl.u32 %v290, 16
      %v668 = vrot.slane %v666, 4
      %v669 = vshll.u32 %v290, 16
      %v671 = vrot.slane %v669, 5
      %v672 = vor.u32 %v668, %v671
      %v673 = vrot.slane %v672, 4
      %v675 = vshll.u32 %v291, 16
      %v677 = vrot.slane %v675, 5
      %v678 = vsel %vm328, %v673, %v677
      %v679 = vshrl.u32 %v291, 16
      %v681 = vrot.slane %v679, 4
      %v682 = vor.u32 %v681, %v677
      %v683 = vrot.slane %v682, 4
      %v685 = vshll.u32 %v324, 16
      %v687 = vrot.slane %v685, 5
      %v688 = vsel %vm328, %v683, %v687
      %v690 = vshrl.u32 %v292, 16
      %v692 = vrot.slane %v690, 4
      %v693 = vshll.u32 %v292, 16
      %v695 = vrot.slane %v693, 5
      %v696 = vor.u32 %v692, %v695
      %v697 = vrot.slane %v696, 4
      %v699 = vshll.u32 %v293, 16
      %v701 = vrot.slane %v699, 5
      %v702 = vsel %vm328, %v697, %v701
      %v703 = vshrl.u32 %v293, 16
      %v705 = vrot.slane %v703, 4
      %v706 = vor.u32 %v705, %v701
      %v707 = vrot.slane %v706, 4
      %v709 = vshll.u32 %v325, 16
      %v711 = vrot.slane %v709, 5
      %v712 = vsel %vm328, %v707, %v711
      %s713 = scalar_lea.vmem %s1, 64
      %v714 = vld [vmem:[%s713] sm:$0xf]
      %v715 = vld [vmem:[%s713 + $0x4] sm:$0xf]
      %v716 = vld [vmem:[%s713 + $0x8] sm:$0xf]
      %v717 = vld [vmem:[%s713 + $0xc] sm:$0xf]
      %v718 = vld [vmem:[%s713 + $0x10] sm:$0xf]
      %v719 = vld [vmem:[%s713 + $0x14] sm:$0xf]
      %v720 = vld [vmem:[%s713 + $0x18] sm:$0xf]
      %v721 = vld [vmem:[%s713 + $0x1c] sm:$0xf]
      %v722 = vld [vmem:[%s713 + $0x20] sm:$0xf]
      %v723 = vld [vmem:[%s713 + $0x24] sm:$0xf]
      %v724 = vld [vmem:[%s713 + $0x28] sm:$0xf]
      %v725 = vld [vmem:[%s713 + $0x2c] sm:$0xf]
      %v726 = vld [vmem:[%s713 + $0x30] sm:$0xf]
      %v727 = vld [vmem:[%s713 + $0x34] sm:$0xf]
      %v728 = vld [vmem:[%s713 + $0x38] sm:$0xf]
      %v729 = vld [vmem:[%s713 + $0x3c] sm:$0xf]
      %v730 = vunpack.c.l.b16 %v342
      %v731 = vunpack.c.l.b16 %v352
      %v732 = vunpack.c.l.b16 %v366
      %v733 = vunpack.c.l.b16 %v376
      %v734 = vunpack.c.l.b16 %v390
      %v735 = vunpack.c.l.b16 %v400
      %v736 = vunpack.c.l.b16 %v414
      %v737 = vunpack.c.l.b16 %v424
      %v738 = vunpack.c.l.b16 %v438
      %v739 = vunpack.c.l.b16 %v448
      %v740 = vunpack.c.l.b16 %v462
      %v741 = vunpack.c.l.b16 %v472
      %v742 = vunpack.c.l.b16 %v486
      %v743 = vunpack.c.l.b16 %v496
      %v744 = vunpack.c.l.b16 %v510
      %v745 = vunpack.c.l.b16 %v520
      %v746 = vunpack.c.l.b16 %v534
      %v747 = vunpack.c.l.b16 %v544
      %v748 = vunpack.c.l.b16 %v558
      %v749 = vunpack.c.l.b16 %v568
      %v750 = vunpack.c.l.b16 %v582
      %v751 = vunpack.c.l.b16 %v592
      %v752 = vunpack.c.l.b16 %v606
      %v753 = vunpack.c.l.b16 %v616
      %v754 = vunpack.c.l.b16 %v630
      %v755 = vunpack.c.l.b16 %v640
      %v756 = vunpack.c.l.b16 %v654
      %v757 = vunpack.c.l.b16 %v664
      %v758 = vunpack.c.l.b16 %v678
      %v759 = vunpack.c.l.b16 %v688
      %v760 = vunpack.c.l.b16 %v702
      %v761 = vunpack.c.l.b16 %v712
      %v762 = vpack.c.b16 %v731, %v730
      %v763 = vpack.c.b16 %v733, %v732
      %v764 = vpack.c.b16 %v735, %v734
      %v765 = vpack.c.b16 %v737, %v736
      %v766 = vpack.c.b16 %v739, %v738
      %v767 = vpack.c.b16 %v741, %v740
      %v768 = vpack.c.b16 %v743, %v742
      %v769 = vpack.c.b16 %v745, %v744
      %v770 = vpack.c.b16 %v747, %v746
      %v771 = vpack.c.b16 %v749, %v748
      %v772 = vpack.c.b16 %v751, %v750
      %v773 = vpack.c.b16 %v753, %v752
      %v774 = vpack.c.b16 %v755, %v754
      %v775 = vpack.c.b16 %v757, %v756
      %v776 = vpack.c.b16 %v759, %v758
      %v777 = vpack.c.b16 %v761, %v760
      %v810 = vunpack.c.l.b16 %v714
      %v811 = vunpack.c.l.b16 %v715
      %v812 = vunpack.c.l.b16 %v716
      %v813 = vunpack.c.l.b16 %v717
      %v814 = vunpack.c.l.b16 %v718
      %v815 = vunpack.c.l.b16 %v719
      %v816 = vunpack.c.l.b16 %v720
      %v817 = vunpack.c.l.b16 %v721
      %v818 = vunpack.c.l.b16 %v722
      %v819 = vunpack.c.l.b16 %v723
      %v820 = vunpack.c.l.b16 %v724
      %v821 = vunpack.c.l.b16 %v725
      %v822 = vunpack.c.l.b16 %v726
      %v823 = vunpack.c.l.b16 %v727
      %v824 = vunpack.c.l.b16 %v728
      %v825 = vunpack.c.l.b16 %v729
      %v826 = vpack.c.b16 %v811, %v810
      %v827 = vpack.c.b16 %v813, %v812
      %v828 = vpack.c.b16 %v815, %v814
      %v829 = vpack.c.b16 %v817, %v816
      %v830 = vpack.c.b16 %v819, %v818
      %v831 = vpack.c.b16 %v821, %v820
      %v832 = vpack.c.b16 %v823, %v822
      %v833 = vpack.c.b16 %v825, %v824
      %842 = vmatprep.subr.bf16.mxu0 0
      %843 = vmatpush1.bf16.msra.mxu0 %v833
      %844 = vmatprep.subr.bf16.mxu0 0
      %845 = vmatpush1.bf16.msra.mxu0 %v832
      %846 = vmatprep.subr.bf16.mxu0 0
      %847 = vmatpush1.bf16.msra.mxu0 %v831
      %848 = vmatprep.subr.bf16.mxu0 0
      %849 = vmatpush1.bf16.msra.mxu0 %v830
      %850 = vmatprep.subr.bf16.mxu0 0
      %851 = vmatpush1.bf16.msra.mxu0 %v829
      %852 = vmatprep.subr.bf16.mxu0 0
      %853 = vmatpush1.bf16.msra.mxu0 %v828
      %854 = vmatprep.subr.bf16.mxu0 0
      %855 = vmatpush1.bf16.msra.mxu0 %v827
      %856 = vmatprep.subr.bf16.mxu0 0
      %857 = vmatpush1.bf16.msra.mxu0 %v826
      %858 = vmatprep.subr.bf16.mxu0 0
      %859 = vmatpush2.bf16.msra.mxu0 0
      %860 = vmatprep.subr.bf16.mxu0 0
      %861 = vmatpush2.bf16.msra.mxu0 0
      %862 = vmatprep.subr.bf16.mxu0 0
      %863 = vmatpush2.bf16.msra.mxu0 0
      %864 = vmatprep.subr.bf16.mxu0 0
      %865 = vmatpush2.bf16.msra.mxu0 0
      %866 = vmatprep.subr.bf16.mxu0 0
      %867 = vmatpush2.bf16.msra.mxu0 0
      %868 = vmatprep.subr.bf16.mxu0 0
      %869 = vmatpush2.bf16.msra.mxu0 0
      %870 = vmatprep.subr.bf16.mxu0 0
      %871 = vmatpush2.bf16.msra.mxu0 0
      %872 = vmatprep.subr.bf16.mxu0 0
      %873 = vmatpush2.bf16.msra.mxu0 0
      %874 = vmatprep.mubr.bf16.mxu0 0
      %875 = vmatmul.mubr.bf16.gmra.mxu0 %v762
      %v876 = vpop.f32.mrf.mxu0
      %v877 = vadd.f32 0.0, %v876
      %v878 = vpop.f32.mrf.mxu0
      %v879 = vpop.f32.mrf.mxu0
      %v880 = vadd.f32 0.0, %v879
      %v881 = vpop.f32.mrf.mxu0
      %882 = vmatprep.mubr.bf16.mxu0 0
      %883 = vmatmul.mubr.bf16.gmra.mxu0 %v763
      %v884 = vpop.f32.mrf.mxu0
      %v885 = vadd.f32 0.0, %v884
      %v886 = vpop.f32.mrf.mxu0
      %v887 = vpop.f32.mrf.mxu0
      %v888 = vadd.f32 0.0, %v887
      %v889 = vpop.f32.mrf.mxu0
      %890 = vmatprep.mubr.bf16.mxu0 0
      %891 = vmatmul.mubr.bf16.gmra.mxu0 %v764
      %v892 = vpop.f32.mrf.mxu0
      %v893 = vadd.f32 0.0, %v892
      %v894 = vpop.f32.mrf.mxu0
      %v895 = vpop.f32.mrf.mxu0
      %v896 = vadd.f32 0.0, %v895
      %v897 = vpop.f32.mrf.mxu0
      %898 = vmatprep.mubr.bf16.mxu0 0
      %899 = vmatmul.mubr.bf16.gmra.mxu0 %v765
      %v900 = vpop.f32.mrf.mxu0
      %v901 = vadd.f32 0.0, %v900
      %v902 = vpop.f32.mrf.mxu0
      %v903 = vpop.f32.mrf.mxu0
      %v904 = vadd.f32 0.0, %v903
      %v905 = vpop.f32.mrf.mxu0
      %906 = vmatprep.mubr.bf16.mxu0 0
      %907 = vmatmul.mubr.bf16.gmra.mxu0 %v766
      %v908 = vpop.f32.mrf.mxu0
      %v909 = vadd.f32 0.0, %v908
      %v910 = vpop.f32.mrf.mxu0
      %v911 = vpop.f32.mrf.mxu0
      %v912 = vadd.f32 0.0, %v911
      %v913 = vpop.f32.mrf.mxu0
      %914 = vmatprep.mubr.bf16.mxu0 0
      %915 = vmatmul.mubr.bf16.gmra.mxu0 %v767
      %v916 = vpop.f32.mrf.mxu0
      %v917 = vadd.f32 0.0, %v916
      %v918 = vpop.f32.mrf.mxu0
      %v919 = vpop.f32.mrf.mxu0
      %v920 = vadd.f32 0.0, %v919
      %v921 = vpop.f32.mrf.mxu0
      %922 = vmatprep.mubr.bf16.mxu0 0
      %923 = vmatmul.mubr.bf16.gmra.mxu0 %v768
      %v924 = vpop.f32.mrf.mxu0
      %v925 = vadd.f32 0.0, %v924
      %v926 = vpop.f32.mrf.mxu0
      %v927 = vpop.f32.mrf.mxu0
      %v928 = vadd.f32 0.0, %v927
      %v929 = vpop.f32.mrf.mxu0
      %930 = vmatprep.mubr.bf16.mxu0 0
      %931 = vmatmul.mubr.bf16.gmra.mxu0 %v769
      %v932 = vpop.f32.mrf.mxu0
      %v933 = vadd.f32 0.0, %v932
      %v934 = vpop.f32.mrf.mxu0
      %v935 = vpop.f32.mrf.mxu0
      %v936 = vadd.f32 0.0, %v935
      %v937 = vpop.f32.mrf.mxu0
      %938 = vmatprep.mubr.bf16.mxu0 0
      %939 = vmatmul.mubr.bf16.gmra.mxu0 %v770
      %v940 = vpop.f32.mrf.mxu0
      %v941 = vadd.f32 0.0, %v940
      %v942 = vpop.f32.mrf.mxu0
      %v943 = vpop.f32.mrf.mxu0
      %v944 = vadd.f32 0.0, %v943
      %v945 = vpop.f32.mrf.mxu0
      %946 = vmatprep.mubr.bf16.mxu0 0
      %947 = vmatmul.mubr.bf16.gmra.mxu0 %v771
      %v948 = vpop.f32.mrf.mxu0
      %v949 = vadd.f32 0.0, %v948
      %v950 = vpop.f32.mrf.mxu0
      %v951 = vpop.f32.mrf.mxu0
      %v952 = vadd.f32 0.0, %v951
      %v953 = vpop.f32.mrf.mxu0
      %954 = vmatprep.mubr.bf16.mxu0 0
      %955 = vmatmul.mubr.bf16.gmra.mxu0 %v772
      %v956 = vpop.f32.mrf.mxu0
      %v957 = vadd.f32 0.0, %v956
      %v958 = vpop.f32.mrf.mxu0
      %v959 = vpop.f32.mrf.mxu0
      %v960 = vadd.f32 0.0, %v959
      %v961 = vpop.f32.mrf.mxu0
      %962 = vmatprep.mubr.bf16.mxu0 0
      %963 = vmatmul.mubr.bf16.gmra.mxu0 %v773
      %v964 = vpop.f32.mrf.mxu0
      %v965 = vadd.f32 0.0, %v964
      %v966 = vpop.f32.mrf.mxu0
      %v967 = vpop.f32.mrf.mxu0
      %v968 = vadd.f32 0.0, %v967
      %v969 = vpop.f32.mrf.mxu0
      %970 = vmatprep.mubr.bf16.mxu0 0
      %971 = vmatmul.mubr.bf16.gmra.mxu0 %v774
      %v972 = vpop.f32.mrf.mxu0
      %v973 = vadd.f32 0.0, %v972
      %v974 = vpop.f32.mrf.mxu0
      %v975 = vpop.f32.mrf.mxu0
      %v976 = vadd.f32 0.0, %v975
      %v977 = vpop.f32.mrf.mxu0
      %978 = vmatprep.mubr.bf16.mxu0 0
      %979 = vmatmul.mubr.bf16.gmra.mxu0 %v775
      %v980 = vpop.f32.mrf.mxu0
      %v981 = vadd.f32 0.0, %v980
      %v982 = vpop.f32.mrf.mxu0
      %v983 = vpop.f32.mrf.mxu0
      %v984 = vadd.f32 0.0, %v983
      %v985 = vpop.f32.mrf.mxu0
      %986 = vmatprep.mubr.bf16.mxu0 0
      %987 = vmatmul.mubr.bf16.gmra.mxu0 %v776
      %v988 = vpop.f32.mrf.mxu0
      %v989 = vadd.f32 0.0, %v988
      %v990 = vpop.f32.mrf.mxu0
      %v991 = vpop.f32.mrf.mxu0
      %v992 = vadd.f32 0.0, %v991
      %v993 = vpop.f32.mrf.mxu0
      %994 = vmatprep.mubr.bf16.mxu0 0
      %995 = vmatmul.mubr.bf16.gmra.mxu0 %v777
      %v996 = vpop.f32.mrf.mxu0
      %v997 = vadd.f32 0.0, %v996
      %v998 = vpop.f32.mrf.mxu0
      %v999 = vpop.f32.mrf.mxu0
      %v1000 = vadd.f32 0.0, %v999
      %v1001 = vpop.f32.mrf.mxu0
      %1002 = vdwg.mxu0
      %v1035 = vunpack.c.l.b16 %v262
      %v1036 = vunpack.c.l.b16 %v263
      %v1037 = vunpack.c.l.b16 %v264
      %v1038 = vunpack.c.l.b16 %v265
      %v1039 = vunpack.c.l.b16 %v266
      %v1040 = vunpack.c.l.b16 %v267
      %v1041 = vunpack.c.l.b16 %v268
      %v1042 = vunpack.c.l.b16 %v269
      %v1043 = vunpack.c.l.b16 %v270
      %v1044 = vunpack.c.l.b16 %v271
      %v1045 = vunpack.c.l.b16 %v272
      %v1046 = vunpack.c.l.b16 %v273
      %v1047 = vunpack.c.l.b16 %v274
      %v1048 = vunpack.c.l.b16 %v275
      %v1049 = vunpack.c.l.b16 %v276
      %v1050 = vunpack.c.l.b16 %v277
      %v1051 = vunpack.c.l.b16 %v278
      %v1052 = vunpack.c.l.b16 %v279
      %v1053 = vunpack.c.l.b16 %v280
      %v1054 = vunpack.c.l.b16 %v281
      %v1055 = vunpack.c.l.b16 %v282
      %v1056 = vunpack.c.l.b16 %v283
      %v1057 = vunpack.c.l.b16 %v284
      %v1058 = vunpack.c.l.b16 %v285
      %v1059 = vunpack.c.l.b16 %v286
      %v1060 = vunpack.c.l.b16 %v287
      %v1061 = vunpack.c.l.b16 %v288
      %v1062 = vunpack.c.l.b16 %v289
      %v1063 = vunpack.c.l.b16 %v290
      %v1064 = vunpack.c.l.b16 %v291
      %v1065 = vunpack.c.l.b16 %v292
      %v1066 = vunpack.c.l.b16 %v293
      %v1067 = vpack.c.b16 %v1036, %v1035
      %v1068 = vpack.c.b16 %v1038, %v1037
      %v1069 = vpack.c.b16 %v1040, %v1039
      %v1070 = vpack.c.b16 %v1042, %v1041
      %v1071 = vpack.c.b16 %v1044, %v1043
      %v1072 = vpack.c.b16 %v1046, %v1045
      %v1073 = vpack.c.b16 %v1048, %v1047
      %v1074 = vpack.c.b16 %v1050, %v1049
      %v1075 = vpack.c.b16 %v1052, %v1051
      %v1076 = vpack.c.b16 %v1054, %v1053
      %v1077 = vpack.c.b16 %v1056, %v1055
      %v1078 = vpack.c.b16 %v1058, %v1057
      %v1079 = vpack.c.b16 %v1060, %v1059
      %v1080 = vpack.c.b16 %v1062, %v1061
      %v1081 = vpack.c.b16 %v1064, %v1063
      %v1082 = vpack.c.b16 %v1066, %v1065
      %v1115 = vunpack.c.l.b16 %v294
      %v1116 = vunpack.c.l.b16 %v295
      %v1117 = vunpack.c.l.b16 %v296
      %v1118 = vunpack.c.l.b16 %v297
      %v1119 = vunpack.c.l.b16 %v298
      %v1120 = vunpack.c.l.b16 %v299
      %v1121 = vunpack.c.l.b16 %v300
      %v1122 = vunpack.c.l.b16 %v301
      %v1123 = vunpack.c.l.b16 %v302
      %v1124 = vunpack.c.l.b16 %v303
      %v1125 = vunpack.c.l.b16 %v304
      %v1126 = vunpack.c.l.b16 %v305
      %v1127 = vunpack.c.l.b16 %v306
      %v1128 = vunpack.c.l.b16 %v307
      %v1129 = vunpack.c.l.b16 %v308
      %v1130 = vunpack.c.l.b16 %v309
      %v1131 = vpack.c.b16 %v1116, %v1115
      %v1132 = vpack.c.b16 %v1118, %v1117
      %v1133 = vpack.c.b16 %v1120, %v1119
      %v1134 = vpack.c.b16 %v1122, %v1121
      %v1135 = vpack.c.b16 %v1124, %v1123
      %v1136 = vpack.c.b16 %v1126, %v1125
      %v1137 = vpack.c.b16 %v1128, %v1127
      %v1138 = vpack.c.b16 %v1130, %v1129
      %1147 = vmatprep.subr.bf16.mxu0 0
      %1148 = vmatpush1.bf16.msra.mxu0 %v1138
      %1149 = vmatprep.subr.bf16.mxu0 0
      %1150 = vmatpush1.bf16.msra.mxu0 %v1137
      %1151 = vmatprep.subr.bf16.mxu0 0
      %1152 = vmatpush1.bf16.msra.mxu0 %v1136
      %1153 = vmatprep.subr.bf16.mxu0 0
      %1154 = vmatpush1.bf16.msra.mxu0 %v1135
      %1155 = vmatprep.subr.bf16.mxu0 0
      %1156 = vmatpush1.bf16.msra.mxu0 %v1134
      %1157 = vmatprep.subr.bf16.mxu0 0
      %1158 = vmatpush1.bf16.msra.mxu0 %v1133
      %1159 = vmatprep.subr.bf16.mxu0 0
      %1160 = vmatpush1.bf16.msra.mxu0 %v1132
      %1161 = vmatprep.subr.bf16.mxu0 0
      %1162 = vmatpush1.bf16.msra.mxu0 %v1131
      %1163 = vmatprep.subr.bf16.mxu0 0
      %1164 = vmatpush2.bf16.msra.mxu0 0
      %1165 = vmatprep.subr.bf16.mxu0 0
      %1166 = vmatpush2.bf16.msra.mxu0 0
      %1167 = vmatprep.subr.bf16.mxu0 0
      %1168 = vmatpush2.bf16.msra.mxu0 0
      %1169 = vmatprep.subr.bf16.mxu0 0
      %1170 = vmatpush2.bf16.msra.mxu0 0
      %1171 = vmatprep.subr.bf16.mxu0 0
      %1172 = vmatpush2.bf16.msra.mxu0 0
      %1173 = vmatprep.subr.bf16.mxu0 0
      %1174 = vmatpush2.bf16.msra.mxu0 0
      %1175 = vmatprep.subr.bf16.mxu0 0
      %1176 = vmatpush2.bf16.msra.mxu0 0
      %1177 = vmatprep.subr.bf16.mxu0 0
      %1178 = vmatpush2.bf16.msra.mxu0 0
      %1179 = vmatprep.mubr.bf16.mxu0 0
      %1180 = vmatmul.mubr.bf16.gmra.mxu0 %v1067
      %v1181 = vpop.f32.mrf.mxu0
      %v1182 = vadd.f32 %v877, %v1181
      %v1183 = vpop.f32.mrf.mxu0
      %v1184 = vpop.f32.mrf.mxu0
      %v1185 = vadd.f32 %v880, %v1184
      %v1186 = vpop.f32.mrf.mxu0
      %1187 = vmatprep.mubr.bf16.mxu0 0
      %1188 = vmatmul.mubr.bf16.gmra.mxu0 %v1068
      %v1189 = vpop.f32.mrf.mxu0
      %v1190 = vadd.f32 %v885, %v1189
      %v1191 = vpop.f32.mrf.mxu0
      %v1192 = vpop.f32.mrf.mxu0
      %v1193 = vadd.f32 %v888, %v1192
      %v1194 = vpop.f32.mrf.mxu0
      %1195 = vmatprep.mubr.bf16.mxu0 0
      %1196 = vmatmul.mubr.bf16.gmra.mxu0 %v1069
      %v1197 = vpop.f32.mrf.mxu0
      %v1198 = vadd.f32 %v893, %v1197
      %v1199 = vpop.f32.mrf.mxu0
      %v1200 = vpop.f32.mrf.mxu0
      %v1201 = vadd.f32 %v896, %v1200
      %v1202 = vpop.f32.mrf.mxu0
      %1203 = vmatprep.mubr.bf16.mxu0 0
      %1204 = vmatmul.mubr.bf16.gmra.mxu0 %v1070
      %v1205 = vpop.f32.mrf.mxu0
      %v1206 = vadd.f32 %v901, %v1205
      %v1207 = vpop.f32.mrf.mxu0
      %v1208 = vpop.f32.mrf.mxu0
      %v1209 = vadd.f32 %v904, %v1208
      %v1210 = vpop.f32.mrf.mxu0
      %1211 = vmatprep.mubr.bf16.mxu0 0
      %1212 = vmatmul.mubr.bf16.gmra.mxu0 %v1071
      %v1213 = vpop.f32.mrf.mxu0
      %v1214 = vadd.f32 %v909, %v1213
      %v1215 = vpop.f32.mrf.mxu0
      %v1216 = vpop.f32.mrf.mxu0
      %v1217 = vadd.f32 %v912, %v1216
      %v1218 = vpop.f32.mrf.mxu0
      %1219 = vmatprep.mubr.bf16.mxu0 0
      %1220 = vmatmul.mubr.bf16.gmra.mxu0 %v1072
      %v1221 = vpop.f32.mrf.mxu0
      %v1222 = vadd.f32 %v917, %v1221
      %v1223 = vpop.f32.mrf.mxu0
      %v1224 = vpop.f32.mrf.mxu0
      %v1225 = vadd.f32 %v920, %v1224
      %v1226 = vpop.f32.mrf.mxu0
      %1227 = vmatprep.mubr.bf16.mxu0 0
      %1228 = vmatmul.mubr.bf16.gmra.mxu0 %v1073
      %v1229 = vpop.f32.mrf.mxu0
      %v1230 = vadd.f32 %v925, %v1229
      %v1231 = vpop.f32.mrf.mxu0
      %v1232 = vpop.f32.mrf.mxu0
      %v1233 = vadd.f32 %v928, %v1232
      %v1234 = vpop.f32.mrf.mxu0
      %1235 = vmatprep.mubr.bf16.mxu0 0
      %1236 = vmatmul.mubr.bf16.gmra.mxu0 %v1074
      %v1237 = vpop.f32.mrf.mxu0
      %v1238 = vadd.f32 %v933, %v1237
      %v1239 = vpop.f32.mrf.mxu0
      %v1240 = vpop.f32.mrf.mxu0
      %v1241 = vadd.f32 %v936, %v1240
      %v1242 = vpop.f32.mrf.mxu0
      %1243 = vmatprep.mubr.bf16.mxu0 0
      %1244 = vmatmul.mubr.bf16.gmra.mxu0 %v1075
      %v1245 = vpop.f32.mrf.mxu0
      %v1246 = vadd.f32 %v941, %v1245
      %v1247 = vpop.f32.mrf.mxu0
      %v1248 = vpop.f32.mrf.mxu0
      %v1249 = vadd.f32 %v944, %v1248
      %v1250 = vpop.f32.mrf.mxu0
      %1251 = vmatprep.mubr.bf16.mxu0 0
      %1252 = vmatmul.mubr.bf16.gmra.mxu0 %v1076
      %v1253 = vpop.f32.mrf.mxu0
      %v1254 = vadd.f32 %v949, %v1253
      %v1255 = vpop.f32.mrf.mxu0
      %v1256 = vpop.f32.mrf.mxu0
      %v1257 = vadd.f32 %v952, %v1256
      %v1258 = vpop.f32.mrf.mxu0
      %1259 = vmatprep.mubr.bf16.mxu0 0
      %1260 = vmatmul.mubr.bf16.gmra.mxu0 %v1077
      %v1261 = vpop.f32.mrf.mxu0
      %v1262 = vadd.f32 %v957, %v1261
      %v1263 = vpop.f32.mrf.mxu0
      %v1264 = vpop.f32.mrf.mxu0
      %v1265 = vadd.f32 %v960, %v1264
      %v1266 = vpop.f32.mrf.mxu0
      %1267 = vmatprep.mubr.bf16.mxu0 0
      %1268 = vmatmul.mubr.bf16.gmra.mxu0 %v1078
      %v1269 = vpop.f32.mrf.mxu0
      %v1270 = vadd.f32 %v965, %v1269
      %v1271 = vpop.f32.mrf.mxu0
      %v1272 = vpop.f32.mrf.mxu0
      %v1273 = vadd.f32 %v968, %v1272
      %v1274 = vpop.f32.mrf.mxu0
      %1275 = vmatprep.mubr.bf16.mxu0 0
      %1276 = vmatmul.mubr.bf16.gmra.mxu0 %v1079
      %v1277 = vpop.f32.mrf.mxu0
      %v1278 = vadd.f32 %v973, %v1277
      %v1279 = vpop.f32.mrf.mxu0
      %v1280 = vpop.f32.mrf.mxu0
      %v1281 = vadd.f32 %v976, %v1280
      %v1282 = vpop.f32.mrf.mxu0
      %1283 = vmatprep.mubr.bf16.mxu0 0
      %1284 = vmatmul.mubr.bf16.gmra.mxu0 %v1080
      %v1285 = vpop.f32.mrf.mxu0
      %v1286 = vadd.f32 %v981, %v1285
      %v1287 = vpop.f32.mrf.mxu0
      %v1288 = vpop.f32.mrf.mxu0
      %v1289 = vadd.f32 %v984, %v1288
      %v1290 = vpop.f32.mrf.mxu0
      %1291 = vmatprep.mubr.bf16.mxu0 0
      %1292 = vmatmul.mubr.bf16.gmra.mxu0 %v1081
      %v1293 = vpop.f32.mrf.mxu0
      %v1294 = vadd.f32 %v989, %v1293
      %v1295 = vpop.f32.mrf.mxu0
      %v1296 = vpop.f32.mrf.mxu0
      %v1297 = vadd.f32 %v992, %v1296
      %v1298 = vpop.f32.mrf.mxu0
      %1299 = vmatprep.mubr.bf16.mxu0 0
      %1300 = vmatmul.mubr.bf16.gmra.mxu0 %v1082
      %v1301 = vpop.f32.mrf.mxu0
      %v1302 = vadd.f32 %v997, %v1301
      %v1303 = vpop.f32.mrf.mxu0
      %v1304 = vpop.f32.mrf.mxu0
      %v1305 = vadd.f32 %v1000, %v1304
      %v1306 = vpop.f32.mrf.mxu0
      %1307 = vdwg.mxu0
      %v1308 = vld [vmem:[%s239] sm:$0xe]
      %v1309 = vld [vmem:[%s239 + $0xc] sm:$0xe]
      %v1310 = vld [vmem:[%s239 + $0x18] sm:$0xe]
      %v1311 = vld [vmem:[%s239 + $0x24] sm:$0xe]
      %v1312 = vld [vmem:[%s239 + $0x30] sm:$0xe]
      %v1313 = vld [vmem:[%s239 + $0x3c] sm:$0xe]
      %v1314 = vld [vmem:[%s239 + $0x48] sm:$0xe]
      %v1315 = vld [vmem:[%s239 + $0x54] sm:$0xe]
      %v1316 = vld [vmem:[%s239 + $0x60] sm:$0xe]
      %v1317 = vld [vmem:[%s239 + $0x6c] sm:$0xe]
      %v1318 = vld [vmem:[%s239 + $0x78] sm:$0xe]
      %v1319 = vld [vmem:[%s239 + $0x84] sm:$0xe]
      %v1320 = vld [vmem:[%s239 + $0x90] sm:$0xe]
      %v1321 = vld [vmem:[%s239 + $0x9c] sm:$0xe]
      %v1322 = vld [vmem:[%s239 + $0xa8] sm:$0xe]
      %v1323 = vld [vmem:[%s239 + $0xb4] sm:$0xe]
      %vm1356 = vcmask 1042432
      %vm1357 = vcmask 1046532
      %vm1358 = vmor %vm1356, %vm1357
      %v1359 = vrot.slane %v1308, 5
      %v1360 = vrot.slane %v1359, 4
      %v1361 = vrot.slane %v263, 5
      %v1362 = vsel %vm1358, %v1360, %v1361
      %v1363 = vrot.slane %v1361, 4
      %v1364 = vrot.slane %v310, 5
      %v1365 = vsel %vm1358, %v1363, %v1364
      %v1366 = vrot.slane %v1309, 5
      %v1367 = vrot.slane %v1366, 4
      %v1368 = vrot.slane %v265, 5
      %v1369 = vsel %vm1358, %v1367, %v1368
      %v1370 = vrot.slane %v1368, 4
      %v1371 = vrot.slane %v311, 5
      %v1372 = vsel %vm1358, %v1370, %v1371
      %v1373 = vrot.slane %v1310, 5
      %v1374 = vrot.slane %v1373, 4
      %v1375 = vrot.slane %v267, 5
      %v1376 = vsel %vm1358, %v1374, %v1375
      %v1377 = vrot.slane %v1375, 4
      %v1378 = vrot.slane %v312, 5
      %v1379 = vsel %vm1358, %v1377, %v1378
      %v1380 = vrot.slane %v1311, 5
      %v1381 = vrot.slane %v1380, 4
      %v1382 = vrot.slane %v269, 5
      %v1383 = vsel %vm1358, %v1381, %v1382
      %v1384 = vrot.slane %v1382, 4
      %v1385 = vrot.slane %v313, 5
      %v1386 = vsel %vm1358, %v1384, %v1385
      %v1387 = vrot.slane %v1312, 5
      %v1388 = vrot.slane %v1387, 4
      %v1389 = vrot.slane %v271, 5
      %v1390 = vsel %vm1358, %v1388, %v1389
      %v1391 = vrot.slane %v1389, 4
      %v1392 = vrot.slane %v314, 5
      %v1393 = vsel %vm1358, %v1391, %v1392
      %v1394 = vrot.slane %v1313, 5
      %v1395 = vrot.slane %v1394, 4
      %v1396 = vrot.slane %v273, 5
      %v1397 = vsel %vm1358, %v1395, %v1396
      %v1398 = vrot.slane %v1396, 4
      %v1399 = vrot.slane %v315, 5
      %v1400 = vsel %vm1358, %v1398, %v1399
      %v1401 = vrot.slane %v1314, 5
      %v1402 = vrot.slane %v1401, 4
      %v1403 = vrot.slane %v275, 5
      %v1404 = vsel %vm1358, %v1402, %v1403
      %v1405 = vrot.slane %v1403, 4
      %v1406 = vrot.slane %v316, 5
      %v1407 = vsel %vm1358, %v1405, %v1406
      %v1408 = vrot.slane %v1315, 5
      %v1409 = vrot.slane %v1408, 4
      %v1410 = vrot.slane %v277, 5
      %v1411 = vsel %vm1358, %v1409, %v1410
      %v1412 = vrot.slane %v1410, 4
      %v1413 = vrot.slane %v317, 5
      %v1414 = vsel %vm1358, %v1412, %v1413
      %v1415 = vrot.slane %v1316, 5
      %v1416 = vrot.slane %v1415, 4
      %v1417 = vrot.slane %v279, 5
      %v1418 = vsel %vm1358, %v1416, %v1417
      %v1419 = vrot.slane %v1417, 4
      %v1420 = vrot.slane %v318, 5
      %v1421 = vsel %vm1358, %v1419, %v1420
      %v1422 = vrot.slane %v1317, 5
      %v1423 = vrot.slane %v1422, 4
      %v1424 = vrot.slane %v281, 5
      %v1425 = vsel %vm1358, %v1423, %v1424
      %v1426 = vrot.slane %v1424, 4
      %v1427 = vrot.slane %v319, 5
      %v1428 = vsel %vm1358, %v1426, %v1427
      %v1429 = vrot.slane %v1318, 5
      %v1430 = vrot.slane %v1429, 4
      %v1431 = vrot.slane %v283, 5
      %v1432 = vsel %vm1358, %v1430, %v1431
      %v1433 = vrot.slane %v1431, 4
      %v1434 = vrot.slane %v320, 5
      %v1435 = vsel %vm1358, %v1433, %v1434
      %v1436 = vrot.slane %v1319, 5
      %v1437 = vrot.slane %v1436, 4
      %v1438 = vrot.slane %v285, 5
      %v1439 = vsel %vm1358, %v1437, %v1438
      %v1440 = vrot.slane %v1438, 4
      %v1441 = vrot.slane %v321, 5
      %v1442 = vsel %vm1358, %v1440, %v1441
      %v1443 = vrot.slane %v1320, 5
      %v1444 = vrot.slane %v1443, 4
      %v1445 = vrot.slane %v287, 5
      %v1446 = vsel %vm1358, %v1444, %v1445
      %v1447 = vrot.slane %v1445, 4
      %v1448 = vrot.slane %v322, 5
      %v1449 = vsel %vm1358, %v1447, %v1448
      %v1450 = vrot.slane %v1321, 5
      %v1451 = vrot.slane %v1450, 4
      %v1452 = vrot.slane %v289, 5
      %v1453 = vsel %vm1358, %v1451, %v1452
      %v1454 = vrot.slane %v1452, 4
      %v1455 = vrot.slane %v323, 5
      %v1456 = vsel %vm1358, %v1454, %v1455
      %v1457 = vrot.slane %v1322, 5
      %v1458 = vrot.slane %v1457, 4
      %v1459 = vrot.slane %v291, 5
      %v1460 = vsel %vm1358, %v1458, %v1459
      %v1461 = vrot.slane %v1459, 4
      %v1462 = vrot.slane %v324, 5
      %v1463 = vsel %vm1358, %v1461, %v1462
      %v1464 = vrot.slane %v1323, 5
      %v1465 = vrot.slane %v1464, 4
      %v1466 = vrot.slane %v293, 5
      %v1467 = vsel %vm1358, %v1465, %v1466
      %v1468 = vrot.slane %v1466, 4
      %v1469 = vrot.slane %v325, 5
      %v1470 = vsel %vm1358, %v1468, %v1469
      %s1471 = scalar_lea.vmem %s1, 128
      %v1472 = vld [vmem:[%s1471] sm:$0xf]
      %v1473 = vld [vmem:[%s1471 + $0x4] sm:$0xf]
      %v1474 = vld [vmem:[%s1471 + $0x8] sm:$0xf]
      %v1475 = vld [vmem:[%s1471 + $0xc] sm:$0xf]
      %v1476 = vld [vmem:[%s1471 + $0x10] sm:$0xf]
      %v1477 = vld [vmem:[%s1471 + $0x14] sm:$0xf]
      %v1478 = vld [vmem:[%s1471 + $0x18] sm:$0xf]
      %v1479 = vld [vmem:[%s1471 + $0x1c] sm:$0xf]
      %v1480 = vld [vmem:[%s1471 + $0x20] sm:$0xf]
      %v1481 = vld [vmem:[%s1471 + $0x24] sm:$0xf]
      %v1482 = vld [vmem:[%s1471 + $0x28] sm:$0xf]
      %v1483 = vld [vmem:[%s1471 + $0x2c] sm:$0xf]
      %v1484 = vld [vmem:[%s1471 + $0x30] sm:$0xf]
      %v1485 = vld [vmem:[%s1471 + $0x34] sm:$0xf]
      %v1486 = vld [vmem:[%s1471 + $0x38] sm:$0xf]
      %v1487 = vld [vmem:[%s1471 + $0x3c] sm:$0xf]
      %v1488 = vunpack.c.l.b16 %v1362
      %v1489 = vunpack.c.l.b16 %v1365
      %v1490 = vunpack.c.l.b16 %v1369
      %v1491 = vunpack.c.l.b16 %v1372
      %v1492 = vunpack.c.l.b16 %v1376
      %v1493 = vunpack.c.l.b16 %v1379
      %v1494 = vunpack.c.l.b16 %v1383
      %v1495 = vunpack.c.l.b16 %v1386
      %v1496 = vunpack.c.l.b16 %v1390
      %v1497 = vunpack.c.l.b16 %v1393
      %v1498 = vunpack.c.l.b16 %v1397
      %v1499 = vunpack.c.l.b16 %v1400
      %v1500 = vunpack.c.l.b16 %v1404
      %v1501 = vunpack.c.l.b16 %v1407
      %v1502 = vunpack.c.l.b16 %v1411
      %v1503 = vunpack.c.l.b16 %v1414
      %v1504 = vunpack.c.l.b16 %v1418
      %v1505 = vunpack.c.l.b16 %v1421
      %v1506 = vunpack.c.l.b16 %v1425
      %v1507 = vunpack.c.l.b16 %v1428
      %v1508 = vunpack.c.l.b16 %v1432
      %v1509 = vunpack.c.l.b16 %v1435
      %v1510 = vunpack.c.l.b16 %v1439
      %v1511 = vunpack.c.l.b16 %v1442
      %v1512 = vunpack.c.l.b16 %v1446
      %v1513 = vunpack.c.l.b16 %v1449
      %v1514 = vunpack.c.l.b16 %v1453
      %v1515 = vunpack.c.l.b16 %v1456
      %v1516 = vunpack.c.l.b16 %v1460
      %v1517 = vunpack.c.l.b16 %v1463
      %v1518 = vunpack.c.l.b16 %v1467
      %v1519 = vunpack.c.l.b16 %v1470
      %v1520 = vpack.c.b16 %v1489, %v1488
      %v1521 = vpack.c.b16 %v1491, %v1490
      %v1522 = vpack.c.b16 %v1493, %v1492
      %v1523 = vpack.c.b16 %v1495, %v1494
      %v1524 = vpack.c.b16 %v1497, %v1496
      %v1525 = vpack.c.b16 %v1499, %v1498
      %v1526 = vpack.c.b16 %v1501, %v1500
      %v1527 = vpack.c.b16 %v1503, %v1502
      %v1528 = vpack.c.b16 %v1505, %v1504
      %v1529 = vpack.c.b16 %v1507, %v1506
      %v1530 = vpack.c.b16 %v1509, %v1508
      %v1531 = vpack.c.b16 %v1511, %v1510
      %v1532 = vpack.c.b16 %v1513, %v1512
      %v1533 = vpack.c.b16 %v1515, %v1514
      %v1534 = vpack.c.b16 %v1517, %v1516
      %v1535 = vpack.c.b16 %v1519, %v1518
      %v1568 = vunpack.c.l.b16 %v1472
      %v1569 = vunpack.c.l.b16 %v1473
      %v1570 = vunpack.c.l.b16 %v1474
      %v1571 = vunpack.c.l.b16 %v1475
      %v1572 = vunpack.c.l.b16 %v1476
      %v1573 = vunpack.c.l.b16 %v1477
      %v1574 = vunpack.c.l.b16 %v1478
      %v1575 = vunpack.c.l.b16 %v1479
      %v1576 = vunpack.c.l.b16 %v1480
      %v1577 = vunpack.c.l.b16 %v1481
      %v1578 = vunpack.c.l.b16 %v1482
      %v1579 = vunpack.c.l.b16 %v1483
      %v1580 = vunpack.c.l.b16 %v1484
      %v1581 = vunpack.c.l.b16 %v1485
      %v1582 = vunpack.c.l.b16 %v1486
      %v1583 = vunpack.c.l.b16 %v1487
      %v1584 = vpack.c.b16 %v1569, %v1568
      %v1585 = vpack.c.b16 %v1571, %v1570
      %v1586 = vpack.c.b16 %v1573, %v1572
      %v1587 = vpack.c.b16 %v1575, %v1574
      %v1588 = vpack.c.b16 %v1577, %v1576
      %v1589 = vpack.c.b16 %v1579, %v1578
      %v1590 = vpack.c.b16 %v1581, %v1580
      %v1591 = vpack.c.b16 %v1583, %v1582
      %1600 = vmatprep.subr.bf16.mxu0 0
      %1601 = vmatpush1.bf16.msra.mxu0 %v1591
      %1602 = vmatprep.subr.bf16.mxu0 0
      %1603 = vmatpush1.bf16.msra.mxu0 %v1590
      %1604 = vmatprep.subr.bf16.mxu0 0
      %1605 = vmatpush1.bf16.msra.mxu0 %v1589
      %1606 = vmatprep.subr.bf16.mxu0 0
      %1607 = vmatpush1.bf16.msra.mxu0 %v1588
      %1608 = vmatprep.subr.bf16.mxu0 0
      %1609 = vmatpush1.bf16.msra.mxu0 %v1587
      %1610 = vmatprep.subr.bf16.mxu0 0
      %1611 = vmatpush1.bf16.msra.mxu0 %v1586
      %1612 = vmatprep.subr.bf16.mxu0 0
      %1613 = vmatpush1.bf16.msra.mxu0 %v1585
      %1614 = vmatprep.subr.bf16.mxu0 0
      %1615 = vmatpush1.bf16.msra.mxu0 %v1584
      %1616 = vmatprep.subr.bf16.mxu0 0
      %1617 = vmatpush2.bf16.msra.mxu0 0
      %1618 = vmatprep.subr.bf16.mxu0 0
      %1619 = vmatpush2.bf16.msra.mxu0 0
      %1620 = vmatprep.subr.bf16.mxu0 0
      %1621 = vmatpush2.bf16.msra.mxu0 0
      %1622 = vmatprep.subr.bf16.mxu0 0
      %1623 = vmatpush2.bf16.msra.mxu0 0
      %1624 = vmatprep.subr.bf16.mxu0 0
      %1625 = vmatpush2.bf16.msra.mxu0 0
      %1626 = vmatprep.subr.bf16.mxu0 0
      %1627 = vmatpush2.bf16.msra.mxu0 0
      %1628 = vmatprep.subr.bf16.mxu0 0
      %1629 = vmatpush2.bf16.msra.mxu0 0
      %1630 = vmatprep.subr.bf16.mxu0 0
      %1631 = vmatpush2.bf16.msra.mxu0 0
      %1632 = vmatprep.mubr.bf16.mxu0 0
      %1633 = vmatmul.mubr.bf16.gmra.mxu0 %v1520
      %v1634 = vpop.f32.mrf.mxu0
      %v1635 = vadd.f32 0.0, %v1634
      %v1636 = vpop.f32.mrf.mxu0
      %v1637 = vpop.f32.mrf.mxu0
      %v1638 = vadd.f32 0.0, %v1637
      %v1639 = vpop.f32.mrf.mxu0
      %1640 = vmatprep.mubr.bf16.mxu0 0
      %1641 = vmatmul.mubr.bf16.gmra.mxu0 %v1521
      %v1642 = vpop.f32.mrf.mxu0
      %v1643 = vadd.f32 0.0, %v1642
      %v1644 = vpop.f32.mrf.mxu0
      %v1645 = vpop.f32.mrf.mxu0
      %v1646 = vadd.f32 0.0, %v1645
      %v1647 = vpop.f32.mrf.mxu0
      %1648 = vmatprep.mubr.bf16.mxu0 0
      %1649 = vmatmul.mubr.bf16.gmra.mxu0 %v1522
      %v1650 = vpop.f32.mrf.mxu0
      %v1651 = vadd.f32 0.0, %v1650
      %v1652 = vpop.f32.mrf.mxu0
      %v1653 = vpop.f32.mrf.mxu0
      %v1654 = vadd.f32 0.0, %v1653
      %v1655 = vpop.f32.mrf.mxu0
      %1656 = vmatprep.mubr.bf16.mxu0 0
      %1657 = vmatmul.mubr.bf16.gmra.mxu0 %v1523
      %v1658 = vpop.f32.mrf.mxu0
      %v1659 = vadd.f32 0.0, %v1658
      %v1660 = vpop.f32.mrf.mxu0
      %v1661 = vpop.f32.mrf.mxu0
      %v1662 = vadd.f32 0.0, %v1661
      %v1663 = vpop.f32.mrf.mxu0
      %1664 = vmatprep.mubr.bf16.mxu0 0
      %1665 = vmatmul.mubr.bf16.gmra.mxu0 %v1524
      %v1666 = vpop.f32.mrf.mxu0
      %v1667 = vadd.f32 0.0, %v1666
      %v1668 = vpop.f32.mrf.mxu0
      %v1669 = vpop.f32.mrf.mxu0
      %v1670 = vadd.f32 0.0, %v1669
      %v1671 = vpop.f32.mrf.mxu0
      %1672 = vmatprep.mubr.bf16.mxu0 0
      %1673 = vmatmul.mubr.bf16.gmra.mxu0 %v1525
      %v1674 = vpop.f32.mrf.mxu0
      %v1675 = vadd.f32 0.0, %v1674
      %v1676 = vpop.f32.mrf.mxu0
      %v1677 = vpop.f32.mrf.mxu0
      %v1678 = vadd.f32 0.0, %v1677
      %v1679 = vpop.f32.mrf.mxu0
      %1680 = vmatprep.mubr.bf16.mxu0 0
      %1681 = vmatmul.mubr.bf16.gmra.mxu0 %v1526
      %v1682 = vpop.f32.mrf.mxu0
      %v1683 = vadd.f32 0.0, %v1682
      %v1684 = vpop.f32.mrf.mxu0
      %v1685 = vpop.f32.mrf.mxu0
      %v1686 = vadd.f32 0.0, %v1685
      %v1687 = vpop.f32.mrf.mxu0
      %1688 = vmatprep.mubr.bf16.mxu0 0
      %1689 = vmatmul.mubr.bf16.gmra.mxu0 %v1527
      %v1690 = vpop.f32.mrf.mxu0
      %v1691 = vadd.f32 0.0, %v1690
      %v1692 = vpop.f32.mrf.mxu0
      %v1693 = vpop.f32.mrf.mxu0
      %v1694 = vadd.f32 0.0, %v1693
      %v1695 = vpop.f32.mrf.mxu0
      %1696 = vmatprep.mubr.bf16.mxu0 0
      %1697 = vmatmul.mubr.bf16.gmra.mxu0 %v1528
      %v1698 = vpop.f32.mrf.mxu0
      %v1699 = vadd.f32 0.0, %v1698
      %v1700 = vpop.f32.mrf.mxu0
      %v1701 = vpop.f32.mrf.mxu0
      %v1702 = vadd.f32 0.0, %v1701
      %v1703 = vpop.f32.mrf.mxu0
      %1704 = vmatprep.mubr.bf16.mxu0 0
      %1705 = vmatmul.mubr.bf16.gmra.mxu0 %v1529
      %v1706 = vpop.f32.mrf.mxu0
      %v1707 = vadd.f32 0.0, %v1706
      %v1708 = vpop.f32.mrf.mxu0
      %v1709 = vpop.f32.mrf.mxu0
      %v1710 = vadd.f32 0.0, %v1709
      %v1711 = vpop.f32.mrf.mxu0
      %1712 = vmatprep.mubr.bf16.mxu0 0
      %1713 = vmatmul.mubr.bf16.gmra.mxu0 %v1530
      %v1714 = vpop.f32.mrf.mxu0
      %v1715 = vadd.f32 0.0, %v1714
      %v1716 = vpop.f32.mrf.mxu0
      %v1717 = vpop.f32.mrf.mxu0
      %v1718 = vadd.f32 0.0, %v1717
      %v1719 = vpop.f32.mrf.mxu0
      %1720 = vmatprep.mubr.bf16.mxu0 0
      %1721 = vmatmul.mubr.bf16.gmra.mxu0 %v1531
      %v1722 = vpop.f32.mrf.mxu0
      %v1723 = vadd.f32 0.0, %v1722
      %v1724 = vpop.f32.mrf.mxu0
      %v1725 = vpop.f32.mrf.mxu0
      %v1726 = vadd.f32 0.0, %v1725
      %v1727 = vpop.f32.mrf.mxu0
      %1728 = vmatprep.mubr.bf16.mxu0 0
      %1729 = vmatmul.mubr.bf16.gmra.mxu0 %v1532
      %v1730 = vpop.f32.mrf.mxu0
      %v1731 = vadd.f32 0.0, %v1730
      %v1732 = vpop.f32.mrf.mxu0
      %v1733 = vpop.f32.mrf.mxu0
      %v1734 = vadd.f32 0.0, %v1733
      %v1735 = vpop.f32.mrf.mxu0
      %1736 = vmatprep.mubr.bf16.mxu0 0
      %1737 = vmatmul.mubr.bf16.gmra.mxu0 %v1533
      %v1738 = vpop.f32.mrf.mxu0
      %v1739 = vadd.f32 0.0, %v1738
      %v1740 = vpop.f32.mrf.mxu0
      %v1741 = vpop.f32.mrf.mxu0
      %v1742 = vadd.f32 0.0, %v1741
      %v1743 = vpop.f32.mrf.mxu0
      %1744 = vmatprep.mubr.bf16.mxu0 0
      %1745 = vmatmul.mubr.bf16.gmra.mxu0 %v1534
      %v1746 = vpop.f32.mrf.mxu0
      %v1747 = vadd.f32 0.0, %v1746
      %v1748 = vpop.f32.mrf.mxu0
      %v1749 = vpop.f32.mrf.mxu0
      %v1750 = vadd.f32 0.0, %v1749
      %v1751 = vpop.f32.mrf.mxu0
      %1752 = vmatprep.mubr.bf16.mxu0 0
      %1753 = vmatmul.mubr.bf16.gmra.mxu0 %v1535
      %v1754 = vpop.f32.mrf.mxu0
      %v1755 = vadd.f32 0.0, %v1754
      %v1756 = vpop.f32.mrf.mxu0
      %v1757 = vpop.f32.mrf.mxu0
      %v1758 = vadd.f32 0.0, %v1757
      %v1759 = vpop.f32.mrf.mxu0
      %1760 = vdwg.mxu0
      %v1761 = vadd.f32 %v1182, %v1635
      %v1762 = vadd.f32 %v1185, %v1638
      %v1763 = vadd.f32 %v1190, %v1643
      %v1764 = vadd.f32 %v1193, %v1646
      %v1765 = vadd.f32 %v1198, %v1651
      %v1766 = vadd.f32 %v1201, %v1654
      %v1767 = vadd.f32 %v1206, %v1659
      %v1768 = vadd.f32 %v1209, %v1662
      %v1769 = vadd.f32 %v1214, %v1667
      %v1770 = vadd.f32 %v1217, %v1670
      %v1771 = vadd.f32 %v1222, %v1675
      %v1772 = vadd.f32 %v1225, %v1678
      %v1773 = vadd.f32 %v1230, %v1683
      %v1774 = vadd.f32 %v1233, %v1686
      %v1775 = vadd.f32 %v1238, %v1691
      %v1776 = vadd.f32 %v1241, %v1694
      %v1777 = vadd.f32 %v1246, %v1699
      %v1778 = vadd.f32 %v1249, %v1702
      %v1779 = vadd.f32 %v1254, %v1707
      %v1780 = vadd.f32 %v1257, %v1710
      %v1781 = vadd.f32 %v1262, %v1715
      %v1782 = vadd.f32 %v1265, %v1718
      %v1783 = vadd.f32 %v1270, %v1723
      %v1784 = vadd.f32 %v1273, %v1726
      %v1785 = vadd.f32 %v1278, %v1731
      %v1786 = vadd.f32 %v1281, %v1734
      %v1787 = vadd.f32 %v1286, %v1739
      %v1788 = vadd.f32 %v1289, %v1742
      %v1789 = vadd.f32 %v1294, %v1747
      %v1790 = vadd.f32 %v1297, %v1750
      %v1791 = vadd.f32 %v1302, %v1755
      %v1792 = vadd.f32 %v1305, %v1758
      %s1793 = scalar_lea.vmem %s239, 12
      %v1794 = vld [vmem:[%s1793] sm:$0xf]
      %v1795 = vld [vmem:[%s1793 + $0x4] sm:$0xf]
      %v1796 = vld [vmem:[%s1793 + $0xc] sm:$0xf]
      %v1797 = vld [vmem:[%s1793 + $0x10] sm:$0xf]
      %v1798 = vld [vmem:[%s1793 + $0x18] sm:$0xf]
      %v1799 = vld [vmem:[%s1793 + $0x1c] sm:$0xf]
      %v1800 = vld [vmem:[%s1793 + $0x24] sm:$0xf]
      %v1801 = vld [vmem:[%s1793 + $0x28] sm:$0xf]
      %v1802 = vld [vmem:[%s1793 + $0x30] sm:$0xf]
      %v1803 = vld [vmem:[%s1793 + $0x34] sm:$0xf]
      %v1804 = vld [vmem:[%s1793 + $0x3c] sm:$0xf]
      %v1805 = vld [vmem:[%s1793 + $0x40] sm:$0xf]
      %v1806 = vld [vmem:[%s1793 + $0x48] sm:$0xf]
      %v1807 = vld [vmem:[%s1793 + $0x4c] sm:$0xf]
      %v1808 = vld [vmem:[%s1793 + $0x54] sm:$0xf]
      %v1809 = vld [vmem:[%s1793 + $0x58] sm:$0xf]
      %v1810 = vld [vmem:[%s1793 + $0x60] sm:$0xf]
      %v1811 = vld [vmem:[%s1793 + $0x64] sm:$0xf]
      %v1812 = vld [vmem:[%s1793 + $0x6c] sm:$0xf]
      %v1813 = vld [vmem:[%s1793 + $0x70] sm:$0xf]
      %v1814 = vld [vmem:[%s1793 + $0x78] sm:$0xf]
      %v1815 = vld [vmem:[%s1793 + $0x7c] sm:$0xf]
      %v1816 = vld [vmem:[%s1793 + $0x84] sm:$0xf]
      %v1817 = vld [vmem:[%s1793 + $0x88] sm:$0xf]
      %v1818 = vld [vmem:[%s1793 + $0x90] sm:$0xf]
      %v1819 = vld [vmem:[%s1793 + $0x94] sm:$0xf]
      %v1820 = vld [vmem:[%s1793 + $0x9c] sm:$0xf]
      %v1821 = vld [vmem:[%s1793 + $0xa0] sm:$0xf]
      %v1822 = vld [vmem:[%s1793 + $0xa8] sm:$0xf]
      %v1823 = vld [vmem:[%s1793 + $0xac] sm:$0xf]
      %v1824 = vld [vmem:[%s1793 + $0xb4] sm:$0xf]
      %v1825 = vld [vmem:[%s1793 + $0xb8] sm:$0xf]
      %s1826 = scalar_lea.vmem %s1, 192
      %v1827 = vld [vmem:[%s1826] sm:$0xf]
      %v1828 = vld [vmem:[%s1826 + $0x4] sm:$0xf]
      %v1829 = vld [vmem:[%s1826 + $0x8] sm:$0xf]
      %v1830 = vld [vmem:[%s1826 + $0xc] sm:$0xf]
      %v1831 = vld [vmem:[%s1826 + $0x10] sm:$0xf]
      %v1832 = vld [vmem:[%s1826 + $0x14] sm:$0xf]
      %v1833 = vld [vmem:[%s1826 + $0x18] sm:$0xf]
      %v1834 = vld [vmem:[%s1826 + $0x1c] sm:$0xf]
      %v1835 = vld [vmem:[%s1826 + $0x20] sm:$0xf]
      %v1836 = vld [vmem:[%s1826 + $0x24] sm:$0xf]
      %v1837 = vld [vmem:[%s1826 + $0x28] sm:$0xf]
      %v1838 = vld [vmem:[%s1826 + $0x2c] sm:$0xf]
      %v1839 = vld [vmem:[%s1826 + $0x30] sm:$0xf]
      %v1840 = vld [vmem:[%s1826 + $0x34] sm:$0xf]
      %v1841 = vld [vmem:[%s1826 + $0x38] sm:$0xf]
      %v1842 = vld [vmem:[%s1826 + $0x3c] sm:$0xf]
      %v1875 = vunpack.c.l.b16 %v1794
      %v1876 = vunpack.c.l.b16 %v1795
      %v1877 = vunpack.c.l.b16 %v1796
      %v1878 = vunpack.c.l.b16 %v1797
      %v1879 = vunpack.c.l.b16 %v1798
      %v1880 = vunpack.c.l.b16 %v1799
      %v1881 = vunpack.c.l.b16 %v1800
      %v1882 = vunpack.c.l.b16 %v1801
      %v1883 = vunpack.c.l.b16 %v1802
      %v1884 = vunpack.c.l.b16 %v1803
      %v1885 = vunpack.c.l.b16 %v1804
      %v1886 = vunpack.c.l.b16 %v1805
      %v1887 = vunpack.c.l.b16 %v1806
      %v1888 = vunpack.c.l.b16 %v1807
      %v1889 = vunpack.c.l.b16 %v1808
      %v1890 = vunpack.c.l.b16 %v1809
      %v1891 = vunpack.c.l.b16 %v1810
      %v1892 = vunpack.c.l.b16 %v1811
      %v1893 = vunpack.c.l.b16 %v1812
      %v1894 = vunpack.c.l.b16 %v1813
      %v1895 = vunpack.c.l.b16 %v1814
      %v1896 = vunpack.c.l.b16 %v1815
      %v1897 = vunpack.c.l.b16 %v1816
      %v1898 = vunpack.c.l.b16 %v1817
      %v1899 = vunpack.c.l.b16 %v1818
      %v1900 = vunpack.c.l.b16 %v1819
      %v1901 = vunpack.c.l.b16 %v1820
      %v1902 = vunpack.c.l.b16 %v1821
      %v1903 = vunpack.c.l.b16 %v1822
      %v1904 = vunpack.c.l.b16 %v1823
      %v1905 = vunpack.c.l.b16 %v1824
      %v1906 = vunpack.c.l.b16 %v1825
      %v1907 = vpack.c.b16 %v1876, %v1875
      %v1908 = vpack.c.b16 %v1878, %v1877
      %v1909 = vpack.c.b16 %v1880, %v1879
      %v1910 = vpack.c.b16 %v1882, %v1881
      %v1911 = vpack.c.b16 %v1884, %v1883
      %v1912 = vpack.c.b16 %v1886, %v1885
      %v1913 = vpack.c.b16 %v1888, %v1887
      %v1914 = vpack.c.b16 %v1890, %v1889
      %v1915 = vpack.c.b16 %v1892, %v1891
      %v1916 = vpack.c.b16 %v1894, %v1893
      %v1917 = vpack.c.b16 %v1896, %v1895
      %v1918 = vpack.c.b16 %v1898, %v1897
      %v1919 = vpack.c.b16 %v1900, %v1899
      %v1920 = vpack.c.b16 %v1902, %v1901
      %v1921 = vpack.c.b16 %v1904, %v1903
      %v1922 = vpack.c.b16 %v1906, %v1905
      %v1955 = vunpack.c.l.b16 %v1827
      %v1956 = vunpack.c.l.b16 %v1828
      %v1957 = vunpack.c.l.b16 %v1829
      %v1958 = vunpack.c.l.b16 %v1830
      %v1959 = vunpack.c.l.b16 %v1831
      %v1960 = vunpack.c.l.b16 %v1832
      %v1961 = vunpack.c.l.b16 %v1833
      %v1962 = vunpack.c.l.b16 %v1834
      %v1963 = vunpack.c.l.b16 %v1835
      %v1964 = vunpack.c.l.b16 %v1836
      %v1965 = vunpack.c.l.b16 %v1837
      %v1966 = vunpack.c.l.b16 %v1838
      %v1967 = vunpack.c.l.b16 %v1839
      %v1968 = vunpack.c.l.b16 %v1840
      %v1969 = vunpack.c.l.b16 %v1841
      %v1970 = vunpack.c.l.b16 %v1842
      %v1971 = vpack.c.b16 %v1956, %v1955
      %v1972 = vpack.c.b16 %v1958, %v1957
      %v1973 = vpack.c.b16 %v1960, %v1959
      %v1974 = vpack.c.b16 %v1962, %v1961
      %v1975 = vpack.c.b16 %v1964, %v1963
      %v1976 = vpack.c.b16 %v1966, %v1965
      %v1977 = vpack.c.b16 %v1968, %v1967
      %v1978 = vpack.c.b16 %v1970, %v1969
      %1987 = vmatprep.subr.bf16.mxu0 0
      %1988 = vmatpush1.bf16.msra.mxu0 %v1978
      %1989 = vmatprep.subr.bf16.mxu0 0
      %1990 = vmatpush1.bf16.msra.mxu0 %v1977
      %1991 = vmatprep.subr.bf16.mxu0 0
      %1992 = vmatpush1.bf16.msra.mxu0 %v1976
      %1993 = vmatprep.subr.bf16.mxu0 0
      %1994 = vmatpush1.bf16.msra.mxu0 %v1975
      %1995 = vmatprep.subr.bf16.mxu0 0
      %1996 = vmatpush1.bf16.msra.mxu0 %v1974
      %1997 = vmatprep.subr.bf16.mxu0 0
      %1998 = vmatpush1.bf16.msra.mxu0 %v1973
      %1999 = vmatprep.subr.bf16.mxu0 0
      %2000 = vmatpush1.bf16.msra.mxu0 %v1972
      %2001 = vmatprep.subr.bf16.mxu0 0
      %2002 = vmatpush1.bf16.msra.mxu0 %v1971
      %2003 = vmatprep.subr.bf16.mxu0 0
      %2004 = vmatpush2.bf16.msra.mxu0 0
      %2005 = vmatprep.subr.bf16.mxu0 0
      %2006 = vmatpush2.bf16.msra.mxu0 0
      %2007 = vmatprep.subr.bf16.mxu0 0
      %2008 = vmatpush2.bf16.msra.mxu0 0
      %2009 = vmatprep.subr.bf16.mxu0 0
      %2010 = vmatpush2.bf16.msra.mxu0 0
      %2011 = vmatprep.subr.bf16.mxu0 0
      %2012 = vmatpush2.bf16.msra.mxu0 0
      %2013 = vmatprep.subr.bf16.mxu0 0
      %2014 = vmatpush2.bf16.msra.mxu0 0
      %2015 = vmatprep.subr.bf16.mxu0 0
      %2016 = vmatpush2.bf16.msra.mxu0 0
      %2017 = vmatprep.subr.bf16.mxu0 0
      %2018 = vmatpush2.bf16.msra.mxu0 0
      %2019 = vmatprep.mubr.bf16.mxu0 0
      %2020 = vmatmul.mubr.bf16.gmra.mxu0 %v1907
      %v2021 = vpop.f32.mrf.mxu0
      %v2022 = vadd.f32 0.0, %v2021
      %v2023 = vpop.f32.mrf.mxu0
      %v2024 = vpop.f32.mrf.mxu0
      %v2025 = vadd.f32 0.0, %v2024
      %v2026 = vpop.f32.mrf.mxu0
      %2027 = vmatprep.mubr.bf16.mxu0 0
      %2028 = vmatmul.mubr.bf16.gmra.mxu0 %v1908
      %v2029 = vpop.f32.mrf.mxu0
      %v2030 = vadd.f32 0.0, %v2029
      %v2031 = vpop.f32.mrf.mxu0
      %v2032 = vpop.f32.mrf.mxu0
      %v2033 = vadd.f32 0.0, %v2032
      %v2034 = vpop.f32.mrf.mxu0
      %2035 = vmatprep.mubr.bf16.mxu0 0
      %2036 = vmatmul.mubr.bf16.gmra.mxu0 %v1909
      %v2037 = vpop.f32.mrf.mxu0
      %v2038 = vadd.f32 0.0, %v2037
      %v2039 = vpop.f32.mrf.mxu0
      %v2040 = vpop.f32.mrf.mxu0
      %v2041 = vadd.f32 0.0, %v2040
      %v2042 = vpop.f32.mrf.mxu0
      %2043 = vmatprep.mubr.bf16.mxu0 0
      %2044 = vmatmul.mubr.bf16.gmra.mxu0 %v1910
      %v2045 = vpop.f32.mrf.mxu0
      %v2046 = vadd.f32 0.0, %v2045
      %v2047 = vpop.f32.mrf.mxu0
      %v2048 = vpop.f32.mrf.mxu0
      %v2049 = vadd.f32 0.0, %v2048
      %v2050 = vpop.f32.mrf.mxu0
      %2051 = vmatprep.mubr.bf16.mxu0 0
      %2052 = vmatmul.mubr.bf16.gmra.mxu0 %v1911
      %v2053 = vpop.f32.mrf.mxu0
      %v2054 = vadd.f32 0.0, %v2053
      %v2055 = vpop.f32.mrf.mxu0
      %v2056 = vpop.f32.mrf.mxu0
      %v2057 = vadd.f32 0.0, %v2056
      %v2058 = vpop.f32.mrf.mxu0
      %2059 = vmatprep.mubr.bf16.mxu0 0
      %2060 = vmatmul.mubr.bf16.gmra.mxu0 %v1912
      %v2061 = vpop.f32.mrf.mxu0
      %v2062 = vadd.f32 0.0, %v2061
      %v2063 = vpop.f32.mrf.mxu0
      %v2064 = vpop.f32.mrf.mxu0
      %v2065 = vadd.f32 0.0, %v2064
      %v2066 = vpop.f32.mrf.mxu0
      %2067 = vmatprep.mubr.bf16.mxu0 0
      %2068 = vmatmul.mubr.bf16.gmra.mxu0 %v1913
      %v2069 = vpop.f32.mrf.mxu0
      %v2070 = vadd.f32 0.0, %v2069
      %v2071 = vpop.f32.mrf.mxu0
      %v2072 = vpop.f32.mrf.mxu0
      %v2073 = vadd.f32 0.0, %v2072
      %v2074 = vpop.f32.mrf.mxu0
      %2075 = vmatprep.mubr.bf16.mxu0 0
      %2076 = vmatmul.mubr.bf16.gmra.mxu0 %v1914
      %v2077 = vpop.f32.mrf.mxu0
      %v2078 = vadd.f32 0.0, %v2077
      %v2079 = vpop.f32.mrf.mxu0
      %v2080 = vpop.f32.mrf.mxu0
      %v2081 = vadd.f32 0.0, %v2080
      %v2082 = vpop.f32.mrf.mxu0
      %2083 = vmatprep.mubr.bf16.mxu0 0
      %2084 = vmatmul.mubr.bf16.gmra.mxu0 %v1915
      %v2085 = vpop.f32.mrf.mxu0
      %v2086 = vadd.f32 0.0, %v2085
      %v2087 = vpop.f32.mrf.mxu0
      %v2088 = vpop.f32.mrf.mxu0
      %v2089 = vadd.f32 0.0, %v2088
      %v2090 = vpop.f32.mrf.mxu0
      %2091 = vmatprep.mubr.bf16.mxu0 0
      %2092 = vmatmul.mubr.bf16.gmra.mxu0 %v1916
      %v2093 = vpop.f32.mrf.mxu0
      %v2094 = vadd.f32 0.0, %v2093
      %v2095 = vpop.f32.mrf.mxu0
      %v2096 = vpop.f32.mrf.mxu0
      %v2097 = vadd.f32 0.0, %v2096
      %v2098 = vpop.f32.mrf.mxu0
      %2099 = vmatprep.mubr.bf16.mxu0 0
      %2100 = vmatmul.mubr.bf16.gmra.mxu0 %v1917
      %v2101 = vpop.f32.mrf.mxu0
      %v2102 = vadd.f32 0.0, %v2101
      %v2103 = vpop.f32.mrf.mxu0
      %v2104 = vpop.f32.mrf.mxu0
      %v2105 = vadd.f32 0.0, %v2104
      %v2106 = vpop.f32.mrf.mxu0
      %2107 = vmatprep.mubr.bf16.mxu0 0
      %2108 = vmatmul.mubr.bf16.gmra.mxu0 %v1918
      %v2109 = vpop.f32.mrf.mxu0
      %v2110 = vadd.f32 0.0, %v2109
      %v2111 = vpop.f32.mrf.mxu0
      %v2112 = vpop.f32.mrf.mxu0
      %v2113 = vadd.f32 0.0, %v2112
      %v2114 = vpop.f32.mrf.mxu0
      %2115 = vmatprep.mubr.bf16.mxu0 0
      %2116 = vmatmul.mubr.bf16.gmra.mxu0 %v1919
      %v2117 = vpop.f32.mrf.mxu0
      %v2118 = vadd.f32 0.0, %v2117
      %v2119 = vpop.f32.mrf.mxu0
      %v2120 = vpop.f32.mrf.mxu0
      %v2121 = vadd.f32 0.0, %v2120
      %v2122 = vpop.f32.mrf.mxu0
      %2123 = vmatprep.mubr.bf16.mxu0 0
      %2124 = vmatmul.mubr.bf16.gmra.mxu0 %v1920
      %v2125 = vpop.f32.mrf.mxu0
      %v2126 = vadd.f32 0.0, %v2125
      %v2127 = vpop.f32.mrf.mxu0
      %v2128 = vpop.f32.mrf.mxu0
      %v2129 = vadd.f32 0.0, %v2128
      %v2130 = vpop.f32.mrf.mxu0
      %2131 = vmatprep.mubr.bf16.mxu0 0
      %2132 = vmatmul.mubr.bf16.gmra.mxu0 %v1921
      %v2133 = vpop.f32.mrf.mxu0
      %v2134 = vadd.f32 0.0, %v2133
      %v2135 = vpop.f32.mrf.mxu0
      %v2136 = vpop.f32.mrf.mxu0
      %v2137 = vadd.f32 0.0, %v2136
      %v2138 = vpop.f32.mrf.mxu0
      %2139 = vmatprep.mubr.bf16.mxu0 0
      %2140 = vmatmul.mubr.bf16.gmra.mxu0 %v1922
      %v2141 = vpop.f32.mrf.mxu0
      %v2142 = vadd.f32 0.0, %v2141
      %v2143 = vpop.f32.mrf.mxu0
      %v2144 = vpop.f32.mrf.mxu0
      %v2145 = vadd.f32 0.0, %v2144
      %v2146 = vpop.f32.mrf.mxu0
      %2147 = vdwg.mxu0
      %v2148 = vadd.f32 %v1761, %v2022
      %v2149 = vadd.f32 %v1762, %v2025
      %v2150 = vadd.f32 %v1763, %v2030
      %v2151 = vadd.f32 %v1764, %v2033
      %v2152 = vadd.f32 %v1765, %v2038
      %v2153 = vadd.f32 %v1766, %v2041
      %v2154 = vadd.f32 %v1767, %v2046
      %v2155 = vadd.f32 %v1768, %v2049
      %v2156 = vadd.f32 %v1769, %v2054
      %v2157 = vadd.f32 %v1770, %v2057
      %v2158 = vadd.f32 %v1771, %v2062
      %v2159 = vadd.f32 %v1772, %v2065
      %v2160 = vadd.f32 %v1773, %v2070
      %v2161 = vadd.f32 %v1774, %v2073
      %v2162 = vadd.f32 %v1775, %v2078
      %v2163 = vadd.f32 %v1776, %v2081
      %v2164 = vadd.f32 %v1777, %v2086
      %v2165 = vadd.f32 %v1778, %v2089
      %v2166 = vadd.f32 %v1779, %v2094
      %v2167 = vadd.f32 %v1780, %v2097
      %v2168 = vadd.f32 %v1781, %v2102
      %v2169 = vadd.f32 %v1782, %v2105
      %v2170 = vadd.f32 %v1783, %v2110
      %v2171 = vadd.f32 %v1784, %v2113
      %v2172 = vadd.f32 %v1785, %v2118
      %v2173 = vadd.f32 %v1786, %v2121
      %v2174 = vadd.f32 %v1787, %v2126
      %v2175 = vadd.f32 %v1788, %v2129
      %v2176 = vadd.f32 %v1789, %v2134
      %v2177 = vadd.f32 %v1790, %v2137
      %v2178 = vadd.f32 %v1791, %v2142
      %v2179 = vadd.f32 %v1792, %v2145
      %v2180 = vld [vmem:[%s1793] sm:$0xf]
      %v2181 = vld [vmem:[%s1793 + $0x4] sm:$0xf]
      %v2182 = vld [vmem:[%s1793 + $0x8] sm:$0x1]
      %v2183 = vld [vmem:[%s1793 + $0xc] sm:$0xf]
      %v2184 = vld [vmem:[%s1793 + $0x10] sm:$0xf]
      %v2185 = vld [vmem:[%s1793 + $0x14] sm:$0x1]
      %v2186 = vld [vmem:[%s1793 + $0x18] sm:$0xf]
      %v2187 = vld [vmem:[%s1793 + $0x1c] sm:$0xf]
      %v2188 = vld [vmem:[%s1793 + $0x20] sm:$0x1]
      %v2189 = vld [vmem:[%s1793 + $0x24] sm:$0xf]
      %v2190 = vld [vmem:[%s1793 + $0x28] sm:$0xf]
      %v2191 = vld [vmem:[%s1793 + $0x2c] sm:$0x1]
      %v2192 = vld [vmem:[%s1793 + $0x30] sm:$0xf]
      %v2193 = vld [vmem:[%s1793 + $0x34] sm:$0xf]
      %v2194 = vld [vmem:[%s1793 + $0x38] sm:$0x1]
      %v2195 = vld [vmem:[%s1793 + $0x3c] sm:$0xf]
      %v2196 = vld [vmem:[%s1793 + $0x40] sm:$0xf]
      %v2197 = vld [vmem:[%s1793 + $0x44] sm:$0x1]
      %v2198 = vld [vmem:[%s1793 + $0x48] sm:$0xf]
      %v2199 = vld [vmem:[%s1793 + $0x4c] sm:$0xf]
      %v2200 = vld [vmem:[%s1793 + $0x50] sm:$0x1]
      %v2201 = vld [vmem:[%s1793 + $0x54] sm:$0xf]
      %v2202 = vld [vmem:[%s1793 + $0x58] sm:$0xf]
      %v2203 = vld [vmem:[%s1793 + $0x5c] sm:$0x1]
      %v2204 = vld [vmem:[%s1793 + $0x60] sm:$0xf]
      %v2205 = vld [vmem:[%s1793 + $0x64] sm:$0xf]
      %v2206 = vld [vmem:[%s1793 + $0x68] sm:$0x1]
      %v2207 = vld [vmem:[%s1793 + $0x6c] sm:$0xf]
      %v2208 = vld [vmem:[%s1793 + $0x70] sm:$0xf]
      %v2209 = vld [vmem:[%s1793 + $0x74] sm:$0x1]
      %v2210 = vld [vmem:[%s1793 + $0x78] sm:$0xf]
      %v2211 = vld [vmem:[%s1793 + $0x7c] sm:$0xf]
      %v2212 = vld [vmem:[%s1793 + $0x80] sm:$0x1]
      %v2213 = vld [vmem:[%s1793 + $0x84] sm:$0xf]
      %v2214 = vld [vmem:[%s1793 + $0x88] sm:$0xf]
      %v2215 = vld [vmem:[%s1793 + $0x8c] sm:$0x1]
      %v2216 = vld [vmem:[%s1793 + $0x90] sm:$0xf]
      %v2217 = vld [vmem:[%s1793 + $0x94] sm:$0xf]
      %v2218 = vld [vmem:[%s1793 + $0x98] sm:$0x1]
      %v2219 = vld [vmem:[%s1793 + $0x9c] sm:$0xf]
      %v2220 = vld [vmem:[%s1793 + $0xa0] sm:$0xf]
      %v2221 = vld [vmem:[%s1793 + $0xa4] sm:$0x1]
      %v2222 = vld [vmem:[%s1793 + $0xa8] sm:$0xf]
      %v2223 = vld [vmem:[%s1793 + $0xac] sm:$0xf]
      %v2224 = vld [vmem:[%s1793 + $0xb0] sm:$0x1]
      %v2225 = vld [vmem:[%s1793 + $0xb4] sm:$0xf]
      %v2226 = vld [vmem:[%s1793 + $0xb8] sm:$0xf]
      %v2227 = vld [vmem:[%s1793 + $0xbc] sm:$0x1]
      %v2229 = vshrl.u32 %v2180, 16
      %v2231 = vrot.slane %v2229, 4
      %v2232 = vshll.u32 %v2180, 16
      %v2234 = vrot.slane %v2232, 5
      %v2235 = vor.u32 %v2231, %v2234
      %v2236 = vrot.slane %v2235, 4
      %v2238 = vshll.u32 %v2181, 16
      %v2240 = vrot.slane %v2238, 5
      %v2241 = vsel %vm328, %v2236, %v2240
      %v2242 = vshrl.u32 %v2181, 16
      %v2244 = vrot.slane %v2242, 4
      %v2245 = vor.u32 %v2244, %v2240
      %v2246 = vrot.slane %v2245, 4
      %v2248 = vshll.u32 %v2182, 16
      %v2250 = vrot.slane %v2248, 5
      %v2251 = vsel %vm328, %v2246, %v2250
      %v2253 = vshrl.u32 %v2183, 16
      %v2255 = vrot.slane %v2253, 4
      %v2256 = vshll.u32 %v2183, 16
      %v2258 = vrot.slane %v2256, 5
      %v2259 = vor.u32 %v2255, %v2258
      %v2260 = vrot.slane %v2259, 4
      %v2262 = vshll.u32 %v2184, 16
      %v2264 = vrot.slane %v2262, 5
      %v2265 = vsel %vm328, %v2260, %v2264
      %v2266 = vshrl.u32 %v2184, 16
      %v2268 = vrot.slane %v2266, 4
      %v2269 = vor.u32 %v2268, %v2264
      %v2270 = vrot.slane %v2269, 4
      %v2272 = vshll.u32 %v2185, 16
      %v2274 = vrot.slane %v2272, 5
      %v2275 = vsel %vm328, %v2270, %v2274
      %v2277 = vshrl.u32 %v2186, 16
      %v2279 = vrot.slane %v2277, 4
      %v2280 = vshll.u32 %v2186, 16
      %v2282 = vrot.slane %v2280, 5
      %v2283 = vor.u32 %v2279, %v2282
      %v2284 = vrot.slane %v2283, 4
      %v2286 = vshll.u32 %v2187, 16
      %v2288 = vrot.slane %v2286, 5
      %v2289 = vsel %vm328, %v2284, %v2288
      %v2290 = vshrl.u32 %v2187, 16
      %v2292 = vrot.slane %v2290, 4
      %v2293 = vor.u32 %v2292, %v2288
      %v2294 = vrot.slane %v2293, 4
      %v2296 = vshll.u32 %v2188, 16
      %v2298 = vrot.slane %v2296, 5
      %v2299 = vsel %vm328, %v2294, %v2298
      %v2301 = vshrl.u32 %v2189, 16
      %v2303 = vrot.slane %v2301, 4
      %v2304 = vshll.u32 %v2189, 16
      %v2306 = vrot.slane %v2304, 5
      %v2307 = vor.u32 %v2303, %v2306
      %v2308 = vrot.slane %v2307, 4
      %v2310 = vshll.u32 %v2190, 16
      %v2312 = vrot.slane %v2310, 5
      %v2313 = vsel %vm328, %v2308, %v2312
      %v2314 = vshrl.u32 %v2190, 16
      %v2316 = vrot.slane %v2314, 4
      %v2317 = vor.u32 %v2316, %v2312
      %v2318 = vrot.slane %v2317, 4
      %v2320 = vshll.u32 %v2191, 16
      %v2322 = vrot.slane %v2320, 5
      %v2323 = vsel %vm328, %v2318, %v2322
      %v2325 = vshrl.u32 %v2192, 16
      %v2327 = vrot.slane %v2325, 4
      %v2328 = vshll.u32 %v2192, 16
      %v2330 = vrot.slane %v2328, 5
      %v2331 = vor.u32 %v2327, %v2330
      %v2332 = vrot.slane %v2331, 4
      %v2334 = vshll.u32 %v2193, 16
      %v2336 = vrot.slane %v2334, 5
      %v2337 = vsel %vm328, %v2332, %v2336
      %v2338 = vshrl.u32 %v2193, 16
      %v2340 = vrot.slane %v2338, 4
      %v2341 = vor.u32 %v2340, %v2336
      %v2342 = vrot.slane %v2341, 4
      %v2344 = vshll.u32 %v2194, 16
      %v2346 = vrot.slane %v2344, 5
      %v2347 = vsel %vm328, %v2342, %v2346
      %v2349 = vshrl.u32 %v2195, 16
      %v2351 = vrot.slane %v2349, 4
      %v2352 = vshll.u32 %v2195, 16
      %v2354 = vrot.slane %v2352, 5
      %v2355 = vor.u32 %v2351, %v2354
      %v2356 = vrot.slane %v2355, 4
      %v2358 = vshll.u32 %v2196, 16
      %v2360 = vrot.slane %v2358, 5
      %v2361 = vsel %vm328, %v2356, %v2360
      %v2362 = vshrl.u32 %v2196, 16
      %v2364 = vrot.slane %v2362, 4
      %v2365 = vor.u32 %v2364, %v2360
      %v2366 = vrot.slane %v2365, 4
      %v2368 = vshll.u32 %v2197, 16
      %v2370 = vrot.slane %v2368, 5
      %v2371 = vsel %vm328, %v2366, %v2370
      %v2373 = vshrl.u32 %v2198, 16
      %v2375 = vrot.slane %v2373, 4
      %v2376 = vshll.u32 %v2198, 16
      %v2378 = vrot.slane %v2376, 5
      %v2379 = vor.u32 %v2375, %v2378
      %v2380 = vrot.slane %v2379, 4
      %v2382 = vshll.u32 %v2199, 16
      %v2384 = vrot.slane %v2382, 5
      %v2385 = vsel %vm328, %v2380, %v2384
      %v2386 = vshrl.u32 %v2199, 16
      %v2388 = vrot.slane %v2386, 4
      %v2389 = vor.u32 %v2388, %v2384
      %v2390 = vrot.slane %v2389, 4
      %v2392 = vshll.u32 %v2200, 16
      %v2394 = vrot.slane %v2392, 5
      %v2395 = vsel %vm328, %v2390, %v2394
      %v2397 = vshrl.u32 %v2201, 16
      %v2399 = vrot.slane %v2397, 4
      %v2400 = vshll.u32 %v2201, 16
      %v2402 = vrot.slane %v2400, 5
      %v2403 = vor.u32 %v2399, %v2402
      %v2404 = vrot.slane %v2403, 4
      %v2406 = vshll.u32 %v2202, 16
      %v2408 = vrot.slane %v2406, 5
      %v2409 = vsel %vm328, %v2404, %v2408
      %v2410 = vshrl.u32 %v2202, 16
      %v2412 = vrot.slane %v2410, 4
      %v2413 = vor.u32 %v2412, %v2408
      %v2414 = vrot.slane %v2413, 4
      %v2416 = vshll.u32 %v2203, 16
      %v2418 = vrot.slane %v2416, 5
      %v2419 = vsel %vm328, %v2414, %v2418
      %v2421 = vshrl.u32 %v2204, 16
      %v2423 = vrot.slane %v2421, 4
      %v2424 = vshll.u32 %v2204, 16
      %v2426 = vrot.slane %v2424, 5
      %v2427 = vor.u32 %v2423, %v2426
      %v2428 = vrot.slane %v2427, 4
      %v2430 = vshll.u32 %v2205, 16
      %v2432 = vrot.slane %v2430, 5
      %v2433 = vsel %vm328, %v2428, %v2432
      %v2434 = vshrl.u32 %v2205, 16
      %v2436 = vrot.slane %v2434, 4
      %v2437 = vor.u32 %v2436, %v2432
      %v2438 = vrot.slane %v2437, 4
      %v2440 = vshll.u32 %v2206, 16
      %v2442 = vrot.slane %v2440, 5
      %v2443 = vsel %vm328, %v2438, %v2442
      %v2445 = vshrl.u32 %v2207, 16
      %v2447 = vrot.slane %v2445, 4
      %v2448 = vshll.u32 %v2207, 16
      %v2450 = vrot.slane %v2448, 5
      %v2451 = vor.u32 %v2447, %v2450
      %v2452 = vrot.slane %v2451, 4
      %v2454 = vshll.u32 %v2208, 16
      %v2456 = vrot.slane %v2454, 5
      %v2457 = vsel %vm328, %v2452, %v2456
      %v2458 = vshrl.u32 %v2208, 16
      %v2460 = vrot.slane %v2458, 4
      %v2461 = vor.u32 %v2460, %v2456
      %v2462 = vrot.slane %v2461, 4
      %v2464 = vshll.u32 %v2209, 16
      %v2466 = vrot.slane %v2464, 5
      %v2467 = vsel %vm328, %v2462, %v2466
      %v2469 = vshrl.u32 %v2210, 16
      %v2471 = vrot.slane %v2469, 4
      %v2472 = vshll.u32 %v2210, 16
      %v2474 = vrot.slane %v2472, 5
      %v2475 = vor.u32 %v2471, %v2474
      %v2476 = vrot.slane %v2475, 4
      %v2478 = vshll.u32 %v2211, 16
      %v2480 = vrot.slane %v2478, 5
      %v2481 = vsel %vm328, %v2476, %v2480
      %v2482 = vshrl.u32 %v2211, 16
      %v2484 = vrot.slane %v2482, 4
      %v2485 = vor.u32 %v2484, %v2480
      %v2486 = vrot.slane %v2485, 4
      %v2488 = vshll.u32 %v2212, 16
      %v2490 = vrot.slane %v2488, 5
      %v2491 = vsel %vm328, %v2486, %v2490
      %v2493 = vshrl.u32 %v2213, 16
      %v2495 = vrot.slane %v2493, 4
      %v2496 = vshll.u32 %v2213, 16
      %v2498 = vrot.slane %v2496, 5
      %v2499 = vor.u32 %v2495, %v2498
      %v2500 = vrot.slane %v2499, 4
      %v2502 = vshll.u32 %v2214, 16
      %v2504 = vrot.slane %v2502, 5
      %v2505 = vsel %vm328, %v2500, %v2504
      %v2506 = vshrl.u32 %v2214, 16
      %v2508 = vrot.slane %v2506, 4
      %v2509 = vor.u32 %v2508, %v2504
      %v2510 = vrot.slane %v2509, 4
      %v2512 = vshll.u32 %v2215, 16
      %v2514 = vrot.slane %v2512, 5
      %v2515 = vsel %vm328, %v2510, %v2514
      %v2517 = vshrl.u32 %v2216, 16
      %v2519 = vrot.slane %v2517, 4
      %v2520 = vshll.u32 %v2216, 16
      %v2522 = vrot.slane %v2520, 5
      %v2523 = vor.u32 %v2519, %v2522
      %v2524 = vrot.slane %v2523, 4
      %v2526 = vshll.u32 %v2217, 16
      %v2528 = vrot.slane %v2526, 5
      %v2529 = vsel %vm328, %v2524, %v2528
      %v2530 = vshrl.u32 %v2217, 16
      %v2532 = vrot.slane %v2530, 4
      %v2533 = vor.u32 %v2532, %v2528
      %v2534 = vrot.slane %v2533, 4
      %v2536 = vshll.u32 %v2218, 16
      %v2538 = vrot.slane %v2536, 5
      %v2539 = vsel %vm328, %v2534, %v2538
      %v2541 = vshrl.u32 %v2219, 16
      %v2543 = vrot.slane %v2541, 4
      %v2544 = vshll.u32 %v2219, 16
      %v2546 = vrot.slane %v2544, 5
      %v2547 = vor.u32 %v2543, %v2546
      %v2548 = vrot.slane %v2547, 4
      %v2550 = vshll.u32 %v2220, 16
      %v2552 = vrot.slane %v2550, 5
      %v2553 = vsel %vm328, %v2548, %v2552
      %v2554 = vshrl.u32 %v2220, 16
      %v2556 = vrot.slane %v2554, 4
      %v2557 = vor.u32 %v2556, %v2552
      %v2558 = vrot.slane %v2557, 4
      %v2560 = vshll.u32 %v2221, 16
      %v2562 = vrot.slane %v2560, 5
      %v2563 = vsel %vm328, %v2558, %v2562
      %v2565 = vshrl.u32 %v2222, 16
      %v2567 = vrot.slane %v2565, 4
      %v2568 = vshll.u32 %v2222, 16
      %v2570 = vrot.slane %v2568, 5
      %v2571 = vor.u32 %v2567, %v2570
      %v2572 = vrot.slane %v2571, 4
      %v2574 = vshll.u32 %v2223, 16
      %v2576 = vrot.slane %v2574, 5
      %v2577 = vsel %vm328, %v2572, %v2576
      %v2578 = vshrl.u32 %v2223, 16
      %v2580 = vrot.slane %v2578, 4
      %v2581 = vor.u32 %v2580, %v2576
      %v2582 = vrot.slane %v2581, 4
      %v2584 = vshll.u32 %v2224, 16
      %v2586 = vrot.slane %v2584, 5
      %v2587 = vsel %vm328, %v2582, %v2586
      %v2589 = vshrl.u32 %v2225, 16
      %v2591 = vrot.slane %v2589, 4
      %v2592 = vshll.u32 %v2225, 16
      %v2594 = vrot.slane %v2592, 5
      %v2595 = vor.u32 %v2591, %v2594
      %v2596 = vrot.slane %v2595, 4
      %v2598 = vshll.u32 %v2226, 16
      %v2600 = vrot.slane %v2598, 5
      %v2601 = vsel %vm328, %v2596, %v2600
      %v2602 = vshrl.u32 %v2226, 16
      %v2604 = vrot.slane %v2602, 4
      %v2605 = vor.u32 %v2604, %v2600
      %v2606 = vrot.slane %v2605, 4
      %v2608 = vshll.u32 %v2227, 16
      %v2610 = vrot.slane %v2608, 5
      %v2611 = vsel %vm328, %v2606, %v2610
      %s2612 = scalar_lea.vmem %s1, 256
      %v2613 = vld [vmem:[%s2612] sm:$0xf]
      %v2614 = vld [vmem:[%s2612 + $0x4] sm:$0xf]
      %v2615 = vld [vmem:[%s2612 + $0x8] sm:$0xf]
      %v2616 = vld [vmem:[%s2612 + $0xc] sm:$0xf]
      %v2617 = vld [vmem:[%s2612 + $0x10] sm:$0xf]
      %v2618 = vld [vmem:[%s2612 + $0x14] sm:$0xf]
      %v2619 = vld [vmem:[%s2612 + $0x18] sm:$0xf]
      %v2620 = vld [vmem:[%s2612 + $0x1c] sm:$0xf]
      %v2621 = vld [vmem:[%s2612 + $0x20] sm:$0xf]
      %v2622 = vld [vmem:[%s2612 + $0x24] sm:$0xf]
      %v2623 = vld [vmem:[%s2612 + $0x28] sm:$0xf]
      %v2624 = vld [vmem:[%s2612 + $0x2c] sm:$0xf]
      %v2625 = vld [vmem:[%s2612 + $0x30] sm:$0xf]
      %v2626 = vld [vmem:[%s2612 + $0x34] sm:$0xf]
      %v2627 = vld [vmem:[%s2612 + $0x38] sm:$0xf]
      %v2628 = vld [vmem:[%s2612 + $0x3c] sm:$0xf]
      %v2629 = vunpack.c.l.b16 %v2241
      %v2630 = vunpack.c.l.b16 %v2251
      %v2631 = vunpack.c.l.b16 %v2265
      %v2632 = vunpack.c.l.b16 %v2275
      %v2633 = vunpack.c.l.b16 %v2289
      %v2634 = vunpack.c.l.b16 %v2299
      %v2635 = vunpack.c.l.b16 %v2313
      %v2636 = vunpack.c.l.b16 %v2323
      %v2637 = vunpack.c.l.b16 %v2337
      %v2638 = vunpack.c.l.b16 %v2347
      %v2639 = vunpack.c.l.b16 %v2361
      %v2640 = vunpack.c.l.b16 %v2371
      %v2641 = vunpack.c.l.b16 %v2385
      %v2642 = vunpack.c.l.b16 %v2395
      %v2643 = vunpack.c.l.b16 %v2409
      %v2644 = vunpack.c.l.b16 %v2419
      %v2645 = vunpack.c.l.b16 %v2433
      %v2646 = vunpack.c.l.b16 %v2443
      %v2647 = vunpack.c.l.b16 %v2457
      %v2648 = vunpack.c.l.b16 %v2467
      %v2649 = vunpack.c.l.b16 %v2481
      %v2650 = vunpack.c.l.b16 %v2491
      %v2651 = vunpack.c.l.b16 %v2505
      %v2652 = vunpack.c.l.b16 %v2515
      %v2653 = vunpack.c.l.b16 %v2529
      %v2654 = vunpack.c.l.b16 %v2539
      %v2655 = vunpack.c.l.b16 %v2553
      %v2656 = vunpack.c.l.b16 %v2563
      %v2657 = vunpack.c.l.b16 %v2577
      %v2658 = vunpack.c.l.b16 %v2587
      %v2659 = vunpack.c.l.b16 %v2601
      %v2660 = vunpack.c.l.b16 %v2611
      %v2661 = vpack.c.b16 %v2630, %v2629
      %v2662 = vpack.c.b16 %v2632, %v2631
      %v2663 = vpack.c.b16 %v2634, %v2633
      %v2664 = vpack.c.b16 %v2636, %v2635
      %v2665 = vpack.c.b16 %v2638, %v2637
      %v2666 = vpack.c.b16 %v2640, %v2639
      %v2667 = vpack.c.b16 %v2642, %v2641
      %v2668 = vpack.c.b16 %v2644, %v2643
      %v2669 = vpack.c.b16 %v2646, %v2645
      %v2670 = vpack.c.b16 %v2648, %v2647
      %v2671 = vpack.c.b16 %v2650, %v2649
      %v2672 = vpack.c.b16 %v2652, %v2651
      %v2673 = vpack.c.b16 %v2654, %v2653
      %v2674 = vpack.c.b16 %v2656, %v2655
      %v2675 = vpack.c.b16 %v2658, %v2657
      %v2676 = vpack.c.b16 %v2660, %v2659
      %v2709 = vunpack.c.l.b16 %v2613
      %v2710 = vunpack.c.l.b16 %v2614
      %v2711 = vunpack.c.l.b16 %v2615
      %v2712 = vunpack.c.l.b16 %v2616
      %v2713 = vunpack.c.l.b16 %v2617
      %v2714 = vunpack.c.l.b16 %v2618
      %v2715 = vunpack.c.l.b16 %v2619
      %v2716 = vunpack.c.l.b16 %v2620
      %v2717 = vunpack.c.l.b16 %v2621
      %v2718 = vunpack.c.l.b16 %v2622
      %v2719 = vunpack.c.l.b16 %v2623
      %v2720 = vunpack.c.l.b16 %v2624
      %v2721 = vunpack.c.l.b16 %v2625
      %v2722 = vunpack.c.l.b16 %v2626
      %v2723 = vunpack.c.l.b16 %v2627
      %v2724 = vunpack.c.l.b16 %v2628
      %v2725 = vpack.c.b16 %v2710, %v2709
      %v2726 = vpack.c.b16 %v2712, %v2711
      %v2727 = vpack.c.b16 %v2714, %v2713
      %v2728 = vpack.c.b16 %v2716, %v2715
      %v2729 = vpack.c.b16 %v2718, %v2717
      %v2730 = vpack.c.b16 %v2720, %v2719
      %v2731 = vpack.c.b16 %v2722, %v2721
      %v2732 = vpack.c.b16 %v2724, %v2723
      %2741 = vmatprep.subr.bf16.mxu0 0
      %2742 = vmatpush1.bf16.msra.mxu0 %v2732
      %2743 = vmatprep.subr.bf16.mxu0 0
      %2744 = vmatpush1.bf16.msra.mxu0 %v2731
      %2745 = vmatprep.subr.bf16.mxu0 0
      %2746 = vmatpush1.bf16.msra.mxu0 %v2730
      %2747 = vmatprep.subr.bf16.mxu0 0
      %2748 = vmatpush1.bf16.msra.mxu0 %v2729
      %2749 = vmatprep.subr.bf16.mxu0 0
      %2750 = vmatpush1.bf16.msra.mxu0 %v2728
      %2751 = vmatprep.subr.bf16.mxu0 0
      %2752 = vmatpush1.bf16.msra.mxu0 %v2727
      %2753 = vmatprep.subr.bf16.mxu0 0
      %2754 = vmatpush1.bf16.msra.mxu0 %v2726
      %2755 = vmatprep.subr.bf16.mxu0 0
      %2756 = vmatpush1.bf16.msra.mxu0 %v2725
      %2757 = vmatprep.subr.bf16.mxu0 0
      %2758 = vmatpush2.bf16.msra.mxu0 0
      %2759 = vmatprep.subr.bf16.mxu0 0
      %2760 = vmatpush2.bf16.msra.mxu0 0
      %2761 = vmatprep.subr.bf16.mxu0 0
      %2762 = vmatpush2.bf16.msra.mxu0 0
      %2763 = vmatprep.subr.bf16.mxu0 0
      %2764 = vmatpush2.bf16.msra.mxu0 0
      %2765 = vmatprep.subr.bf16.mxu0 0
      %2766 = vmatpush2.bf16.msra.mxu0 0
      %2767 = vmatprep.subr.bf16.mxu0 0
      %2768 = vmatpush2.bf16.msra.mxu0 0
      %2769 = vmatprep.subr.bf16.mxu0 0
      %2770 = vmatpush2.bf16.msra.mxu0 0
      %2771 = vmatprep.subr.bf16.mxu0 0
      %2772 = vmatpush2.bf16.msra.mxu0 0
      %2773 = vmatprep.mubr.bf16.mxu0 0
      %2774 = vmatmul.mubr.bf16.gmra.mxu0 %v2661
      %v2775 = vpop.f32.mrf.mxu0
      %v2776 = vadd.f32 0.0, %v2775
      %v2777 = vpop.f32.mrf.mxu0
      %v2778 = vpop.f32.mrf.mxu0
      %v2779 = vadd.f32 0.0, %v2778
      %v2780 = vpop.f32.mrf.mxu0
      %2781 = vmatprep.mubr.bf16.mxu0 0
      %2782 = vmatmul.mubr.bf16.gmra.mxu0 %v2662
      %v2783 = vpop.f32.mrf.mxu0
      %v2784 = vadd.f32 0.0, %v2783
      %v2785 = vpop.f32.mrf.mxu0
      %v2786 = vpop.f32.mrf.mxu0
      %v2787 = vadd.f32 0.0, %v2786
      %v2788 = vpop.f32.mrf.mxu0
      %2789 = vmatprep.mubr.bf16.mxu0 0
      %2790 = vmatmul.mubr.bf16.gmra.mxu0 %v2663
      %v2791 = vpop.f32.mrf.mxu0
      %v2792 = vadd.f32 0.0, %v2791
      %v2793 = vpop.f32.mrf.mxu0
      %v2794 = vpop.f32.mrf.mxu0
      %v2795 = vadd.f32 0.0, %v2794
      %v2796 = vpop.f32.mrf.mxu0
      %2797 = vmatprep.mubr.bf16.mxu0 0
      %2798 = vmatmul.mubr.bf16.gmra.mxu0 %v2664
      %v2799 = vpop.f32.mrf.mxu0
      %v2800 = vadd.f32 0.0, %v2799
      %v2801 = vpop.f32.mrf.mxu0
      %v2802 = vpop.f32.mrf.mxu0
      %v2803 = vadd.f32 0.0, %v2802
      %v2804 = vpop.f32.mrf.mxu0
      %2805 = vmatprep.mubr.bf16.mxu0 0
      %2806 = vmatmul.mubr.bf16.gmra.mxu0 %v2665
      %v2807 = vpop.f32.mrf.mxu0
      %v2808 = vadd.f32 0.0, %v2807
      %v2809 = vpop.f32.mrf.mxu0
      %v2810 = vpop.f32.mrf.mxu0
      %v2811 = vadd.f32 0.0, %v2810
      %v2812 = vpop.f32.mrf.mxu0
      %2813 = vmatprep.mubr.bf16.mxu0 0
      %2814 = vmatmul.mubr.bf16.gmra.mxu0 %v2666
      %v2815 = vpop.f32.mrf.mxu0
      %v2816 = vadd.f32 0.0, %v2815
      %v2817 = vpop.f32.mrf.mxu0
      %v2818 = vpop.f32.mrf.mxu0
      %v2819 = vadd.f32 0.0, %v2818
      %v2820 = vpop.f32.mrf.mxu0
      %2821 = vmatprep.mubr.bf16.mxu0 0
      %2822 = vmatmul.mubr.bf16.gmra.mxu0 %v2667
      %v2823 = vpop.f32.mrf.mxu0
      %v2824 = vadd.f32 0.0, %v2823
      %v2825 = vpop.f32.mrf.mxu0
      %v2826 = vpop.f32.mrf.mxu0
      %v2827 = vadd.f32 0.0, %v2826
      %v2828 = vpop.f32.mrf.mxu0
      %2829 = vmatprep.mubr.bf16.mxu0 0
      %2830 = vmatmul.mubr.bf16.gmra.mxu0 %v2668
      %v2831 = vpop.f32.mrf.mxu0
      %v2832 = vadd.f32 0.0, %v2831
      %v2833 = vpop.f32.mrf.mxu0
      %v2834 = vpop.f32.mrf.mxu0
      %v2835 = vadd.f32 0.0, %v2834
      %v2836 = vpop.f32.mrf.mxu0
      %2837 = vmatprep.mubr.bf16.mxu0 0
      %2838 = vmatmul.mubr.bf16.gmra.mxu0 %v2669
      %v2839 = vpop.f32.mrf.mxu0
      %v2840 = vadd.f32 0.0, %v2839
      %v2841 = vpop.f32.mrf.mxu0
      %v2842 = vpop.f32.mrf.mxu0
      %v2843 = vadd.f32 0.0, %v2842
      %v2844 = vpop.f32.mrf.mxu0
      %2845 = vmatprep.mubr.bf16.mxu0 0
      %2846 = vmatmul.mubr.bf16.gmra.mxu0 %v2670
      %v2847 = vpop.f32.mrf.mxu0
      %v2848 = vadd.f32 0.0, %v2847
      %v2849 = vpop.f32.mrf.mxu0
      %v2850 = vpop.f32.mrf.mxu0
      %v2851 = vadd.f32 0.0, %v2850
      %v2852 = vpop.f32.mrf.mxu0
      %2853 = vmatprep.mubr.bf16.mxu0 0
      %2854 = vmatmul.mubr.bf16.gmra.mxu0 %v2671
      %v2855 = vpop.f32.mrf.mxu0
      %v2856 = vadd.f32 0.0, %v2855
      %v2857 = vpop.f32.mrf.mxu0
      %v2858 = vpop.f32.mrf.mxu0
      %v2859 = vadd.f32 0.0, %v2858
      %v2860 = vpop.f32.mrf.mxu0
      %2861 = vmatprep.mubr.bf16.mxu0 0
      %2862 = vmatmul.mubr.bf16.gmra.mxu0 %v2672
      %v2863 = vpop.f32.mrf.mxu0
      %v2864 = vadd.f32 0.0, %v2863
      %v2865 = vpop.f32.mrf.mxu0
      %v2866 = vpop.f32.mrf.mxu0
      %v2867 = vadd.f32 0.0, %v2866
      %v2868 = vpop.f32.mrf.mxu0
      %2869 = vmatprep.mubr.bf16.mxu0 0
      %2870 = vmatmul.mubr.bf16.gmra.mxu0 %v2673
      %v2871 = vpop.f32.mrf.mxu0
      %v2872 = vadd.f32 0.0, %v2871
      %v2873 = vpop.f32.mrf.mxu0
      %v2874 = vpop.f32.mrf.mxu0
      %v2875 = vadd.f32 0.0, %v2874
      %v2876 = vpop.f32.mrf.mxu0
      %2877 = vmatprep.mubr.bf16.mxu0 0
      %2878 = vmatmul.mubr.bf16.gmra.mxu0 %v2674
      %v2879 = vpop.f32.mrf.mxu0
      %v2880 = vadd.f32 0.0, %v2879
      %v2881 = vpop.f32.mrf.mxu0
      %v2882 = vpop.f32.mrf.mxu0
      %v2883 = vadd.f32 0.0, %v2882
      %v2884 = vpop.f32.mrf.mxu0
      %2885 = vmatprep.mubr.bf16.mxu0 0
      %2886 = vmatmul.mubr.bf16.gmra.mxu0 %v2675
      %v2887 = vpop.f32.mrf.mxu0
      %v2888 = vadd.f32 0.0, %v2887
      %v2889 = vpop.f32.mrf.mxu0
      %v2890 = vpop.f32.mrf.mxu0
      %v2891 = vadd.f32 0.0, %v2890
      %v2892 = vpop.f32.mrf.mxu0
      %2893 = vmatprep.mubr.bf16.mxu0 0
      %2894 = vmatmul.mubr.bf16.gmra.mxu0 %v2676
      %v2895 = vpop.f32.mrf.mxu0
      %v2896 = vadd.f32 0.0, %v2895
      %v2897 = vpop.f32.mrf.mxu0
      %v2898 = vpop.f32.mrf.mxu0
      %v2899 = vadd.f32 0.0, %v2898
      %v2900 = vpop.f32.mrf.mxu0
      %2901 = vdwg.mxu0
      %v2902 = vadd.f32 %v2148, %v2776
      %v2903 = vadd.f32 %v2149, %v2779
      %v2904 = vadd.f32 %v2150, %v2784
      %v2905 = vadd.f32 %v2151, %v2787
      %v2906 = vadd.f32 %v2152, %v2792
      %v2907 = vadd.f32 %v2153, %v2795
      %v2908 = vadd.f32 %v2154, %v2800
      %v2909 = vadd.f32 %v2155, %v2803
      %v2910 = vadd.f32 %v2156, %v2808
      %v2911 = vadd.f32 %v2157, %v2811
      %v2912 = vadd.f32 %v2158, %v2816
      %v2913 = vadd.f32 %v2159, %v2819
      %v2914 = vadd.f32 %v2160, %v2824
      %v2915 = vadd.f32 %v2161, %v2827
      %v2916 = vadd.f32 %v2162, %v2832
      %v2917 = vadd.f32 %v2163, %v2835
      %v2918 = vadd.f32 %v2164, %v2840
      %v2919 = vadd.f32 %v2165, %v2843
      %v2920 = vadd.f32 %v2166, %v2848
      %v2921 = vadd.f32 %v2167, %v2851
      %v2922 = vadd.f32 %v2168, %v2856
      %v2923 = vadd.f32 %v2169, %v2859
      %v2924 = vadd.f32 %v2170, %v2864
      %v2925 = vadd.f32 %v2171, %v2867
      %v2926 = vadd.f32 %v2172, %v2872
      %v2927 = vadd.f32 %v2173, %v2875
      %v2928 = vadd.f32 %v2174, %v2880
      %v2929 = vadd.f32 %v2175, %v2883
      %v2930 = vadd.f32 %v2176, %v2888
      %v2931 = vadd.f32 %v2177, %v2891
      %v2932 = vadd.f32 %v2178, %v2896
      %v2933 = vadd.f32 %v2179, %v2899
      %v2934 = vld [vmem:[%s1793] sm:$0xe]
      %v2935 = vld [vmem:[%s1793 + $0xc] sm:$0xe]
      %v2936 = vld [vmem:[%s1793 + $0x18] sm:$0xe]
      %v2937 = vld [vmem:[%s1793 + $0x24] sm:$0xe]
      %v2938 = vld [vmem:[%s1793 + $0x30] sm:$0xe]
      %v2939 = vld [vmem:[%s1793 + $0x3c] sm:$0xe]
      %v2940 = vld [vmem:[%s1793 + $0x48] sm:$0xe]
      %v2941 = vld [vmem:[%s1793 + $0x54] sm:$0xe]
      %v2942 = vld [vmem:[%s1793 + $0x60] sm:$0xe]
      %v2943 = vld [vmem:[%s1793 + $0x6c] sm:$0xe]
      %v2944 = vld [vmem:[%s1793 + $0x78] sm:$0xe]
      %v2945 = vld [vmem:[%s1793 + $0x84] sm:$0xe]
      %v2946 = vld [vmem:[%s1793 + $0x90] sm:$0xe]
      %v2947 = vld [vmem:[%s1793 + $0x9c] sm:$0xe]
      %v2948 = vld [vmem:[%s1793 + $0xa8] sm:$0xe]
      %v2949 = vld [vmem:[%s1793 + $0xb4] sm:$0xe]
      %v2998 = vrot.slane %v2934, 5
      %v2999 = vrot.slane %v2998, 4
      %v3000 = vrot.slane %v2181, 5
      %v3001 = vsel %vm1358, %v2999, %v3000
      %v3002 = vrot.slane %v3000, 4
      %v3003 = vrot.slane %v2182, 5
      %v3004 = vsel %vm1358, %v3002, %v3003
      %v3005 = vrot.slane %v2935, 5
      %v3006 = vrot.slane %v3005, 4
      %v3007 = vrot.slane %v2184, 5
      %v3008 = vsel %vm1358, %v3006, %v3007
      %v3009 = vrot.slane %v3007, 4
      %v3010 = vrot.slane %v2185, 5
      %v3011 = vsel %vm1358, %v3009, %v3010
      %v3012 = vrot.slane %v2936, 5
      %v3013 = vrot.slane %v3012, 4
      %v3014 = vrot.slane %v2187, 5
      %v3015 = vsel %vm1358, %v3013, %v3014
      %v3016 = vrot.slane %v3014, 4
      %v3017 = vrot.slane %v2188, 5
      %v3018 = vsel %vm1358, %v3016, %v3017
      %v3019 = vrot.slane %v2937, 5
      %v3020 = vrot.slane %v3019, 4
      %v3021 = vrot.slane %v2190, 5
      %v3022 = vsel %vm1358, %v3020, %v3021
      %v3023 = vrot.slane %v3021, 4
      %v3024 = vrot.slane %v2191, 5
      %v3025 = vsel %vm1358, %v3023, %v3024
      %v3026 = vrot.slane %v2938, 5
      %v3027 = vrot.slane %v3026, 4
      %v3028 = vrot.slane %v2193, 5
      %v3029 = vsel %vm1358, %v3027, %v3028
      %v3030 = vrot.slane %v3028, 4
      %v3031 = vrot.slane %v2194, 5
      %v3032 = vsel %vm1358, %v3030, %v3031
      %v3033 = vrot.slane %v2939, 5
      %v3034 = vrot.slane %v3033, 4
      %v3035 = vrot.slane %v2196, 5
      %v3036 = vsel %vm1358, %v3034, %v3035
      %v3037 = vrot.slane %v3035, 4
      %v3038 = vrot.slane %v2197, 5
      %v3039 = vsel %vm1358, %v3037, %v3038
      %v3040 = vrot.slane %v2940, 5
      %v3041 = vrot.slane %v3040, 4
      %v3042 = vrot.slane %v2199, 5
      %v3043 = vsel %vm1358, %v3041, %v3042
      %v3044 = vrot.slane %v3042, 4
      %v3045 = vrot.slane %v2200, 5
      %v3046 = vsel %vm1358, %v3044, %v3045
      %v3047 = vrot.slane %v2941, 5
      %v3048 = vrot.slane %v3047, 4
      %v3049 = vrot.slane %v2202, 5
      %v3050 = vsel %vm1358, %v3048, %v3049
      %v3051 = vrot.slane %v3049, 4
      %v3052 = vrot.slane %v2203, 5
      %v3053 = vsel %vm1358, %v3051, %v3052
      %v3054 = vrot.slane %v2942, 5
      %v3055 = vrot.slane %v3054, 4
      %v3056 = vrot.slane %v2205, 5
      %v3057 = vsel %vm1358, %v3055, %v3056
      %v3058 = vrot.slane %v3056, 4
      %v3059 = vrot.slane %v2206, 5
      %v3060 = vsel %vm1358, %v3058, %v3059
      %v3061 = vrot.slane %v2943, 5
      %v3062 = vrot.slane %v3061, 4
      %v3063 = vrot.slane %v2208, 5
      %v3064 = vsel %vm1358, %v3062, %v3063
      %v3065 = vrot.slane %v3063, 4
      %v3066 = vrot.slane %v2209, 5
      %v3067 = vsel %vm1358, %v3065, %v3066
      %v3068 = vrot.slane %v2944, 5
      %v3069 = vrot.slane %v3068, 4
      %v3070 = vrot.slane %v2211, 5
      %v3071 = vsel %vm1358, %v3069, %v3070
      %v3072 = vrot.slane %v3070, 4
      %v3073 = vrot.slane %v2212, 5
      %v3074 = vsel %vm1358, %v3072, %v3073
      %v3075 = vrot.slane %v2945, 5
      %v3076 = vrot.slane %v3075, 4
      %v3077 = vrot.slane %v2214, 5
      %v3078 = vsel %vm1358, %v3076, %v3077
      %v3079 = vrot.slane %v3077, 4
      %v3080 = vrot.slane %v2215, 5
      %v3081 = vsel %vm1358, %v3079, %v3080
      %v3082 = vrot.slane %v2946, 5
      %v3083 = vrot.slane %v3082, 4
      %v3084 = vrot.slane %v2217, 5
      %v3085 = vsel %vm1358, %v3083, %v3084
      %v3086 = vrot.slane %v3084, 4
      %v3087 = vrot.slane %v2218, 5
      %v3088 = vsel %vm1358, %v3086, %v3087
      %v3089 = vrot.slane %v2947, 5
      %v3090 = vrot.slane %v3089, 4
      %v3091 = vrot.slane %v2220, 5
      %v3092 = vsel %vm1358, %v3090, %v3091
      %v3093 = vrot.slane %v3091, 4
      %v3094 = vrot.slane %v2221, 5
      %v3095 = vsel %vm1358, %v3093, %v3094
      %v3096 = vrot.slane %v2948, 5
      %v3097 = vrot.slane %v3096, 4
      %v3098 = vrot.slane %v2223, 5
      %v3099 = vsel %vm1358, %v3097, %v3098
      %v3100 = vrot.slane %v3098, 4
      %v3101 = vrot.slane %v2224, 5
      %v3102 = vsel %vm1358, %v3100, %v3101
      %v3103 = vrot.slane %v2949, 5
      %v3104 = vrot.slane %v3103, 4
      %v3105 = vrot.slane %v2226, 5
      %v3106 = vsel %vm1358, %v3104, %v3105
      %v3107 = vrot.slane %v3105, 4
      %v3108 = vrot.slane %v2227, 5
      %v3109 = vsel %vm1358, %v3107, %v3108
      %s3110 = scalar_lea.vmem %s1, 320
      %v3111 = vld [vmem:[%s3110] sm:$0xf]
      %v3112 = vld [vmem:[%s3110 + $0x4] sm:$0xf]
      %v3113 = vld [vmem:[%s3110 + $0x8] sm:$0xf]
      %v3114 = vld [vmem:[%s3110 + $0xc] sm:$0xf]
      %v3115 = vld [vmem:[%s3110 + $0x10] sm:$0xf]
      %v3116 = vld [vmem:[%s3110 + $0x14] sm:$0xf]
      %v3117 = vld [vmem:[%s3110 + $0x18] sm:$0xf]
      %v3118 = vld [vmem:[%s3110 + $0x1c] sm:$0xf]
      %v3119 = vld [vmem:[%s3110 + $0x20] sm:$0xf]
      %v3120 = vld [vmem:[%s3110 + $0x24] sm:$0xf]
      %v3121 = vld [vmem:[%s3110 + $0x28] sm:$0xf]
      %v3122 = vld [vmem:[%s3110 + $0x2c] sm:$0xf]
      %v3123 = vld [vmem:[%s3110 + $0x30] sm:$0xf]
      %v3124 = vld [vmem:[%s3110 + $0x34] sm:$0xf]
      %v3125 = vld [vmem:[%s3110 + $0x38] sm:$0xf]
      %v3126 = vld [vmem:[%s3110 + $0x3c] sm:$0xf]
      %v3127 = vunpack.c.l.b16 %v3001
      %v3128 = vunpack.c.l.b16 %v3004
      %v3129 = vunpack.c.l.b16 %v3008
      %v3130 = vunpack.c.l.b16 %v3011
      %v3131 = vunpack.c.l.b16 %v3015
      %v3132 = vunpack.c.l.b16 %v3018
      %v3133 = vunpack.c.l.b16 %v3022
      %v3134 = vunpack.c.l.b16 %v3025
      %v3135 = vunpack.c.l.b16 %v3029
      %v3136 = vunpack.c.l.b16 %v3032
      %v3137 = vunpack.c.l.b16 %v3036
      %v3138 = vunpack.c.l.b16 %v3039
      %v3139 = vunpack.c.l.b16 %v3043
      %v3140 = vunpack.c.l.b16 %v3046
      %v3141 = vunpack.c.l.b16 %v3050
      %v3142 = vunpack.c.l.b16 %v3053
      %v3143 = vunpack.c.l.b16 %v3057
      %v3144 = vunpack.c.l.b16 %v3060
      %v3145 = vunpack.c.l.b16 %v3064
      %v3146 = vunpack.c.l.b16 %v3067
      %v3147 = vunpack.c.l.b16 %v3071
      %v3148 = vunpack.c.l.b16 %v3074
      %v3149 = vunpack.c.l.b16 %v3078
      %v3150 = vunpack.c.l.b16 %v3081
      %v3151 = vunpack.c.l.b16 %v3085
      %v3152 = vunpack.c.l.b16 %v3088
      %v3153 = vunpack.c.l.b16 %v3092
      %v3154 = vunpack.c.l.b16 %v3095
      %v3155 = vunpack.c.l.b16 %v3099
      %v3156 = vunpack.c.l.b16 %v3102
      %v3157 = vunpack.c.l.b16 %v3106
      %v3158 = vunpack.c.l.b16 %v3109
      %v3159 = vpack.c.b16 %v3128, %v3127
      %v3160 = vpack.c.b16 %v3130, %v3129
      %v3161 = vpack.c.b16 %v3132, %v3131
      %v3162 = vpack.c.b16 %v3134, %v3133
      %v3163 = vpack.c.b16 %v3136, %v3135
      %v3164 = vpack.c.b16 %v3138, %v3137
      %v3165 = vpack.c.b16 %v3140, %v3139
      %v3166 = vpack.c.b16 %v3142, %v3141
      %v3167 = vpack.c.b16 %v3144, %v3143
      %v3168 = vpack.c.b16 %v3146, %v3145
      %v3169 = vpack.c.b16 %v3148, %v3147
      %v3170 = vpack.c.b16 %v3150, %v3149
      %v3171 = vpack.c.b16 %v3152, %v3151
      %v3172 = vpack.c.b16 %v3154, %v3153
      %v3173 = vpack.c.b16 %v3156, %v3155
      %v3174 = vpack.c.b16 %v3158, %v3157
      %v3207 = vunpack.c.l.b16 %v3111
      %v3208 = vunpack.c.l.b16 %v3112
      %v3209 = vunpack.c.l.b16 %v3113
      %v3210 = vunpack.c.l.b16 %v3114
      %v3211 = vunpack.c.l.b16 %v3115
      %v3212 = vunpack.c.l.b16 %v3116
      %v3213 = vunpack.c.l.b16 %v3117
      %v3214 = vunpack.c.l.b16 %v3118
      %v3215 = vunpack.c.l.b16 %v3119
      %v3216 = vunpack.c.l.b16 %v3120
      %v3217 = vunpack.c.l.b16 %v3121
      %v3218 = vunpack.c.l.b16 %v3122
      %v3219 = vunpack.c.l.b16 %v3123
      %v3220 = vunpack.c.l.b16 %v3124
      %v3221 = vunpack.c.l.b16 %v3125
      %v3222 = vunpack.c.l.b16 %v3126
      %v3223 = vpack.c.b16 %v3208, %v3207
      %v3224 = vpack.c.b16 %v3210, %v3209
      %v3225 = vpack.c.b16 %v3212, %v3211
      %v3226 = vpack.c.b16 %v3214, %v3213
      %v3227 = vpack.c.b16 %v3216, %v3215
      %v3228 = vpack.c.b16 %v3218, %v3217
      %v3229 = vpack.c.b16 %v3220, %v3219
      %v3230 = vpack.c.b16 %v3222, %v3221
      %3239 = vmatprep.subr.bf16.mxu0 0
      %3240 = vmatpush1.bf16.msra.mxu0 %v3230
      %3241 = vmatprep.subr.bf16.mxu0 0
      %3242 = vmatpush1.bf16.msra.mxu0 %v3229
      %3243 = vmatprep.subr.bf16.mxu0 0
      %3244 = vmatpush1.bf16.msra.mxu0 %v3228
      %3245 = vmatprep.subr.bf16.mxu0 0
      %3246 = vmatpush1.bf16.msra.mxu0 %v3227
      %3247 = vmatprep.subr.bf16.mxu0 0
      %3248 = vmatpush1.bf16.msra.mxu0 %v3226
      %3249 = vmatprep.subr.bf16.mxu0 0
      %3250 = vmatpush1.bf16.msra.mxu0 %v3225
      %3251 = vmatprep.subr.bf16.mxu0 0
      %3252 = vmatpush1.bf16.msra.mxu0 %v3224
      %3253 = vmatprep.subr.bf16.mxu0 0
      %3254 = vmatpush1.bf16.msra.mxu0 %v3223
      %3255 = vmatprep.subr.bf16.mxu0 0
      %3256 = vmatpush2.bf16.msra.mxu0 0
      %3257 = vmatprep.subr.bf16.mxu0 0
      %3258 = vmatpush2.bf16.msra.mxu0 0
      %3259 = vmatprep.subr.bf16.mxu0 0
      %3260 = vmatpush2.bf16.msra.mxu0 0
      %3261 = vmatprep.subr.bf16.mxu0 0
      %3262 = vmatpush2.bf16.msra.mxu0 0
      %3263 = vmatprep.subr.bf16.mxu0 0
      %3264 = vmatpush2.bf16.msra.mxu0 0
      %3265 = vmatprep.subr.bf16.mxu0 0
      %3266 = vmatpush2.bf16.msra.mxu0 0
      %3267 = vmatprep.subr.bf16.mxu0 0
      %3268 = vmatpush2.bf16.msra.mxu0 0
      %3269 = vmatprep.subr.bf16.mxu0 0
      %3270 = vmatpush2.bf16.msra.mxu0 0
      %3271 = vmatprep.mubr.bf16.mxu0 0
      %3272 = vmatmul.mubr.bf16.gmra.mxu0 %v3159
      %v3273 = vpop.f32.mrf.mxu0
      %v3274 = vadd.f32 0.0, %v3273
      %v3275 = vpop.f32.mrf.mxu0
      %v3276 = vpop.f32.mrf.mxu0
      %v3277 = vadd.f32 0.0, %v3276
      %v3278 = vpop.f32.mrf.mxu0
      %3279 = vmatprep.mubr.bf16.mxu0 0
      %3280 = vmatmul.mubr.bf16.gmra.mxu0 %v3160
      %v3281 = vpop.f32.mrf.mxu0
      %v3282 = vadd.f32 0.0, %v3281
      %v3283 = vpop.f32.mrf.mxu0
      %v3284 = vpop.f32.mrf.mxu0
      %v3285 = vadd.f32 0.0, %v3284
      %v3286 = vpop.f32.mrf.mxu0
      %3287 = vmatprep.mubr.bf16.mxu0 0
      %3288 = vmatmul.mubr.bf16.gmra.mxu0 %v3161
      %v3289 = vpop.f32.mrf.mxu0
      %v3290 = vadd.f32 0.0, %v3289
      %v3291 = vpop.f32.mrf.mxu0
      %v3292 = vpop.f32.mrf.mxu0
      %v3293 = vadd.f32 0.0, %v3292
      %v3294 = vpop.f32.mrf.mxu0
      %3295 = vmatprep.mubr.bf16.mxu0 0
      %3296 = vmatmul.mubr.bf16.gmra.mxu0 %v3162
      %v3297 = vpop.f32.mrf.mxu0
      %v3298 = vadd.f32 0.0, %v3297
      %v3299 = vpop.f32.mrf.mxu0
      %v3300 = vpop.f32.mrf.mxu0
      %v3301 = vadd.f32 0.0, %v3300
      %v3302 = vpop.f32.mrf.mxu0
      %3303 = vmatprep.mubr.bf16.mxu0 0
      %3304 = vmatmul.mubr.bf16.gmra.mxu0 %v3163
      %v3305 = vpop.f32.mrf.mxu0
      %v3306 = vadd.f32 0.0, %v3305
      %v3307 = vpop.f32.mrf.mxu0
      %v3308 = vpop.f32.mrf.mxu0
      %v3309 = vadd.f32 0.0, %v3308
      %v3310 = vpop.f32.mrf.mxu0
      %3311 = vmatprep.mubr.bf16.mxu0 0
      %3312 = vmatmul.mubr.bf16.gmra.mxu0 %v3164
      %v3313 = vpop.f32.mrf.mxu0
      %v3314 = vadd.f32 0.0, %v3313
      %v3315 = vpop.f32.mrf.mxu0
      %v3316 = vpop.f32.mrf.mxu0
      %v3317 = vadd.f32 0.0, %v3316
      %v3318 = vpop.f32.mrf.mxu0
      %3319 = vmatprep.mubr.bf16.mxu0 0
      %3320 = vmatmul.mubr.bf16.gmra.mxu0 %v3165
      %v3321 = vpop.f32.mrf.mxu0
      %v3322 = vadd.f32 0.0, %v3321
      %v3323 = vpop.f32.mrf.mxu0
      %v3324 = vpop.f32.mrf.mxu0
      %v3325 = vadd.f32 0.0, %v3324
      %v3326 = vpop.f32.mrf.mxu0
      %3327 = vmatprep.mubr.bf16.mxu0 0
      %3328 = vmatmul.mubr.bf16.gmra.mxu0 %v3166
      %v3329 = vpop.f32.mrf.mxu0
      %v3330 = vadd.f32 0.0, %v3329
      %v3331 = vpop.f32.mrf.mxu0
      %v3332 = vpop.f32.mrf.mxu0
      %v3333 = vadd.f32 0.0, %v3332
      %v3334 = vpop.f32.mrf.mxu0
      %3335 = vmatprep.mubr.bf16.mxu0 0
      %3336 = vmatmul.mubr.bf16.gmra.mxu0 %v3167
      %v3337 = vpop.f32.mrf.mxu0
      %v3338 = vadd.f32 0.0, %v3337
      %v3339 = vpop.f32.mrf.mxu0
      %v3340 = vpop.f32.mrf.mxu0
      %v3341 = vadd.f32 0.0, %v3340
      %v3342 = vpop.f32.mrf.mxu0
      %3343 = vmatprep.mubr.bf16.mxu0 0
      %3344 = vmatmul.mubr.bf16.gmra.mxu0 %v3168
      %v3345 = vpop.f32.mrf.mxu0
      %v3346 = vadd.f32 0.0, %v3345
      %v3347 = vpop.f32.mrf.mxu0
      %v3348 = vpop.f32.mrf.mxu0
      %v3349 = vadd.f32 0.0, %v3348
      %v3350 = vpop.f32.mrf.mxu0
      %3351 = vmatprep.mubr.bf16.mxu0 0
      %3352 = vmatmul.mubr.bf16.gmra.mxu0 %v3169
      %v3353 = vpop.f32.mrf.mxu0
      %v3354 = vadd.f32 0.0, %v3353
      %v3355 = vpop.f32.mrf.mxu0
      %v3356 = vpop.f32.mrf.mxu0
      %v3357 = vadd.f32 0.0, %v3356
      %v3358 = vpop.f32.mrf.mxu0
      %3359 = vmatprep.mubr.bf16.mxu0 0
      %3360 = vmatmul.mubr.bf16.gmra.mxu0 %v3170
      %v3361 = vpop.f32.mrf.mxu0
      %v3362 = vadd.f32 0.0, %v3361
      %v3363 = vpop.f32.mrf.mxu0
      %v3364 = vpop.f32.mrf.mxu0
      %v3365 = vadd.f32 0.0, %v3364
      %v3366 = vpop.f32.mrf.mxu0
      %3367 = vmatprep.mubr.bf16.mxu0 0
      %3368 = vmatmul.mubr.bf16.gmra.mxu0 %v3171
      %v3369 = vpop.f32.mrf.mxu0
      %v3370 = vadd.f32 0.0, %v3369
      %v3371 = vpop.f32.mrf.mxu0
      %v3372 = vpop.f32.mrf.mxu0
      %v3373 = vadd.f32 0.0, %v3372
      %v3374 = vpop.f32.mrf.mxu0
      %3375 = vmatprep.mubr.bf16.mxu0 0
      %3376 = vmatmul.mubr.bf16.gmra.mxu0 %v3172
      %v3377 = vpop.f32.mrf.mxu0
      %v3378 = vadd.f32 0.0, %v3377
      %v3379 = vpop.f32.mrf.mxu0
      %v3380 = vpop.f32.mrf.mxu0
      %v3381 = vadd.f32 0.0, %v3380
      %v3382 = vpop.f32.mrf.mxu0
      %3383 = vmatprep.mubr.bf16.mxu0 0
      %3384 = vmatmul.mubr.bf16.gmra.mxu0 %v3173
      %v3385 = vpop.f32.mrf.mxu0
      %v3386 = vadd.f32 0.0, %v3385
      %v3387 = vpop.f32.mrf.mxu0
      %v3388 = vpop.f32.mrf.mxu0
      %v3389 = vadd.f32 0.0, %v3388
      %v3390 = vpop.f32.mrf.mxu0
      %3391 = vmatprep.mubr.bf16.mxu0 0
      %3392 = vmatmul.mubr.bf16.gmra.mxu0 %v3174
      %v3393 = vpop.f32.mrf.mxu0
      %v3394 = vadd.f32 0.0, %v3393
      %v3395 = vpop.f32.mrf.mxu0
      %v3396 = vpop.f32.mrf.mxu0
      %v3397 = vadd.f32 0.0, %v3396
      %v3398 = vpop.f32.mrf.mxu0
      %3399 = vdwg.mxu0
      %v3400 = vadd.f32 %v2902, %v3274
      %v3401 = vadd.f32 %v2903, %v3277
      %v3402 = vadd.f32 %v2904, %v3282
      %v3403 = vadd.f32 %v2905, %v3285
      %v3404 = vadd.f32 %v2906, %v3290
      %v3405 = vadd.f32 %v2907, %v3293
      %v3406 = vadd.f32 %v2908, %v3298
      %v3407 = vadd.f32 %v2909, %v3301
      %v3408 = vadd.f32 %v2910, %v3306
      %v3409 = vadd.f32 %v2911, %v3309
      %v3410 = vadd.f32 %v2912, %v3314
      %v3411 = vadd.f32 %v2913, %v3317
      %v3412 = vadd.f32 %v2914, %v3322
      %v3413 = vadd.f32 %v2915, %v3325
      %v3414 = vadd.f32 %v2916, %v3330
      %v3415 = vadd.f32 %v2917, %v3333
      %v3416 = vadd.f32 %v2918, %v3338
      %v3417 = vadd.f32 %v2919, %v3341
      %v3418 = vadd.f32 %v2920, %v3346
      %v3419 = vadd.f32 %v2921, %v3349
      %v3420 = vadd.f32 %v2922, %v3354
      %v3421 = vadd.f32 %v2923, %v3357
      %v3422 = vadd.f32 %v2924, %v3362
      %v3423 = vadd.f32 %v2925, %v3365
      %v3424 = vadd.f32 %v2926, %v3370
      %v3425 = vadd.f32 %v2927, %v3373
      %v3426 = vadd.f32 %v2928, %v3378
      %v3427 = vadd.f32 %v2929, %v3381
      %v3428 = vadd.f32 %v2930, %v3386
      %v3429 = vadd.f32 %v2931, %v3389
      %v3430 = vadd.f32 %v2932, %v3394
      %v3431 = vadd.f32 %v2933, %v3397
      %s3432 = scalar_lea.vmem %s239, 24
      %v3433 = vld [vmem:[%s3432] sm:$0xf]
      %v3434 = vld [vmem:[%s3432 + $0x4] sm:$0xf]
      %v3435 = vld [vmem:[%s3432 + $0xc] sm:$0xf]
      %v3436 = vld [vmem:[%s3432 + $0x10] sm:$0xf]
      %v3437 = vld [vmem:[%s3432 + $0x18] sm:$0xf]
      %v3438 = vld [vmem:[%s3432 + $0x1c] sm:$0xf]
      %v3439 = vld [vmem:[%s3432 + $0x24] sm:$0xf]
      %v3440 = vld [vmem:[%s3432 + $0x28] sm:$0xf]
      %v3441 = vld [vmem:[%s3432 + $0x30] sm:$0xf]
      %v3442 = vld [vmem:[%s3432 + $0x34] sm:$0xf]
      %v3443 = vld [vmem:[%s3432 + $0x3c] sm:$0xf]
      %v3444 = vld [vmem:[%s3432 + $0x40] sm:$0xf]
      %v3445 = vld [vmem:[%s3432 + $0x48] sm:$0xf]
      %v3446 = vld [vmem:[%s3432 + $0x4c] sm:$0xf]
      %v3447 = vld [vmem:[%s3432 + $0x54] sm:$0xf]
      %v3448 = vld [vmem:[%s3432 + $0x58] sm:$0xf]
      %v3449 = vld [vmem:[%s3432 + $0x60] sm:$0xf]
      %v3450 = vld [vmem:[%s3432 + $0x64] sm:$0xf]
      %v3451 = vld [vmem:[%s3432 + $0x6c] sm:$0xf]
      %v3452 = vld [vmem:[%s3432 + $0x70] sm:$0xf]
      %v3453 = vld [vmem:[%s3432 + $0x78] sm:$0xf]
      %v3454 = vld [vmem:[%s3432 + $0x7c] sm:$0xf]
      %v3455 = vld [vmem:[%s3432 + $0x84] sm:$0xf]
      %v3456 = vld [vmem:[%s3432 + $0x88] sm:$0xf]
      %v3457 = vld [vmem:[%s3432 + $0x90] sm:$0xf]
      %v3458 = vld [vmem:[%s3432 + $0x94] sm:$0xf]
      %v3459 = vld [vmem:[%s3432 + $0x9c] sm:$0xf]
      %v3460 = vld [vmem:[%s3432 + $0xa0] sm:$0xf]
      %v3461 = vld [vmem:[%s3432 + $0xa8] sm:$0xf]
      %v3462 = vld [vmem:[%s3432 + $0xac] sm:$0xf]
      %v3463 = vld [vmem:[%s3432 + $0xb4] sm:$0xf]
      %v3464 = vld [vmem:[%s3432 + $0xb8] sm:$0xf]
      %s3465 = scalar_lea.vmem %s1, 384
      %v3466 = vld [vmem:[%s3465] sm:$0xf]
      %v3467 = vld [vmem:[%s3465 + $0x4] sm:$0xf]
      %v3468 = vld [vmem:[%s3465 + $0x8] sm:$0xf]
      %v3469 = vld [vmem:[%s3465 + $0xc] sm:$0xf]
      %v3470 = vld [vmem:[%s3465 + $0x10] sm:$0xf]
      %v3471 = vld [vmem:[%s3465 + $0x14] sm:$0xf]
      %v3472 = vld [vmem:[%s3465 + $0x18] sm:$0xf]
      %v3473 = vld [vmem:[%s3465 + $0x1c] sm:$0xf]
      %v3474 = vld [vmem:[%s3465 + $0x20] sm:$0xf]
      %v3475 = vld [vmem:[%s3465 + $0x24] sm:$0xf]
      %v3476 = vld [vmem:[%s3465 + $0x28] sm:$0xf]
      %v3477 = vld [vmem:[%s3465 + $0x2c] sm:$0xf]
      %v3478 = vld [vmem:[%s3465 + $0x30] sm:$0xf]
      %v3479 = vld [vmem:[%s3465 + $0x34] sm:$0xf]
      %v3480 = vld [vmem:[%s3465 + $0x38] sm:$0xf]
      %v3481 = vld [vmem:[%s3465 + $0x3c] sm:$0xf]
      %v3514 = vunpack.c.l.b16 %v3433
      %v3515 = vunpack.c.l.b16 %v3434
      %v3516 = vunpack.c.l.b16 %v3435
      %v3517 = vunpack.c.l.b16 %v3436
      %v3518 = vunpack.c.l.b16 %v3437
      %v3519 = vunpack.c.l.b16 %v3438
      %v3520 = vunpack.c.l.b16 %v3439
      %v3521 = vunpack.c.l.b16 %v3440
      %v3522 = vunpack.c.l.b16 %v3441
      %v3523 = vunpack.c.l.b16 %v3442
      %v3524 = vunpack.c.l.b16 %v3443
      %v3525 = vunpack.c.l.b16 %v3444
      %v3526 = vunpack.c.l.b16 %v3445
      %v3527 = vunpack.c.l.b16 %v3446
      %v3528 = vunpack.c.l.b16 %v3447
      %v3529 = vunpack.c.l.b16 %v3448
      %v3530 = vunpack.c.l.b16 %v3449
      %v3531 = vunpack.c.l.b16 %v3450
      %v3532 = vunpack.c.l.b16 %v3451
      %v3533 = vunpack.c.l.b16 %v3452
      %v3534 = vunpack.c.l.b16 %v3453
      %v3535 = vunpack.c.l.b16 %v3454
      %v3536 = vunpack.c.l.b16 %v3455
      %v3537 = vunpack.c.l.b16 %v3456
      %v3538 = vunpack.c.l.b16 %v3457
      %v3539 = vunpack.c.l.b16 %v3458
      %v3540 = vunpack.c.l.b16 %v3459
      %v3541 = vunpack.c.l.b16 %v3460
      %v3542 = vunpack.c.l.b16 %v3461
      %v3543 = vunpack.c.l.b16 %v3462
      %v3544 = vunpack.c.l.b16 %v3463
      %v3545 = vunpack.c.l.b16 %v3464
      %v3546 = vpack.c.b16 %v3515, %v3514
      %v3547 = vpack.c.b16 %v3517, %v3516
      %v3548 = vpack.c.b16 %v3519, %v3518
      %v3549 = vpack.c.b16 %v3521, %v3520
      %v3550 = vpack.c.b16 %v3523, %v3522
      %v3551 = vpack.c.b16 %v3525, %v3524
      %v3552 = vpack.c.b16 %v3527, %v3526
      %v3553 = vpack.c.b16 %v3529, %v3528
      %v3554 = vpack.c.b16 %v3531, %v3530
      %v3555 = vpack.c.b16 %v3533, %v3532
      %v3556 = vpack.c.b16 %v3535, %v3534
      %v3557 = vpack.c.b16 %v3537, %v3536
      %v3558 = vpack.c.b16 %v3539, %v3538
      %v3559 = vpack.c.b16 %v3541, %v3540
      %v3560 = vpack.c.b16 %v3543, %v3542
      %v3561 = vpack.c.b16 %v3545, %v3544
      %v3594 = vunpack.c.l.b16 %v3466
      %v3595 = vunpack.c.l.b16 %v3467
      %v3596 = vunpack.c.l.b16 %v3468
      %v3597 = vunpack.c.l.b16 %v3469
      %v3598 = vunpack.c.l.b16 %v3470
      %v3599 = vunpack.c.l.b16 %v3471
      %v3600 = vunpack.c.l.b16 %v3472
      %v3601 = vunpack.c.l.b16 %v3473
      %v3602 = vunpack.c.l.b16 %v3474
      %v3603 = vunpack.c.l.b16 %v3475
      %v3604 = vunpack.c.l.b16 %v3476
      %v3605 = vunpack.c.l.b16 %v3477
      %v3606 = vunpack.c.l.b16 %v3478
      %v3607 = vunpack.c.l.b16 %v3479
      %v3608 = vunpack.c.l.b16 %v3480
      %v3609 = vunpack.c.l.b16 %v3481
      %v3610 = vpack.c.b16 %v3595, %v3594
      %v3611 = vpack.c.b16 %v3597, %v3596
      %v3612 = vpack.c.b16 %v3599, %v3598
      %v3613 = vpack.c.b16 %v3601, %v3600
      %v3614 = vpack.c.b16 %v3603, %v3602
      %v3615 = vpack.c.b16 %v3605, %v3604
      %v3616 = vpack.c.b16 %v3607, %v3606
      %v3617 = vpack.c.b16 %v3609, %v3608
      %3626 = vmatprep.subr.bf16.mxu0 0
      %3627 = vmatpush1.bf16.msra.mxu0 %v3617
      %3628 = vmatprep.subr.bf16.mxu0 0
      %3629 = vmatpush1.bf16.msra.mxu0 %v3616
      %3630 = vmatprep.subr.bf16.mxu0 0
      %3631 = vmatpush1.bf16.msra.mxu0 %v3615
      %3632 = vmatprep.subr.bf16.mxu0 0
      %3633 = vmatpush1.bf16.msra.mxu0 %v3614
      %3634 = vmatprep.subr.bf16.mxu0 0
      %3635 = vmatpush1.bf16.msra.mxu0 %v3613
      %3636 = vmatprep.subr.bf16.mxu0 0
      %3637 = vmatpush1.bf16.msra.mxu0 %v3612
      %3638 = vmatprep.subr.bf16.mxu0 0
      %3639 = vmatpush1.bf16.msra.mxu0 %v3611
      %3640 = vmatprep.subr.bf16.mxu0 0
      %3641 = vmatpush1.bf16.msra.mxu0 %v3610
      %3642 = vmatprep.subr.bf16.mxu0 0
      %3643 = vmatpush2.bf16.msra.mxu0 0
      %3644 = vmatprep.subr.bf16.mxu0 0
      %3645 = vmatpush2.bf16.msra.mxu0 0
      %3646 = vmatprep.subr.bf16.mxu0 0
      %3647 = vmatpush2.bf16.msra.mxu0 0
      %3648 = vmatprep.subr.bf16.mxu0 0
      %3649 = vmatpush2.bf16.msra.mxu0 0
      %3650 = vmatprep.subr.bf16.mxu0 0
      %3651 = vmatpush2.bf16.msra.mxu0 0
      %3652 = vmatprep.subr.bf16.mxu0 0
      %3653 = vmatpush2.bf16.msra.mxu0 0
      %3654 = vmatprep.subr.bf16.mxu0 0
      %3655 = vmatpush2.bf16.msra.mxu0 0
      %3656 = vmatprep.subr.bf16.mxu0 0
      %3657 = vmatpush2.bf16.msra.mxu0 0
      %3658 = vmatprep.mubr.bf16.mxu0 0
      %3659 = vmatmul.mubr.bf16.gmra.mxu0 %v3546
      %v3660 = vpop.f32.mrf.mxu0
      %v3661 = vadd.f32 0.0, %v3660
      %v3662 = vpop.f32.mrf.mxu0
      %v3663 = vpop.f32.mrf.mxu0
      %v3664 = vadd.f32 0.0, %v3663
      %v3665 = vpop.f32.mrf.mxu0
      %3666 = vmatprep.mubr.bf16.mxu0 0
      %3667 = vmatmul.mubr.bf16.gmra.mxu0 %v3547
      %v3668 = vpop.f32.mrf.mxu0
      %v3669 = vadd.f32 0.0, %v3668
      %v3670 = vpop.f32.mrf.mxu0
      %v3671 = vpop.f32.mrf.mxu0
      %v3672 = vadd.f32 0.0, %v3671
      %v3673 = vpop.f32.mrf.mxu0
      %3674 = vmatprep.mubr.bf16.mxu0 0
      %3675 = vmatmul.mubr.bf16.gmra.mxu0 %v3548
      %v3676 = vpop.f32.mrf.mxu0
      %v3677 = vadd.f32 0.0, %v3676
      %v3678 = vpop.f32.mrf.mxu0
      %v3679 = vpop.f32.mrf.mxu0
      %v3680 = vadd.f32 0.0, %v3679
      %v3681 = vpop.f32.mrf.mxu0
      %3682 = vmatprep.mubr.bf16.mxu0 0
      %3683 = vmatmul.mubr.bf16.gmra.mxu0 %v3549
      %v3684 = vpop.f32.mrf.mxu0
      %v3685 = vadd.f32 0.0, %v3684
      %v3686 = vpop.f32.mrf.mxu0
      %v3687 = vpop.f32.mrf.mxu0
      %v3688 = vadd.f32 0.0, %v3687
      %v3689 = vpop.f32.mrf.mxu0
      %3690 = vmatprep.mubr.bf16.mxu0 0
      %3691 = vmatmul.mubr.bf16.gmra.mxu0 %v3550
      %v3692 = vpop.f32.mrf.mxu0
      %v3693 = vadd.f32 0.0, %v3692
      %v3694 = vpop.f32.mrf.mxu0
      %v3695 = vpop.f32.mrf.mxu0
      %v3696 = vadd.f32 0.0, %v3695
      %v3697 = vpop.f32.mrf.mxu0
      %3698 = vmatprep.mubr.bf16.mxu0 0
      %3699 = vmatmul.mubr.bf16.gmra.mxu0 %v3551
      %v3700 = vpop.f32.mrf.mxu0
      %v3701 = vadd.f32 0.0, %v3700
      %v3702 = vpop.f32.mrf.mxu0
      %v3703 = vpop.f32.mrf.mxu0
      %v3704 = vadd.f32 0.0, %v3703
      %v3705 = vpop.f32.mrf.mxu0
      %3706 = vmatprep.mubr.bf16.mxu0 0
      %3707 = vmatmul.mubr.bf16.gmra.mxu0 %v3552
      %v3708 = vpop.f32.mrf.mxu0
      %v3709 = vadd.f32 0.0, %v3708
      %v3710 = vpop.f32.mrf.mxu0
      %v3711 = vpop.f32.mrf.mxu0
      %v3712 = vadd.f32 0.0, %v3711
      %v3713 = vpop.f32.mrf.mxu0
      %3714 = vmatprep.mubr.bf16.mxu0 0
      %3715 = vmatmul.mubr.bf16.gmra.mxu0 %v3553
      %v3716 = vpop.f32.mrf.mxu0
      %v3717 = vadd.f32 0.0, %v3716
      %v3718 = vpop.f32.mrf.mxu0
      %v3719 = vpop.f32.mrf.mxu0
      %v3720 = vadd.f32 0.0, %v3719
      %v3721 = vpop.f32.mrf.mxu0
      %3722 = vmatprep.mubr.bf16.mxu0 0
      %3723 = vmatmul.mubr.bf16.gmra.mxu0 %v3554
      %v3724 = vpop.f32.mrf.mxu0
      %v3725 = vadd.f32 0.0, %v3724
      %v3726 = vpop.f32.mrf.mxu0
      %v3727 = vpop.f32.mrf.mxu0
      %v3728 = vadd.f32 0.0, %v3727
      %v3729 = vpop.f32.mrf.mxu0
      %3730 = vmatprep.mubr.bf16.mxu0 0
      %3731 = vmatmul.mubr.bf16.gmra.mxu0 %v3555
      %v3732 = vpop.f32.mrf.mxu0
      %v3733 = vadd.f32 0.0, %v3732
      %v3734 = vpop.f32.mrf.mxu0
      %v3735 = vpop.f32.mrf.mxu0
      %v3736 = vadd.f32 0.0, %v3735
      %v3737 = vpop.f32.mrf.mxu0
      %3738 = vmatprep.mubr.bf16.mxu0 0
      %3739 = vmatmul.mubr.bf16.gmra.mxu0 %v3556
      %v3740 = vpop.f32.mrf.mxu0
      %v3741 = vadd.f32 0.0, %v3740
      %v3742 = vpop.f32.mrf.mxu0
      %v3743 = vpop.f32.mrf.mxu0
      %v3744 = vadd.f32 0.0, %v3743
      %v3745 = vpop.f32.mrf.mxu0
      %3746 = vmatprep.mubr.bf16.mxu0 0
      %3747 = vmatmul.mubr.bf16.gmra.mxu0 %v3557
      %v3748 = vpop.f32.mrf.mxu0
      %v3749 = vadd.f32 0.0, %v3748
      %v3750 = vpop.f32.mrf.mxu0
      %v3751 = vpop.f32.mrf.mxu0
      %v3752 = vadd.f32 0.0, %v3751
      %v3753 = vpop.f32.mrf.mxu0
      %3754 = vmatprep.mubr.bf16.mxu0 0
      %3755 = vmatmul.mubr.bf16.gmra.mxu0 %v3558
      %v3756 = vpop.f32.mrf.mxu0
      %v3757 = vadd.f32 0.0, %v3756
      %v3758 = vpop.f32.mrf.mxu0
      %v3759 = vpop.f32.mrf.mxu0
      %v3760 = vadd.f32 0.0, %v3759
      %v3761 = vpop.f32.mrf.mxu0
      %3762 = vmatprep.mubr.bf16.mxu0 0
      %3763 = vmatmul.mubr.bf16.gmra.mxu0 %v3559
      %v3764 = vpop.f32.mrf.mxu0
      %v3765 = vadd.f32 0.0, %v3764
      %v3766 = vpop.f32.mrf.mxu0
      %v3767 = vpop.f32.mrf.mxu0
      %v3768 = vadd.f32 0.0, %v3767
      %v3769 = vpop.f32.mrf.mxu0
      %3770 = vmatprep.mubr.bf16.mxu0 0
      %3771 = vmatmul.mubr.bf16.gmra.mxu0 %v3560
      %v3772 = vpop.f32.mrf.mxu0
      %v3773 = vadd.f32 0.0, %v3772
      %v3774 = vpop.f32.mrf.mxu0
      %v3775 = vpop.f32.mrf.mxu0
      %v3776 = vadd.f32 0.0, %v3775
      %v3777 = vpop.f32.mrf.mxu0
      %3778 = vmatprep.mubr.bf16.mxu0 0
      %3779 = vmatmul.mubr.bf16.gmra.mxu0 %v3561
      %v3780 = vpop.f32.mrf.mxu0
      %v3781 = vadd.f32 0.0, %v3780
      %v3782 = vpop.f32.mrf.mxu0
      %v3783 = vpop.f32.mrf.mxu0
      %v3784 = vadd.f32 0.0, %v3783
      %v3785 = vpop.f32.mrf.mxu0
      %3786 = vdwg.mxu0
      %v3787 = vadd.f32 %v3400, %v3661
      %v3788 = vadd.f32 %v3401, %v3664
      %v3789 = vadd.f32 %v3402, %v3669
      %v3790 = vadd.f32 %v3403, %v3672
      %v3791 = vadd.f32 %v3404, %v3677
      %v3792 = vadd.f32 %v3405, %v3680
      %v3793 = vadd.f32 %v3406, %v3685
      %v3794 = vadd.f32 %v3407, %v3688
      %v3795 = vadd.f32 %v3408, %v3693
      %v3796 = vadd.f32 %v3409, %v3696
      %v3797 = vadd.f32 %v3410, %v3701
      %v3798 = vadd.f32 %v3411, %v3704
      %v3799 = vadd.f32 %v3412, %v3709
      %v3800 = vadd.f32 %v3413, %v3712
      %v3801 = vadd.f32 %v3414, %v3717
      %v3802 = vadd.f32 %v3415, %v3720
      %v3803 = vadd.f32 %v3416, %v3725
      %v3804 = vadd.f32 %v3417, %v3728
      %v3805 = vadd.f32 %v3418, %v3733
      %v3806 = vadd.f32 %v3419, %v3736
      %v3807 = vadd.f32 %v3420, %v3741
      %v3808 = vadd.f32 %v3421, %v3744
      %v3809 = vadd.f32 %v3422, %v3749
      %v3810 = vadd.f32 %v3423, %v3752
      %v3811 = vadd.f32 %v3424, %v3757
      %v3812 = vadd.f32 %v3425, %v3760
      %v3813 = vadd.f32 %v3426, %v3765
      %v3814 = vadd.f32 %v3427, %v3768
      %v3815 = vadd.f32 %v3428, %v3773
      %v3816 = vadd.f32 %v3429, %v3776
      %v3817 = vadd.f32 %v3430, %v3781
      %v3818 = vadd.f32 %v3431, %v3784
      %v3819 = vld [vmem:[%s3432] sm:$0xf]
      %v3820 = vld [vmem:[%s3432 + $0x4] sm:$0xf]
      %v3821 = vld [vmem:[%s3432 + $0x8] sm:$0x1]
      %v3822 = vld [vmem:[%s3432 + $0xc] sm:$0xf]
      %v3823 = vld [vmem:[%s3432 + $0x10] sm:$0xf]
      %v3824 = vld [vmem:[%s3432 + $0x14] sm:$0x1]
      %v3825 = vld [vmem:[%s3432 + $0x18] sm:$0xf]
      %v3826 = vld [vmem:[%s3432 + $0x1c] sm:$0xf]
      %v3827 = vld [vmem:[%s3432 + $0x20] sm:$0x1]
      %v3828 = vld [vmem:[%s3432 + $0x24] sm:$0xf]
      %v3829 = vld [vmem:[%s3432 + $0x28] sm:$0xf]
      %v3830 = vld [vmem:[%s3432 + $0x2c] sm:$0x1]
      %v3831 = vld [vmem:[%s3432 + $0x30] sm:$0xf]
      %v3832 = vld [vmem:[%s3432 + $0x34] sm:$0xf]
      %v3833 = vld [vmem:[%s3432 + $0x38] sm:$0x1]
      %v3834 = vld [vmem:[%s3432 + $0x3c] sm:$0xf]
      %v3835 = vld [vmem:[%s3432 + $0x40] sm:$0xf]
      %v3836 = vld [vmem:[%s3432 + $0x44] sm:$0x1]
      %v3837 = vld [vmem:[%s3432 + $0x48] sm:$0xf]
      %v3838 = vld [vmem:[%s3432 + $0x4c] sm:$0xf]
      %v3839 = vld [vmem:[%s3432 + $0x50] sm:$0x1]
      %v3840 = vld [vmem:[%s3432 + $0x54] sm:$0xf]
      %v3841 = vld [vmem:[%s3432 + $0x58] sm:$0xf]
      %v3842 = vld [vmem:[%s3432 + $0x5c] sm:$0x1]
      %v3843 = vld [vmem:[%s3432 + $0x60] sm:$0xf]
      %v3844 = vld [vmem:[%s3432 + $0x64] sm:$0xf]
      %v3845 = vld [vmem:[%s3432 + $0x68] sm:$0x1]
      %v3846 = vld [vmem:[%s3432 + $0x6c] sm:$0xf]
      %v3847 = vld [vmem:[%s3432 + $0x70] sm:$0xf]
      %v3848 = vld [vmem:[%s3432 + $0x74] sm:$0x1]
      %v3849 = vld [vmem:[%s3432 + $0x78] sm:$0xf]
      %v3850 = vld [vmem:[%s3432 + $0x7c] sm:$0xf]
      %v3851 = vld [vmem:[%s3432 + $0x80] sm:$0x1]
      %v3852 = vld [vmem:[%s3432 + $0x84] sm:$0xf]
      %v3853 = vld [vmem:[%s3432 + $0x88] sm:$0xf]
      %v3854 = vld [vmem:[%s3432 + $0x8c] sm:$0x1]
      %v3855 = vld [vmem:[%s3432 + $0x90] sm:$0xf]
      %v3856 = vld [vmem:[%s3432 + $0x94] sm:$0xf]
      %v3857 = vld [vmem:[%s3432 + $0x98] sm:$0x1]
      %v3858 = vld [vmem:[%s3432 + $0x9c] sm:$0xf]
      %v3859 = vld [vmem:[%s3432 + $0xa0] sm:$0xf]
      %v3860 = vld [vmem:[%s3432 + $0xa4] sm:$0x1]
      %v3861 = vld [vmem:[%s3432 + $0xa8] sm:$0xf]
      %v3862 = vld [vmem:[%s3432 + $0xac] sm:$0xf]
      %v3863 = vld [vmem:[%s3432 + $0xb0] sm:$0x1]
      %v3864 = vld [vmem:[%s3432 + $0xb4] sm:$0xf]
      %v3865 = vld [vmem:[%s3432 + $0xb8] sm:$0xf]
      %v3866 = vld [vmem:[%s3432 + $0xbc] sm:$0x1]
      %v3868 = vshrl.u32 %v3819, 16
      %v3870 = vrot.slane %v3868, 4
      %v3871 = vshll.u32 %v3819, 16
      %v3873 = vrot.slane %v3871, 5
      %v3874 = vor.u32 %v3870, %v3873
      %v3875 = vrot.slane %v3874, 4
      %v3877 = vshll.u32 %v3820, 16
      %v3879 = vrot.slane %v3877, 5
      %v3880 = vsel %vm328, %v3875, %v3879
      %v3881 = vshrl.u32 %v3820, 16
      %v3883 = vrot.slane %v3881, 4
      %v3884 = vor.u32 %v3883, %v3879
      %v3885 = vrot.slane %v3884, 4
      %v3887 = vshll.u32 %v3821, 16
      %v3889 = vrot.slane %v3887, 5
      %v3890 = vsel %vm328, %v3885, %v3889
      %v3892 = vshrl.u32 %v3822, 16
      %v3894 = vrot.slane %v3892, 4
      %v3895 = vshll.u32 %v3822, 16
      %v3897 = vrot.slane %v3895, 5
      %v3898 = vor.u32 %v3894, %v3897
      %v3899 = vrot.slane %v3898, 4
      %v3901 = vshll.u32 %v3823, 16
      %v3903 = vrot.slane %v3901, 5
      %v3904 = vsel %vm328, %v3899, %v3903
      %v3905 = vshrl.u32 %v3823, 16
      %v3907 = vrot.slane %v3905, 4
      %v3908 = vor.u32 %v3907, %v3903
      %v3909 = vrot.slane %v3908, 4
      %v3911 = vshll.u32 %v3824, 16
      %v3913 = vrot.slane %v3911, 5
      %v3914 = vsel %vm328, %v3909, %v3913
      %v3916 = vshrl.u32 %v3825, 16
      %v3918 = vrot.slane %v3916, 4
      %v3919 = vshll.u32 %v3825, 16
      %v3921 = vrot.slane %v3919, 5
      %v3922 = vor.u32 %v3918, %v3921
      %v3923 = vrot.slane %v3922, 4
      %v3925 = vshll.u32 %v3826, 16
      %v3927 = vrot.slane %v3925, 5
      %v3928 = vsel %vm328, %v3923, %v3927
      %v3929 = vshrl.u32 %v3826, 16
      %v3931 = vrot.slane %v3929, 4
      %v3932 = vor.u32 %v3931, %v3927
      %v3933 = vrot.slane %v3932, 4
      %v3935 = vshll.u32 %v3827, 16
      %v3937 = vrot.slane %v3935, 5
      %v3938 = vsel %vm328, %v3933, %v3937
      %v3940 = vshrl.u32 %v3828, 16
      %v3942 = vrot.slane %v3940, 4
      %v3943 = vshll.u32 %v3828, 16
      %v3945 = vrot.slane %v3943, 5
      %v3946 = vor.u32 %v3942, %v3945
      %v3947 = vrot.slane %v3946, 4
      %v3949 = vshll.u32 %v3829, 16
      %v3951 = vrot.slane %v3949, 5
      %v3952 = vsel %vm328, %v3947, %v3951
      %v3953 = vshrl.u32 %v3829, 16
      %v3955 = vrot.slane %v3953, 4
      %v3956 = vor.u32 %v3955, %v3951
      %v3957 = vrot.slane %v3956, 4
      %v3959 = vshll.u32 %v3830, 16
      %v3961 = vrot.slane %v3959, 5
      %v3962 = vsel %vm328, %v3957, %v3961
      %v3964 = vshrl.u32 %v3831, 16
      %v3966 = vrot.slane %v3964, 4
      %v3967 = vshll.u32 %v3831, 16
      %v3969 = vrot.slane %v3967, 5
      %v3970 = vor.u32 %v3966, %v3969
      %v3971 = vrot.slane %v3970, 4
      %v3973 = vshll.u32 %v3832, 16
      %v3975 = vrot.slane %v3973, 5
      %v3976 = vsel %vm328, %v3971, %v3975
      %v3977 = vshrl.u32 %v3832, 16
      %v3979 = vrot.slane %v3977, 4
      %v3980 = vor.u32 %v3979, %v3975
      %v3981 = vrot.slane %v3980, 4
      %v3983 = vshll.u32 %v3833, 16
      %v3985 = vrot.slane %v3983, 5
      %v3986 = vsel %vm328, %v3981, %v3985
      %v3988 = vshrl.u32 %v3834, 16
      %v3990 = vrot.slane %v3988, 4
      %v3991 = vshll.u32 %v3834, 16
      %v3993 = vrot.slane %v3991, 5
      %v3994 = vor.u32 %v3990, %v3993
      %v3995 = vrot.slane %v3994, 4
      %v3997 = vshll.u32 %v3835, 16
      %v3999 = vrot.slane %v3997, 5
      %v4000 = vsel %vm328, %v3995, %v3999
      %v4001 = vshrl.u32 %v3835, 16
      %v4003 = vrot.slane %v4001, 4
      %v4004 = vor.u32 %v4003, %v3999
      %v4005 = vrot.slane %v4004, 4
      %v4007 = vshll.u32 %v3836, 16
      %v4009 = vrot.slane %v4007, 5
      %v4010 = vsel %vm328, %v4005, %v4009
      %v4012 = vshrl.u32 %v3837, 16
      %v4014 = vrot.slane %v4012, 4
      %v4015 = vshll.u32 %v3837, 16
      %v4017 = vrot.slane %v4015, 5
      %v4018 = vor.u32 %v4014, %v4017
      %v4019 = vrot.slane %v4018, 4
      %v4021 = vshll.u32 %v3838, 16
      %v4023 = vrot.slane %v4021, 5
      %v4024 = vsel %vm328, %v4019, %v4023
      %v4025 = vshrl.u32 %v3838, 16
      %v4027 = vrot.slane %v4025, 4
      %v4028 = vor.u32 %v4027, %v4023
      %v4029 = vrot.slane %v4028, 4
      %v4031 = vshll.u32 %v3839, 16
      %v4033 = vrot.slane %v4031, 5
      %v4034 = vsel %vm328, %v4029, %v4033
      %v4036 = vshrl.u32 %v3840, 16
      %v4038 = vrot.slane %v4036, 4
      %v4039 = vshll.u32 %v3840, 16
      %v4041 = vrot.slane %v4039, 5
      %v4042 = vor.u32 %v4038, %v4041
      %v4043 = vrot.slane %v4042, 4
      %v4045 = vshll.u32 %v3841, 16
      %v4047 = vrot.slane %v4045, 5
      %v4048 = vsel %vm328, %v4043, %v4047
      %v4049 = vshrl.u32 %v3841, 16
      %v4051 = vrot.slane %v4049, 4
      %v4052 = vor.u32 %v4051, %v4047
      %v4053 = vrot.slane %v4052, 4
      %v4055 = vshll.u32 %v3842, 16
      %v4057 = vrot.slane %v4055, 5
      %v4058 = vsel %vm328, %v4053, %v4057
      %v4060 = vshrl.u32 %v3843, 16
      %v4062 = vrot.slane %v4060, 4
      %v4063 = vshll.u32 %v3843, 16
      %v4065 = vrot.slane %v4063, 5
      %v4066 = vor.u32 %v4062, %v4065
      %v4067 = vrot.slane %v4066, 4
      %v4069 = vshll.u32 %v3844, 16
      %v4071 = vrot.slane %v4069, 5
      %v4072 = vsel %vm328, %v4067, %v4071
      %v4073 = vshrl.u32 %v3844, 16
      %v4075 = vrot.slane %v4073, 4
      %v4076 = vor.u32 %v4075, %v4071
      %v4077 = vrot.slane %v4076, 4
      %v4079 = vshll.u32 %v3845, 16
      %v4081 = vrot.slane %v4079, 5
      %v4082 = vsel %vm328, %v4077, %v4081
      %v4084 = vshrl.u32 %v3846, 16
      %v4086 = vrot.slane %v4084, 4
      %v4087 = vshll.u32 %v3846, 16
      %v4089 = vrot.slane %v4087, 5
      %v4090 = vor.u32 %v4086, %v4089
      %v4091 = vrot.slane %v4090, 4
      %v4093 = vshll.u32 %v3847, 16
      %v4095 = vrot.slane %v4093, 5
      %v4096 = vsel %vm328, %v4091, %v4095
      %v4097 = vshrl.u32 %v3847, 16
      %v4099 = vrot.slane %v4097, 4
      %v4100 = vor.u32 %v4099, %v4095
      %v4101 = vrot.slane %v4100, 4
      %v4103 = vshll.u32 %v3848, 16
      %v4105 = vrot.slane %v4103, 5
      %v4106 = vsel %vm328, %v4101, %v4105
      %v4108 = vshrl.u32 %v3849, 16
      %v4110 = vrot.slane %v4108, 4
      %v4111 = vshll.u32 %v3849, 16
      %v4113 = vrot.slane %v4111, 5
      %v4114 = vor.u32 %v4110, %v4113
      %v4115 = vrot.slane %v4114, 4
      %v4117 = vshll.u32 %v3850, 16
      %v4119 = vrot.slane %v4117, 5
      %v4120 = vsel %vm328, %v4115, %v4119
      %v4121 = vshrl.u32 %v3850, 16
      %v4123 = vrot.slane %v4121, 4
      %v4124 = vor.u32 %v4123, %v4119
      %v4125 = vrot.slane %v4124, 4
      %v4127 = vshll.u32 %v3851, 16
      %v4129 = vrot.slane %v4127, 5
      %v4130 = vsel %vm328, %v4125, %v4129
      %v4132 = vshrl.u32 %v3852, 16
      %v4134 = vrot.slane %v4132, 4
      %v4135 = vshll.u32 %v3852, 16
      %v4137 = vrot.slane %v4135, 5
      %v4138 = vor.u32 %v4134, %v4137
      %v4139 = vrot.slane %v4138, 4
      %v4141 = vshll.u32 %v3853, 16
      %v4143 = vrot.slane %v4141, 5
      %v4144 = vsel %vm328, %v4139, %v4143
      %v4145 = vshrl.u32 %v3853, 16
      %v4147 = vrot.slane %v4145, 4
      %v4148 = vor.u32 %v4147, %v4143
      %v4149 = vrot.slane %v4148, 4
      %v4151 = vshll.u32 %v3854, 16
      %v4153 = vrot.slane %v4151, 5
      %v4154 = vsel %vm328, %v4149, %v4153
      %v4156 = vshrl.u32 %v3855, 16
      %v4158 = vrot.slane %v4156, 4
      %v4159 = vshll.u32 %v3855, 16
      %v4161 = vrot.slane %v4159, 5
      %v4162 = vor.u32 %v4158, %v4161
      %v4163 = vrot.slane %v4162, 4
      %v4165 = vshll.u32 %v3856, 16
      %v4167 = vrot.slane %v4165, 5
      %v4168 = vsel %vm328, %v4163, %v4167
      %v4169 = vshrl.u32 %v3856, 16
      %v4171 = vrot.slane %v4169, 4
      %v4172 = vor.u32 %v4171, %v4167
      %v4173 = vrot.slane %v4172, 4
      %v4175 = vshll.u32 %v3857, 16
      %v4177 = vrot.slane %v4175, 5
      %v4178 = vsel %vm328, %v4173, %v4177
      %v4180 = vshrl.u32 %v3858, 16
      %v4182 = vrot.slane %v4180, 4
      %v4183 = vshll.u32 %v3858, 16
      %v4185 = vrot.slane %v4183, 5
      %v4186 = vor.u32 %v4182, %v4185
      %v4187 = vrot.slane %v4186, 4
      %v4189 = vshll.u32 %v3859, 16
      %v4191 = vrot.slane %v4189, 5
      %v4192 = vsel %vm328, %v4187, %v4191
      %v4193 = vshrl.u32 %v3859, 16
      %v4195 = vrot.slane %v4193, 4
      %v4196 = vor.u32 %v4195, %v4191
      %v4197 = vrot.slane %v4196, 4
      %v4199 = vshll.u32 %v3860, 16
      %v4201 = vrot.slane %v4199, 5
      %v4202 = vsel %vm328, %v4197, %v4201
      %v4204 = vshrl.u32 %v3861, 16
      %v4206 = vrot.slane %v4204, 4
      %v4207 = vshll.u32 %v3861, 16
      %v4209 = vrot.slane %v4207, 5
      %v4210 = vor.u32 %v4206, %v4209
      %v4211 = vrot.slane %v4210, 4
      %v4213 = vshll.u32 %v3862, 16
      %v4215 = vrot.slane %v4213, 5
      %v4216 = vsel %vm328, %v4211, %v4215
      %v4217 = vshrl.u32 %v3862, 16
      %v4219 = vrot.slane %v4217, 4
      %v4220 = vor.u32 %v4219, %v4215
      %v4221 = vrot.slane %v4220, 4
      %v4223 = vshll.u32 %v3863, 16
      %v4225 = vrot.slane %v4223, 5
      %v4226 = vsel %vm328, %v4221, %v4225
      %v4228 = vshrl.u32 %v3864, 16
      %v4230 = vrot.slane %v4228, 4
      %v4231 = vshll.u32 %v3864, 16
      %v4233 = vrot.slane %v4231, 5
      %v4234 = vor.u32 %v4230, %v4233
      %v4235 = vrot.slane %v4234, 4
      %v4237 = vshll.u32 %v3865, 16
      %v4239 = vrot.slane %v4237, 5
      %v4240 = vsel %vm328, %v4235, %v4239
      %v4241 = vshrl.u32 %v3865, 16
      %v4243 = vrot.slane %v4241, 4
      %v4244 = vor.u32 %v4243, %v4239
      %v4245 = vrot.slane %v4244, 4
      %v4247 = vshll.u32 %v3866, 16
      %v4249 = vrot.slane %v4247, 5
      %v4250 = vsel %vm328, %v4245, %v4249
      %s4251 = scalar_lea.vmem %s1, 448
      %v4252 = vld [vmem:[%s4251] sm:$0xf]
      %v4253 = vld [vmem:[%s4251 + $0x4] sm:$0xf]
      %v4254 = vld [vmem:[%s4251 + $0x8] sm:$0xf]
      %v4255 = vld [vmem:[%s4251 + $0xc] sm:$0xf]
      %v4256 = vld [vmem:[%s4251 + $0x10] sm:$0xf]
      %v4257 = vld [vmem:[%s4251 + $0x14] sm:$0xf]
      %v4258 = vld [vmem:[%s4251 + $0x18] sm:$0xf]
      %v4259 = vld [vmem:[%s4251 + $0x1c] sm:$0xf]
      %v4260 = vld [vmem:[%s4251 + $0x20] sm:$0xf]
      %v4261 = vld [vmem:[%s4251 + $0x24] sm:$0xf]
      %v4262 = vld [vmem:[%s4251 + $0x28] sm:$0xf]
      %v4263 = vld [vmem:[%s4251 + $0x2c] sm:$0xf]
      %v4264 = vld [vmem:[%s4251 + $0x30] sm:$0xf]
      %v4265 = vld [vmem:[%s4251 + $0x34] sm:$0xf]
      %v4266 = vld [vmem:[%s4251 + $0x38] sm:$0xf]
      %v4267 = vld [vmem:[%s4251 + $0x3c] sm:$0xf]
      %v4268 = vunpack.c.l.b16 %v3880
      %v4269 = vunpack.c.l.b16 %v3890
      %v4270 = vunpack.c.l.b16 %v3904
      %v4271 = vunpack.c.l.b16 %v3914
      %v4272 = vunpack.c.l.b16 %v3928
      %v4273 = vunpack.c.l.b16 %v3938
      %v4274 = vunpack.c.l.b16 %v3952
      %v4275 = vunpack.c.l.b16 %v3962
      %v4276 = vunpack.c.l.b16 %v3976
      %v4277 = vunpack.c.l.b16 %v3986
      %v4278 = vunpack.c.l.b16 %v4000
      %v4279 = vunpack.c.l.b16 %v4010
      %v4280 = vunpack.c.l.b16 %v4024
      %v4281 = vunpack.c.l.b16 %v4034
      %v4282 = vunpack.c.l.b16 %v4048
      %v4283 = vunpack.c.l.b16 %v4058
      %v4284 = vunpack.c.l.b16 %v4072
      %v4285 = vunpack.c.l.b16 %v4082
      %v4286 = vunpack.c.l.b16 %v4096
      %v4287 = vunpack.c.l.b16 %v4106
      %v4288 = vunpack.c.l.b16 %v4120
      %v4289 = vunpack.c.l.b16 %v4130
      %v4290 = vunpack.c.l.b16 %v4144
      %v4291 = vunpack.c.l.b16 %v4154
      %v4292 = vunpack.c.l.b16 %v4168
      %v4293 = vunpack.c.l.b16 %v4178
      %v4294 = vunpack.c.l.b16 %v4192
      %v4295 = vunpack.c.l.b16 %v4202
      %v4296 = vunpack.c.l.b16 %v4216
      %v4297 = vunpack.c.l.b16 %v4226
      %v4298 = vunpack.c.l.b16 %v4240
      %v4299 = vunpack.c.l.b16 %v4250
      %v4300 = vpack.c.b16 %v4269, %v4268
      %v4301 = vpack.c.b16 %v4271, %v4270
      %v4302 = vpack.c.b16 %v4273, %v4272
      %v4303 = vpack.c.b16 %v4275, %v4274
      %v4304 = vpack.c.b16 %v4277, %v4276
      %v4305 = vpack.c.b16 %v4279, %v4278
      %v4306 = vpack.c.b16 %v4281, %v4280
      %v4307 = vpack.c.b16 %v4283, %v4282
      %v4308 = vpack.c.b16 %v4285, %v4284
      %v4309 = vpack.c.b16 %v4287, %v4286
      %v4310 = vpack.c.b16 %v4289, %v4288
      %v4311 = vpack.c.b16 %v4291, %v4290
      %v4312 = vpack.c.b16 %v4293, %v4292
      %v4313 = vpack.c.b16 %v4295, %v4294
      %v4314 = vpack.c.b16 %v4297, %v4296
      %v4315 = vpack.c.b16 %v4299, %v4298
      %v4348 = vunpack.c.l.b16 %v4252
      %v4349 = vunpack.c.l.b16 %v4253
      %v4350 = vunpack.c.l.b16 %v4254
      %v4351 = vunpack.c.l.b16 %v4255
      %v4352 = vunpack.c.l.b16 %v4256
      %v4353 = vunpack.c.l.b16 %v4257
      %v4354 = vunpack.c.l.b16 %v4258
      %v4355 = vunpack.c.l.b16 %v4259
      %v4356 = vunpack.c.l.b16 %v4260
      %v4357 = vunpack.c.l.b16 %v4261
      %v4358 = vunpack.c.l.b16 %v4262
      %v4359 = vunpack.c.l.b16 %v4263
      %v4360 = vunpack.c.l.b16 %v4264
      %v4361 = vunpack.c.l.b16 %v4265
      %v4362 = vunpack.c.l.b16 %v4266
      %v4363 = vunpack.c.l.b16 %v4267
      %v4364 = vpack.c.b16 %v4349, %v4348
      %v4365 = vpack.c.b16 %v4351, %v4350
      %v4366 = vpack.c.b16 %v4353, %v4352
      %v4367 = vpack.c.b16 %v4355, %v4354
      %v4368 = vpack.c.b16 %v4357, %v4356
      %v4369 = vpack.c.b16 %v4359, %v4358
      %v4370 = vpack.c.b16 %v4361, %v4360
      %v4371 = vpack.c.b16 %v4363, %v4362
      %4380 = vmatprep.subr.bf16.mxu0 0
      %4381 = vmatpush1.bf16.msra.mxu0 %v4371
      %4382 = vmatprep.subr.bf16.mxu0 0
      %4383 = vmatpush1.bf16.msra.mxu0 %v4370
      %4384 = vmatprep.subr.bf16.mxu0 0
      %4385 = vmatpush1.bf16.msra.mxu0 %v4369
      %4386 = vmatprep.subr.bf16.mxu0 0
      %4387 = vmatpush1.bf16.msra.mxu0 %v4368
      %4388 = vmatprep.subr.bf16.mxu0 0
      %4389 = vmatpush1.bf16.msra.mxu0 %v4367
      %4390 = vmatprep.subr.bf16.mxu0 0
      %4391 = vmatpush1.bf16.msra.mxu0 %v4366
      %4392 = vmatprep.subr.bf16.mxu0 0
      %4393 = vmatpush1.bf16.msra.mxu0 %v4365
      %4394 = vmatprep.subr.bf16.mxu0 0
      %4395 = vmatpush1.bf16.msra.mxu0 %v4364
      %4396 = vmatprep.subr.bf16.mxu0 0
      %4397 = vmatpush2.bf16.msra.mxu0 0
      %4398 = vmatprep.subr.bf16.mxu0 0
      %4399 = vmatpush2.bf16.msra.mxu0 0
      %4400 = vmatprep.subr.bf16.mxu0 0
      %4401 = vmatpush2.bf16.msra.mxu0 0
      %4402 = vmatprep.subr.bf16.mxu0 0
      %4403 = vmatpush2.bf16.msra.mxu0 0
      %4404 = vmatprep.subr.bf16.mxu0 0
      %4405 = vmatpush2.bf16.msra.mxu0 0
      %4406 = vmatprep.subr.bf16.mxu0 0
      %4407 = vmatpush2.bf16.msra.mxu0 0
      %4408 = vmatprep.subr.bf16.mxu0 0
      %4409 = vmatpush2.bf16.msra.mxu0 0
      %4410 = vmatprep.subr.bf16.mxu0 0
      %4411 = vmatpush2.bf16.msra.mxu0 0
      %4412 = vmatprep.mubr.bf16.mxu0 0
      %4413 = vmatmul.mubr.bf16.gmra.mxu0 %v4300
      %v4414 = vpop.f32.mrf.mxu0
      %v4415 = vadd.f32 0.0, %v4414
      %v4416 = vpop.f32.mrf.mxu0
      %v4417 = vpop.f32.mrf.mxu0
      %v4418 = vadd.f32 0.0, %v4417
      %v4419 = vpop.f32.mrf.mxu0
      %4420 = vmatprep.mubr.bf16.mxu0 0
      %4421 = vmatmul.mubr.bf16.gmra.mxu0 %v4301
      %v4422 = vpop.f32.mrf.mxu0
      %v4423 = vadd.f32 0.0, %v4422
      %v4424 = vpop.f32.mrf.mxu0
      %v4425 = vpop.f32.mrf.mxu0
      %v4426 = vadd.f32 0.0, %v4425
      %v4427 = vpop.f32.mrf.mxu0
      %4428 = vmatprep.mubr.bf16.mxu0 0
      %4429 = vmatmul.mubr.bf16.gmra.mxu0 %v4302
      %v4430 = vpop.f32.mrf.mxu0
      %v4431 = vadd.f32 0.0, %v4430
      %v4432 = vpop.f32.mrf.mxu0
      %v4433 = vpop.f32.mrf.mxu0
      %v4434 = vadd.f32 0.0, %v4433
      %v4435 = vpop.f32.mrf.mxu0
      %4436 = vmatprep.mubr.bf16.mxu0 0
      %4437 = vmatmul.mubr.bf16.gmra.mxu0 %v4303
      %v4438 = vpop.f32.mrf.mxu0
      %v4439 = vadd.f32 0.0, %v4438
      %v4440 = vpop.f32.mrf.mxu0
      %v4441 = vpop.f32.mrf.mxu0
      %v4442 = vadd.f32 0.0, %v4441
      %v4443 = vpop.f32.mrf.mxu0
      %4444 = vmatprep.mubr.bf16.mxu0 0
      %4445 = vmatmul.mubr.bf16.gmra.mxu0 %v4304
      %v4446 = vpop.f32.mrf.mxu0
      %v4447 = vadd.f32 0.0, %v4446
      %v4448 = vpop.f32.mrf.mxu0
      %v4449 = vpop.f32.mrf.mxu0
      %v4450 = vadd.f32 0.0, %v4449
      %v4451 = vpop.f32.mrf.mxu0
      %4452 = vmatprep.mubr.bf16.mxu0 0
      %4453 = vmatmul.mubr.bf16.gmra.mxu0 %v4305
      %v4454 = vpop.f32.mrf.mxu0
      %v4455 = vadd.f32 0.0, %v4454
      %v4456 = vpop.f32.mrf.mxu0
      %v4457 = vpop.f32.mrf.mxu0
      %v4458 = vadd.f32 0.0, %v4457
      %v4459 = vpop.f32.mrf.mxu0
      %4460 = vmatprep.mubr.bf16.mxu0 0
      %4461 = vmatmul.mubr.bf16.gmra.mxu0 %v4306
      %v4462 = vpop.f32.mrf.mxu0
      %v4463 = vadd.f32 0.0, %v4462
      %v4464 = vpop.f32.mrf.mxu0
      %v4465 = vpop.f32.mrf.mxu0
      %v4466 = vadd.f32 0.0, %v4465
      %v4467 = vpop.f32.mrf.mxu0
      %4468 = vmatprep.mubr.bf16.mxu0 0
      %4469 = vmatmul.mubr.bf16.gmra.mxu0 %v4307
      %v4470 = vpop.f32.mrf.mxu0
      %v4471 = vadd.f32 0.0, %v4470
      %v4472 = vpop.f32.mrf.mxu0
      %v4473 = vpop.f32.mrf.mxu0
      %v4474 = vadd.f32 0.0, %v4473
      %v4475 = vpop.f32.mrf.mxu0
      %4476 = vmatprep.mubr.bf16.mxu0 0
      %4477 = vmatmul.mubr.bf16.gmra.mxu0 %v4308
      %v4478 = vpop.f32.mrf.mxu0
      %v4479 = vadd.f32 0.0, %v4478
      %v4480 = vpop.f32.mrf.mxu0
      %v4481 = vpop.f32.mrf.mxu0
      %v4482 = vadd.f32 0.0, %v4481
      %v4483 = vpop.f32.mrf.mxu0
      %4484 = vmatprep.mubr.bf16.mxu0 0
      %4485 = vmatmul.mubr.bf16.gmra.mxu0 %v4309
      %v4486 = vpop.f32.mrf.mxu0
      %v4487 = vadd.f32 0.0, %v4486
      %v4488 = vpop.f32.mrf.mxu0
      %v4489 = vpop.f32.mrf.mxu0
      %v4490 = vadd.f32 0.0, %v4489
      %v4491 = vpop.f32.mrf.mxu0
      %4492 = vmatprep.mubr.bf16.mxu0 0
      %4493 = vmatmul.mubr.bf16.gmra.mxu0 %v4310
      %v4494 = vpop.f32.mrf.mxu0
      %v4495 = vadd.f32 0.0, %v4494
      %v4496 = vpop.f32.mrf.mxu0
      %v4497 = vpop.f32.mrf.mxu0
      %v4498 = vadd.f32 0.0, %v4497
      %v4499 = vpop.f32.mrf.mxu0
      %4500 = vmatprep.mubr.bf16.mxu0 0
      %4501 = vmatmul.mubr.bf16.gmra.mxu0 %v4311
      %v4502 = vpop.f32.mrf.mxu0
      %v4503 = vadd.f32 0.0, %v4502
      %v4504 = vpop.f32.mrf.mxu0
      %v4505 = vpop.f32.mrf.mxu0
      %v4506 = vadd.f32 0.0, %v4505
      %v4507 = vpop.f32.mrf.mxu0
      %4508 = vmatprep.mubr.bf16.mxu0 0
      %4509 = vmatmul.mubr.bf16.gmra.mxu0 %v4312
      %v4510 = vpop.f32.mrf.mxu0
      %v4511 = vadd.f32 0.0, %v4510
      %v4512 = vpop.f32.mrf.mxu0
      %v4513 = vpop.f32.mrf.mxu0
      %v4514 = vadd.f32 0.0, %v4513
      %v4515 = vpop.f32.mrf.mxu0
      %4516 = vmatprep.mubr.bf16.mxu0 0
      %4517 = vmatmul.mubr.bf16.gmra.mxu0 %v4313
      %v4518 = vpop.f32.mrf.mxu0
      %v4519 = vadd.f32 0.0, %v4518
      %v4520 = vpop.f32.mrf.mxu0
      %v4521 = vpop.f32.mrf.mxu0
      %v4522 = vadd.f32 0.0, %v4521
      %v4523 = vpop.f32.mrf.mxu0
      %4524 = vmatprep.mubr.bf16.mxu0 0
      %4525 = vmatmul.mubr.bf16.gmra.mxu0 %v4314
      %v4526 = vpop.f32.mrf.mxu0
      %v4527 = vadd.f32 0.0, %v4526
      %v4528 = vpop.f32.mrf.mxu0
      %v4529 = vpop.f32.mrf.mxu0
      %v4530 = vadd.f32 0.0, %v4529
      %v4531 = vpop.f32.mrf.mxu0
      %4532 = vmatprep.mubr.bf16.mxu0 0
      %4533 = vmatmul.mubr.bf16.gmra.mxu0 %v4315
      %v4534 = vpop.f32.mrf.mxu0
      %v4535 = vadd.f32 0.0, %v4534
      %v4536 = vpop.f32.mrf.mxu0
      %v4537 = vpop.f32.mrf.mxu0
      %v4538 = vadd.f32 0.0, %v4537
      %v4539 = vpop.f32.mrf.mxu0
      %4540 = vdwg.mxu0
      %v4541 = vadd.f32 %v3787, %v4415
      %v4542 = vadd.f32 %v3788, %v4418
      %v4543 = vadd.f32 %v3789, %v4423
      %v4544 = vadd.f32 %v3790, %v4426
      %v4545 = vadd.f32 %v3791, %v4431
      %v4546 = vadd.f32 %v3792, %v4434
      %v4547 = vadd.f32 %v3793, %v4439
      %v4548 = vadd.f32 %v3794, %v4442
      %v4549 = vadd.f32 %v3795, %v4447
      %v4550 = vadd.f32 %v3796, %v4450
      %v4551 = vadd.f32 %v3797, %v4455
      %v4552 = vadd.f32 %v3798, %v4458
      %v4553 = vadd.f32 %v3799, %v4463
      %v4554 = vadd.f32 %v3800, %v4466
      %v4555 = vadd.f32 %v3801, %v4471
      %v4556 = vadd.f32 %v3802, %v4474
      %v4557 = vadd.f32 %v3803, %v4479
      %v4558 = vadd.f32 %v3804, %v4482
      %v4559 = vadd.f32 %v3805, %v4487
      %v4560 = vadd.f32 %v3806, %v4490
      %v4561 = vadd.f32 %v3807, %v4495
      %v4562 = vadd.f32 %v3808, %v4498
      %v4563 = vadd.f32 %v3809, %v4503
      %v4564 = vadd.f32 %v3810, %v4506
      %v4565 = vadd.f32 %v3811, %v4511
      %v4566 = vadd.f32 %v3812, %v4514
      %v4567 = vadd.f32 %v3813, %v4519
      %v4568 = vadd.f32 %v3814, %v4522
      %v4569 = vadd.f32 %v3815, %v4527
      %v4570 = vadd.f32 %v3816, %v4530
      %v4571 = vadd.f32 %v3817, %v4535
      %v4572 = vadd.f32 %v3818, %v4538
      %v4573 = vld [vmem:[%s3432] sm:$0xe]
      %v4574 = vld [vmem:[%s3432 + $0xc] sm:$0xe]
      %v4575 = vld [vmem:[%s3432 + $0x18] sm:$0xe]
      %v4576 = vld [vmem:[%s3432 + $0x24] sm:$0xe]
      %v4577 = vld [vmem:[%s3432 + $0x30] sm:$0xe]
      %v4578 = vld [vmem:[%s3432 + $0x3c] sm:$0xe]
      %v4579 = vld [vmem:[%s3432 + $0x48] sm:$0xe]
      %v4580 = vld [vmem:[%s3432 + $0x54] sm:$0xe]
      %v4581 = vld [vmem:[%s3432 + $0x60] sm:$0xe]
      %v4582 = vld [vmem:[%s3432 + $0x6c] sm:$0xe]
      %v4583 = vld [vmem:[%s3432 + $0x78] sm:$0xe]
      %v4584 = vld [vmem:[%s3432 + $0x84] sm:$0xe]
      %v4585 = vld [vmem:[%s3432 + $0x90] sm:$0xe]
      %v4586 = vld [vmem:[%s3432 + $0x9c] sm:$0xe]
      %v4587 = vld [vmem:[%s3432 + $0xa8] sm:$0xe]
      %v4588 = vld [vmem:[%s3432 + $0xb4] sm:$0xe]
      %v4637 = vrot.slane %v4573, 5
      %v4638 = vrot.slane %v4637, 4
      %v4639 = vrot.slane %v3820, 5
      %v4640 = vsel %vm1358, %v4638, %v4639
      %v4641 = vrot.slane %v4639, 4
      %v4642 = vrot.slane %v3821, 5
      %v4643 = vsel %vm1358, %v4641, %v4642
      %v4644 = vrot.slane %v4574, 5
      %v4645 = vrot.slane %v4644, 4
      %v4646 = vrot.slane %v3823, 5
      %v4647 = vsel %vm1358, %v4645, %v4646
      %v4648 = vrot.slane %v4646, 4
      %v4649 = vrot.slane %v3824, 5
      %v4650 = vsel %vm1358, %v4648, %v4649
      %v4651 = vrot.slane %v4575, 5
      %v4652 = vrot.slane %v4651, 4
      %v4653 = vrot.slane %v3826, 5
      %v4654 = vsel %vm1358, %v4652, %v4653
      %v4655 = vrot.slane %v4653, 4
      %v4656 = vrot.slane %v3827, 5
      %v4657 = vsel %vm1358, %v4655, %v4656
      %v4658 = vrot.slane %v4576, 5
      %v4659 = vrot.slane %v4658, 4
      %v4660 = vrot.slane %v3829, 5
      %v4661 = vsel %vm1358, %v4659, %v4660
      %v4662 = vrot.slane %v4660, 4
      %v4663 = vrot.slane %v3830, 5
      %v4664 = vsel %vm1358, %v4662, %v4663
      %v4665 = vrot.slane %v4577, 5
      %v4666 = vrot.slane %v4665, 4
      %v4667 = vrot.slane %v3832, 5
      %v4668 = vsel %vm1358, %v4666, %v4667
      %v4669 = vrot.slane %v4667, 4
      %v4670 = vrot.slane %v3833, 5
      %v4671 = vsel %vm1358, %v4669, %v4670
      %v4672 = vrot.slane %v4578, 5
      %v4673 = vrot.slane %v4672, 4
      %v4674 = vrot.slane %v3835, 5
      %v4675 = vsel %vm1358, %v4673, %v4674
      %v4676 = vrot.slane %v4674, 4
      %v4677 = vrot.slane %v3836, 5
      %v4678 = vsel %vm1358, %v4676, %v4677
      %v4679 = vrot.slane %v4579, 5
      %v4680 = vrot.slane %v4679, 4
      %v4681 = vrot.slane %v3838, 5
      %v4682 = vsel %vm1358, %v4680, %v4681
      %v4683 = vrot.slane %v4681, 4
      %v4684 = vrot.slane %v3839, 5
      %v4685 = vsel %vm1358, %v4683, %v4684
      %v4686 = vrot.slane %v4580, 5
      %v4687 = vrot.slane %v4686, 4
      %v4688 = vrot.slane %v3841, 5
      %v4689 = vsel %vm1358, %v4687, %v4688
      %v4690 = vrot.slane %v4688, 4
      %v4691 = vrot.slane %v3842, 5
      %v4692 = vsel %vm1358, %v4690, %v4691
      %v4693 = vrot.slane %v4581, 5
      %v4694 = vrot.slane %v4693, 4
      %v4695 = vrot.slane %v3844, 5
      %v4696 = vsel %vm1358, %v4694, %v4695
      %v4697 = vrot.slane %v4695, 4
      %v4698 = vrot.slane %v3845, 5
      %v4699 = vsel %vm1358, %v4697, %v4698
      %v4700 = vrot.slane %v4582, 5
      %v4701 = vrot.slane %v4700, 4
      %v4702 = vrot.slane %v3847, 5
      %v4703 = vsel %vm1358, %v4701, %v4702
      %v4704 = vrot.slane %v4702, 4
      %v4705 = vrot.slane %v3848, 5
      %v4706 = vsel %vm1358, %v4704, %v4705
      %v4707 = vrot.slane %v4583, 5
      %v4708 = vrot.slane %v4707, 4
      %v4709 = vrot.slane %v3850, 5
      %v4710 = vsel %vm1358, %v4708, %v4709
      %v4711 = vrot.slane %v4709, 4
      %v4712 = vrot.slane %v3851, 5
      %v4713 = vsel %vm1358, %v4711, %v4712
      %v4714 = vrot.slane %v4584, 5
      %v4715 = vrot.slane %v4714, 4
      %v4716 = vrot.slane %v3853, 5
      %v4717 = vsel %vm1358, %v4715, %v4716
      %v4718 = vrot.slane %v4716, 4
      %v4719 = vrot.slane %v3854, 5
      %v4720 = vsel %vm1358, %v4718, %v4719
      %v4721 = vrot.slane %v4585, 5
      %v4722 = vrot.slane %v4721, 4
      %v4723 = vrot.slane %v3856, 5
      %v4724 = vsel %vm1358, %v4722, %v4723
      %v4725 = vrot.slane %v4723, 4
      %v4726 = vrot.slane %v3857, 5
      %v4727 = vsel %vm1358, %v4725, %v4726
      %v4728 = vrot.slane %v4586, 5
      %v4729 = vrot.slane %v4728, 4
      %v4730 = vrot.slane %v3859, 5
      %v4731 = vsel %vm1358, %v4729, %v4730
      %v4732 = vrot.slane %v4730, 4
      %v4733 = vrot.slane %v3860, 5
      %v4734 = vsel %vm1358, %v4732, %v4733
      %v4735 = vrot.slane %v4587, 5
      %v4736 = vrot.slane %v4735, 4
      %v4737 = vrot.slane %v3862, 5
      %v4738 = vsel %vm1358, %v4736, %v4737
      %v4739 = vrot.slane %v4737, 4
      %v4740 = vrot.slane %v3863, 5
      %v4741 = vsel %vm1358, %v4739, %v4740
      %v4742 = vrot.slane %v4588, 5
      %v4743 = vrot.slane %v4742, 4
      %v4744 = vrot.slane %v3865, 5
      %v4745 = vsel %vm1358, %v4743, %v4744
      %v4746 = vrot.slane %v4744, 4
      %v4747 = vrot.slane %v3866, 5
      %v4748 = vsel %vm1358, %v4746, %v4747
      %s4749 = scalar_lea.vmem %s1, 512
      %v4750 = vld [vmem:[%s4749] sm:$0xf]
      %v4751 = vld [vmem:[%s4749 + $0x4] sm:$0xf]
      %v4752 = vld [vmem:[%s4749 + $0x8] sm:$0xf]
      %v4753 = vld [vmem:[%s4749 + $0xc] sm:$0xf]
      %v4754 = vld [vmem:[%s4749 + $0x10] sm:$0xf]
      %v4755 = vld [vmem:[%s4749 + $0x14] sm:$0xf]
      %v4756 = vld [vmem:[%s4749 + $0x18] sm:$0xf]
      %v4757 = vld [vmem:[%s4749 + $0x1c] sm:$0xf]
      %v4758 = vld [vmem:[%s4749 + $0x20] sm:$0xf]
      %v4759 = vld [vmem:[%s4749 + $0x24] sm:$0xf]
      %v4760 = vld [vmem:[%s4749 + $0x28] sm:$0xf]
      %v4761 = vld [vmem:[%s4749 + $0x2c] sm:$0xf]
      %v4762 = vld [vmem:[%s4749 + $0x30] sm:$0xf]
      %v4763 = vld [vmem:[%s4749 + $0x34] sm:$0xf]
      %v4764 = vld [vmem:[%s4749 + $0x38] sm:$0xf]
      %v4765 = vld [vmem:[%s4749 + $0x3c] sm:$0xf]
      %v4766 = vunpack.c.l.b16 %v4640
      %v4767 = vunpack.c.l.b16 %v4643
      %v4768 = vunpack.c.l.b16 %v4647
      %v4769 = vunpack.c.l.b16 %v4650
      %v4770 = vunpack.c.l.b16 %v4654
      %v4771 = vunpack.c.l.b16 %v4657
      %v4772 = vunpack.c.l.b16 %v4661
      %v4773 = vunpack.c.l.b16 %v4664
      %v4774 = vunpack.c.l.b16 %v4668
      %v4775 = vunpack.c.l.b16 %v4671
      %v4776 = vunpack.c.l.b16 %v4675
      %v4777 = vunpack.c.l.b16 %v4678
      %v4778 = vunpack.c.l.b16 %v4682
      %v4779 = vunpack.c.l.b16 %v4685
      %v4780 = vunpack.c.l.b16 %v4689
      %v4781 = vunpack.c.l.b16 %v4692
      %v4782 = vunpack.c.l.b16 %v4696
      %v4783 = vunpack.c.l.b16 %v4699
      %v4784 = vunpack.c.l.b16 %v4703
      %v4785 = vunpack.c.l.b16 %v4706
      %v4786 = vunpack.c.l.b16 %v4710
      %v4787 = vunpack.c.l.b16 %v4713
      %v4788 = vunpack.c.l.b16 %v4717
      %v4789 = vunpack.c.l.b16 %v4720
      %v4790 = vunpack.c.l.b16 %v4724
      %v4791 = vunpack.c.l.b16 %v4727
      %v4792 = vunpack.c.l.b16 %v4731
      %v4793 = vunpack.c.l.b16 %v4734
      %v4794 = vunpack.c.l.b16 %v4738
      %v4795 = vunpack.c.l.b16 %v4741
      %v4796 = vunpack.c.l.b16 %v4745
      %v4797 = vunpack.c.l.b16 %v4748
      %v4798 = vpack.c.b16 %v4767, %v4766
      %v4799 = vpack.c.b16 %v4769, %v4768
      %v4800 = vpack.c.b16 %v4771, %v4770
      %v4801 = vpack.c.b16 %v4773, %v4772
      %v4802 = vpack.c.b16 %v4775, %v4774
      %v4803 = vpack.c.b16 %v4777, %v4776
      %v4804 = vpack.c.b16 %v4779, %v4778
      %v4805 = vpack.c.b16 %v4781, %v4780
      %v4806 = vpack.c.b16 %v4783, %v4782
      %v4807 = vpack.c.b16 %v4785, %v4784
      %v4808 = vpack.c.b16 %v4787, %v4786
      %v4809 = vpack.c.b16 %v4789, %v4788
      %v4810 = vpack.c.b16 %v4791, %v4790
      %v4811 = vpack.c.b16 %v4793, %v4792
      %v4812 = vpack.c.b16 %v4795, %v4794
      %v4813 = vpack.c.b16 %v4797, %v4796
      %v4846 = vunpack.c.l.b16 %v4750
      %v4847 = vunpack.c.l.b16 %v4751
      %v4848 = vunpack.c.l.b16 %v4752
      %v4849 = vunpack.c.l.b16 %v4753
      %v4850 = vunpack.c.l.b16 %v4754
      %v4851 = vunpack.c.l.b16 %v4755
      %v4852 = vunpack.c.l.b16 %v4756
      %v4853 = vunpack.c.l.b16 %v4757
      %v4854 = vunpack.c.l.b16 %v4758
      %v4855 = vunpack.c.l.b16 %v4759
      %v4856 = vunpack.c.l.b16 %v4760
      %v4857 = vunpack.c.l.b16 %v4761
      %v4858 = vunpack.c.l.b16 %v4762
      %v4859 = vunpack.c.l.b16 %v4763
      %v4860 = vunpack.c.l.b16 %v4764
      %v4861 = vunpack.c.l.b16 %v4765
      %v4862 = vpack.c.b16 %v4847, %v4846
      %v4863 = vpack.c.b16 %v4849, %v4848
      %v4864 = vpack.c.b16 %v4851, %v4850
      %v4865 = vpack.c.b16 %v4853, %v4852
      %v4866 = vpack.c.b16 %v4855, %v4854
      %v4867 = vpack.c.b16 %v4857, %v4856
      %v4868 = vpack.c.b16 %v4859, %v4858
      %v4869 = vpack.c.b16 %v4861, %v4860
      %4878 = vmatprep.subr.bf16.mxu0 0
      %4879 = vmatpush1.bf16.msra.mxu0 %v4869
      %4880 = vmatprep.subr.bf16.mxu0 0
      %4881 = vmatpush1.bf16.msra.mxu0 %v4868
      %4882 = vmatprep.subr.bf16.mxu0 0
      %4883 = vmatpush1.bf16.msra.mxu0 %v4867
      %4884 = vmatprep.subr.bf16.mxu0 0
      %4885 = vmatpush1.bf16.msra.mxu0 %v4866
      %4886 = vmatprep.subr.bf16.mxu0 0
      %4887 = vmatpush1.bf16.msra.mxu0 %v4865
      %4888 = vmatprep.subr.bf16.mxu0 0
      %4889 = vmatpush1.bf16.msra.mxu0 %v4864
      %4890 = vmatprep.subr.bf16.mxu0 0
      %4891 = vmatpush1.bf16.msra.mxu0 %v4863
      %4892 = vmatprep.subr.bf16.mxu0 0
      %4893 = vmatpush1.bf16.msra.mxu0 %v4862
      %4894 = vmatprep.subr.bf16.mxu0 0
      %4895 = vmatpush2.bf16.msra.mxu0 0
      %4896 = vmatprep.subr.bf16.mxu0 0
      %4897 = vmatpush2.bf16.msra.mxu0 0
      %4898 = vmatprep.subr.bf16.mxu0 0
      %4899 = vmatpush2.bf16.msra.mxu0 0
      %4900 = vmatprep.subr.bf16.mxu0 0
      %4901 = vmatpush2.bf16.msra.mxu0 0
      %4902 = vmatprep.subr.bf16.mxu0 0
      %4903 = vmatpush2.bf16.msra.mxu0 0
      %4904 = vmatprep.subr.bf16.mxu0 0
      %4905 = vmatpush2.bf16.msra.mxu0 0
      %4906 = vmatprep.subr.bf16.mxu0 0
      %4907 = vmatpush2.bf16.msra.mxu0 0
      %4908 = vmatprep.subr.bf16.mxu0 0
      %4909 = vmatpush2.bf16.msra.mxu0 0
      %4910 = vmatprep.mubr.bf16.mxu0 0
      %4911 = vmatmul.mubr.bf16.gmra.mxu0 %v4798
      %v4912 = vpop.f32.mrf.mxu0
      %v4913 = vadd.f32 0.0, %v4912
      %v4914 = vpop.f32.mrf.mxu0
      %v4915 = vpop.f32.mrf.mxu0
      %v4916 = vadd.f32 0.0, %v4915
      %v4917 = vpop.f32.mrf.mxu0
      %4918 = vmatprep.mubr.bf16.mxu0 0
      %4919 = vmatmul.mubr.bf16.gmra.mxu0 %v4799
      %v4920 = vpop.f32.mrf.mxu0
      %v4921 = vadd.f32 0.0, %v4920
      %v4922 = vpop.f32.mrf.mxu0
      %v4923 = vpop.f32.mrf.mxu0
      %v4924 = vadd.f32 0.0, %v4923
      %v4925 = vpop.f32.mrf.mxu0
      %4926 = vmatprep.mubr.bf16.mxu0 0
      %4927 = vmatmul.mubr.bf16.gmra.mxu0 %v4800
      %v4928 = vpop.f32.mrf.mxu0
      %v4929 = vadd.f32 0.0, %v4928
      %v4930 = vpop.f32.mrf.mxu0
      %v4931 = vpop.f32.mrf.mxu0
      %v4932 = vadd.f32 0.0, %v4931
      %v4933 = vpop.f32.mrf.mxu0
      %4934 = vmatprep.mubr.bf16.mxu0 0
      %4935 = vmatmul.mubr.bf16.gmra.mxu0 %v4801
      %v4936 = vpop.f32.mrf.mxu0
      %v4937 = vadd.f32 0.0, %v4936
      %v4938 = vpop.f32.mrf.mxu0
      %v4939 = vpop.f32.mrf.mxu0
      %v4940 = vadd.f32 0.0, %v4939
      %v4941 = vpop.f32.mrf.mxu0
      %4942 = vmatprep.mubr.bf16.mxu0 0
      %4943 = vmatmul.mubr.bf16.gmra.mxu0 %v4802
      %v4944 = vpop.f32.mrf.mxu0
      %v4945 = vadd.f32 0.0, %v4944
      %v4946 = vpop.f32.mrf.mxu0
      %v4947 = vpop.f32.mrf.mxu0
      %v4948 = vadd.f32 0.0, %v4947
      %v4949 = vpop.f32.mrf.mxu0
      %4950 = vmatprep.mubr.bf16.mxu0 0
      %4951 = vmatmul.mubr.bf16.gmra.mxu0 %v4803
      %v4952 = vpop.f32.mrf.mxu0
      %v4953 = vadd.f32 0.0, %v4952
      %v4954 = vpop.f32.mrf.mxu0
      %v4955 = vpop.f32.mrf.mxu0
      %v4956 = vadd.f32 0.0, %v4955
      %v4957 = vpop.f32.mrf.mxu0
      %4958 = vmatprep.mubr.bf16.mxu0 0
      %4959 = vmatmul.mubr.bf16.gmra.mxu0 %v4804
      %v4960 = vpop.f32.mrf.mxu0
      %v4961 = vadd.f32 0.0, %v4960
      %v4962 = vpop.f32.mrf.mxu0
      %v4963 = vpop.f32.mrf.mxu0
      %v4964 = vadd.f32 0.0, %v4963
      %v4965 = vpop.f32.mrf.mxu0
      %4966 = vmatprep.mubr.bf16.mxu0 0
      %4967 = vmatmul.mubr.bf16.gmra.mxu0 %v4805
      %v4968 = vpop.f32.mrf.mxu0
      %v4969 = vadd.f32 0.0, %v4968
      %v4970 = vpop.f32.mrf.mxu0
      %v4971 = vpop.f32.mrf.mxu0
      %v4972 = vadd.f32 0.0, %v4971
      %v4973 = vpop.f32.mrf.mxu0
      %4974 = vmatprep.mubr.bf16.mxu0 0
      %4975 = vmatmul.mubr.bf16.gmra.mxu0 %v4806
      %v4976 = vpop.f32.mrf.mxu0
      %v4977 = vadd.f32 0.0, %v4976
      %v4978 = vpop.f32.mrf.mxu0
      %v4979 = vpop.f32.mrf.mxu0
      %v4980 = vadd.f32 0.0, %v4979
      %v4981 = vpop.f32.mrf.mxu0
      %4982 = vmatprep.mubr.bf16.mxu0 0
      %4983 = vmatmul.mubr.bf16.gmra.mxu0 %v4807
      %v4984 = vpop.f32.mrf.mxu0
      %v4985 = vadd.f32 0.0, %v4984
      %v4986 = vpop.f32.mrf.mxu0
      %v4987 = vpop.f32.mrf.mxu0
      %v4988 = vadd.f32 0.0, %v4987
      %v4989 = vpop.f32.mrf.mxu0
      %4990 = vmatprep.mubr.bf16.mxu0 0
      %4991 = vmatmul.mubr.bf16.gmra.mxu0 %v4808
      %v4992 = vpop.f32.mrf.mxu0
      %v4993 = vadd.f32 0.0, %v4992
      %v4994 = vpop.f32.mrf.mxu0
      %v4995 = vpop.f32.mrf.mxu0
      %v4996 = vadd.f32 0.0, %v4995
      %v4997 = vpop.f32.mrf.mxu0
      %4998 = vmatprep.mubr.bf16.mxu0 0
      %4999 = vmatmul.mubr.bf16.gmra.mxu0 %v4809
      %v5000 = vpop.f32.mrf.mxu0
      %v5001 = vadd.f32 0.0, %v5000
      %v5002 = vpop.f32.mrf.mxu0
      %v5003 = vpop.f32.mrf.mxu0
      %v5004 = vadd.f32 0.0, %v5003
      %v5005 = vpop.f32.mrf.mxu0
      %5006 = vmatprep.mubr.bf16.mxu0 0
      %5007 = vmatmul.mubr.bf16.gmra.mxu0 %v4810
      %v5008 = vpop.f32.mrf.mxu0
      %v5009 = vadd.f32 0.0, %v5008
      %v5010 = vpop.f32.mrf.mxu0
      %v5011 = vpop.f32.mrf.mxu0
      %v5012 = vadd.f32 0.0, %v5011
      %v5013 = vpop.f32.mrf.mxu0
      %5014 = vmatprep.mubr.bf16.mxu0 0
      %5015 = vmatmul.mubr.bf16.gmra.mxu0 %v4811
      %v5016 = vpop.f32.mrf.mxu0
      %v5017 = vadd.f32 0.0, %v5016
      %v5018 = vpop.f32.mrf.mxu0
      %v5019 = vpop.f32.mrf.mxu0
      %v5020 = vadd.f32 0.0, %v5019
      %v5021 = vpop.f32.mrf.mxu0
      %5022 = vmatprep.mubr.bf16.mxu0 0
      %5023 = vmatmul.mubr.bf16.gmra.mxu0 %v4812
      %v5024 = vpop.f32.mrf.mxu0
      %v5025 = vadd.f32 0.0, %v5024
      %v5026 = vpop.f32.mrf.mxu0
      %v5027 = vpop.f32.mrf.mxu0
      %v5028 = vadd.f32 0.0, %v5027
      %v5029 = vpop.f32.mrf.mxu0
      %5030 = vmatprep.mubr.bf16.mxu0 0
      %5031 = vmatmul.mubr.bf16.gmra.mxu0 %v4813
      %v5032 = vpop.f32.mrf.mxu0
      %v5033 = vadd.f32 0.0, %v5032
      %v5034 = vpop.f32.mrf.mxu0
      %v5035 = vpop.f32.mrf.mxu0
      %v5036 = vadd.f32 0.0, %v5035
      %v5037 = vpop.f32.mrf.mxu0
      %5038 = vdwg.mxu0
      %v5039 = vadd.f32 %v4541, %v4913
      %v5040 = vadd.f32 %v4542, %v4916
      %v5041 = vadd.f32 %v4543, %v4921
      %v5042 = vadd.f32 %v4544, %v4924
      %v5043 = vadd.f32 %v4545, %v4929
      %v5044 = vadd.f32 %v4546, %v4932
      %v5045 = vadd.f32 %v4547, %v4937
      %v5046 = vadd.f32 %v4548, %v4940
      %v5047 = vadd.f32 %v4549, %v4945
      %v5048 = vadd.f32 %v4550, %v4948
      %v5049 = vadd.f32 %v4551, %v4953
      %v5050 = vadd.f32 %v4552, %v4956
      %v5051 = vadd.f32 %v4553, %v4961
      %v5052 = vadd.f32 %v4554, %v4964
      %v5053 = vadd.f32 %v4555, %v4969
      %v5054 = vadd.f32 %v4556, %v4972
      %v5055 = vadd.f32 %v4557, %v4977
      %v5056 = vadd.f32 %v4558, %v4980
      %v5057 = vadd.f32 %v4559, %v4985
      %v5058 = vadd.f32 %v4560, %v4988
      %v5059 = vadd.f32 %v4561, %v4993
      %v5060 = vadd.f32 %v4562, %v4996
      %v5061 = vadd.f32 %v4563, %v5001
      %v5062 = vadd.f32 %v4564, %v5004
      %v5063 = vadd.f32 %v4565, %v5009
      %v5064 = vadd.f32 %v4566, %v5012
      %v5065 = vadd.f32 %v4567, %v5017
      %v5066 = vadd.f32 %v4568, %v5020
      %v5067 = vadd.f32 %v4569, %v5025
      %v5068 = vadd.f32 %v4570, %v5028
      %v5069 = vadd.f32 %v4571, %v5033
      %v5070 = vadd.f32 %v4572, %v5036
      %v5071 = vld [vmem:[%s2] sm:$0x1]
      %v5073 = vlaneseq
      %v5074 = vshrl.u32 %v5073, 7
      %v5075 = vsub.s32 0, %v5074
      %v5076 = vrot.slane %v5071, %v5075
      %v5078 = vadd.f32 %v5039, %v5076
      %v5079 = vadd.f32 %v5040, %v5076
      %v5080 = vadd.f32 %v5041, %v5076
      %v5081 = vadd.f32 %v5042, %v5076
      %v5082 = vadd.f32 %v5043, %v5076
      %v5083 = vadd.f32 %v5044, %v5076
      %v5084 = vadd.f32 %v5045, %v5076
      %v5085 = vadd.f32 %v5046, %v5076
      %v5086 = vadd.f32 %v5047, %v5076
      %v5087 = vadd.f32 %v5048, %v5076
      %v5088 = vadd.f32 %v5049, %v5076
      %v5089 = vadd.f32 %v5050, %v5076
      %v5090 = vadd.f32 %v5051, %v5076
      %v5091 = vadd.f32 %v5052, %v5076
      %v5092 = vadd.f32 %v5053, %v5076
      %v5093 = vadd.f32 %v5054, %v5076
      %v5094 = vadd.f32 %v5055, %v5076
      %v5095 = vadd.f32 %v5056, %v5076
      %v5096 = vadd.f32 %v5057, %v5076
      %v5097 = vadd.f32 %v5058, %v5076
      %v5098 = vadd.f32 %v5059, %v5076
      %v5099 = vadd.f32 %v5060, %v5076
      %v5100 = vadd.f32 %v5061, %v5076
      %v5101 = vadd.f32 %v5062, %v5076
      %v5102 = vadd.f32 %v5063, %v5076
      %v5103 = vadd.f32 %v5064, %v5076
      %v5104 = vadd.f32 %v5065, %v5076
      %v5105 = vadd.f32 %v5066, %v5076
      %v5106 = vadd.f32 %v5067, %v5076
      %v5107 = vadd.f32 %v5068, %v5076
      %v5108 = vadd.f32 %v5069, %v5076
      %v5109 = vadd.f32 %v5070, %v5076
      %v5110 = vmax.f32 %v5078, 0.0
      %v5111 = vmax.f32 %v5079, 0.0
      %v5112 = vmax.f32 %v5080, 0.0
      %v5113 = vmax.f32 %v5081, 0.0
      %v5114 = vmax.f32 %v5082, 0.0
      %v5115 = vmax.f32 %v5083, 0.0
      %v5116 = vmax.f32 %v5084, 0.0
      %v5117 = vmax.f32 %v5085, 0.0
      %v5118 = vmax.f32 %v5086, 0.0
      %v5119 = vmax.f32 %v5087, 0.0
      %v5120 = vmax.f32 %v5088, 0.0
      %v5121 = vmax.f32 %v5089, 0.0
      %v5122 = vmax.f32 %v5090, 0.0
      %v5123 = vmax.f32 %v5091, 0.0
      %v5124 = vmax.f32 %v5092, 0.0
      %v5125 = vmax.f32 %v5093, 0.0
      %v5126 = vmax.f32 %v5094, 0.0
      %v5127 = vmax.f32 %v5095, 0.0
      %v5128 = vmax.f32 %v5096, 0.0
      %v5129 = vmax.f32 %v5097, 0.0
      %v5130 = vmax.f32 %v5098, 0.0
      %v5131 = vmax.f32 %v5099, 0.0
      %v5132 = vmax.f32 %v5100, 0.0
      %v5133 = vmax.f32 %v5101, 0.0
      %v5134 = vmax.f32 %v5102, 0.0
      %v5135 = vmax.f32 %v5103, 0.0
      %v5136 = vmax.f32 %v5104, 0.0
      %v5137 = vmax.f32 %v5105, 0.0
      %v5138 = vmax.f32 %v5106, 0.0
      %v5139 = vmax.f32 %v5107, 0.0
      %v5140 = vmax.f32 %v5108, 0.0
      %v5141 = vmax.f32 %v5109, 0.0
      %5142 = vst [vmem:[%s249] sm:$0xff] %v5110
      %5143 = vst [vmem:[%s249 + $0x8] sm:$0xff] %v5111
      %5144 = vst [vmem:[%s249 + $0x10] sm:$0xff] %v5112
      %5145 = vst [vmem:[%s249 + $0x18] sm:$0xff] %v5113
      %5146 = vst [vmem:[%s249 + $0x20] sm:$0xff] %v5114
      %5147 = vst [vmem:[%s249 + $0x28] sm:$0xff] %v5115
      %5148 = vst [vmem:[%s249 + $0x30] sm:$0xff] %v5116
      %5149 = vst [vmem:[%s249 + $0x38] sm:$0xff] %v5117
      %5150 = vst [vmem:[%s249 + $0x40] sm:$0xff] %v5118
      %5151 = vst [vmem:[%s249 + $0x48] sm:$0xff] %v5119
      %5152 = vst [vmem:[%s249 + $0x50] sm:$0xff] %v5120
      %5153 = vst [vmem:[%s249 + $0x58] sm:$0xff] %v5121
      %5154 = vst [vmem:[%s249 + $0x60] sm:$0xff] %v5122
      %5155 = vst [vmem:[%s249 + $0x68] sm:$0xff] %v5123
      %5156 = vst [vmem:[%s249 + $0x70] sm:$0xff] %v5124
      %5157 = vst [vmem:[%s249 + $0x78] sm:$0xff] %v5125
      %5158 = vst [vmem:[%s249 + $0x80] sm:$0xff] %v5126
      %5159 = vst [vmem:[%s249 + $0x88] sm:$0xff] %v5127
      %5160 = vst [vmem:[%s249 + $0x90] sm:$0xff] %v5128
      %5161 = vst [vmem:[%s249 + $0x98] sm:$0xff] %v5129
      %5162 = vst [vmem:[%s249 + $0xa0] sm:$0xff] %v5130
      %5163 = vst [vmem:[%s249 + $0xa8] sm:$0xff] %v5131
      %5164 = vst [vmem:[%s249 + $0xb0] sm:$0xff] %v5132
      %5165 = vst [vmem:[%s249 + $0xb8] sm:$0xff] %v5133
      %5166 = vst [vmem:[%s249 + $0xc0] sm:$0xff] %v5134
      %5167 = vst [vmem:[%s249 + $0xc8] sm:$0xff] %v5135
      %5168 = vst [vmem:[%s249 + $0xd0] sm:$0xff] %v5136
      %5169 = vst [vmem:[%s249 + $0xd8] sm:$0xff] %v5137
      %5170 = vst [vmem:[%s249 + $0xe0] sm:$0xff] %v5138
      %5171 = vst [vmem:[%s249 + $0xe8] sm:$0xff] %v5139
      %5172 = vst [vmem:[%s249 + $0xf0] sm:$0xff] %v5140
      %5173 = vst [vmem:[%s249 + $0xf8] sm:$0xff] %v5141
      %v5174 = vld [vmem:[%s249] ss:$2 sm:$0xff]
      %s5175 = scalar_lea.vmem %s249, 16
      %v5176 = vld [vmem:[%s5175] ss:$2 sm:$0xff]
      %s5177 = scalar_lea.vmem %s249, 32
      %v5178 = vld [vmem:[%s5177] ss:$2 sm:$0xff]
      %s5179 = scalar_lea.vmem %s249, 48
      %v5180 = vld [vmem:[%s5179] ss:$2 sm:$0xff]
      %s5181 = scalar_lea.vmem %s249, 64
      %v5182 = vld [vmem:[%s5181] ss:$2 sm:$0xff]
      %s5183 = scalar_lea.vmem %s249, 80
      %v5184 = vld [vmem:[%s5183] ss:$2 sm:$0xff]
      %s5185 = scalar_lea.vmem %s249, 96
      %v5186 = vld [vmem:[%s5185] ss:$2 sm:$0xff]
      %s5187 = scalar_lea.vmem %s249, 112
      %v5188 = vld [vmem:[%s5187] ss:$2 sm:$0xff]
      %s5189 = scalar_lea.vmem %s249, 128
      %v5190 = vld [vmem:[%s5189] ss:$2 sm:$0xff]
      %s5191 = scalar_lea.vmem %s249, 144
      %v5192 = vld [vmem:[%s5191] ss:$2 sm:$0xff]
      %s5193 = scalar_lea.vmem %s249, 160
      %v5194 = vld [vmem:[%s5193] ss:$2 sm:$0xff]
      %s5195 = scalar_lea.vmem %s249, 176
      %v5196 = vld [vmem:[%s5195] ss:$2 sm:$0xff]
      %s5197 = scalar_lea.vmem %s249, 192
      %v5198 = vld [vmem:[%s5197] ss:$2 sm:$0xff]
      %s5199 = scalar_lea.vmem %s249, 208
      %v5200 = vld [vmem:[%s5199] ss:$2 sm:$0xff]
      %s5201 = scalar_lea.vmem %s249, 224
      %v5202 = vld [vmem:[%s5201] ss:$2 sm:$0xff]
      %s5203 = scalar_lea.vmem %s249, 240
      %v5204 = vld [vmem:[%s5203] ss:$2 sm:$0xff]
      %s5205 = scalar_lea.vmem %s249, 1
      %v5206 = vld [vmem:[%s5205] ss:$2 sm:$0xff]
      %s5207 = scalar_lea.vmem %s249, 17
      %v5208 = vld [vmem:[%s5207] ss:$2 sm:$0xff]
      %s5209 = scalar_lea.vmem %s249, 33
      %v5210 = vld [vmem:[%s5209] ss:$2 sm:$0xff]
      %s5211 = scalar_lea.vmem %s249, 49
      %v5212 = vld [vmem:[%s5211] ss:$2 sm:$0xff]
      %s5213 = scalar_lea.vmem %s249, 65
      %v5214 = vld [vmem:[%s5213] ss:$2 sm:$0xff]
      %s5215 = scalar_lea.vmem %s249, 81
      %v5216 = vld [vmem:[%s5215] ss:$2 sm:$0xff]
      %s5217 = scalar_lea.vmem %s249, 97
      %v5218 = vld [vmem:[%s5217] ss:$2 sm:$0xff]
      %s5219 = scalar_lea.vmem %s249, 113
      %v5220 = vld [vmem:[%s5219] ss:$2 sm:$0xff]
      %s5221 = scalar_lea.vmem %s249, 129
      %v5222 = vld [vmem:[%s5221] ss:$2 sm:$0xff]
      %s5223 = scalar_lea.vmem %s249, 145
      %v5224 = vld [vmem:[%s5223] ss:$2 sm:$0xff]
      %s5225 = scalar_lea.vmem %s249, 161
      %v5226 = vld [vmem:[%s5225] ss:$2 sm:$0xff]
      %s5227 = scalar_lea.vmem %s249, 177
      %v5228 = vld [vmem:[%s5227] ss:$2 sm:$0xff]
      %s5229 = scalar_lea.vmem %s249, 193
      %v5230 = vld [vmem:[%s5229] ss:$2 sm:$0xff]
      %s5231 = scalar_lea.vmem %s249, 209
      %v5232 = vld [vmem:[%s5231] ss:$2 sm:$0xff]
      %s5233 = scalar_lea.vmem %s249, 225
      %v5234 = vld [vmem:[%s5233] ss:$2 sm:$0xff]
      %s5235 = scalar_lea.vmem %s249, 241
      %v5236 = vld [vmem:[%s5235] ss:$2 sm:$0xff]
      %v5237 = vmax.f32 %v5174, %v5206
      %v5238 = vmax.f32 %v5176, %v5208
      %v5239 = vmax.f32 %v5178, %v5210
      %v5240 = vmax.f32 %v5180, %v5212
      %v5241 = vmax.f32 %v5182, %v5214
      %v5242 = vmax.f32 %v5184, %v5216
      %v5243 = vmax.f32 %v5186, %v5218
      %v5244 = vmax.f32 %v5188, %v5220
      %v5245 = vmax.f32 %v5190, %v5222
      %v5246 = vmax.f32 %v5192, %v5224
      %v5247 = vmax.f32 %v5194, %v5226
      %v5248 = vmax.f32 %v5196, %v5228
      %v5249 = vmax.f32 %v5198, %v5230
      %v5250 = vmax.f32 %v5200, %v5232
      %v5251 = vmax.f32 %v5202, %v5234
      %v5252 = vmax.f32 %v5204, %v5236
      %v5253 = vmax.f32 %v5237, %v5238
      %v5254 = vmax.f32 %v5239, %v5240
      %v5255 = vmax.f32 %v5241, %v5242
      %v5256 = vmax.f32 %v5243, %v5244
      %v5257 = vmax.f32 %v5245, %v5246
      %v5258 = vmax.f32 %v5247, %v5248
      %v5259 = vmax.f32 %v5249, %v5250
      %v5260 = vmax.f32 %v5251, %v5252
      %5261 = vst [vmem:[%s259] sm:$0xff] %v5253
      %5262 = vst [vmem:[%s259 + $0x8] sm:$0xff] %v5254
      %5263 = vst [vmem:[%s259 + $0x10] sm:$0xff] %v5255
      %5264 = vst [vmem:[%s259 + $0x18] sm:$0xff] %v5256
      %5265 = vst [vmem:[%s259 + $0x20] sm:$0xff] %v5257
      %5266 = vst [vmem:[%s259 + $0x28] sm:$0xff] %v5258
      %5267 = vst [vmem:[%s259 + $0x30] sm:$0xff] %v5259
      %5268 = vst [vmem:[%s259 + $0x38] sm:$0xff] %v5260
      %s5269 = smul.u32 16, %s21
      %p5270 = scmp.lt.s32.totalorder %s20, 1
      %s5271 = scalar_select %p5270, %s20, 1
      %p5272 = scmp.lt.s32.totalorder %s5269, 15
      %s5273 = scalar_select %p5272, %s5269, 15
      %s5274 = smul.addr %s5273, 2
      %s5275 = smul.addr %s5271, 32
      %s5276 = sadd.s32 %s5274, %s5275
      %s5277 = smul.addr %s5276, 8
      %s5278 = scalar_lea.vmem %s3, %s5277
      %s5279 = smul.u32 8, %s21
      %p5280 = scmp.lt.s32.totalorder %s20, 1
      %s5281 = scalar_select %p5280, %s20, 1
      %p5282 = scmp.lt.s32.totalorder %s5279, 7
      %s5283 = scalar_select %p5282, %s5279, 7
      %s5284 = smul.addr %s5281, 8
      %s5285 = sadd.s32 %s5283, %s5284
      %s5286 = smul.addr %s5285, 8
      %s5287 = scalar_lea.vmem %s4, %s5286
      // Predicated region
      $region33: #{downsampling_forward.3} parent=31 // pred_check
        %p5288 = pneg %p118
      $region34: #{downsampling_forward.3} parent=31 // pred_check_branch
        %5290 = sbr.rel (%p5288) target = $region36
      $region35: #{downsampling_forward.3} parent=31 // pred_region
        %s5291 = smul.u32 16, %s21
      $region36: #{downsampling_forward.3} parent=31 // pred_fallthru
        _
      // Predicated region
      $region37: #{downsampling_forward.3} parent=31 // pred_check
        %p5292 = pneg %p146
      $region38: #{downsampling_forward.3} parent=31 // pred_check_branch
        %5294 = sbr.rel (%p5292) target = $region40
      $region39: #{downsampling_forward.3} parent=31 // pred_region
        %s5295 = smul.u32 8, %s21
      $region40: #{downsampling_forward.3} parent=31 // pred_fallthru
        _
    $region32: #{downsampling_forward.3} parent=5 // pred_fallthru
      _
    %p5296 = scmp.le.s32.totalorder 2, %s11
    // Predicated region
    $region41: #{downsampling_forward.3} parent=5 // pred_check
      %p5297 = pneg %p5296
    $region42: #{downsampling_forward.3} parent=5 // pred_check_branch
      %5299 = sbr.rel (%p5297) target = $region44
    $region43: #{downsampling_forward.3} parent=5 // pred_region
      %s5300 = ssub.s32 %s11, 2
      // Predicated region
      $region45: #{downsampling_forward.3} parent=43 // pred_check
        %p5301 = pneg %p124
      $region46: #{downsampling_forward.3} parent=43 // pred_check_branch
        %5303 = sbr.rel (%p5301) target = $region48
      $region47: #{downsampling_forward.3} parent=43 // pred_region
        %s5304 = smul.u32 16, %s23
        %p5305 = scmp.lt.s32.totalorder %s22, 1
        %s5306 = scalar_select %p5305, %s22, 1
        %p5307 = scmp.lt.s32.totalorder %s5304, 15
        %s5308 = scalar_select %p5307, %s5304, 15
        %s5309 = smul.addr %s5308, 2
        %s5310 = smul.addr %s5306, 32
        %s5311 = sadd.s32 %s5309, %s5310
        %s5312 = smul.addr %s5311, 8
        %s5313 = scalar_lea.vmem %s3, %s5312
      $region48: #{downsampling_forward.3} parent=43 // pred_fallthru
        _
      // Predicated region
      $region49: #{downsampling_forward.3} parent=43 // pred_check
        %p5314 = pneg %p152
      $region50: #{downsampling_forward.3} parent=43 // pred_check_branch
        %5316 = sbr.rel (%p5314) target = $region52
      $region51: #{downsampling_forward.3} parent=43 // pred_region
        %s5317 = smul.u32 8, %s23
        %p5318 = scmp.lt.s32.totalorder %s22, 1
        %s5319 = scalar_select %p5318, %s22, 1
        %p5320 = scmp.lt.s32.totalorder %s5317, 7
        %s5321 = scalar_select %p5320, %s5317, 7
        %s5322 = smul.addr %s5319, 8
        %s5323 = sadd.s32 %s5321, %s5322
        %s5324 = smul.addr %s5323, 8
        %s5325 = scalar_lea.vmem %s4, %s5324
      $region52: #{downsampling_forward.3} parent=43 // pred_fallthru
        _
    $region44: #{downsampling_forward.3} parent=5 // pred_fallthru
      _
  $region6: #{downsampling_forward.3} parent=0 // loop_footer
    %s15 = sadd.s32 1, %s11
  $region7: #{downsampling_forward.3} parent=0 // loop_footer_branch
    %10 = sbr.rel target = $region3
  $region8: #{downsampling_forward.3} parent=0 // loop_exit
    _

</llo_original>
